<compile_context>
chip_gen: v6e
topology: v6e:2x2x1
jax: 0.10.0
libtpu: 0.0.40
codegen_flags: <defaults>
</compile_context>

<pallas_src>
import functools
import math

import jax
import jax.numpy as jnp
from jax import lax
from jax.experimental import pallas as pl
from jax.experimental.pallas import tpu as pltpu

LANE = 128                 # lane (last-dim) alignment
ROW = 16                   # sublane row alignment (bf16-safe)
COMPUTE_DTYPE = jnp.bfloat16

_VMEM = pl.BlockSpec(memory_space=pltpu.MemorySpace.VMEM)


def _round_up(n, m):
    return ((n + m - 1) // m) * m


def _pick_time_chunk(T, max_chunk=32):
    """Largest divisor of T that is <= max_chunk (keeps the recurrence exact,
    no time-axis padding needed for either direction)."""
    best = 1
    for c in range(1, min(T, max_chunk) + 1):
        if T % c == 0:
            best = c
    return best


# ----------------------------------------------------------------------------
# Pallas kernels
# ----------------------------------------------------------------------------

def _lstm_seq_kernel(x_ref, w_ref, b_ref, out_ref, xh_ref, c_ref, *, Inp, Hp, Tc):
    """Fused LSTM over a Tc-timestep block; grid=(D, T//Tc).

    x_ref   : (Tc, Bp, Inp)   timestep block (bf16)
    w_ref   : (Inp+Hp, 4*Hp)  [W_ih ; W_hh], gate order [i,f,o,g] (bf16, resident)
    b_ref   : (1, 4*Hp)       b_ih + b_hh (f32, resident)
    out_ref : (Tc, Bp, Hp)    h_t block (bf16)
    xh_ref  : (Bp, Inp+Hp)    persistent fused [x_t | h_{t-1}] operand (bf16)
    c_ref   : (Bp, Hp)        persistent cell state (f32)
    program_id(0) == 1 means this is the backward direction: the BlockSpecs
    already deliver the time blocks in reverse order and the in-kernel loop
    walks the block back-to-front, so outputs land at their natural indices.
    """
    tb = pl.program_id(1)
    rev = pl.program_id(0)          # 0: forward sweep, 1: reversed sweep

    @pl.when(tb == 0)
    def _():
        xh_ref[...] = jnp.zeros_like(xh_ref)   # h_0 = 0 (and clean x slot)
        c_ref[...] = jnp.zeros_like(c_ref)     # c_0 = 0

    w = w_ref[...]                  # resident (Inp+Hp, 4*Hp)
    bias = b_ref[...]               # (1, 4*Hp) f32

    def step(s, carry):
        t = s + rev * (Tc - 1 - 2 * s)                 # s (fwd) or Tc-1-s (bwd)
        xh_ref[:, :Inp] = x_ref[t]
        gates = (jnp.dot(xh_ref[...], w, preferred_element_type=jnp.float32)
                 + bias)                                # (Bp, 4*Hp) f32
        sg = jax.nn.sigmoid(gates[:, :3 * Hp])          # one wide [i|f|o] dispatch
        i_g = sg[:, 0 * Hp:1 * Hp]
        f_g = sg[:, 1 * Hp:2 * Hp]
        o_g = sg[:, 2 * Hp:3 * Hp]
        g_g = jnp.tanh(gates[:, 3 * Hp:4 * Hp])
        c_new = f_g * c_ref[...] + i_g * g_g
        h_new = (o_g * jnp.tanh(c_new)).astype(out_ref.dtype)
        c_ref[...] = c_new
        xh_ref[:, Inp:] = h_new
        out_ref[t] = h_new
        return carry

    lax.fori_loop(0, Tc, step, 0, unroll=True)


def _linear_kernel(x_ref, w_ref, b_ref, o_ref):
    y = jnp.dot(x_ref[...], w_ref[...], preferred_element_type=jnp.float32) + b_ref[...]
    o_ref[...] = y.astype(o_ref.dtype)


def _linear_softmax_kernel(x_ref, w_ref, b_ref, o_ref, *, valid_n):
    y = jnp.dot(x_ref[...], w_ref[...], preferred_element_type=jnp.float32) + b_ref[...]
    if valid_n < y.shape[-1]:
        col = jax.lax.broadcasted_iota(jnp.int32, y.shape, 1)
        y = jnp.where(col < valid_n, y, -1e30)   # padded lanes leave the softmax
    y = y - jnp.max(y, axis=-1, keepdims=True)
    e = jnp.exp(y)
    o_ref[...] = (e / jnp.sum(e, axis=-1, keepdims=True)).astype(o_ref.dtype)


def _mu_sigma_kernel(x_ref, w_ref, b_ref, mu_ref, sig_ref, *, half):
    """Fused mu / std heads: one matmul into [mu | std], softplus on the std half."""
    y = jnp.dot(x_ref[...], w_ref[...], preferred_element_type=jnp.float32) + b_ref[...]
    mu_ref[...] = y[:, :half].astype(mu_ref.dtype)
    s = y[:, half:]
    # numerically-stable log(exp(s) + 1): same value as the PyTorch expression,
    # but never overflows to inf in f32.
    sig = jnp.where(s > 20.0, s, jnp.log(jnp.exp(jnp.minimum(s, 20.0)) + 1.0))
    sig_ref[...] = sig.astype(sig_ref.dtype)


# ----------------------------------------------------------------------------
# Pallas wrappers
# ----------------------------------------------------------------------------

def lstm_stack_layer(x_pad, W, b, max_time_chunk=32):
    """One LSTM layer, all directions in a single pallas_call.

    x_pad : (T, Bp, Inp) bf16, already padded/lane-dense.
    W     : (D, Inp+Hp, 4*Hp) bf16;  b : (D, 1, 4*Hp) f32.
    Returns (D, T, Bp, Hp) bf16 (outputs at natural time positions for both
    directions; padded feature columns stay exactly zero).
    """
    T, Bp, Inp = x_pad.shape
    D, K, G = W.shape
    Hp = G // 4
    Tc = _pick_time_chunk(T, max_time_chunk)
    nT = T // Tc

    # Backward direction (d==1) reads/writes the time blocks in reverse order.
    def time_block(d, tb):
        return tb + d * (nT - 1 - 2 * tb)

    out = pl.pallas_call(
        functools.partial(_lstm_seq_kernel, Inp=Inp, Hp=Hp, Tc=Tc),
        grid=(D, nT),
        in_specs=[
            pl.BlockSpec((Tc, Bp, Inp), lambda d, tb: (time_block(d, tb), 0, 0)),
            pl.BlockSpec((None, K, G), lambda d, tb: (d, 0, 0)),      # resident W
            pl.BlockSpec((None, 1, G), lambda d, tb: (d, 0, 0)),      # resident b
        ],
        out_specs=pl.BlockSpec((None, Tc, Bp, Hp),
                               lambda d, tb: (d, time_block(d, tb), 0, 0)),
        out_shape=jax.ShapeDtypeStruct((D, T, Bp, Hp), COMPUTE_DTYPE),
        scratch_shapes=[pltpu.VMEM((Bp, K), COMPUTE_DTYPE),   # fused [x|h] operand
                        pltpu.VMEM((Bp, Hp), jnp.float32)],   # cell state
        compiler_params=pltpu.CompilerParams(
            dimension_semantics=("parallel", "arbitrary")),
    )(x_pad, W, b)
    return out


def run_lstm(x_pad, layer_params):
    """Multi-layer (optionally bidirectional) LSTM on padded activations.

    x_pad: (T, Bp, In0p) bf16.  layer_params[l] = (W (D,K,4Hp), b (D,1,4Hp)).
    Returns (padded outputs (T, Bp, D*Hp) bf16,
             hn (num_layers*D, Bp, Hp) bf16 in PyTorch's layer*D+dir order).
    """
    T = x_pad.shape[0]
    hn_list = []
    layer_in = x_pad
    for (W, b) in layer_params:
        out = lstm_stack_layer(layer_in, W, b)          # (D, T, Bp, Hp)
        D = out.shape[0]
        hn_list.append(out[0, T - 1])                   # forward: last step
        if D == 2:
            hn_list.append(out[1, 0])                   # backward: first step
            layer_in = jnp.concatenate([out[0], out[1]], axis=-1)
        else:
            layer_in = out[0]
    return layer_in, jnp.stack(hn_list, axis=0)


def pallas_linear(x, w, b, out_f, activation=None, out_dtype=COMPUTE_DTYPE,
                  block_m=256):
    """x: (M, K) -> (M, out_f).  w: (Kp, Np) zero-padded, b: (1, Np).

    Row-tiled (grid over M, resident weight).  If x is already padded/bf16
    (padded layout flowing out of an LSTM), no copy is made.
    """
    M, K = x.shape
    Kp, Np = w.shape
    Mb = min(_round_up(M, ROW), block_m)
    Mp = _round_up(M, Mb)
    if (M, K) != (Mp, Kp) or x.dtype != w.dtype:
        xp = jnp.zeros((Mp, Kp), w.dtype).at[:M, :K].set(x.astype(w.dtype))
    else:
        xp = x
    if activation == "softmax":
        kernel = functools.partial(_linear_softmax_kernel, valid_n=out_f)
    else:
        kernel = _linear_kernel
    y = pl.pallas_call(
        kernel,
        grid=(Mp // Mb,),
        in_specs=[pl.BlockSpec((Mb, Kp), lambda m: (m, 0)),
                  pl.BlockSpec((Kp, Np), lambda m: (0, 0)),   # resident weight
                  pl.BlockSpec((1, Np), lambda m: (0, 0))],
        out_specs=pl.BlockSpec((Mb, Np), lambda m: (m, 0)),
        out_shape=jax.ShapeDtypeStruct((Mp, Np), out_dtype),
        compiler_params=pltpu.CompilerParams(
            dimension_semantics=("parallel",)),
    )(xp, w, b)
    return y[:M, :out_f]


def pallas_mu_sigma(h, w, b, latent):
    """Fused mu / softplus(std) heads.  h: (M, Kp) -> ((M, latent), (M, latent))."""
    M, K = h.shape
    Kp, N2 = w.shape
    Np = N2 // 2
    Mp = _round_up(M, ROW)
    if (M, K) != (Mp, Kp) or h.dtype != w.dtype:
        hp = jnp.zeros((Mp, Kp), w.dtype).at[:M, :K].set(h.astype(w.dtype))
    else:
        hp = h
    mu, sig = pl.pallas_call(
        functools.partial(_mu_sigma_kernel, half=Np),
        out_shape=(jax.ShapeDtypeStruct((Mp, Np), jnp.float32),
                   jax.ShapeDtypeStruct((Mp, Np), jnp.float32)),
        in_specs=[_VMEM, _VMEM, _VMEM],
        out_specs=(_VMEM, _VMEM),
    )(hp, w, b)
    return mu[:M, :latent], sig[:M, :latent]


# ----------------------------------------------------------------------------
# Parameter initialization (PyTorch-like uniform(-k, k), padded layouts)
# ----------------------------------------------------------------------------

def _uni(key, shape, k):
    return jax.random.uniform(key, shape, jnp.float32, minval=-k, maxval=k)


def init_lstm_layer(key, segments, in_width_p, hidden, num_dirs):
    """One layer's weights for all directions, laid out against the padded
    input (real input features live at `segments` = [(offset, size), ...]
    within the padded width `in_width_p`).  Gate order is [i, f, o, g] so the
    three sigmoids are contiguous (internal convention; weights are random)."""
    Hp = _round_up(hidden, LANE)
    in_size = sum(sz for _, sz in segments)
    kscale = 1.0 / math.sqrt(hidden)
    Ws, bs = [], []
    for _ in range(num_dirs):
        key, k1, k2, k3, k4 = jax.random.split(key, 5)
        wih = _uni(k1, (in_size, 4, hidden), kscale)     # transposed weight_ih
        whh = _uni(k2, (hidden, 4, hidden), kscale)      # transposed weight_hh
        bias = _uni(k3, (4, hidden), kscale) + _uni(k4, (4, hidden), kscale)
        W = jnp.zeros((in_width_p + Hp, 4, Hp), jnp.float32)
        row = 0
        for off, sz in segments:
            W = W.at[off:off + sz, :, :hidden].set(wih[row:row + sz])
            row += sz
        W = W.at[in_width_p:in_width_p + hidden, :, :hidden].set(whh)
        Ws.append(W.reshape(in_width_p + Hp, 4 * Hp).astype(COMPUTE_DTYPE))
        bs.append(jnp.zeros((4, Hp), jnp.float32)
                  .at[:, :hidden].set(bias).reshape(1, 4 * Hp))
    return (jnp.stack(Ws, axis=0), jnp.stack(bs, axis=0)), key


def init_lstm_params(key, input_size, hidden, num_layers, bidirectional):
    D = 2 if bidirectional else 1
    Hp = _round_up(hidden, LANE)
    Ip = _round_up(input_size, LANE)
    layers = []
    for layer in range(num_layers):
        if layer == 0:
            segments, in_wp = [(0, input_size)], Ip
        else:   # padded concat of the previous layer's D direction outputs
            segments, in_wp = [(d * Hp, hidden) for d in range(D)], D * Hp
        p, key = init_lstm_layer(key, segments, in_wp, hidden, D)
        layers.append(p)
    return layers, key


def init_linear_params(key, in_f, out_f):
    Kp, Np = _round_up(in_f, LANE), _round_up(out_f, LANE)
    k = 1.0 / math.sqrt(in_f)
    key, k1, k2 = jax.random.split(key, 3)
    w = jnp.zeros((Kp, Np), jnp.float32).at[:in_f, :out_f].set(
        _uni(k1, (in_f, out_f), k)).astype(COMPUTE_DTYPE)
    b = jnp.zeros((1, Np), jnp.float32).at[:, :out_f].set(_uni(k2, (1, out_f), k))
    return (w, b), key


def init_mu_sigma_params(key, num_blocks, block_size, block_pad, latent):
    """Fused [mu | std] head whose input is the PADDED hn layout: block k of
    the input occupies columns [k*block_pad, k*block_pad + block_size)."""
    in_f = num_blocks * block_size
    Kp = num_blocks * block_pad
    Np = _round_up(latent, LANE)
    kscale = 1.0 / math.sqrt(in_f)
    key, k1, k2, k3, k4 = jax.random.split(key, 5)
    w_mu = _uni(k1, (in_f, latent), kscale)
    w_sd = _uni(k2, (in_f, latent), kscale)
    W = jnp.zeros((Kp, 2 * Np), jnp.float32)
    for blk in range(num_blocks):
        rows = slice(blk * block_pad, blk * block_pad + block_size)
        src = slice(blk * block_size, (blk + 1) * block_size)
        W = W.at[rows, :latent].set(w_mu[src])
        W = W.at[rows, Np:Np + latent].set(w_sd[src])
    W = W.astype(COMPUTE_DTYPE)
    b = (jnp.zeros((1, 2 * Np), jnp.float32)
         .at[:, :latent].set(_uni(k3, (1, latent), kscale))
         .at[:, Np:Np + latent].set(_uni(k4, (1, latent), kscale)))
    return (W, b), key


def init_music_vae_params(key, input_size, latent_dim, conductor_dim, U,
                          enc_hidden, dec_hidden, cond_hidden,
                          enc_layers, dec_layers, cond_layers):
    params = {}
    params["encoder"], key = init_lstm_params(key, input_size, enc_hidden,
                                              enc_layers, bidirectional=True)
    params["mu_std"], key = init_mu_sigma_params(
        key, enc_layers * 2, enc_hidden, _round_up(enc_hidden, LANE), latent_dim)
    params["z"], key = init_linear_params(key, latent_dim, U * input_size)
    params["conductor"], key = init_lstm_params(key, input_size, cond_hidden,
                                                cond_layers, bidirectional=False)
    params["conductor_out"], key = init_linear_params(key, cond_hidden, conductor_dim)
    params["decoder"], key = init_lstm_params(key, input_size, dec_hidden,
                                              dec_layers, bidirectional=False)
    params["classifier"], key = init_linear_params(key, dec_hidden, input_size)
    return params


# ----------------------------------------------------------------------------
# MusicVAE forward
# ----------------------------------------------------------------------------

def music_vae_forward(params, x, epsilon, *, cfg):
    """x: (B, T, I) float32; epsilon: (B, latent) uniform[0,1) noise.

    cfg is a static dict: {"U", "conductor_dim"}.
    """
    B, T, I = x.shape
    U = cfg["U"]
    latent = epsilon.shape[1]
    S = T // U
    Tu = U * S
    Bp = _round_up(B, ROW)
    Ip = _round_up(I, LANE)

    # ---- encoder (bidirectional, padded layout end-to-end) ----
    xs = jnp.zeros((T, Bp, Ip), COMPUTE_DTYPE).at[:, :B, :I].set(
        jnp.transpose(x, (1, 0, 2)).astype(COMPUTE_DTYPE))
    _, hn = run_lstm(xs, params["encoder"])                       # (L*2, Bp, Hep)
    h = jnp.transpose(hn, (1, 0, 2)).reshape(Bp, -1)              # (Bp, L*2*Hep) padded

    mu_p, sigma_p = pallas_mu_sigma(h, *params["mu_std"], latent=latent)
    mu, sigma = mu_p[:B], sigma_p[:B]                             # (B, latent) f32
    z = mu + sigma * epsilon                                      # reparameterization
    z = pallas_linear(z, *params["z"], out_f=U * I).reshape(B, U, I)

    # ---- conductor ----
    # The PyTorch module feeds z[:, u, :].unsqueeze(1) to an nn.LSTM with
    # batch_first=False, i.e. it treats the *batch* axis as time (seq=B, batch=1).
    # That quirk is reproduced here; the U independent chunks are batched along
    # the LSTM batch axis (equivalent, since LSTM batch elements are independent).
    Up = _round_up(U, ROW)
    cond_in = jnp.zeros((B, Up, Ip), COMPUTE_DTYPE).at[:, :U, :I].set(
        z.astype(COMPUTE_DTYPE))
    cond_out, _ = run_lstm(cond_in, params["conductor"])          # (B, Up, Hcp) padded
    Hcp = cond_out.shape[-1]
    embed = pallas_linear(cond_out.reshape(B * Up, Hcp), *params["conductor_out"],
                          out_f=cfg["conductor_dim"])             # (B*Up, I)
    embed = embed.reshape(B, Up, -1)[:, :U].reshape(B, U, 1, I)

    # ---- decoder: all U chunks batched along the LSTM batch axis ----
    x_r = x[:, :Tu].reshape(B, U, S, I).astype(embed.dtype)
    x_embed = jnp.concatenate([embed, x_r], axis=2)               # (B, U, 1+S, I)
    dec_T = 1 + S
    BU = B * U
    BUp = _round_up(BU, ROW)
    dec_in = jnp.zeros((dec_T, BUp, Ip), COMPUTE_DTYPE).at[:, :BU, :I].set(
        jnp.transpose(x_embed, (2, 0, 1, 3)).reshape(dec_T, BU, I))
    dec_out, _ = run_lstm(dec_in, params["decoder"])              # (1+S, BUp, Hdp) padded
    Hdp = dec_out.shape[-1]

    # ---- classifier softmax: row-tiled over every (chunk, timestep) row ----
    y = dec_out[1:].reshape(S * BUp, Hdp)
    y_hat = pallas_linear(y, *params["classifier"], out_f=I,
                          activation="softmax", out_dtype=jnp.float32)
    y_hat_seq = (y_hat.reshape(S, BUp, I)[:, :BU]
                 .reshape(S, B, U, I)
                 .transpose(1, 2, 0, 3)
                 .reshape(B, Tu, I))
    if Tu < T:   # torch leaves the trailing remainder rows as zeros
        y_hat_seq = jnp.concatenate(
            [y_hat_seq, jnp.zeros((B, T - Tu, I), y_hat_seq.dtype)], axis=1)
    return y_hat_seq, mu, sigma


# ----------------------------------------------------------------------------
# Demo
# ----------------------------------------------------------------------------

if __name__ == "__main__":
    # Small config consistent with the module.  NOTE: the original forward only
    # type-checks when conductor_dim == input_size (it concatenates the conductor
    # embedding with x along the sequence dim), so that constraint is kept here.
    B, T, I = 2, 8, 16
    U = 2
    LATENT = 8
    COND_DIM = I
    ENC_H = DEC_H = COND_H = 16
    ENC_L = DEC_L = COND_L = 2

    key = jax.random.PRNGKey(0)
    kx, keps, kp = jax.random.split(key, 3)

    x = jax.random.normal(kx, (B, T, I), jnp.float32)
    # epsilon = torch.rand_like(sigma): uniform[0,1), drawn deterministically here.
    epsilon = jax.random.uniform(keps, (B, LATENT), jnp.float32)

    params = init_music_vae_params(kp, I, LATENT, COND_DIM, U,
                                   ENC_H, DEC_H, COND_H,
                                   ENC_L, DEC_L, COND_L)

    cfg = {"U": U, "conductor_dim": COND_DIM}

    fwd = jax.jit(functools.partial(music_vae_forward, cfg=cfg))
    y_hat_seq, mu, sigma = jax.block_until_ready(fwd(params, x, epsilon))

    assert y_hat_seq.shape == (B, T, I), y_hat_seq.shape
    assert mu.shape == (B, LATENT), mu.shape
    assert sigma.shape == (B, LATENT), sigma.shape
    # softmax rows sum to 1 (exact divide in the kernel)
    assert jnp.allclose(jnp.sum(y_hat_seq, axis=-1), 1.0, atol=1e-3)
    assert bool(jnp.all(jnp.isfinite(y_hat_seq)))
    assert bool(jnp.all(jnp.isfinite(mu)))
    assert bool(jnp.all(sigma > 0))

    print("KERNEL_OK")
</pallas_src>

<mosaic_0001>
module attributes {stable_mosaic.version = 11 : i64} {
  func.func @_lstm_seq_kernel(%arg0: i32, %arg1: i32, %arg2: memref<8x16x128xbf16, #tpu.memory_space<vmem>>, %arg3: memref<1x256x512xbf16, #tpu.memory_space<vmem>>, %arg4: memref<1x1x512xf32, #tpu.memory_space<vmem>>, %arg5: memref<1x8x16x128xbf16, #tpu.memory_space<vmem>>, %arg6: memref<16x256xbf16, #tpu.memory_space<vmem>>, %arg7: memref<16x128xf32, #tpu.memory_space<vmem>>) attributes {dimension_semantics = [#tpu.dimension_semantics<parallel>, #tpu.dimension_semantics<arbitrary>], iteration_bounds = array<i64: 2, 1>, scalar_prefetch = 0 : i64, scratch_operands = 2 : i64, tpu.core_type = #tpu.core_type<tc>, window_params = [{transform_indices = @transform_0, window_bounds = array<i64: 8, 16, 128>}, {transform_indices = @transform_1, window_bounds = array<i64: 1, 256, 512>}, {transform_indices = @transform_2, window_bounds = array<i64: 1, 1, 512>}, {transform_indices = @transform_3, window_bounds = array<i64: 1, 8, 16, 128>}]} {
    %c0_i32 = arith.constant 0 : i32
    %0 = arith.cmpi eq, %arg1, %c0_i32 : i32
    %1 = arith.extui %0 : i1 to i32
    %c0_i32_0 = arith.constant 0 : i32
    %2 = arith.cmpi ne, %1, %c0_i32_0 : i32
    scf.if %2 {
      %cst_157 = arith.constant 0.000000e+00 : bf16
      %295 = vector.broadcast %cst_157 : bf16 to vector<16x256xbf16>
      %c0_158 = arith.constant 0 : index
      %c0_159 = arith.constant 0 : index
      %296 = vector.load %arg6[%c0_158, %c0_159] : memref<16x256xbf16, #tpu.memory_space<vmem>>, vector<16x256xbf16>
      tpu.vector_store %arg6[%c0_158, %c0_159], %295 {strides = array<i32>} : memref<16x256xbf16, #tpu.memory_space<vmem>>, vector<16x256xbf16>,
      %cst_160 = arith.constant 0.000000e+00 : f32
      %297 = vector.broadcast %cst_160 : f32 to vector<16x128xf32>
      %c0_161 = arith.constant 0 : index
      %c0_162 = arith.constant 0 : index
      %298 = vector.load %arg7[%c0_161, %c0_162] : memref<16x128xf32, #tpu.memory_space<vmem>>, vector<16x128xf32>
      tpu.vector_store %arg7[%c0_161, %c0_162], %297 {strides = array<i32>} : memref<16x128xf32, #tpu.memory_space<vmem>>, vector<16x128xf32>,
    } else {
    }
    %c0 = arith.constant 0 : index
    %c0_1 = arith.constant 0 : index
    %c0_2 = arith.constant 0 : index
    %3 = vector.load %arg3[%c0, %c0_1, %c0_2] : memref<1x256x512xbf16, #tpu.memory_space<vmem>>, vector<1x256x512xbf16>
    %4 = vector.shape_cast %3 : vector<1x256x512xbf16> to vector<256x512xbf16>
    %c0_3 = arith.constant 0 : index
    %c0_4 = arith.constant 0 : index
    %c0_5 = arith.constant 0 : index
    %5 = vector.load %arg4[%c0_3, %c0_4, %c0_5] : memref<1x1x512xf32, #tpu.memory_space<vmem>>, vector<1x1x512xf32>
    %6 = vector.shape_cast %5 : vector<1x1x512xf32> to vector<1x512xf32>
    %c0_i32_6 = arith.constant 0 : i32
    %c2_i32 = arith.constant 2 : i32
    %7 = arith.muli %c2_i32, %c0_i32_6 : i32
    %c7_i32 = arith.constant 7 : i32
    %8 = arith.subi %c7_i32, %7 : i32
    %9 = arith.muli %arg0, %8 : i32
    %10 = arith.addi %c0_i32_6, %9 : i32
    %11 = arith.index_cast %10 : i32 to index
    %c0_7 = arith.constant 0 : index
    %c0_8 = arith.constant 0 : index
    %12 = vector.load %arg2[%11, %c0_7, %c0_8] : memref<8x16x128xbf16, #tpu.memory_space<vmem>>, vector<1x16x128xbf16>
    %13 = vector.shape_cast %12 : vector<1x16x128xbf16> to vector<16x128xbf16>
    %c0_9 = arith.constant 0 : index
    %c0_10 = arith.constant 0 : index
    %14 = vector.load %arg6[%c0_9, %c0_10] : memref<16x256xbf16, #tpu.memory_space<vmem>>, vector<16x128xbf16>
    tpu.vector_store %arg6[%c0_9, %c0_10], %13 {strides = array<i32>} : memref<16x256xbf16, #tpu.memory_space<vmem>>, vector<16x128xbf16>,
    %c0_11 = arith.constant 0 : index
    %c0_12 = arith.constant 0 : index
    %15 = vector.load %arg6[%c0_11, %c0_12] : memref<16x256xbf16, #tpu.memory_space<vmem>>, vector<16x256xbf16>
    %cst = arith.constant dense<0.000000e+00> : vector<16x512xf32>
    %16 = tpu.matmul %15, %4, %cst {dimension_numbers = #tpu.dot_dimension_numbers<[1], [0], [0], [1], [0, 0, 1, 1], [], []>} : vector<16x256xbf16>, vector<256x512xbf16>, vector<16x512xf32> -> vector<16x512xf32>
    %17 = vector.broadcast %6 : vector<1x512xf32> to vector<16x512xf32>
    %18 = arith.addf %16, %17 : vector<16x512xf32>
    %19 = vector.extract_strided_slice %18 {offsets = [0, 0], sizes = [16, 384], strides = [1, 1]} : vector<16x512xf32> to vector<16x384xf32>
    %20 = arith.negf %19 : vector<16x384xf32>
    %21 = math.exp %20 : vector<16x384xf32>
    %cst_13 = arith.constant 1.000000e+00 : f32
    %22 = vector.broadcast %cst_13 : f32 to vector<16x384xf32>
    %23 = arith.addf %22, %21 : vector<16x384xf32>
    %24 = arith.divf %22, %23 : vector<16x384xf32>
    %25 = vector.extract_strided_slice %24 {offsets = [0, 0], sizes = [16, 128], strides = [1, 1]} : vector<16x384xf32> to vector<16x128xf32>
    %26 = vector.extract_strided_slice %24 {offsets = [0, 128], sizes = [16, 128], strides = [1, 1]} : vector<16x384xf32> to vector<16x128xf32>
    %27 = vector.extract_strided_slice %24 {offsets = [0, 256], sizes = [16, 128], strides = [1, 1]} : vector<16x384xf32> to vector<16x128xf32>
    %28 = vector.extract_strided_slice %18 {offsets = [0, 384], sizes = [16, 128], strides = [1, 1]} : vector<16x512xf32> to vector<16x128xf32>
    %29 = math.tanh %28 : vector<16x128xf32>
    %c0_14 = arith.constant 0 : index
    %c0_15 = arith.constant 0 : index
    %30 = vector.load %arg7[%c0_14, %c0_15] : memref<16x128xf32, #tpu.memory_space<vmem>>, vector<16x128xf32>
    %31 = arith.mulf %26, %30 : vector<16x128xf32>
    %32 = arith.mulf %25, %29 : vector<16x128xf32>
    %33 = arith.addf %31, %32 : vector<16x128xf32>
    %34 = math.tanh %33 : vector<16x128xf32>
    %35 = arith.mulf %27, %34 : vector<16x128xf32>
    %36 = arith.truncf %35 : vector<16x128xf32> to vector<16x128xbf16>
    %c0_16 = arith.constant 0 : index
    %c0_17 = arith.constant 0 : index
    %37 = vector.load %arg7[%c0_16, %c0_17] : memref<16x128xf32, #tpu.memory_space<vmem>>, vector<16x128xf32>
    tpu.vector_store %arg7[%c0_16, %c0_17], %33 {strides = array<i32>} : memref<16x128xf32, #tpu.memory_space<vmem>>, vector<16x128xf32>,
    %c0_18 = arith.constant 0 : index
    %c128 = arith.constant 128 : index
    %38 = vector.load %arg6[%c0_18, %c128] : memref<16x256xbf16, #tpu.memory_space<vmem>>, vector<16x128xbf16>
    tpu.vector_store %arg6[%c0_18, %c128], %36 {strides = array<i32>} : memref<16x256xbf16, #tpu.memory_space<vmem>>, vector<16x128xbf16>,
    %c0_19 = arith.constant 0 : index
    %39 = arith.index_cast %10 : i32 to index
    %c0_20 = arith.constant 0 : index
    %c0_21 = arith.constant 0 : index
    %40 = vector.load %arg5[%c0_19, %39, %c0_20, %c0_21] : memref<1x8x16x128xbf16, #tpu.memory_space<vmem>>, vector<1x1x16x128xbf16>
    %41 = vector.shape_cast %40 : vector<1x1x16x128xbf16> to vector<16x128xbf16>
    %42 = vector.shape_cast %36 : vector<16x128xbf16> to vector<1x1x16x128xbf16>
    tpu.vector_store %arg5[%c0_19, %39, %c0_20, %c0_21], %42 {strides = array<i32>} : memref<1x8x16x128xbf16, #tpu.memory_space<vmem>>, vector<1x1x16x128xbf16>,
    %c1_i32 = arith.constant 1 : i32
    %c2_i32_22 = arith.constant 2 : i32
    %43 = arith.muli %c2_i32_22, %c1_i32 : i32
    %c7_i32_23 = arith.constant 7 : i32
    %44 = arith.subi %c7_i32_23, %43 : i32
    %45 = arith.muli %arg0, %44 : i32
    %46 = arith.addi %c1_i32, %45 : i32
    %47 = arith.index_cast %46 : i32 to index
    %c0_24 = arith.constant 0 : index
    %c0_25 = arith.constant 0 : index
    %48 = vector.load %arg2[%47, %c0_24, %c0_25] : memref<8x16x128xbf16, #tpu.memory_space<vmem>>, vector<1x16x128xbf16>
    %49 = vector.shape_cast %48 : vector<1x16x128xbf16> to vector<16x128xbf16>
    %c0_26 = arith.constant 0 : index
    %c0_27 = arith.constant 0 : index
    %50 = vector.load %arg6[%c0_26, %c0_27] : memref<16x256xbf16, #tpu.memory_space<vmem>>, vector<16x128xbf16>
    tpu.vector_store %arg6[%c0_26, %c0_27], %49 {strides = array<i32>} : memref<16x256xbf16, #tpu.memory_space<vmem>>, vector<16x128xbf16>,
    %c0_28 = arith.constant 0 : index
    %c0_29 = arith.constant 0 : index
    %51 = vector.load %arg6[%c0_28, %c0_29] : memref<16x256xbf16, #tpu.memory_space<vmem>>, vector<16x256xbf16>
    %cst_30 = arith.constant dense<0.000000e+00> : vector<16x512xf32>
    %52 = tpu.matmul %51, %4, %cst_30 {dimension_numbers = #tpu.dot_dimension_numbers<[1], [0], [0], [1], [0, 0, 1, 1], [], []>} : vector<16x256xbf16>, vector<256x512xbf16>, vector<16x512xf32> -> vector<16x512xf32>
    %53 = vector.broadcast %6 : vector<1x512xf32> to vector<16x512xf32>
    %54 = arith.addf %52, %53 : vector<16x512xf32>
    %55 = vector.extract_strided_slice %54 {offsets = [0, 0], sizes = [16, 384], strides = [1, 1]} : vector<16x512xf32> to vector<16x384xf32>
    %56 = arith.negf %55 : vector<16x384xf32>
    %57 = math.exp %56 : vector<16x384xf32>
    %cst_31 = arith.constant 1.000000e+00 : f32
    %58 = vector.broadcast %cst_31 : f32 to vector<16x384xf32>
    %59 = arith.addf %58, %57 : vector<16x384xf32>
    %60 = arith.divf %58, %59 : vector<16x384xf32>
    %61 = vector.extract_strided_slice %60 {offsets = [0, 0], sizes = [16, 128], strides = [1, 1]} : vector<16x384xf32> to vector<16x128xf32>
    %62 = vector.extract_strided_slice %60 {offsets = [0, 128], sizes = [16, 128], strides = [1, 1]} : vector<16x384xf32> to vector<16x128xf32>
    %63 = vector.extract_strided_slice %60 {offsets = [0, 256], sizes = [16, 128], strides = [1, 1]} : vector<16x384xf32> to vector<16x128xf32>
    %64 = vector.extract_strided_slice %54 {offsets = [0, 384], sizes = [16, 128], strides = [1, 1]} : vector<16x512xf32> to vector<16x128xf32>
    %65 = math.tanh %64 : vector<16x128xf32>
    %c0_32 = arith.constant 0 : index
    %c0_33 = arith.constant 0 : index
    %66 = vector.load %arg7[%c0_32, %c0_33] : memref<16x128xf32, #tpu.memory_space<vmem>>, vector<16x128xf32>
    %67 = arith.mulf %62, %66 : vector<16x128xf32>
    %68 = arith.mulf %61, %65 : vector<16x128xf32>
    %69 = arith.addf %67, %68 : vector<16x128xf32>
    %70 = math.tanh %69 : vector<16x128xf32>
    %71 = arith.mulf %63, %70 : vector<16x128xf32>
    %72 = arith.truncf %71 : vector<16x128xf32> to vector<16x128xbf16>
    %c0_34 = arith.constant 0 : index
    %c0_35 = arith.constant 0 : index
    %73 = vector.load %arg7[%c0_34, %c0_35] : memref<16x128xf32, #tpu.memory_space<vmem>>, vector<16x128xf32>
    tpu.vector_store %arg7[%c0_34, %c0_35], %69 {strides = array<i32>} : memref<16x128xf32, #tpu.memory_space<vmem>>, vector<16x128xf32>,
    %c0_36 = arith.constant 0 : index
    %c128_37 = arith.constant 128 : index
    %74 = vector.load %arg6[%c0_36, %c128_37] : memref<16x256xbf16, #tpu.memory_space<vmem>>, vector<16x128xbf16>
    tpu.vector_store %arg6[%c0_36, %c128_37], %72 {strides = array<i32>} : memref<16x256xbf16, #tpu.memory_space<vmem>>, vector<16x128xbf16>,
    %c0_38 = arith.constant 0 : index
    %75 = arith.index_cast %46 : i32 to index
    %c0_39 = arith.constant 0 : index
    %c0_40 = arith.constant 0 : index
    %76 = vector.load %arg5[%c0_38, %75, %c0_39, %c0_40] : memref<1x8x16x128xbf16, #tpu.memory_space<vmem>>, vector<1x1x16x128xbf16>
    %77 = vector.shape_cast %76 : vector<1x1x16x128xbf16> to vector<16x128xbf16>
    %78 = vector.shape_cast %72 : vector<16x128xbf16> to vector<1x1x16x128xbf16>
    tpu.vector_store %arg5[%c0_38, %75, %c0_39, %c0_40], %78 {strides = array<i32>} : memref<1x8x16x128xbf16, #tpu.memory_space<vmem>>, vector<1x1x16x128xbf16>,
    %c2_i32_41 = arith.constant 2 : i32
    %c2_i32_42 = arith.constant 2 : i32
    %79 = arith.muli %c2_i32_42, %c2_i32_41 : i32
    %c7_i32_43 = arith.constant 7 : i32
    %80 = arith.subi %c7_i32_43, %79 : i32
    %81 = arith.muli %arg0, %80 : i32
    %82 = arith.addi %c2_i32_41, %81 : i32
    %83 = arith.index_cast %82 : i32 to index
    %c0_44 = arith.constant 0 : index
    %c0_45 = arith.constant 0 : index
    %84 = vector.load %arg2[%83, %c0_44, %c0_45] : memref<8x16x128xbf16, #tpu.memory_space<vmem>>, vector<1x16x128xbf16>
    %85 = vector.shape_cast %84 : vector<1x16x128xbf16> to vector<16x128xbf16>
    %c0_46 = arith.constant 0 : index
    %c0_47 = arith.constant 0 : index
    %86 = vector.load %arg6[%c0_46, %c0_47] : memref<16x256xbf16, #tpu.memory_space<vmem>>, vector<16x128xbf16>
    tpu.vector_store %arg6[%c0_46, %c0_47], %85 {strides = array<i32>} : memref<16x256xbf16, #tpu.memory_space<vmem>>, vector<16x128xbf16>,
    %c0_48 = arith.constant 0 : index
    %c0_49 = arith.constant 0 : index
    %87 = vector.load %arg6[%c0_48, %c0_49] : memref<16x256xbf16, #tpu.memory_space<vmem>>, vector<16x256xbf16>
    %cst_50 = arith.constant dense<0.000000e+00> : vector<16x512xf32>
    %88 = tpu.matmul %87, %4, %cst_50 {dimension_numbers = #tpu.dot_dimension_numbers<[1], [0], [0], [1], [0, 0, 1, 1], [], []>} : vector<16x256xbf16>, vector<256x512xbf16>, vector<16x512xf32> -> vector<16x512xf32>
    %89 = vector.broadcast %6 : vector<1x512xf32> to vector<16x512xf32>
    %90 = arith.addf %88, %89 : vector<16x512xf32>
    %91 = vector.extract_strided_slice %90 {offsets = [0, 0], sizes = [16, 384], strides = [1, 1]} : vector<16x512xf32> to vector<16x384xf32>
    %92 = arith.negf %91 : vector<16x384xf32>
    %93 = math.exp %92 : vector<16x384xf32>
    %cst_51 = arith.constant 1.000000e+00 : f32
    %94 = vector.broadcast %cst_51 : f32 to vector<16x384xf32>
    %95 = arith.addf %94, %93 : vector<16x384xf32>
    %96 = arith.divf %94, %95 : vector<16x384xf32>
    %97 = vector.extract_strided_slice %96 {offsets = [0, 0], sizes = [16, 128], strides = [1, 1]} : vector<16x384xf32> to vector<16x128xf32>
    %98 = vector.extract_strided_slice %96 {offsets = [0, 128], sizes = [16, 128], strides = [1, 1]} : vector<16x384xf32> to vector<16x128xf32>
    %99 = vector.extract_strided_slice %96 {offsets = [0, 256], sizes = [16, 128], strides = [1, 1]} : vector<16x384xf32> to vector<16x128xf32>
    %100 = vector.extract_strided_slice %90 {offsets = [0, 384], sizes = [16, 128], strides = [1, 1]} : vector<16x512xf32> to vector<16x128xf32>
    %101 = math.tanh %100 : vector<16x128xf32>
    %c0_52 = arith.constant 0 : index
    %c0_53 = arith.constant 0 : index
    %102 = vector.load %arg7[%c0_52, %c0_53] : memref<16x128xf32, #tpu.memory_space<vmem>>, vector<16x128xf32>
    %103 = arith.mulf %98, %102 : vector<16x128xf32>
    %104 = arith.mulf %97, %101 : vector<16x128xf32>
    %105 = arith.addf %103, %104 : vector<16x128xf32>
    %106 = math.tanh %105 : vector<16x128xf32>
    %107 = arith.mulf %99, %106 : vector<16x128xf32>
    %108 = arith.truncf %107 : vector<16x128xf32> to vector<16x128xbf16>
    %c0_54 = arith.constant 0 : index
    %c0_55 = arith.constant 0 : index
    %109 = vector.load %arg7[%c0_54, %c0_55] : memref<16x128xf32, #tpu.memory_space<vmem>>, vector<16x128xf32>
    tpu.vector_store %arg7[%c0_54, %c0_55], %105 {strides = array<i32>} : memref<16x128xf32, #tpu.memory_space<vmem>>, vector<16x128xf32>,
    %c0_56 = arith.constant 0 : index
    %c128_57 = arith.constant 128 : index
    %110 = vector.load %arg6[%c0_56, %c128_57] : memref<16x256xbf16, #tpu.memory_space<vmem>>, vector<16x128xbf16>
    tpu.vector_store %arg6[%c0_56, %c128_57], %108 {strides = array<i32>} : memref<16x256xbf16, #tpu.memory_space<vmem>>, vector<16x128xbf16>,
    %c0_58 = arith.constant 0 : index
    %111 = arith.index_cast %82 : i32 to index
    %c0_59 = arith.constant 0 : index
    %c0_60 = arith.constant 0 : index
    %112 = vector.load %arg5[%c0_58, %111, %c0_59, %c0_60] : memref<1x8x16x128xbf16, #tpu.memory_space<vmem>>, vector<1x1x16x128xbf16>
    %113 = vector.shape_cast %112 : vector<1x1x16x128xbf16> to vector<16x128xbf16>
    %114 = vector.shape_cast %108 : vector<16x128xbf16> to vector<1x1x16x128xbf16>
    tpu.vector_store %arg5[%c0_58, %111, %c0_59, %c0_60], %114 {strides = array<i32>} : memref<1x8x16x128xbf16, #tpu.memory_space<vmem>>, vector<1x1x16x128xbf16>,
    %c3_i32 = arith.constant 3 : i32
    %c2_i32_61 = arith.constant 2 : i32
    %115 = arith.muli %c2_i32_61, %c3_i32 : i32
    %c7_i32_62 = arith.constant 7 : i32
    %116 = arith.subi %c7_i32_62, %115 : i32
    %117 = arith.muli %arg0, %116 : i32
    %118 = arith.addi %c3_i32, %117 : i32
    %119 = arith.index_cast %118 : i32 to index
    %c0_63 = arith.constant 0 : index
    %c0_64 = arith.constant 0 : index
    %120 = vector.load %arg2[%119, %c0_63, %c0_64] : memref<8x16x128xbf16, #tpu.memory_space<vmem>>, vector<1x16x128xbf16>
    %121 = vector.shape_cast %120 : vector<1x16x128xbf16> to vector<16x128xbf16>
    %c0_65 = arith.constant 0 : index
    %c0_66 = arith.constant 0 : index
    %122 = vector.load %arg6[%c0_65, %c0_66] : memref<16x256xbf16, #tpu.memory_space<vmem>>, vector<16x128xbf16>
    tpu.vector_store %arg6[%c0_65, %c0_66], %121 {strides = array<i32>} : memref<16x256xbf16, #tpu.memory_space<vmem>>, vector<16x128xbf16>,
    %c0_67 = arith.constant 0 : index
    %c0_68 = arith.constant 0 : index
    %123 = vector.load %arg6[%c0_67, %c0_68] : memref<16x256xbf16, #tpu.memory_space<vmem>>, vector<16x256xbf16>
    %cst_69 = arith.constant dense<0.000000e+00> : vector<16x512xf32>
    %124 = tpu.matmul %123, %4, %cst_69 {dimension_numbers = #tpu.dot_dimension_numbers<[1], [0], [0], [1], [0, 0, 1, 1], [], []>} : vector<16x256xbf16>, vector<256x512xbf16>, vector<16x512xf32> -> vector<16x512xf32>
    %125 = vector.broadcast %6 : vector<1x512xf32> to vector<16x512xf32>
    %126 = arith.addf %124, %125 : vector<16x512xf32>
    %127 = vector.extract_strided_slice %126 {offsets = [0, 0], sizes = [16, 384], strides = [1, 1]} : vector<16x512xf32> to vector<16x384xf32>
    %128 = arith.negf %127 : vector<16x384xf32>
    %129 = math.exp %128 : vector<16x384xf32>
    %cst_70 = arith.constant 1.000000e+00 : f32
    %130 = vector.broadcast %cst_70 : f32 to vector<16x384xf32>
    %131 = arith.addf %130, %129 : vector<16x384xf32>
    %132 = arith.divf %130, %131 : vector<16x384xf32>
    %133 = vector.extract_strided_slice %132 {offsets = [0, 0], sizes = [16, 128], strides = [1, 1]} : vector<16x384xf32> to vector<16x128xf32>
    %134 = vector.extract_strided_slice %132 {offsets = [0, 128], sizes = [16, 128], strides = [1, 1]} : vector<16x384xf32> to vector<16x128xf32>
    %135 = vector.extract_strided_slice %132 {offsets = [0, 256], sizes = [16, 128], strides = [1, 1]} : vector<16x384xf32> to vector<16x128xf32>
    %136 = vector.extract_strided_slice %126 {offsets = [0, 384], sizes = [16, 128], strides = [1, 1]} : vector<16x512xf32> to vector<16x128xf32>
    %137 = math.tanh %136 : vector<16x128xf32>
    %c0_71 = arith.constant 0 : index
    %c0_72 = arith.constant 0 : index
    %138 = vector.load %arg7[%c0_71, %c0_72] : memref<16x128xf32, #tpu.memory_space<vmem>>, vector<16x128xf32>
    %139 = arith.mulf %134, %138 : vector<16x128xf32>
    %140 = arith.mulf %133, %137 : vector<16x128xf32>
    %141 = arith.addf %139, %140 : vector<16x128xf32>
    %142 = math.tanh %141 : vector<16x128xf32>
    %143 = arith.mulf %135, %142 : vector<16x128xf32>
    %144 = arith.truncf %143 : vector<16x128xf32> to vector<16x128xbf16>
    %c0_73 = arith.constant 0 : index
    %c0_74 = arith.constant 0 : index
    %145 = vector.load %arg7[%c0_73, %c0_74] : memref<16x128xf32, #tpu.memory_space<vmem>>, vector<16x128xf32>
    tpu.vector_store %arg7[%c0_73, %c0_74], %141 {strides = array<i32>} : memref<16x128xf32, #tpu.memory_space<vmem>>, vector<16x128xf32>,
    %c0_75 = arith.constant 0 : index
    %c128_76 = arith.constant 128 : index
    %146 = vector.load %arg6[%c0_75, %c128_76] : memref<16x256xbf16, #tpu.memory_space<vmem>>, vector<16x128xbf16>
    tpu.vector_store %arg6[%c0_75, %c128_76], %144 {strides = array<i32>} : memref<16x256xbf16, #tpu.memory_space<vmem>>, vector<16x128xbf16>,
    %c0_77 = arith.constant 0 : index
    %147 = arith.index_cast %118 : i32 to index
    %c0_78 = arith.constant 0 : index
    %c0_79 = arith.constant 0 : index
    %148 = vector.load %arg5[%c0_77, %147, %c0_78, %c0_79] : memref<1x8x16x128xbf16, #tpu.memory_space<vmem>>, vector<1x1x16x128xbf16>
    %149 = vector.shape_cast %148 : vector<1x1x16x128xbf16> to vector<16x128xbf16>
    %150 = vector.shape_cast %144 : vector<16x128xbf16> to vector<1x1x16x128xbf16>
    tpu.vector_store %arg5[%c0_77, %147, %c0_78, %c0_79], %150 {strides = array<i32>} : memref<1x8x16x128xbf16, #tpu.memory_space<vmem>>, vector<1x1x16x128xbf16>,
    %c4_i32 = arith.constant 4 : i32
    %c2_i32_80 = arith.constant 2 : i32
    %151 = arith.muli %c2_i32_80, %c4_i32 : i32
    %c7_i32_81 = arith.constant 7 : i32
    %152 = arith.subi %c7_i32_81, %151 : i32
    %153 = arith.muli %arg0, %152 : i32
    %154 = arith.addi %c4_i32, %153 : i32
    %155 = arith.index_cast %154 : i32 to index
    %c0_82 = arith.constant 0 : index
    %c0_83 = arith.constant 0 : index
    %156 = vector.load %arg2[%155, %c0_82, %c0_83] : memref<8x16x128xbf16, #tpu.memory_space<vmem>>, vector<1x16x128xbf16>
    %157 = vector.shape_cast %156 : vector<1x16x128xbf16> to vector<16x128xbf16>
    %c0_84 = arith.constant 0 : index
    %c0_85 = arith.constant 0 : index
    %158 = vector.load %arg6[%c0_84, %c0_85] : memref<16x256xbf16, #tpu.memory_space<vmem>>, vector<16x128xbf16>
    tpu.vector_store %arg6[%c0_84, %c0_85], %157 {strides = array<i32>} : memref<16x256xbf16, #tpu.memory_space<vmem>>, vector<16x128xbf16>,
    %c0_86 = arith.constant 0 : index
    %c0_87 = arith.constant 0 : index
    %159 = vector.load %arg6[%c0_86, %c0_87] : memref<16x256xbf16, #tpu.memory_space<vmem>>, vector<16x256xbf16>
    %cst_88 = arith.constant dense<0.000000e+00> : vector<16x512xf32>
    %160 = tpu.matmul %159, %4, %cst_88 {dimension_numbers = #tpu.dot_dimension_numbers<[1], [0], [0], [1], [0, 0, 1, 1], [], []>} : vector<16x256xbf16>, vector<256x512xbf16>, vector<16x512xf32> -> vector<16x512xf32>
    %161 = vector.broadcast %6 : vector<1x512xf32> to vector<16x512xf32>
    %162 = arith.addf %160, %161 : vector<16x512xf32>
    %163 = vector.extract_strided_slice %162 {offsets = [0, 0], sizes = [16, 384], strides = [1, 1]} : vector<16x512xf32> to vector<16x384xf32>
    %164 = arith.negf %163 : vector<16x384xf32>
    %165 = math.exp %164 : vector<16x384xf32>
    %cst_89 = arith.constant 1.000000e+00 : f32
    %166 = vector.broadcast %cst_89 : f32 to vector<16x384xf32>
    %167 = arith.addf %166, %165 : vector<16x384xf32>
    %168 = arith.divf %166, %167 : vector<16x384xf32>
    %169 = vector.extract_strided_slice %168 {offsets = [0, 0], sizes = [16, 128], strides = [1, 1]} : vector<16x384xf32> to vector<16x128xf32>
    %170 = vector.extract_strided_slice %168 {offsets = [0, 128], sizes = [16, 128], strides = [1, 1]} : vector<16x384xf32> to vector<16x128xf32>
    %171 = vector.extract_strided_slice %168 {offsets = [0, 256], sizes = [16, 128], strides = [1, 1]} : vector<16x384xf32> to vector<16x128xf32>
    %172 = vector.extract_strided_slice %162 {offsets = [0, 384], sizes = [16, 128], strides = [1, 1]} : vector<16x512xf32> to vector<16x128xf32>
    %173 = math.tanh %172 : vector<16x128xf32>
    %c0_90 = arith.constant 0 : index
    %c0_91 = arith.constant 0 : index
    %174 = vector.load %arg7[%c0_90, %c0_91] : memref<16x128xf32, #tpu.memory_space<vmem>>, vector<16x128xf32>
    %175 = arith.mulf %170, %174 : vector<16x128xf32>
    %176 = arith.mulf %169, %173 : vector<16x128xf32>
    %177 = arith.addf %175, %176 : vector<16x128xf32>
    %178 = math.tanh %177 : vector<16x128xf32>
    %179 = arith.mulf %171, %178 : vector<16x128xf32>
    %180 = arith.truncf %179 : vector<16x128xf32> to vector<16x128xbf16>
    %c0_92 = arith.constant 0 : index
    %c0_93 = arith.constant 0 : index
    %181 = vector.load %arg7[%c0_92, %c0_93] : memref<16x128xf32, #tpu.memory_space<vmem>>, vector<16x128xf32>
    tpu.vector_store %arg7[%c0_92, %c0_93], %177 {strides = array<i32>} : memref<16x128xf32, #tpu.memory_space<vmem>>, vector<16x128xf32>,
    %c0_94 = arith.constant 0 : index
    %c128_95 = arith.constant 128 : index
    %182 = vector.load %arg6[%c0_94, %c128_95] : memref<16x256xbf16, #tpu.memory_space<vmem>>, vector<16x128xbf16>
    tpu.vector_store %arg6[%c0_94, %c128_95], %180 {strides = array<i32>} : memref<16x256xbf16, #tpu.memory_space<vmem>>, vector<16x128xbf16>,
    %c0_96 = arith.constant 0 : index
    %183 = arith.index_cast %154 : i32 to index
    %c0_97 = arith.constant 0 : index
    %c0_98 = arith.constant 0 : index
    %184 = vector.load %arg5[%c0_96, %183, %c0_97, %c0_98] : memref<1x8x16x128xbf16, #tpu.memory_space<vmem>>, vector<1x1x16x128xbf16>
    %185 = vector.shape_cast %184 : vector<1x1x16x128xbf16> to vector<16x128xbf16>
    %186 = vector.shape_cast %180 : vector<16x128xbf16> to vector<1x1x16x128xbf16>
    tpu.vector_store %arg5[%c0_96, %183, %c0_97, %c0_98], %186 {strides = array<i32>} : memref<1x8x16x128xbf16, #tpu.memory_space<vmem>>, vector<1x1x16x128xbf16>,
    %c5_i32 = arith.constant 5 : i32
    %c2_i32_99 = arith.constant 2 : i32
    %187 = arith.muli %c2_i32_99, %c5_i32 : i32
    %c7_i32_100 = arith.constant 7 : i32
    %188 = arith.subi %c7_i32_100, %187 : i32
    %189 = arith.muli %arg0, %188 : i32
    %190 = arith.addi %c5_i32, %189 : i32
    %191 = arith.index_cast %190 : i32 to index
    %c0_101 = arith.constant 0 : index
    %c0_102 = arith.constant 0 : index
    %192 = vector.load %arg2[%191, %c0_101, %c0_102] : memref<8x16x128xbf16, #tpu.memory_space<vmem>>, vector<1x16x128xbf16>
    %193 = vector.shape_cast %192 : vector<1x16x128xbf16> to vector<16x128xbf16>
    %c0_103 = arith.constant 0 : index
    %c0_104 = arith.constant 0 : index
    %194 = vector.load %arg6[%c0_103, %c0_104] : memref<16x256xbf16, #tpu.memory_space<vmem>>, vector<16x128xbf16>
    tpu.vector_store %arg6[%c0_103, %c0_104], %193 {strides = array<i32>} : memref<16x256xbf16, #tpu.memory_space<vmem>>, vector<16x128xbf16>,
    %c0_105 = arith.constant 0 : index
    %c0_106 = arith.constant 0 : index
    %195 = vector.load %arg6[%c0_105, %c0_106] : memref<16x256xbf16, #tpu.memory_space<vmem>>, vector<16x256xbf16>
    %cst_107 = arith.constant dense<0.000000e+00> : vector<16x512xf32>
    %196 = tpu.matmul %195, %4, %cst_107 {dimension_numbers = #tpu.dot_dimension_numbers<[1], [0], [0], [1], [0, 0, 1, 1], [], []>} : vector<16x256xbf16>, vector<256x512xbf16>, vector<16x512xf32> -> vector<16x512xf32>
    %197 = vector.broadcast %6 : vector<1x512xf32> to vector<16x512xf32>
    %198 = arith.addf %196, %197 : vector<16x512xf32>
    %199 = vector.extract_strided_slice %198 {offsets = [0, 0], sizes = [16, 384], strides = [1, 1]} : vector<16x512xf32> to vector<16x384xf32>
    %200 = arith.negf %199 : vector<16x384xf32>
    %201 = math.exp %200 : vector<16x384xf32>
    %cst_108 = arith.constant 1.000000e+00 : f32
    %202 = vector.broadcast %cst_108 : f32 to vector<16x384xf32>
    %203 = arith.addf %202, %201 : vector<16x384xf32>
    %204 = arith.divf %202, %203 : vector<16x384xf32>
    %205 = vector.extract_strided_slice %204 {offsets = [0, 0], sizes = [16, 128], strides = [1, 1]} : vector<16x384xf32> to vector<16x128xf32>
    %206 = vector.extract_strided_slice %204 {offsets = [0, 128], sizes = [16, 128], strides = [1, 1]} : vector<16x384xf32> to vector<16x128xf32>
    %207 = vector.extract_strided_slice %204 {offsets = [0, 256], sizes = [16, 128], strides = [1, 1]} : vector<16x384xf32> to vector<16x128xf32>
    %208 = vector.extract_strided_slice %198 {offsets = [0, 384], sizes = [16, 128], strides = [1, 1]} : vector<16x512xf32> to vector<16x128xf32>
    %209 = math.tanh %208 : vector<16x128xf32>
    %c0_109 = arith.constant 0 : index
    %c0_110 = arith.constant 0 : index
    %210 = vector.load %arg7[%c0_109, %c0_110] : memref<16x128xf32, #tpu.memory_space<vmem>>, vector<16x128xf32>
    %211 = arith.mulf %206, %210 : vector<16x128xf32>
    %212 = arith.mulf %205, %209 : vector<16x128xf32>
    %213 = arith.addf %211, %212 : vector<16x128xf32>
    %214 = math.tanh %213 : vector<16x128xf32>
    %215 = arith.mulf %207, %214 : vector<16x128xf32>
    %216 = arith.truncf %215 : vector<16x128xf32> to vector<16x128xbf16>
    %c0_111 = arith.constant 0 : index
    %c0_112 = arith.constant 0 : index
    %217 = vector.load %arg7[%c0_111, %c0_112] : memref<16x128xf32, #tpu.memory_space<vmem>>, vector<16x128xf32>
    tpu.vector_store %arg7[%c0_111, %c0_112], %213 {strides = array<i32>} : memref<16x128xf32, #tpu.memory_space<vmem>>, vector<16x128xf32>,
    %c0_113 = arith.constant 0 : index
    %c128_114 = arith.constant 128 : index
    %218 = vector.load %arg6[%c0_113, %c128_114] : memref<16x256xbf16, #tpu.memory_space<vmem>>, vector<16x128xbf16>
    tpu.vector_store %arg6[%c0_113, %c128_114], %216 {strides = array<i32>} : memref<16x256xbf16, #tpu.memory_space<vmem>>, vector<16x128xbf16>,
    %c0_115 = arith.constant 0 : index
    %219 = arith.index_cast %190 : i32 to index
    %c0_116 = arith.constant 0 : index
    %c0_117 = arith.constant 0 : index
    %220 = vector.load %arg5[%c0_115, %219, %c0_116, %c0_117] : memref<1x8x16x128xbf16, #tpu.memory_space<vmem>>, vector<1x1x16x128xbf16>
    %221 = vector.shape_cast %220 : vector<1x1x16x128xbf16> to vector<16x128xbf16>
    %222 = vector.shape_cast %216 : vector<16x128xbf16> to vector<1x1x16x128xbf16>
    tpu.vector_store %arg5[%c0_115, %219, %c0_116, %c0_117], %222 {strides = array<i32>} : memref<1x8x16x128xbf16, #tpu.memory_space<vmem>>, vector<1x1x16x128xbf16>,
    %c6_i32 = arith.constant 6 : i32
    %c2_i32_118 = arith.constant 2 : i32
    %223 = arith.muli %c2_i32_118, %c6_i32 : i32
    %c7_i32_119 = arith.constant 7 : i32
    %224 = arith.subi %c7_i32_119, %223 : i32
    %225 = arith.muli %arg0, %224 : i32
    %226 = arith.addi %c6_i32, %225 : i32
    %227 = arith.index_cast %226 : i32 to index
    %c0_120 = arith.constant 0 : index
    %c0_121 = arith.constant 0 : index
    %228 = vector.load %arg2[%227, %c0_120, %c0_121] : memref<8x16x128xbf16, #tpu.memory_space<vmem>>, vector<1x16x128xbf16>
    %229 = vector.shape_cast %228 : vector<1x16x128xbf16> to vector<16x128xbf16>
    %c0_122 = arith.constant 0 : index
    %c0_123 = arith.constant 0 : index
    %230 = vector.load %arg6[%c0_122, %c0_123] : memref<16x256xbf16, #tpu.memory_space<vmem>>, vector<16x128xbf16>
    tpu.vector_store %arg6[%c0_122, %c0_123], %229 {strides = array<i32>} : memref<16x256xbf16, #tpu.memory_space<vmem>>, vector<16x128xbf16>,
    %c0_124 = arith.constant 0 : index
    %c0_125 = arith.constant 0 : index
    %231 = vector.load %arg6[%c0_124, %c0_125] : memref<16x256xbf16, #tpu.memory_space<vmem>>, vector<16x256xbf16>
    %cst_126 = arith.constant dense<0.000000e+00> : vector<16x512xf32>
    %232 = tpu.matmul %231, %4, %cst_126 {dimension_numbers = #tpu.dot_dimension_numbers<[1], [0], [0], [1], [0, 0, 1, 1], [], []>} : vector<16x256xbf16>, vector<256x512xbf16>, vector<16x512xf32> -> vector<16x512xf32>
    %233 = vector.broadcast %6 : vector<1x512xf32> to vector<16x512xf32>
    %234 = arith.addf %232, %233 : vector<16x512xf32>
    %235 = vector.extract_strided_slice %234 {offsets = [0, 0], sizes = [16, 384], strides = [1, 1]} : vector<16x512xf32> to vector<16x384xf32>
    %236 = arith.negf %235 : vector<16x384xf32>
    %237 = math.exp %236 : vector<16x384xf32>
    %cst_127 = arith.constant 1.000000e+00 : f32
    %238 = vector.broadcast %cst_127 : f32 to vector<16x384xf32>
    %239 = arith.addf %238, %237 : vector<16x384xf32>
    %240 = arith.divf %238, %239 : vector<16x384xf32>
    %241 = vector.extract_strided_slice %240 {offsets = [0, 0], sizes = [16, 128], strides = [1, 1]} : vector<16x384xf32> to vector<16x128xf32>
    %242 = vector.extract_strided_slice %240 {offsets = [0, 128], sizes = [16, 128], strides = [1, 1]} : vector<16x384xf32> to vector<16x128xf32>
    %243 = vector.extract_strided_slice %240 {offsets = [0, 256], sizes = [16, 128], strides = [1, 1]} : vector<16x384xf32> to vector<16x128xf32>
    %244 = vector.extract_strided_slice %234 {offsets = [0, 384], sizes = [16, 128], strides = [1, 1]} : vector<16x512xf32> to vector<16x128xf32>
    %245 = math.tanh %244 : vector<16x128xf32>
    %c0_128 = arith.constant 0 : index
    %c0_129 = arith.constant 0 : index
    %246 = vector.load %arg7[%c0_128, %c0_129] : memref<16x128xf32, #tpu.memory_space<vmem>>, vector<16x128xf32>
    %247 = arith.mulf %242, %246 : vector<16x128xf32>
    %248 = arith.mulf %241, %245 : vector<16x128xf32>
    %249 = arith.addf %247, %248 : vector<16x128xf32>
    %250 = math.tanh %249 : vector<16x128xf32>
    %251 = arith.mulf %243, %250 : vector<16x128xf32>
    %252 = arith.truncf %251 : vector<16x128xf32> to vector<16x128xbf16>
    %c0_130 = arith.constant 0 : index
    %c0_131 = arith.constant 0 : index
    %253 = vector.load %arg7[%c0_130, %c0_131] : memref<16x128xf32, #tpu.memory_space<vmem>>, vector<16x128xf32>
    tpu.vector_store %arg7[%c0_130, %c0_131], %249 {strides = array<i32>} : memref<16x128xf32, #tpu.memory_space<vmem>>, vector<16x128xf32>,
    %c0_132 = arith.constant 0 : index
    %c128_133 = arith.constant 128 : index
    %254 = vector.load %arg6[%c0_132, %c128_133] : memref<16x256xbf16, #tpu.memory_space<vmem>>, vector<16x128xbf16>
    tpu.vector_store %arg6[%c0_132, %c128_133], %252 {strides = array<i32>} : memref<16x256xbf16, #tpu.memory_space<vmem>>, vector<16x128xbf16>,
    %c0_134 = arith.constant 0 : index
    %255 = arith.index_cast %226 : i32 to index
    %c0_135 = arith.constant 0 : index
    %c0_136 = arith.constant 0 : index
    %256 = vector.load %arg5[%c0_134, %255, %c0_135, %c0_136] : memref<1x8x16x128xbf16, #tpu.memory_space<vmem>>, vector<1x1x16x128xbf16>
    %257 = vector.shape_cast %256 : vector<1x1x16x128xbf16> to vector<16x128xbf16>
    %258 = vector.shape_cast %252 : vector<16x128xbf16> to vector<1x1x16x128xbf16>
    tpu.vector_store %arg5[%c0_134, %255, %c0_135, %c0_136], %258 {strides = array<i32>} : memref<1x8x16x128xbf16, #tpu.memory_space<vmem>>, vector<1x1x16x128xbf16>,
    %c7_i32_137 = arith.constant 7 : i32
    %c2_i32_138 = arith.constant 2 : i32
    %259 = arith.muli %c2_i32_138, %c7_i32_137 : i32
    %c7_i32_139 = arith.constant 7 : i32
    %260 = arith.subi %c7_i32_139, %259 : i32
    %261 = arith.muli %arg0, %260 : i32
    %262 = arith.addi %c7_i32_137, %261 : i32
    %263 = arith.index_cast %262 : i32 to index
    %c0_140 = arith.constant 0 : index
    %c0_141 = arith.constant 0 : index
    %264 = vector.load %arg2[%263, %c0_140, %c0_141] : memref<8x16x128xbf16, #tpu.memory_space<vmem>>, vector<1x16x128xbf16>
    %265 = vector.shape_cast %264 : vector<1x16x128xbf16> to vector<16x128xbf16>
    %c0_142 = arith.constant 0 : index
    %c0_143 = arith.constant 0 : index
    %266 = vector.load %arg6[%c0_142, %c0_143] : memref<16x256xbf16, #tpu.memory_space<vmem>>, vector<16x128xbf16>
    tpu.vector_store %arg6[%c0_142, %c0_143], %265 {strides = array<i32>} : memref<16x256xbf16, #tpu.memory_space<vmem>>, vector<16x128xbf16>,
    %c0_144 = arith.constant 0 : index
    %c0_145 = arith.constant 0 : index
    %267 = vector.load %arg6[%c0_144, %c0_145] : memref<16x256xbf16, #tpu.memory_space<vmem>>, vector<16x256xbf16>
    %cst_146 = arith.constant dense<0.000000e+00> : vector<16x512xf32>
    %268 = tpu.matmul %267, %4, %cst_146 {dimension_numbers = #tpu.dot_dimension_numbers<[1], [0], [0], [1], [0, 0, 1, 1], [], []>} : vector<16x256xbf16>, vector<256x512xbf16>, vector<16x512xf32> -> vector<16x512xf32>
    %269 = vector.broadcast %6 : vector<1x512xf32> to vector<16x512xf32>
    %270 = arith.addf %268, %269 : vector<16x512xf32>
    %271 = vector.extract_strided_slice %270 {offsets = [0, 0], sizes = [16, 384], strides = [1, 1]} : vector<16x512xf32> to vector<16x384xf32>
    %272 = arith.negf %271 : vector<16x384xf32>
    %273 = math.exp %272 : vector<16x384xf32>
    %cst_147 = arith.constant 1.000000e+00 : f32
    %274 = vector.broadcast %cst_147 : f32 to vector<16x384xf32>
    %275 = arith.addf %274, %273 : vector<16x384xf32>
    %276 = arith.divf %274, %275 : vector<16x384xf32>
    %277 = vector.extract_strided_slice %276 {offsets = [0, 0], sizes = [16, 128], strides = [1, 1]} : vector<16x384xf32> to vector<16x128xf32>
    %278 = vector.extract_strided_slice %276 {offsets = [0, 128], sizes = [16, 128], strides = [1, 1]} : vector<16x384xf32> to vector<16x128xf32>
    %279 = vector.extract_strided_slice %276 {offsets = [0, 256], sizes = [16, 128], strides = [1, 1]} : vector<16x384xf32> to vector<16x128xf32>
    %280 = vector.extract_strided_slice %270 {offsets = [0, 384], sizes = [16, 128], strides = [1, 1]} : vector<16x512xf32> to vector<16x128xf32>
    %281 = math.tanh %280 : vector<16x128xf32>
    %c0_148 = arith.constant 0 : index
    %c0_149 = arith.constant 0 : index
    %282 = vector.load %arg7[%c0_148, %c0_149] : memref<16x128xf32, #tpu.memory_space<vmem>>, vector<16x128xf32>
    %283 = arith.mulf %278, %282 : vector<16x128xf32>
    %284 = arith.mulf %277, %281 : vector<16x128xf32>
    %285 = arith.addf %283, %284 : vector<16x128xf32>
    %286 = math.tanh %285 : vector<16x128xf32>
    %287 = arith.mulf %279, %286 : vector<16x128xf32>
    %288 = arith.truncf %287 : vector<16x128xf32> to vector<16x128xbf16>
    %c0_150 = arith.constant 0 : index
    %c0_151 = arith.constant 0 : index
    %289 = vector.load %arg7[%c0_150, %c0_151] : memref<16x128xf32, #tpu.memory_space<vmem>>, vector<16x128xf32>
    tpu.vector_store %arg7[%c0_150, %c0_151], %285 {strides = array<i32>} : memref<16x128xf32, #tpu.memory_space<vmem>>, vector<16x128xf32>,
    %c0_152 = arith.constant 0 : index
    %c128_153 = arith.constant 128 : index
    %290 = vector.load %arg6[%c0_152, %c128_153] : memref<16x256xbf16, #tpu.memory_space<vmem>>, vector<16x128xbf16>
    tpu.vector_store %arg6[%c0_152, %c128_153], %288 {strides = array<i32>} : memref<16x256xbf16, #tpu.memory_space<vmem>>, vector<16x128xbf16>,
    %c0_154 = arith.constant 0 : index
    %291 = arith.index_cast %262 : i32 to index
    %c0_155 = arith.constant 0 : index
    %c0_156 = arith.constant 0 : index
    %292 = vector.load %arg5[%c0_154, %291, %c0_155, %c0_156] : memref<1x8x16x128xbf16, #tpu.memory_space<vmem>>, vector<1x1x16x128xbf16>
    %293 = vector.shape_cast %292 : vector<1x1x16x128xbf16> to vector<16x128xbf16>
    %294 = vector.shape_cast %288 : vector<16x128xbf16> to vector<1x1x16x128xbf16>
    tpu.vector_store %arg5[%c0_154, %291, %c0_155, %c0_156], %294 {strides = array<i32>} : memref<1x8x16x128xbf16, #tpu.memory_space<vmem>>, vector<1x1x16x128xbf16>,
    %c8_i32 = arith.constant 8 : i32
    return
  }
  func.func @transform_0(%arg0: i32, %arg1: i32) -> (i32, i32, i32) {
    %c2_i32 = arith.constant 2 : i32
    %0 = arith.muli %c2_i32, %arg1 : i32
    %c0_i32 = arith.constant 0 : i32
    %1 = arith.subi %c0_i32, %0 : i32
    %2 = arith.muli %arg0, %1 : i32
    %3 = arith.addi %arg1, %2 : i32
    %c0_i32_0 = arith.constant 0 : i32
    %c0_i32_1 = arith.constant 0 : i32
    %c0_i32_2 = arith.constant 0 : i32
    return %3, %c0_i32_0, %c0_i32_1 : i32, i32, i32
  }
  func.func @transform_1(%arg0: i32, %arg1: i32) -> (i32, i32, i32) {
    %c0_i32 = arith.constant 0 : i32
    %c0_i32_0 = arith.constant 0 : i32
    %c0_i32_1 = arith.constant 0 : i32
    return %arg0, %c0_i32, %c0_i32_0 : i32, i32, i32
  }
  func.func @transform_2(%arg0: i32, %arg1: i32) -> (i32, i32, i32) {
    %c0_i32 = arith.constant 0 : i32
    %c0_i32_0 = arith.constant 0 : i32
    %c0_i32_1 = arith.constant 0 : i32
    return %arg0, %c0_i32, %c0_i32_0 : i32, i32, i32
  }
  func.func @transform_3(%arg0: i32, %arg1: i32) -> (i32, i32, i32, i32) {
    %c2_i32 = arith.constant 2 : i32
    %0 = arith.muli %c2_i32, %arg1 : i32
    %c0_i32 = arith.constant 0 : i32
    %1 = arith.subi %c0_i32, %0 : i32
    %2 = arith.muli %arg0, %1 : i32
    %3 = arith.addi %arg1, %2 : i32
    %c0_i32_0 = arith.constant 0 : i32
    %c0_i32_1 = arith.constant 0 : i32
    %c0_i32_2 = arith.constant 0 : i32
    return %arg0, %3, %c0_i32_0, %c0_i32_1 : i32, i32, i32, i32
  }
}

module attributes {stable_mosaic.version = 11 : i64} {
  func.func @_mu_sigma_kernel(%arg0: memref<16x512xbf16, #tpu.memory_space<vmem>>, %arg1: memref<512x256xbf16, #tpu.memory_space<vmem>>, %arg2: memref<1x256xf32, #tpu.memory_space<vmem>>, %arg3: memref<16x128xf32, #tpu.memory_space<vmem>>, %arg4: memref<16x128xf32, #tpu.memory_space<vmem>>) attributes {dimension_semantics = [], scalar_prefetch = 0 : i64, scratch_operands = 0 : i64, tpu.core_type = #tpu.core_type<tc>} {
    %c0 = arith.constant 0 : index
    %c0_0 = arith.constant 0 : index
    %0 = vector.load %arg0[%c0, %c0_0] : memref<16x512xbf16, #tpu.memory_space<vmem>>, vector<16x512xbf16>
    %c0_1 = arith.constant 0 : index
    %c0_2 = arith.constant 0 : index
    %1 = vector.load %arg1[%c0_1, %c0_2] : memref<512x256xbf16, #tpu.memory_space<vmem>>, vector<512x256xbf16>
    %cst = arith.constant dense<0.000000e+00> : vector<16x256xf32>
    %2 = tpu.matmul %0, %1, %cst {dimension_numbers = #tpu.dot_dimension_numbers<[1], [0], [0], [1], [0, 0, 1, 1], [], []>} : vector<16x512xbf16>, vector<512x256xbf16>, vector<16x256xf32> -> vector<16x256xf32>
    %c0_3 = arith.constant 0 : index
    %c0_4 = arith.constant 0 : index
    %3 = vector.load %arg2[%c0_3, %c0_4] : memref<1x256xf32, #tpu.memory_space<vmem>>, vector<1x256xf32>
    %4 = vector.broadcast %3 : vector<1x256xf32> to vector<16x256xf32>
    %5 = arith.addf %2, %4 : vector<16x256xf32>
    %6 = vector.extract_strided_slice %5 {offsets = [0, 0], sizes = [16, 128], strides = [1, 1]} : vector<16x256xf32> to vector<16x128xf32>
    %c0_5 = arith.constant 0 : index
    %c0_6 = arith.constant 0 : index
    %7 = vector.load %arg3[%c0_5, %c0_6] : memref<16x128xf32, #tpu.memory_space<vmem>>, vector<16x128xf32>
    tpu.vector_store %arg3[%c0_5, %c0_6], %6 {strides = array<i32>} : memref<16x128xf32, #tpu.memory_space<vmem>>, vector<16x128xf32>,
    %8 = vector.extract_strided_slice %5 {offsets = [0, 128], sizes = [16, 128], strides = [1, 1]} : vector<16x256xf32> to vector<16x128xf32>
    %cst_7 = arith.constant 2.000000e+01 : f32
    %9 = vector.broadcast %cst_7 : f32 to vector<16x128xf32>
    %10 = arith.cmpf ogt, %8, %9 : vector<16x128xf32>
    %cst_8 = arith.constant 2.000000e+01 : f32
    %11 = vector.broadcast %cst_8 : f32 to vector<16x128xf32>
    %12 = arith.minimumf %8, %11 : vector<16x128xf32>
    %13 = math.exp %12 : vector<16x128xf32>
    %cst_9 = arith.constant 1.000000e+00 : f32
    %14 = vector.broadcast %cst_9 : f32 to vector<16x128xf32>
    %15 = arith.addf %13, %14 : vector<16x128xf32>
    %16 = math.log %15 : vector<16x128xf32>
    %17 = arith.select %10, %8, %16 : vector<16x128xi1>, vector<16x128xf32>
    %c0_10 = arith.constant 0 : index
    %c0_11 = arith.constant 0 : index
    %18 = vector.load %arg4[%c0_10, %c0_11] : memref<16x128xf32, #tpu.memory_space<vmem>>, vector<16x128xf32>
    tpu.vector_store %arg4[%c0_10, %c0_11], %17 {strides = array<i32>} : memref<16x128xf32, #tpu.memory_space<vmem>>, vector<16x128xf32>,
    return
  }
}

module attributes {stable_mosaic.version = 11 : i64} {
  func.func @_lstm_seq_kernel(%arg0: i32, %arg1: i32, %arg2: memref<8x16x256xbf16, #tpu.memory_space<vmem>>, %arg3: memref<1x384x512xbf16, #tpu.memory_space<vmem>>, %arg4: memref<1x1x512xf32, #tpu.memory_space<vmem>>, %arg5: memref<1x8x16x128xbf16, #tpu.memory_space<vmem>>, %arg6: memref<16x384xbf16, #tpu.memory_space<vmem>>, %arg7: memref<16x128xf32, #tpu.memory_space<vmem>>) attributes {dimension_semantics = [#tpu.dimension_semantics<parallel>, #tpu.dimension_semantics<arbitrary>], iteration_bounds = array<i64: 2, 1>, scalar_prefetch = 0 : i64, scratch_operands = 2 : i64, tpu.core_type = #tpu.core_type<tc>, window_params = [{transform_indices = @transform_0, window_bounds = array<i64: 8, 16, 256>}, {transform_indices = @transform_1, window_bounds = array<i64: 1, 384, 512>}, {transform_indices = @transform_2, window_bounds = array<i64: 1, 1, 512>}, {transform_indices = @transform_3, window_bounds = array<i64: 1, 8, 16, 128>}]} {
    %c0_i32 = arith.constant 0 : i32
    %0 = arith.cmpi eq, %arg1, %c0_i32 : i32
    %1 = arith.extui %0 : i1 to i32
    %c0_i32_0 = arith.constant 0 : i32
    %2 = arith.cmpi ne, %1, %c0_i32_0 : i32
    scf.if %2 {
      %cst_157 = arith.constant 0.000000e+00 : bf16
      %295 = vector.broadcast %cst_157 : bf16 to vector<16x384xbf16>
      %c0_158 = arith.constant 0 : index
      %c0_159 = arith.constant 0 : index
      %296 = vector.load %arg6[%c0_158, %c0_159] : memref<16x384xbf16, #tpu.memory_space<vmem>>, vector<16x384xbf16>
      tpu.vector_store %arg6[%c0_158, %c0_159], %295 {strides = array<i32>} : memref<16x384xbf16, #tpu.memory_space<vmem>>, vector<16x384xbf16>,
      %cst_160 = arith.constant 0.000000e+00 : f32
      %297 = vector.broadcast %cst_160 : f32 to vector<16x128xf32>
      %c0_161 = arith.constant 0 : index
      %c0_162 = arith.constant 0 : index
      %298 = vector.load %arg7[%c0_161, %c0_162] : memref<16x128xf32, #tpu.memory_space<vmem>>, vector<16x128xf32>
      tpu.vector_store %arg7[%c0_161, %c0_162], %297 {strides = array<i32>} : memref<16x128xf32, #tpu.memory_space<vmem>>, vector<16x128xf32>,
    } else {
    }
    %c0 = arith.constant 0 : index
    %c0_1 = arith.constant 0 : index
    %c0_2 = arith.constant 0 : index
    %3 = vector.load %arg3[%c0, %c0_1, %c0_2] : memref<1x384x512xbf16, #tpu.memory_space<vmem>>, vector<1x384x512xbf16>
    %4 = vector.shape_cast %3 : vector<1x384x512xbf16> to vector<384x512xbf16>
    %c0_3 = arith.constant 0 : index
    %c0_4 = arith.constant 0 : index
    %c0_5 = arith.constant 0 : index
    %5 = vector.load %arg4[%c0_3, %c0_4, %c0_5] : memref<1x1x512xf32, #tpu.memory_space<vmem>>, vector<1x1x512xf32>
    %6 = vector.shape_cast %5 : vector<1x1x512xf32> to vector<1x512xf32>
    %c0_i32_6 = arith.constant 0 : i32
    %c2_i32 = arith.constant 2 : i32
    %7 = arith.muli %c2_i32, %c0_i32_6 : i32
    %c7_i32 = arith.constant 7 : i32
    %8 = arith.subi %c7_i32, %7 : i32
    %9 = arith.muli %arg0, %8 : i32
    %10 = arith.addi %c0_i32_6, %9 : i32
    %11 = arith.index_cast %10 : i32 to index
    %c0_7 = arith.constant 0 : index
    %c0_8 = arith.constant 0 : index
    %12 = vector.load %arg2[%11, %c0_7, %c0_8] : memref<8x16x256xbf16, #tpu.memory_space<vmem>>, vector<1x16x256xbf16>
    %13 = vector.shape_cast %12 : vector<1x16x256xbf16> to vector<16x256xbf16>
    %c0_9 = arith.constant 0 : index
    %c0_10 = arith.constant 0 : index
    %14 = vector.load %arg6[%c0_9, %c0_10] : memref<16x384xbf16, #tpu.memory_space<vmem>>, vector<16x256xbf16>
    tpu.vector_store %arg6[%c0_9, %c0_10], %13 {strides = array<i32>} : memref<16x384xbf16, #tpu.memory_space<vmem>>, vector<16x256xbf16>,
    %c0_11 = arith.constant 0 : index
    %c0_12 = arith.constant 0 : index
    %15 = vector.load %arg6[%c0_11, %c0_12] : memref<16x384xbf16, #tpu.memory_space<vmem>>, vector<16x384xbf16>
    %cst = arith.constant dense<0.000000e+00> : vector<16x512xf32>
    %16 = tpu.matmul %15, %4, %cst {dimension_numbers = #tpu.dot_dimension_numbers<[1], [0], [0], [1], [0, 0, 1, 1], [], []>} : vector<16x384xbf16>, vector<384x512xbf16>, vector<16x512xf32> -> vector<16x512xf32>
    %17 = vector.broadcast %6 : vector<1x512xf32> to vector<16x512xf32>
    %18 = arith.addf %16, %17 : vector<16x512xf32>
    %19 = vector.extract_strided_slice %18 {offsets = [0, 0], sizes = [16, 384], strides = [1, 1]} : vector<16x512xf32> to vector<16x384xf32>
    %20 = arith.negf %19 : vector<16x384xf32>
    %21 = math.exp %20 : vector<16x384xf32>
    %cst_13 = arith.constant 1.000000e+00 : f32
    %22 = vector.broadcast %cst_13 : f32 to vector<16x384xf32>
    %23 = arith.addf %22, %21 : vector<16x384xf32>
    %24 = arith.divf %22, %23 : vector<16x384xf32>
    %25 = vector.extract_strided_slice %24 {offsets = [0, 0], sizes = [16, 128], strides = [1, 1]} : vector<16x384xf32> to vector<16x128xf32>
    %26 = vector.extract_strided_slice %24 {offsets = [0, 128], sizes = [16, 128], strides = [1, 1]} : vector<16x384xf32> to vector<16x128xf32>
    %27 = vector.extract_strided_slice %24 {offsets = [0, 256], sizes = [16, 128], strides = [1, 1]} : vector<16x384xf32> to vector<16x128xf32>
    %28 = vector.extract_strided_slice %18 {offsets = [0, 384], sizes = [16, 128], strides = [1, 1]} : vector<16x512xf32> to vector<16x128xf32>
    %29 = math.tanh %28 : vector<16x128xf32>
    %c0_14 = arith.constant 0 : index
    %c0_15 = arith.constant 0 : index
    %30 = vector.load %arg7[%c0_14, %c0_15] : memref<16x128xf32, #tpu.memory_space<vmem>>, vector<16x128xf32>
    %31 = arith.mulf %26, %30 : vector<16x128xf32>
    %32 = arith.mulf %25, %29 : vector<16x128xf32>
    %33 = arith.addf %31, %32 : vector<16x128xf32>
    %34 = math.tanh %33 : vector<16x128xf32>
    %35 = arith.mulf %27, %34 : vector<16x128xf32>
    %36 = arith.truncf %35 : vector<16x128xf32> to vector<16x128xbf16>
    %c0_16 = arith.constant 0 : index
    %c0_17 = arith.constant 0 : index
    %37 = vector.load %arg7[%c0_16, %c0_17] : memref<16x128xf32, #tpu.memory_space<vmem>>, vector<16x128xf32>
    tpu.vector_store %arg7[%c0_16, %c0_17], %33 {strides = array<i32>} : memref<16x128xf32, #tpu.memory_space<vmem>>, vector<16x128xf32>,
    %c0_18 = arith.constant 0 : index
    %c256 = arith.constant 256 : index
    %38 = vector.load %arg6[%c0_18, %c256] : memref<16x384xbf16, #tpu.memory_space<vmem>>, vector<16x128xbf16>
    tpu.vector_store %arg6[%c0_18, %c256], %36 {strides = array<i32>} : memref<16x384xbf16, #tpu.memory_space<vmem>>, vector<16x128xbf16>,
    %c0_19 = arith.constant 0 : index
    %39 = arith.index_cast %10 : i32 to index
    %c0_20 = arith.constant 0 : index
    %c0_21 = arith.constant 0 : index
    %40 = vector.load %arg5[%c0_19, %39, %c0_20, %c0_21] : memref<1x8x16x128xbf16, #tpu.memory_space<vmem>>, vector<1x1x16x128xbf16>
    %41 = vector.shape_cast %40 : vector<1x1x16x128xbf16> to vector<16x128xbf16>
    %42 = vector.shape_cast %36 : vector<16x128xbf16> to vector<1x1x16x128xbf16>
    tpu.vector_store %arg5[%c0_19, %39, %c0_20, %c0_21], %42 {strides = array<i32>} : memref<1x8x16x128xbf16, #tpu.memory_space<vmem>>, vector<1x1x16x128xbf16>,
    %c1_i32 = arith.constant 1 : i32
    %c2_i32_22 = arith.constant 2 : i32
    %43 = arith.muli %c2_i32_22, %c1_i32 : i32
    %c7_i32_23 = arith.constant 7 : i32
    %44 = arith.subi %c7_i32_23, %43 : i32
    %45 = arith.muli %arg0, %44 : i32
    %46 = arith.addi %c1_i32, %45 : i32
    %47 = arith.index_cast %46 : i32 to index
    %c0_24 = arith.constant 0 : index
    %c0_25 = arith.constant 0 : index
    %48 = vector.load %arg2[%47, %c0_24, %c0_25] : memref<8x16x256xbf16, #tpu.memory_space<vmem>>, vector<1x16x256xbf16>
    %49 = vector.shape_cast %48 : vector<1x16x256xbf16> to vector<16x256xbf16>
    %c0_26 = arith.constant 0 : index
    %c0_27 = arith.constant 0 : index
    %50 = vector.load %arg6[%c0_26, %c0_27] : memref<16x384xbf16, #tpu.memory_space<vmem>>, vector<16x256xbf16>
    tpu.vector_store %arg6[%c0_26, %c0_27], %49 {strides = array<i32>} : memref<16x384xbf16, #tpu.memory_space<vmem>>, vector<16x256xbf16>,
    %c0_28 = arith.constant 0 : index
    %c0_29 = arith.constant 0 : index
    %51 = vector.load %arg6[%c0_28, %c0_29] : memref<16x384xbf16, #tpu.memory_space<vmem>>, vector<16x384xbf16>
    %cst_30 = arith.constant dense<0.000000e+00> : vector<16x512xf32>
    %52 = tpu.matmul %51, %4, %cst_30 {dimension_numbers = #tpu.dot_dimension_numbers<[1], [0], [0], [1], [0, 0, 1, 1], [], []>} : vector<16x384xbf16>, vector<384x512xbf16>, vector<16x512xf32> -> vector<16x512xf32>
    %53 = vector.broadcast %6 : vector<1x512xf32> to vector<16x512xf32>
    %54 = arith.addf %52, %53 : vector<16x512xf32>
    %55 = vector.extract_strided_slice %54 {offsets = [0, 0], sizes = [16, 384], strides = [1, 1]} : vector<16x512xf32> to vector<16x384xf32>
    %56 = arith.negf %55 : vector<16x384xf32>
    %57 = math.exp %56 : vector<16x384xf32>
    %cst_31 = arith.constant 1.000000e+00 : f32
    %58 = vector.broadcast %cst_31 : f32 to vector<16x384xf32>
    %59 = arith.addf %58, %57 : vector<16x384xf32>
    %60 = arith.divf %58, %59 : vector<16x384xf32>
    %61 = vector.extract_strided_slice %60 {offsets = [0, 0], sizes = [16, 128], strides = [1, 1]} : vector<16x384xf32> to vector<16x128xf32>
    %62 = vector.extract_strided_slice %60 {offsets = [0, 128], sizes = [16, 128], strides = [1, 1]} : vector<16x384xf32> to vector<16x128xf32>
    %63 = vector.extract_strided_slice %60 {offsets = [0, 256], sizes = [16, 128], strides = [1, 1]} : vector<16x384xf32> to vector<16x128xf32>
    %64 = vector.extract_strided_slice %54 {offsets = [0, 384], sizes = [16, 128], strides = [1, 1]} : vector<16x512xf32> to vector<16x128xf32>
    %65 = math.tanh %64 : vector<16x128xf32>
    %c0_32 = arith.constant 0 : index
    %c0_33 = arith.constant 0 : index
    %66 = vector.load %arg7[%c0_32, %c0_33] : memref<16x128xf32, #tpu.memory_space<vmem>>, vector<16x128xf32>
    %67 = arith.mulf %62, %66 : vector<16x128xf32>
    %68 = arith.mulf %61, %65 : vector<16x128xf32>
    %69 = arith.addf %67, %68 : vector<16x128xf32>
    %70 = math.tanh %69 : vector<16x128xf32>
    %71 = arith.mulf %63, %70 : vector<16x128xf32>
    %72 = arith.truncf %71 : vector<16x128xf32> to vector<16x128xbf16>
    %c0_34 = arith.constant 0 : index
    %c0_35 = arith.constant 0 : index
    %73 = vector.load %arg7[%c0_34, %c0_35] : memref<16x128xf32, #tpu.memory_space<vmem>>, vector<16x128xf32>
    tpu.vector_store %arg7[%c0_34, %c0_35], %69 {strides = array<i32>} : memref<16x128xf32, #tpu.memory_space<vmem>>, vector<16x128xf32>,
    %c0_36 = arith.constant 0 : index
    %c256_37 = arith.constant 256 : index
    %74 = vector.load %arg6[%c0_36, %c256_37] : memref<16x384xbf16, #tpu.memory_space<vmem>>, vector<16x128xbf16>
    tpu.vector_store %arg6[%c0_36, %c256_37], %72 {strides = array<i32>} : memref<16x384xbf16, #tpu.memory_space<vmem>>, vector<16x128xbf16>,
    %c0_38 = arith.constant 0 : index
    %75 = arith.index_cast %46 : i32 to index
    %c0_39 = arith.constant 0 : index
    %c0_40 = arith.constant 0 : index
    %76 = vector.load %arg5[%c0_38, %75, %c0_39, %c0_40] : memref<1x8x16x128xbf16, #tpu.memory_space<vmem>>, vector<1x1x16x128xbf16>
    %77 = vector.shape_cast %76 : vector<1x1x16x128xbf16> to vector<16x128xbf16>
    %78 = vector.shape_cast %72 : vector<16x128xbf16> to vector<1x1x16x128xbf16>
    tpu.vector_store %arg5[%c0_38, %75, %c0_39, %c0_40], %78 {strides = array<i32>} : memref<1x8x16x128xbf16, #tpu.memory_space<vmem>>, vector<1x1x16x128xbf16>,
    %c2_i32_41 = arith.constant 2 : i32
    %c2_i32_42 = arith.constant 2 : i32
    %79 = arith.muli %c2_i32_42, %c2_i32_41 : i32
    %c7_i32_43 = arith.constant 7 : i32
    %80 = arith.subi %c7_i32_43, %79 : i32
    %81 = arith.muli %arg0, %80 : i32
    %82 = arith.addi %c2_i32_41, %81 : i32
    %83 = arith.index_cast %82 : i32 to index
    %c0_44 = arith.constant 0 : index
    %c0_45 = arith.constant 0 : index
    %84 = vector.load %arg2[%83, %c0_44, %c0_45] : memref<8x16x256xbf16, #tpu.memory_space<vmem>>, vector<1x16x256xbf16>
    %85 = vector.shape_cast %84 : vector<1x16x256xbf16> to vector<16x256xbf16>
    %c0_46 = arith.constant 0 : index
    %c0_47 = arith.constant 0 : index
    %86 = vector.load %arg6[%c0_46, %c0_47] : memref<16x384xbf16, #tpu.memory_space<vmem>>, vector<16x256xbf16>
    tpu.vector_store %arg6[%c0_46, %c0_47], %85 {strides = array<i32>} : memref<16x384xbf16, #tpu.memory_space<vmem>>, vector<16x256xbf16>,
    %c0_48 = arith.constant 0 : index
    %c0_49 = arith.constant 0 : index
    %87 = vector.load %arg6[%c0_48, %c0_49] : memref<16x384xbf16, #tpu.memory_space<vmem>>, vector<16x384xbf16>
    %cst_50 = arith.constant dense<0.000000e+00> : vector<16x512xf32>
    %88 = tpu.matmul %87, %4, %cst_50 {dimension_numbers = #tpu.dot_dimension_numbers<[1], [0], [0], [1], [0, 0, 1, 1], [], []>} : vector<16x384xbf16>, vector<384x512xbf16>, vector<16x512xf32> -> vector<16x512xf32>
    %89 = vector.broadcast %6 : vector<1x512xf32> to vector<16x512xf32>
    %90 = arith.addf %88, %89 : vector<16x512xf32>
    %91 = vector.extract_strided_slice %90 {offsets = [0, 0], sizes = [16, 384], strides = [1, 1]} : vector<16x512xf32> to vector<16x384xf32>
    %92 = arith.negf %91 : vector<16x384xf32>
    %93 = math.exp %92 : vector<16x384xf32>
    %cst_51 = arith.constant 1.000000e+00 : f32
    %94 = vector.broadcast %cst_51 : f32 to vector<16x384xf32>
    %95 = arith.addf %94, %93 : vector<16x384xf32>
    %96 = arith.divf %94, %95 : vector<16x384xf32>
    %97 = vector.extract_strided_slice %96 {offsets = [0, 0], sizes = [16, 128], strides = [1, 1]} : vector<16x384xf32> to vector<16x128xf32>
    %98 = vector.extract_strided_slice %96 {offsets = [0, 128], sizes = [16, 128], strides = [1, 1]} : vector<16x384xf32> to vector<16x128xf32>
    %99 = vector.extract_strided_slice %96 {offsets = [0, 256], sizes = [16, 128], strides = [1, 1]} : vector<16x384xf32> to vector<16x128xf32>
    %100 = vector.extract_strided_slice %90 {offsets = [0, 384], sizes = [16, 128], strides = [1, 1]} : vector<16x512xf32> to vector<16x128xf32>
    %101 = math.tanh %100 : vector<16x128xf32>
    %c0_52 = arith.constant 0 : index
    %c0_53 = arith.constant 0 : index
    %102 = vector.load %arg7[%c0_52, %c0_53] : memref<16x128xf32, #tpu.memory_space<vmem>>, vector<16x128xf32>
    %103 = arith.mulf %98, %102 : vector<16x128xf32>
    %104 = arith.mulf %97, %101 : vector<16x128xf32>
    %105 = arith.addf %103, %104 : vector<16x128xf32>
    %106 = math.tanh %105 : vector<16x128xf32>
    %107 = arith.mulf %99, %106 : vector<16x128xf32>
    %108 = arith.truncf %107 : vector<16x128xf32> to vector<16x128xbf16>
    %c0_54 = arith.constant 0 : index
    %c0_55 = arith.constant 0 : index
    %109 = vector.load %arg7[%c0_54, %c0_55] : memref<16x128xf32, #tpu.memory_space<vmem>>, vector<16x128xf32>
    tpu.vector_store %arg7[%c0_54, %c0_55], %105 {strides = array<i32>} : memref<16x128xf32, #tpu.memory_space<vmem>>, vector<16x128xf32>,
    %c0_56 = arith.constant 0 : index
    %c256_57 = arith.constant 256 : index
    %110 = vector.load %arg6[%c0_56, %c256_57] : memref<16x384xbf16, #tpu.memory_space<vmem>>, vector<16x128xbf16>
    tpu.vector_store %arg6[%c0_56, %c256_57], %108 {strides = array<i32>} : memref<16x384xbf16, #tpu.memory_space<vmem>>, vector<16x128xbf16>,
    %c0_58 = arith.constant 0 : index
    %111 = arith.index_cast %82 : i32 to index
    %c0_59 = arith.constant 0 : index
    %c0_60 = arith.constant 0 : index
    %112 = vector.load %arg5[%c0_58, %111, %c0_59, %c0_60] : memref<1x8x16x128xbf16, #tpu.memory_space<vmem>>, vector<1x1x16x128xbf16>
    %113 = vector.shape_cast %112 : vector<1x1x16x128xbf16> to vector<16x128xbf16>
    %114 = vector.shape_cast %108 : vector<16x128xbf16> to vector<1x1x16x128xbf16>
    tpu.vector_store %arg5[%c0_58, %111, %c0_59, %c0_60], %114 {strides = array<i32>} : memref<1x8x16x128xbf16, #tpu.memory_space<vmem>>, vector<1x1x16x128xbf16>,
    %c3_i32 = arith.constant 3 : i32
    %c2_i32_61 = arith.constant 2 : i32
    %115 = arith.muli %c2_i32_61, %c3_i32 : i32
    %c7_i32_62 = arith.constant 7 : i32
    %116 = arith.subi %c7_i32_62, %115 : i32
    %117 = arith.muli %arg0, %116 : i32
    %118 = arith.addi %c3_i32, %117 : i32
    %119 = arith.index_cast %118 : i32 to index
    %c0_63 = arith.constant 0 : index
    %c0_64 = arith.constant 0 : index
    %120 = vector.load %arg2[%119, %c0_63, %c0_64] : memref<8x16x256xbf16, #tpu.memory_space<vmem>>, vector<1x16x256xbf16>
    %121 = vector.shape_cast %120 : vector<1x16x256xbf16> to vector<16x256xbf16>
    %c0_65 = arith.constant 0 : index
    %c0_66 = arith.constant 0 : index
    %122 = vector.load %arg6[%c0_65, %c0_66] : memref<16x384xbf16, #tpu.memory_space<vmem>>, vector<16x256xbf16>
    tpu.vector_store %arg6[%c0_65, %c0_66], %121 {strides = array<i32>} : memref<16x384xbf16, #tpu.memory_space<vmem>>, vector<16x256xbf16>,
    %c0_67 = arith.constant 0 : index
    %c0_68 = arith.constant 0 : index
    %123 = vector.load %arg6[%c0_67, %c0_68] : memref<16x384xbf16, #tpu.memory_space<vmem>>, vector<16x384xbf16>
    %cst_69 = arith.constant dense<0.000000e+00> : vector<16x512xf32>
    %124 = tpu.matmul %123, %4, %cst_69 {dimension_numbers = #tpu.dot_dimension_numbers<[1], [0], [0], [1], [0, 0, 1, 1], [], []>} : vector<16x384xbf16>, vector<384x512xbf16>, vector<16x512xf32> -> vector<16x512xf32>
    %125 = vector.broadcast %6 : vector<1x512xf32> to vector<16x512xf32>
    %126 = arith.addf %124, %125 : vector<16x512xf32>
    %127 = vector.extract_strided_slice %126 {offsets = [0, 0], sizes = [16, 384], strides = [1, 1]} : vector<16x512xf32> to vector<16x384xf32>
    %128 = arith.negf %127 : vector<16x384xf32>
    %129 = math.exp %128 : vector<16x384xf32>
    %cst_70 = arith.constant 1.000000e+00 : f32
    %130 = vector.broadcast %cst_70 : f32 to vector<16x384xf32>
    %131 = arith.addf %130, %129 : vector<16x384xf32>
    %132 = arith.divf %130, %131 : vector<16x384xf32>
    %133 = vector.extract_strided_slice %132 {offsets = [0, 0], sizes = [16, 128], strides = [1, 1]} : vector<16x384xf32> to vector<16x128xf32>
    %134 = vector.extract_strided_slice %132 {offsets = [0, 128], sizes = [16, 128], strides = [1, 1]} : vector<16x384xf32> to vector<16x128xf32>
    %135 = vector.extract_strided_slice %132 {offsets = [0, 256], sizes = [16, 128], strides = [1, 1]} : vector<16x384xf32> to vector<16x128xf32>
    %136 = vector.extract_strided_slice %126 {offsets = [0, 384], sizes = [16, 128], strides = [1, 1]} : vector<16x512xf32> to vector<16x128xf32>
    %137 = math.tanh %136 : vector<16x128xf32>
    %c0_71 = arith.constant 0 : index
    %c0_72 = arith.constant 0 : index
    %138 = vector.load %arg7[%c0_71, %c0_72] : memref<16x128xf32, #tpu.memory_space<vmem>>, vector<16x128xf32>
    %139 = arith.mulf %134, %138 : vector<16x128xf32>
    %140 = arith.mulf %133, %137 : vector<16x128xf32>
    %141 = arith.addf %139, %140 : vector<16x128xf32>
    %142 = math.tanh %141 : vector<16x128xf32>
    %143 = arith.mulf %135, %142 : vector<16x128xf32>
    %144 = arith.truncf %143 : vector<16x128xf32> to vector<16x128xbf16>
    %c0_73 = arith.constant 0 : index
    %c0_74 = arith.constant 0 : index
    %145 = vector.load %arg7[%c0_73, %c0_74] : memref<16x128xf32, #tpu.memory_space<vmem>>, vector<16x128xf32>
    tpu.vector_store %arg7[%c0_73, %c0_74], %141 {strides = array<i32>} : memref<16x128xf32, #tpu.memory_space<vmem>>, vector<16x128xf32>,
    %c0_75 = arith.constant 0 : index
    %c256_76 = arith.constant 256 : index
    %146 = vector.load %arg6[%c0_75, %c256_76] : memref<16x384xbf16, #tpu.memory_space<vmem>>, vector<16x128xbf16>
    tpu.vector_store %arg6[%c0_75, %c256_76], %144 {strides = array<i32>} : memref<16x384xbf16, #tpu.memory_space<vmem>>, vector<16x128xbf16>,
    %c0_77 = arith.constant 0 : index
    %147 = arith.index_cast %118 : i32 to index
    %c0_78 = arith.constant 0 : index
    %c0_79 = arith.constant 0 : index
    %148 = vector.load %arg5[%c0_77, %147, %c0_78, %c0_79] : memref<1x8x16x128xbf16, #tpu.memory_space<vmem>>, vector<1x1x16x128xbf16>
    %149 = vector.shape_cast %148 : vector<1x1x16x128xbf16> to vector<16x128xbf16>
    %150 = vector.shape_cast %144 : vector<16x128xbf16> to vector<1x1x16x128xbf16>
    tpu.vector_store %arg5[%c0_77, %147, %c0_78, %c0_79], %150 {strides = array<i32>} : memref<1x8x16x128xbf16, #tpu.memory_space<vmem>>, vector<1x1x16x128xbf16>,
    %c4_i32 = arith.constant 4 : i32
    %c2_i32_80 = arith.constant 2 : i32
    %151 = arith.muli %c2_i32_80, %c4_i32 : i32
    %c7_i32_81 = arith.constant 7 : i32
    %152 = arith.subi %c7_i32_81, %151 : i32
    %153 = arith.muli %arg0, %152 : i32
    %154 = arith.addi %c4_i32, %153 : i32
    %155 = arith.index_cast %154 : i32 to index
    %c0_82 = arith.constant 0 : index
    %c0_83 = arith.constant 0 : index
    %156 = vector.load %arg2[%155, %c0_82, %c0_83] : memref<8x16x256xbf16, #tpu.memory_space<vmem>>, vector<1x16x256xbf16>
    %157 = vector.shape_cast %156 : vector<1x16x256xbf16> to vector<16x256xbf16>
    %c0_84 = arith.constant 0 : index
    %c0_85 = arith.constant 0 : index
    %158 = vector.load %arg6[%c0_84, %c0_85] : memref<16x384xbf16, #tpu.memory_space<vmem>>, vector<16x256xbf16>
    tpu.vector_store %arg6[%c0_84, %c0_85], %157 {strides = array<i32>} : memref<16x384xbf16, #tpu.memory_space<vmem>>, vector<16x256xbf16>,
    %c0_86 = arith.constant 0 : index
    %c0_87 = arith.constant 0 : index
    %159 = vector.load %arg6[%c0_86, %c0_87] : memref<16x384xbf16, #tpu.memory_space<vmem>>, vector<16x384xbf16>
    %cst_88 = arith.constant dense<0.000000e+00> : vector<16x512xf32>
    %160 = tpu.matmul %159, %4, %cst_88 {dimension_numbers = #tpu.dot_dimension_numbers<[1], [0], [0], [1], [0, 0, 1, 1], [], []>} : vector<16x384xbf16>, vector<384x512xbf16>, vector<16x512xf32> -> vector<16x512xf32>
    %161 = vector.broadcast %6 : vector<1x512xf32> to vector<16x512xf32>
    %162 = arith.addf %160, %161 : vector<16x512xf32>
    %163 = vector.extract_strided_slice %162 {offsets = [0, 0], sizes = [16, 384], strides = [1, 1]} : vector<16x512xf32> to vector<16x384xf32>
    %164 = arith.negf %163 : vector<16x384xf32>
    %165 = math.exp %164 : vector<16x384xf32>
    %cst_89 = arith.constant 1.000000e+00 : f32
    %166 = vector.broadcast %cst_89 : f32 to vector<16x384xf32>
    %167 = arith.addf %166, %165 : vector<16x384xf32>
    %168 = arith.divf %166, %167 : vector<16x384xf32>
    %169 = vector.extract_strided_slice %168 {offsets = [0, 0], sizes = [16, 128], strides = [1, 1]} : vector<16x384xf32> to vector<16x128xf32>
    %170 = vector.extract_strided_slice %168 {offsets = [0, 128], sizes = [16, 128], strides = [1, 1]} : vector<16x384xf32> to vector<16x128xf32>
    %171 = vector.extract_strided_slice %168 {offsets = [0, 256], sizes = [16, 128], strides = [1, 1]} : vector<16x384xf32> to vector<16x128xf32>
    %172 = vector.extract_strided_slice %162 {offsets = [0, 384], sizes = [16, 128], strides = [1, 1]} : vector<16x512xf32> to vector<16x128xf32>
    %173 = math.tanh %172 : vector<16x128xf32>
    %c0_90 = arith.constant 0 : index
    %c0_91 = arith.constant 0 : index
    %174 = vector.load %arg7[%c0_90, %c0_91] : memref<16x128xf32, #tpu.memory_space<vmem>>, vector<16x128xf32>
    %175 = arith.mulf %170, %174 : vector<16x128xf32>
    %176 = arith.mulf %169, %173 : vector<16x128xf32>
    %177 = arith.addf %175, %176 : vector<16x128xf32>
    %178 = math.tanh %177 : vector<16x128xf32>
    %179 = arith.mulf %171, %178 : vector<16x128xf32>
    %180 = arith.truncf %179 : vector<16x128xf32> to vector<16x128xbf16>
    %c0_92 = arith.constant 0 : index
    %c0_93 = arith.constant 0 : index
    %181 = vector.load %arg7[%c0_92, %c0_93] : memref<16x128xf32, #tpu.memory_space<vmem>>, vector<16x128xf32>
    tpu.vector_store %arg7[%c0_92, %c0_93], %177 {strides = array<i32>} : memref<16x128xf32, #tpu.memory_space<vmem>>, vector<16x128xf32>,
    %c0_94 = arith.constant 0 : index
    %c256_95 = arith.constant 256 : index
    %182 = vector.load %arg6[%c0_94, %c256_95] : memref<16x384xbf16, #tpu.memory_space<vmem>>, vector<16x128xbf16>
    tpu.vector_store %arg6[%c0_94, %c256_95], %180 {strides = array<i32>} : memref<16x384xbf16, #tpu.memory_space<vmem>>, vector<16x128xbf16>,
    %c0_96 = arith.constant 0 : index
    %183 = arith.index_cast %154 : i32 to index
    %c0_97 = arith.constant 0 : index
    %c0_98 = arith.constant 0 : index
    %184 = vector.load %arg5[%c0_96, %183, %c0_97, %c0_98] : memref<1x8x16x128xbf16, #tpu.memory_space<vmem>>, vector<1x1x16x128xbf16>
    %185 = vector.shape_cast %184 : vector<1x1x16x128xbf16> to vector<16x128xbf16>
    %186 = vector.shape_cast %180 : vector<16x128xbf16> to vector<1x1x16x128xbf16>
    tpu.vector_store %arg5[%c0_96, %183, %c0_97, %c0_98], %186 {strides = array<i32>} : memref<1x8x16x128xbf16, #tpu.memory_space<vmem>>, vector<1x1x16x128xbf16>,
    %c5_i32 = arith.constant 5 : i32
    %c2_i32_99 = arith.constant 2 : i32
    %187 = arith.muli %c2_i32_99, %c5_i32 : i32
    %c7_i32_100 = arith.constant 7 : i32
    %188 = arith.subi %c7_i32_100, %187 : i32
    %189 = arith.muli %arg0, %188 : i32
    %190 = arith.addi %c5_i32, %189 : i32
    %191 = arith.index_cast %190 : i32 to index
    %c0_101 = arith.constant 0 : index
    %c0_102 = arith.constant 0 : index
    %192 = vector.load %arg2[%191, %c0_101, %c0_102] : memref<8x16x256xbf16, #tpu.memory_space<vmem>>, vector<1x16x256xbf16>
    %193 = vector.shape_cast %192 : vector<1x16x256xbf16> to vector<16x256xbf16>
    %c0_103 = arith.constant 0 : index
    %c0_104 = arith.constant 0 : index
    %194 = vector.load %arg6[%c0_103, %c0_104] : memref<16x384xbf16, #tpu.memory_space<vmem>>, vector<16x256xbf16>
    tpu.vector_store %arg6[%c0_103, %c0_104], %193 {strides = array<i32>} : memref<16x384xbf16, #tpu.memory_space<vmem>>, vector<16x256xbf16>,
    %c0_105 = arith.constant 0 : index
    %c0_106 = arith.constant 0 : index
    %195 = vector.load %arg6[%c0_105, %c0_106] : memref<16x384xbf16, #tpu.memory_space<vmem>>, vector<16x384xbf16>
    %cst_107 = arith.constant dense<0.000000e+00> : vector<16x512xf32>
    %196 = tpu.matmul %195, %4, %cst_107 {dimension_numbers = #tpu.dot_dimension_numbers<[1], [0], [0], [1], [0, 0, 1, 1], [], []>} : vector<16x384xbf16>, vector<384x512xbf16>, vector<16x512xf32> -> vector<16x512xf32>
    %197 = vector.broadcast %6 : vector<1x512xf32> to vector<16x512xf32>
    %198 = arith.addf %196, %197 : vector<16x512xf32>
    %199 = vector.extract_strided_slice %198 {offsets = [0, 0], sizes = [16, 384], strides = [1, 1]} : vector<16x512xf32> to vector<16x384xf32>
    %200 = arith.negf %199 : vector<16x384xf32>
    %201 = math.exp %200 : vector<16x384xf32>
    %cst_108 = arith.constant 1.000000e+00 : f32
    %202 = vector.broadcast %cst_108 : f32 to vector<16x384xf32>
    %203 = arith.addf %202, %201 : vector<16x384xf32>
    %204 = arith.divf %202, %203 : vector<16x384xf32>
    %205 = vector.extract_strided_slice %204 {offsets = [0, 0], sizes = [16, 128], strides = [1, 1]} : vector<16x384xf32> to vector<16x128xf32>
    %206 = vector.extract_strided_slice %204 {offsets = [0, 128], sizes = [16, 128], strides = [1, 1]} : vector<16x384xf32> to vector<16x128xf32>
    %207 = vector.extract_strided_slice %204 {offsets = [0, 256], sizes = [16, 128], strides = [1, 1]} : vector<16x384xf32> to vector<16x128xf32>
    %208 = vector.extract_strided_slice %198 {offsets = [0, 384], sizes = [16, 128], strides = [1, 1]} : vector<16x512xf32> to vector<16x128xf32>
    %209 = math.tanh %208 : vector<16x128xf32>
    %c0_109 = arith.constant 0 : index
    %c0_110 = arith.constant 0 : index
    %210 = vector.load %arg7[%c0_109, %c0_110] : memref<16x128xf32, #tpu.memory_space<vmem>>, vector<16x128xf32>
    %211 = arith.mulf %206, %210 : vector<16x128xf32>
    %212 = arith.mulf %205, %209 : vector<16x128xf32>
    %213 = arith.addf %211, %212 : vector<16x128xf32>
    %214 = math.tanh %213 : vector<16x128xf32>
    %215 = arith.mulf %207, %214 : vector<16x128xf32>
    %216 = arith.truncf %215 : vector<16x128xf32> to vector<16x128xbf16>
    %c0_111 = arith.constant 0 : index
    %c0_112 = arith.constant 0 : index
    %217 = vector.load %arg7[%c0_111, %c0_112] : memref<16x128xf32, #tpu.memory_space<vmem>>, vector<16x128xf32>
    tpu.vector_store %arg7[%c0_111, %c0_112], %213 {strides = array<i32>} : memref<16x128xf32, #tpu.memory_space<vmem>>, vector<16x128xf32>,
    %c0_113 = arith.constant 0 : index
    %c256_114 = arith.constant 256 : index
    %218 = vector.load %arg6[%c0_113, %c256_114] : memref<16x384xbf16, #tpu.memory_space<vmem>>, vector<16x128xbf16>
    tpu.vector_store %arg6[%c0_113, %c256_114], %216 {strides = array<i32>} : memref<16x384xbf16, #tpu.memory_space<vmem>>, vector<16x128xbf16>,
    %c0_115 = arith.constant 0 : index
    %219 = arith.index_cast %190 : i32 to index
    %c0_116 = arith.constant 0 : index
    %c0_117 = arith.constant 0 : index
    %220 = vector.load %arg5[%c0_115, %219, %c0_116, %c0_117] : memref<1x8x16x128xbf16, #tpu.memory_space<vmem>>, vector<1x1x16x128xbf16>
    %221 = vector.shape_cast %220 : vector<1x1x16x128xbf16> to vector<16x128xbf16>
    %222 = vector.shape_cast %216 : vector<16x128xbf16> to vector<1x1x16x128xbf16>
    tpu.vector_store %arg5[%c0_115, %219, %c0_116, %c0_117], %222 {strides = array<i32>} : memref<1x8x16x128xbf16, #tpu.memory_space<vmem>>, vector<1x1x16x128xbf16>,
    %c6_i32 = arith.constant 6 : i32
    %c2_i32_118 = arith.constant 2 : i32
    %223 = arith.muli %c2_i32_118, %c6_i32 : i32
    %c7_i32_119 = arith.constant 7 : i32
    %224 = arith.subi %c7_i32_119, %223 : i32
    %225 = arith.muli %arg0, %224 : i32
    %226 = arith.addi %c6_i32, %225 : i32
    %227 = arith.index_cast %226 : i32 to index
    %c0_120 = arith.constant 0 : index
    %c0_121 = arith.constant 0 : index
    %228 = vector.load %arg2[%227, %c0_120, %c0_121] : memref<8x16x256xbf16, #tpu.memory_space<vmem>>, vector<1x16x256xbf16>
    %229 = vector.shape_cast %228 : vector<1x16x256xbf16> to vector<16x256xbf16>
    %c0_122 = arith.constant 0 : index
    %c0_123 = arith.constant 0 : index
    %230 = vector.load %arg6[%c0_122, %c0_123] : memref<16x384xbf16, #tpu.memory_space<vmem>>, vector<16x256xbf16>
    tpu.vector_store %arg6[%c0_122, %c0_123], %229 {strides = array<i32>} : memref<16x384xbf16, #tpu.memory_space<vmem>>, vector<16x256xbf16>,
    %c0_124 = arith.constant 0 : index
    %c0_125 = arith.constant 0 : index
    %231 = vector.load %arg6[%c0_124, %c0_125] : memref<16x384xbf16, #tpu.memory_space<vmem>>, vector<16x384xbf16>
    %cst_126 = arith.constant dense<0.000000e+00> : vector<16x512xf32>
    %232 = tpu.matmul %231, %4, %cst_126 {dimension_numbers = #tpu.dot_dimension_numbers<[1], [0], [0], [1], [0, 0, 1, 1], [], []>} : vector<16x384xbf16>, vector<384x512xbf16>, vector<16x512xf32> -> vector<16x512xf32>
    %233 = vector.broadcast %6 : vector<1x512xf32> to vector<16x512xf32>
    %234 = arith.addf %232, %233 : vector<16x512xf32>
    %235 = vector.extract_strided_slice %234 {offsets = [0, 0], sizes = [16, 384], strides = [1, 1]} : vector<16x512xf32> to vector<16x384xf32>
    %236 = arith.negf %235 : vector<16x384xf32>
    %237 = math.exp %236 : vector<16x384xf32>
    %cst_127 = arith.constant 1.000000e+00 : f32
    %238 = vector.broadcast %cst_127 : f32 to vector<16x384xf32>
    %239 = arith.addf %238, %237 : vector<16x384xf32>
    %240 = arith.divf %238, %239 : vector<16x384xf32>
    %241 = vector.extract_strided_slice %240 {offsets = [0, 0], sizes = [16, 128], strides = [1, 1]} : vector<16x384xf32> to vector<16x128xf32>
    %242 = vector.extract_strided_slice %240 {offsets = [0, 128], sizes = [16, 128], strides = [1, 1]} : vector<16x384xf32> to vector<16x128xf32>
    %243 = vector.extract_strided_slice %240 {offsets = [0, 256], sizes = [16, 128], strides = [1, 1]} : vector<16x384xf32> to vector<16x128xf32>
    %244 = vector.extract_strided_slice %234 {offsets = [0, 384], sizes = [16, 128], strides = [1, 1]} : vector<16x512xf32> to vector<16x128xf32>
    %245 = math.tanh %244 : vector<16x128xf32>
    %c0_128 = arith.constant 0 : index
    %c0_129 = arith.constant 0 : index
    %246 = vector.load %arg7[%c0_128, %c0_129] : memref<16x128xf32, #tpu.memory_space<vmem>>, vector<16x128xf32>
    %247 = arith.mulf %242, %246 : vector<16x128xf32>
    %248 = arith.mulf %241, %245 : vector<16x128xf32>
    %249 = arith.addf %247, %248 : vector<16x128xf32>
    %250 = math.tanh %249 : vector<16x128xf32>
    %251 = arith.mulf %243, %250 : vector<16x128xf32>
    %252 = arith.truncf %251 : vector<16x128xf32> to vector<16x128xbf16>
    %c0_130 = arith.constant 0 : index
    %c0_131 = arith.constant 0 : index
    %253 = vector.load %arg7[%c0_130, %c0_131] : memref<16x128xf32, #tpu.memory_space<vmem>>, vector<16x128xf32>
    tpu.vector_store %arg7[%c0_130, %c0_131], %249 {strides = array<i32>} : memref<16x128xf32, #tpu.memory_space<vmem>>, vector<16x128xf32>,
    %c0_132 = arith.constant 0 : index
    %c256_133 = arith.constant 256 : index
    %254 = vector.load %arg6[%c0_132, %c256_133] : memref<16x384xbf16, #tpu.memory_space<vmem>>, vector<16x128xbf16>
    tpu.vector_store %arg6[%c0_132, %c256_133], %252 {strides = array<i32>} : memref<16x384xbf16, #tpu.memory_space<vmem>>, vector<16x128xbf16>,
    %c0_134 = arith.constant 0 : index
    %255 = arith.index_cast %226 : i32 to index
    %c0_135 = arith.constant 0 : index
    %c0_136 = arith.constant 0 : index
    %256 = vector.load %arg5[%c0_134, %255, %c0_135, %c0_136] : memref<1x8x16x128xbf16, #tpu.memory_space<vmem>>, vector<1x1x16x128xbf16>
    %257 = vector.shape_cast %256 : vector<1x1x16x128xbf16> to vector<16x128xbf16>
    %258 = vector.shape_cast %252 : vector<16x128xbf16> to vector<1x1x16x128xbf16>
    tpu.vector_store %arg5[%c0_134, %255, %c0_135, %c0_136], %258 {strides = array<i32>} : memref<1x8x16x128xbf16, #tpu.memory_space<vmem>>, vector<1x1x16x128xbf16>,
    %c7_i32_137 = arith.constant 7 : i32
    %c2_i32_138 = arith.constant 2 : i32
    %259 = arith.muli %c2_i32_138, %c7_i32_137 : i32
    %c7_i32_139 = arith.constant 7 : i32
    %260 = arith.subi %c7_i32_139, %259 : i32
    %261 = arith.muli %arg0, %260 : i32
    %262 = arith.addi %c7_i32_137, %261 : i32
    %263 = arith.index_cast %262 : i32 to index
    %c0_140 = arith.constant 0 : index
    %c0_141 = arith.constant 0 : index
    %264 = vector.load %arg2[%263, %c0_140, %c0_141] : memref<8x16x256xbf16, #tpu.memory_space<vmem>>, vector<1x16x256xbf16>
    %265 = vector.shape_cast %264 : vector<1x16x256xbf16> to vector<16x256xbf16>
    %c0_142 = arith.constant 0 : index
    %c0_143 = arith.constant 0 : index
    %266 = vector.load %arg6[%c0_142, %c0_143] : memref<16x384xbf16, #tpu.memory_space<vmem>>, vector<16x256xbf16>
    tpu.vector_store %arg6[%c0_142, %c0_143], %265 {strides = array<i32>} : memref<16x384xbf16, #tpu.memory_space<vmem>>, vector<16x256xbf16>,
    %c0_144 = arith.constant 0 : index
    %c0_145 = arith.constant 0 : index
    %267 = vector.load %arg6[%c0_144, %c0_145] : memref<16x384xbf16, #tpu.memory_space<vmem>>, vector<16x384xbf16>
    %cst_146 = arith.constant dense<0.000000e+00> : vector<16x512xf32>
    %268 = tpu.matmul %267, %4, %cst_146 {dimension_numbers = #tpu.dot_dimension_numbers<[1], [0], [0], [1], [0, 0, 1, 1], [], []>} : vector<16x384xbf16>, vector<384x512xbf16>, vector<16x512xf32> -> vector<16x512xf32>
    %269 = vector.broadcast %6 : vector<1x512xf32> to vector<16x512xf32>
    %270 = arith.addf %268, %269 : vector<16x512xf32>
    %271 = vector.extract_strided_slice %270 {offsets = [0, 0], sizes = [16, 384], strides = [1, 1]} : vector<16x512xf32> to vector<16x384xf32>
    %272 = arith.negf %271 : vector<16x384xf32>
    %273 = math.exp %272 : vector<16x384xf32>
    %cst_147 = arith.constant 1.000000e+00 : f32
    %274 = vector.broadcast %cst_147 : f32 to vector<16x384xf32>
    %275 = arith.addf %274, %273 : vector<16x384xf32>
    %276 = arith.divf %274, %275 : vector<16x384xf32>
    %277 = vector.extract_strided_slice %276 {offsets = [0, 0], sizes = [16, 128], strides = [1, 1]} : vector<16x384xf32> to vector<16x128xf32>
    %278 = vector.extract_strided_slice %276 {offsets = [0, 128], sizes = [16, 128], strides = [1, 1]} : vector<16x384xf32> to vector<16x128xf32>
    %279 = vector.extract_strided_slice %276 {offsets = [0, 256], sizes = [16, 128], strides = [1, 1]} : vector<16x384xf32> to vector<16x128xf32>
    %280 = vector.extract_strided_slice %270 {offsets = [0, 384], sizes = [16, 128], strides = [1, 1]} : vector<16x512xf32> to vector<16x128xf32>
    %281 = math.tanh %280 : vector<16x128xf32>
    %c0_148 = arith.constant 0 : index
    %c0_149 = arith.constant 0 : index
    %282 = vector.load %arg7[%c0_148, %c0_149] : memref<16x128xf32, #tpu.memory_space<vmem>>, vector<16x128xf32>
    %283 = arith.mulf %278, %282 : vector<16x128xf32>
    %284 = arith.mulf %277, %281 : vector<16x128xf32>
    %285 = arith.addf %283, %284 : vector<16x128xf32>
    %286 = math.tanh %285 : vector<16x128xf32>
    %287 = arith.mulf %279, %286 : vector<16x128xf32>
    %288 = arith.truncf %287 : vector<16x128xf32> to vector<16x128xbf16>
    %c0_150 = arith.constant 0 : index
    %c0_151 = arith.constant 0 : index
    %289 = vector.load %arg7[%c0_150, %c0_151] : memref<16x128xf32, #tpu.memory_space<vmem>>, vector<16x128xf32>
    tpu.vector_store %arg7[%c0_150, %c0_151], %285 {strides = array<i32>} : memref<16x128xf32, #tpu.memory_space<vmem>>, vector<16x128xf32>,
    %c0_152 = arith.constant 0 : index
    %c256_153 = arith.constant 256 : index
    %290 = vector.load %arg6[%c0_152, %c256_153] : memref<16x384xbf16, #tpu.memory_space<vmem>>, vector<16x128xbf16>
    tpu.vector_store %arg6[%c0_152, %c256_153], %288 {strides = array<i32>} : memref<16x384xbf16, #tpu.memory_space<vmem>>, vector<16x128xbf16>,
    %c0_154 = arith.constant 0 : index
    %291 = arith.index_cast %262 : i32 to index
    %c0_155 = arith.constant 0 : index
    %c0_156 = arith.constant 0 : index
    %292 = vector.load %arg5[%c0_154, %291, %c0_155, %c0_156] : memref<1x8x16x128xbf16, #tpu.memory_space<vmem>>, vector<1x1x16x128xbf16>
    %293 = vector.shape_cast %292 : vector<1x1x16x128xbf16> to vector<16x128xbf16>
    %294 = vector.shape_cast %288 : vector<16x128xbf16> to vector<1x1x16x128xbf16>
    tpu.vector_store %arg5[%c0_154, %291, %c0_155, %c0_156], %294 {strides = array<i32>} : memref<1x8x16x128xbf16, #tpu.memory_space<vmem>>, vector<1x1x16x128xbf16>,
    %c8_i32 = arith.constant 8 : i32
    return
  }
  func.func @transform_0(%arg0: i32, %arg1: i32) -> (i32, i32, i32) {
    %c2_i32 = arith.constant 2 : i32
    %0 = arith.muli %c2_i32, %arg1 : i32
    %c0_i32 = arith.constant 0 : i32
    %1 = arith.subi %c0_i32, %0 : i32
    %2 = arith.muli %arg0, %1 : i32
    %3 = arith.addi %arg1, %2 : i32
    %c0_i32_0 = arith.constant 0 : i32
    %c0_i32_1 = arith.constant 0 : i32
    %c0_i32_2 = arith.constant 0 : i32
    return %3, %c0_i32_0, %c0_i32_1 : i32, i32, i32
  }
  func.func @transform_1(%arg0: i32, %arg1: i32) -> (i32, i32, i32) {
    %c0_i32 = arith.constant 0 : i32
    %c0_i32_0 = arith.constant 0 : i32
    %c0_i32_1 = arith.constant 0 : i32
    return %arg0, %c0_i32, %c0_i32_0 : i32, i32, i32
  }
  func.func @transform_2(%arg0: i32, %arg1: i32) -> (i32, i32, i32) {
    %c0_i32 = arith.constant 0 : i32
    %c0_i32_0 = arith.constant 0 : i32
    %c0_i32_1 = arith.constant 0 : i32
    return %arg0, %c0_i32, %c0_i32_0 : i32, i32, i32
  }
  func.func @transform_3(%arg0: i32, %arg1: i32) -> (i32, i32, i32, i32) {
    %c2_i32 = arith.constant 2 : i32
    %0 = arith.muli %c2_i32, %arg1 : i32
    %c0_i32 = arith.constant 0 : i32
    %1 = arith.subi %c0_i32, %0 : i32
    %2 = arith.muli %arg0, %1 : i32
    %3 = arith.addi %arg1, %2 : i32
    %c0_i32_0 = arith.constant 0 : i32
    %c0_i32_1 = arith.constant 0 : i32
    %c0_i32_2 = arith.constant 0 : i32
    return %arg0, %3, %c0_i32_0, %c0_i32_1 : i32, i32, i32, i32
  }
}

module attributes {stable_mosaic.version = 11 : i64} {
  func.func @_linear_kernel(%arg0: i32, %arg1: memref<16x128xbf16, #tpu.memory_space<vmem>>, %arg2: memref<128x128xbf16, #tpu.memory_space<vmem>>, %arg3: memref<1x128xf32, #tpu.memory_space<vmem>>, %arg4: memref<16x128xbf16, #tpu.memory_space<vmem>>) attributes {dimension_semantics = [#tpu.dimension_semantics<parallel>], iteration_bounds = array<i64: 1>, scalar_prefetch = 0 : i64, scratch_operands = 0 : i64, tpu.core_type = #tpu.core_type<tc>, window_params = [{transform_indices = @transform_0, window_bounds = array<i64: 16, 128>}, {pipeline_mode = #tpu.pipeline_mode<synchronous>, transform_indices = @transform_1, window_bounds = array<i64: 128, 128>}, {pipeline_mode = #tpu.pipeline_mode<synchronous>, transform_indices = @transform_2, window_bounds = array<i64: 1, 128>}, {transform_indices = @transform_3, window_bounds = array<i64: 16, 128>}]} {
    %c0 = arith.constant 0 : index
    %c0_0 = arith.constant 0 : index
    %0 = vector.load %arg1[%c0, %c0_0] : memref<16x128xbf16, #tpu.memory_space<vmem>>, vector<16x128xbf16>
    %c0_1 = arith.constant 0 : index
    %c0_2 = arith.constant 0 : index
    %1 = vector.load %arg2[%c0_1, %c0_2] : memref<128x128xbf16, #tpu.memory_space<vmem>>, vector<128x128xbf16>
    %cst = arith.constant dense<0.000000e+00> : vector<16x128xf32>
    %2 = tpu.matmul %0, %1, %cst {dimension_numbers = #tpu.dot_dimension_numbers<[1], [0], [0], [1], [0, 0, 1, 1], [], []>} : vector<16x128xbf16>, vector<128x128xbf16>, vector<16x128xf32> -> vector<16x128xf32>
    %c0_3 = arith.constant 0 : index
    %c0_4 = arith.constant 0 : index
    %3 = vector.load %arg3[%c0_3, %c0_4] : memref<1x128xf32, #tpu.memory_space<vmem>>, vector<1x128xf32>
    %4 = vector.broadcast %3 : vector<1x128xf32> to vector<16x128xf32>
    %5 = arith.addf %2, %4 : vector<16x128xf32>
    %6 = arith.truncf %5 : vector<16x128xf32> to vector<16x128xbf16>
    %c0_5 = arith.constant 0 : index
    %c0_6 = arith.constant 0 : index
    %7 = vector.load %arg4[%c0_5, %c0_6] : memref<16x128xbf16, #tpu.memory_space<vmem>>, vector<16x128xbf16>
    tpu.vector_store %arg4[%c0_5, %c0_6], %6 {strides = array<i32>} : memref<16x128xbf16, #tpu.memory_space<vmem>>, vector<16x128xbf16>,
    return
  }
  func.func @transform_0(%arg0: i32) -> (i32, i32) {
    %c0_i32 = arith.constant 0 : i32
    %c0_i32_0 = arith.constant 0 : i32
    return %arg0, %c0_i32 : i32, i32
  }
  func.func @transform_1(%arg0: i32) -> (i32, i32) {
    %c0_i32 = arith.constant 0 : i32
    %c0_i32_0 = arith.constant 0 : i32
    %c0_i32_1 = arith.constant 0 : i32
    return %c0_i32, %c0_i32_0 : i32, i32
  }
  func.func @transform_2(%arg0: i32) -> (i32, i32) {
    %c0_i32 = arith.constant 0 : i32
    %c0_i32_0 = arith.constant 0 : i32
    %c0_i32_1 = arith.constant 0 : i32
    return %c0_i32, %c0_i32_0 : i32, i32
  }
  func.func @transform_3(%arg0: i32) -> (i32, i32) {
    %c0_i32 = arith.constant 0 : i32
    %c0_i32_0 = arith.constant 0 : i32
    return %arg0, %c0_i32 : i32, i32
  }
}

module attributes {stable_mosaic.version = 11 : i64} {
  func.func @_linear_kernel(%arg0: i32, %arg1: memref<32x128xbf16, #tpu.memory_space<vmem>>, %arg2: memref<128x128xbf16, #tpu.memory_space<vmem>>, %arg3: memref<1x128xf32, #tpu.memory_space<vmem>>, %arg4: memref<32x128xbf16, #tpu.memory_space<vmem>>) attributes {dimension_semantics = [#tpu.dimension_semantics<parallel>], iteration_bounds = array<i64: 1>, scalar_prefetch = 0 : i64, scratch_operands = 0 : i64, tpu.core_type = #tpu.core_type<tc>, window_params = [{transform_indices = @transform_0, window_bounds = array<i64: 32, 128>}, {pipeline_mode = #tpu.pipeline_mode<synchronous>, transform_indices = @transform_1, window_bounds = array<i64: 128, 128>}, {pipeline_mode = #tpu.pipeline_mode<synchronous>, transform_indices = @transform_2, window_bounds = array<i64: 1, 128>}, {transform_indices = @transform_3, window_bounds = array<i64: 32, 128>}]} {
    %c0 = arith.constant 0 : index
    %c0_0 = arith.constant 0 : index
    %0 = vector.load %arg1[%c0, %c0_0] : memref<32x128xbf16, #tpu.memory_space<vmem>>, vector<32x128xbf16>
    %c0_1 = arith.constant 0 : index
    %c0_2 = arith.constant 0 : index
    %1 = vector.load %arg2[%c0_1, %c0_2] : memref<128x128xbf16, #tpu.memory_space<vmem>>, vector<128x128xbf16>
    %cst = arith.constant dense<0.000000e+00> : vector<32x128xf32>
    %2 = tpu.matmul %0, %1, %cst {dimension_numbers = #tpu.dot_dimension_numbers<[1], [0], [0], [1], [0, 0, 1, 1], [], []>} : vector<32x128xbf16>, vector<128x128xbf16>, vector<32x128xf32> -> vector<32x128xf32>
    %c0_3 = arith.constant 0 : index
    %c0_4 = arith.constant 0 : index
    %3 = vector.load %arg3[%c0_3, %c0_4] : memref<1x128xf32, #tpu.memory_space<vmem>>, vector<1x128xf32>
    %4 = vector.broadcast %3 : vector<1x128xf32> to vector<32x128xf32>
    %5 = arith.addf %2, %4 : vector<32x128xf32>
    %6 = arith.truncf %5 : vector<32x128xf32> to vector<32x128xbf16>
    %c0_5 = arith.constant 0 : index
    %c0_6 = arith.constant 0 : index
    %7 = vector.load %arg4[%c0_5, %c0_6] : memref<32x128xbf16, #tpu.memory_space<vmem>>, vector<32x128xbf16>
    tpu.vector_store %arg4[%c0_5, %c0_6], %6 {strides = array<i32>} : memref<32x128xbf16, #tpu.memory_space<vmem>>, vector<32x128xbf16>,
    return
  }
  func.func @transform_0(%arg0: i32) -> (i32, i32) {
    %c0_i32 = arith.constant 0 : i32
    %c0_i32_0 = arith.constant 0 : i32
    return %arg0, %c0_i32 : i32, i32
  }
  func.func @transform_1(%arg0: i32) -> (i32, i32) {
    %c0_i32 = arith.constant 0 : i32
    %c0_i32_0 = arith.constant 0 : i32
    %c0_i32_1 = arith.constant 0 : i32
    return %c0_i32, %c0_i32_0 : i32, i32
  }
  func.func @transform_2(%arg0: i32) -> (i32, i32) {
    %c0_i32 = arith.constant 0 : i32
    %c0_i32_0 = arith.constant 0 : i32
    %c0_i32_1 = arith.constant 0 : i32
    return %c0_i32, %c0_i32_0 : i32, i32
  }
  func.func @transform_3(%arg0: i32) -> (i32, i32) {
    %c0_i32 = arith.constant 0 : i32
    %c0_i32_0 = arith.constant 0 : i32
    return %arg0, %c0_i32 : i32, i32
  }
}

module attributes {stable_mosaic.version = 11 : i64} {
  func.func @_lstm_seq_kernel(%arg0: i32, %arg1: i32, %arg2: memref<2x16x128xbf16, #tpu.memory_space<vmem>>, %arg3: memref<1x256x512xbf16, #tpu.memory_space<vmem>>, %arg4: memref<1x1x512xf32, #tpu.memory_space<vmem>>, %arg5: memref<1x2x16x128xbf16, #tpu.memory_space<vmem>>, %arg6: memref<16x256xbf16, #tpu.memory_space<vmem>>, %arg7: memref<16x128xf32, #tpu.memory_space<vmem>>) attributes {dimension_semantics = [#tpu.dimension_semantics<parallel>, #tpu.dimension_semantics<arbitrary>], iteration_bounds = array<i64: 1, 1>, scalar_prefetch = 0 : i64, scratch_operands = 2 : i64, tpu.core_type = #tpu.core_type<tc>, window_params = [{transform_indices = @transform_0, window_bounds = array<i64: 2, 16, 128>}, {transform_indices = @transform_1, window_bounds = array<i64: 1, 256, 512>}, {transform_indices = @transform_2, window_bounds = array<i64: 1, 1, 512>}, {transform_indices = @transform_3, window_bounds = array<i64: 1, 2, 16, 128>}]} {
    %c0_i32 = arith.constant 0 : i32
    %0 = arith.cmpi eq, %arg1, %c0_i32 : i32
    %1 = arith.extui %0 : i1 to i32
    %c0_i32_0 = arith.constant 0 : i32
    %2 = arith.cmpi ne, %1, %c0_i32_0 : i32
    scf.if %2 {
      %cst_43 = arith.constant 0.000000e+00 : bf16
      %79 = vector.broadcast %cst_43 : bf16 to vector<16x256xbf16>
      %c0_44 = arith.constant 0 : index
      %c0_45 = arith.constant 0 : index
      %80 = vector.load %arg6[%c0_44, %c0_45] : memref<16x256xbf16, #tpu.memory_space<vmem>>, vector<16x256xbf16>
      tpu.vector_store %arg6[%c0_44, %c0_45], %79 {strides = array<i32>} : memref<16x256xbf16, #tpu.memory_space<vmem>>, vector<16x256xbf16>,
      %cst_46 = arith.constant 0.000000e+00 : f32
      %81 = vector.broadcast %cst_46 : f32 to vector<16x128xf32>
      %c0_47 = arith.constant 0 : index
      %c0_48 = arith.constant 0 : index
      %82 = vector.load %arg7[%c0_47, %c0_48] : memref<16x128xf32, #tpu.memory_space<vmem>>, vector<16x128xf32>
      tpu.vector_store %arg7[%c0_47, %c0_48], %81 {strides = array<i32>} : memref<16x128xf32, #tpu.memory_space<vmem>>, vector<16x128xf32>,
    } else {
    }
    %c0 = arith.constant 0 : index
    %c0_1 = arith.constant 0 : index
    %c0_2 = arith.constant 0 : index
    %3 = vector.load %arg3[%c0, %c0_1, %c0_2] : memref<1x256x512xbf16, #tpu.memory_space<vmem>>, vector<1x256x512xbf16>
    %4 = vector.shape_cast %3 : vector<1x256x512xbf16> to vector<256x512xbf16>
    %c0_3 = arith.constant 0 : index
    %c0_4 = arith.constant 0 : index
    %c0_5 = arith.constant 0 : index
    %5 = vector.load %arg4[%c0_3, %c0_4, %c0_5] : memref<1x1x512xf32, #tpu.memory_space<vmem>>, vector<1x1x512xf32>
    %6 = vector.shape_cast %5 : vector<1x1x512xf32> to vector<1x512xf32>
    %c0_i32_6 = arith.constant 0 : i32
    %c2_i32 = arith.constant 2 : i32
    %7 = arith.muli %c2_i32, %c0_i32_6 : i32
    %c1_i32 = arith.constant 1 : i32
    %8 = arith.subi %c1_i32, %7 : i32
    %9 = arith.muli %arg0, %8 : i32
    %10 = arith.addi %c0_i32_6, %9 : i32
    %11 = arith.index_cast %10 : i32 to index
    %c0_7 = arith.constant 0 : index
    %c0_8 = arith.constant 0 : index
    %12 = vector.load %arg2[%11, %c0_7, %c0_8] : memref<2x16x128xbf16, #tpu.memory_space<vmem>>, vector<1x16x128xbf16>
    %13 = vector.shape_cast %12 : vector<1x16x128xbf16> to vector<16x128xbf16>
    %c0_9 = arith.constant 0 : index
    %c0_10 = arith.constant 0 : index
    %14 = vector.load %arg6[%c0_9, %c0_10] : memref<16x256xbf16, #tpu.memory_space<vmem>>, vector<16x128xbf16>
    tpu.vector_store %arg6[%c0_9, %c0_10], %13 {strides = array<i32>} : memref<16x256xbf16, #tpu.memory_space<vmem>>, vector<16x128xbf16>,
    %c0_11 = arith.constant 0 : index
    %c0_12 = arith.constant 0 : index
    %15 = vector.load %arg6[%c0_11, %c0_12] : memref<16x256xbf16, #tpu.memory_space<vmem>>, vector<16x256xbf16>
    %cst = arith.constant dense<0.000000e+00> : vector<16x512xf32>
    %16 = tpu.matmul %15, %4, %cst {dimension_numbers = #tpu.dot_dimension_numbers<[1], [0], [0], [1], [0, 0, 1, 1], [], []>} : vector<16x256xbf16>, vector<256x512xbf16>, vector<16x512xf32> -> vector<16x512xf32>
    %17 = vector.broadcast %6 : vector<1x512xf32> to vector<16x512xf32>
    %18 = arith.addf %16, %17 : vector<16x512xf32>
    %19 = vector.extract_strided_slice %18 {offsets = [0, 0], sizes = [16, 384], strides = [1, 1]} : vector<16x512xf32> to vector<16x384xf32>
    %20 = arith.negf %19 : vector<16x384xf32>
    %21 = math.exp %20 : vector<16x384xf32>
    %cst_13 = arith.constant 1.000000e+00 : f32
    %22 = vector.broadcast %cst_13 : f32 to vector<16x384xf32>
    %23 = arith.addf %22, %21 : vector<16x384xf32>
    %24 = arith.divf %22, %23 : vector<16x384xf32>
    %25 = vector.extract_strided_slice %24 {offsets = [0, 0], sizes = [16, 128], strides = [1, 1]} : vector<16x384xf32> to vector<16x128xf32>
    %26 = vector.extract_strided_slice %24 {offsets = [0, 128], sizes = [16, 128], strides = [1, 1]} : vector<16x384xf32> to vector<16x128xf32>
    %27 = vector.extract_strided_slice %24 {offsets = [0, 256], sizes = [16, 128], strides = [1, 1]} : vector<16x384xf32> to vector<16x128xf32>
    %28 = vector.extract_strided_slice %18 {offsets = [0, 384], sizes = [16, 128], strides = [1, 1]} : vector<16x512xf32> to vector<16x128xf32>
    %29 = math.tanh %28 : vector<16x128xf32>
    %c0_14 = arith.constant 0 : index
    %c0_15 = arith.constant 0 : index
    %30 = vector.load %arg7[%c0_14, %c0_15] : memref<16x128xf32, #tpu.memory_space<vmem>>, vector<16x128xf32>
    %31 = arith.mulf %26, %30 : vector<16x128xf32>
    %32 = arith.mulf %25, %29 : vector<16x128xf32>
    %33 = arith.addf %31, %32 : vector<16x128xf32>
    %34 = math.tanh %33 : vector<16x128xf32>
    %35 = arith.mulf %27, %34 : vector<16x128xf32>
    %36 = arith.truncf %35 : vector<16x128xf32> to vector<16x128xbf16>
    %c0_16 = arith.constant 0 : index
    %c0_17 = arith.constant 0 : index
    %37 = vector.load %arg7[%c0_16, %c0_17] : memref<16x128xf32, #tpu.memory_space<vmem>>, vector<16x128xf32>
    tpu.vector_store %arg7[%c0_16, %c0_17], %33 {strides = array<i32>} : memref<16x128xf32, #tpu.memory_space<vmem>>, vector<16x128xf32>,
    %c0_18 = arith.constant 0 : index
    %c128 = arith.constant 128 : index
    %38 = vector.load %arg6[%c0_18, %c128] : memref<16x256xbf16, #tpu.memory_space<vmem>>, vector<16x128xbf16>
    tpu.vector_store %arg6[%c0_18, %c128], %36 {strides = array<i32>} : memref<16x256xbf16, #tpu.memory_space<vmem>>, vector<16x128xbf16>,
    %c0_19 = arith.constant 0 : index
    %39 = arith.index_cast %10 : i32 to index
    %c0_20 = arith.constant 0 : index
    %c0_21 = arith.constant 0 : index
    %40 = vector.load %arg5[%c0_19, %39, %c0_20, %c0_21] : memref<1x2x16x128xbf16, #tpu.memory_space<vmem>>, vector<1x1x16x128xbf16>
    %41 = vector.shape_cast %40 : vector<1x1x16x128xbf16> to vector<16x128xbf16>
    %42 = vector.shape_cast %36 : vector<16x128xbf16> to vector<1x1x16x128xbf16>
    tpu.vector_store %arg5[%c0_19, %39, %c0_20, %c0_21], %42 {strides = array<i32>} : memref<1x2x16x128xbf16, #tpu.memory_space<vmem>>, vector<1x1x16x128xbf16>,
    %c1_i32_22 = arith.constant 1 : i32
    %c2_i32_23 = arith.constant 2 : i32
    %43 = arith.muli %c2_i32_23, %c1_i32_22 : i32
    %c1_i32_24 = arith.constant 1 : i32
    %44 = arith.subi %c1_i32_24, %43 : i32
    %45 = arith.muli %arg0, %44 : i32
    %46 = arith.addi %c1_i32_22, %45 : i32
    %47 = arith.index_cast %46 : i32 to index
    %c0_25 = arith.constant 0 : index
    %c0_26 = arith.constant 0 : index
    %48 = vector.load %arg2[%47, %c0_25, %c0_26] : memref<2x16x128xbf16, #tpu.memory_space<vmem>>, vector<1x16x128xbf16>
    %49 = vector.shape_cast %48 : vector<1x16x128xbf16> to vector<16x128xbf16>
    %c0_27 = arith.constant 0 : index
    %c0_28 = arith.constant 0 : index
    %50 = vector.load %arg6[%c0_27, %c0_28] : memref<16x256xbf16, #tpu.memory_space<vmem>>, vector<16x128xbf16>
    tpu.vector_store %arg6[%c0_27, %c0_28], %49 {strides = array<i32>} : memref<16x256xbf16, #tpu.memory_space<vmem>>, vector<16x128xbf16>,
    %c0_29 = arith.constant 0 : index
    %c0_30 = arith.constant 0 : index
    %51 = vector.load %arg6[%c0_29, %c0_30] : memref<16x256xbf16, #tpu.memory_space<vmem>>, vector<16x256xbf16>
    %cst_31 = arith.constant dense<0.000000e+00> : vector<16x512xf32>
    %52 = tpu.matmul %51, %4, %cst_31 {dimension_numbers = #tpu.dot_dimension_numbers<[1], [0], [0], [1], [0, 0, 1, 1], [], []>} : vector<16x256xbf16>, vector<256x512xbf16>, vector<16x512xf32> -> vector<16x512xf32>
    %53 = vector.broadcast %6 : vector<1x512xf32> to vector<16x512xf32>
    %54 = arith.addf %52, %53 : vector<16x512xf32>
    %55 = vector.extract_strided_slice %54 {offsets = [0, 0], sizes = [16, 384], strides = [1, 1]} : vector<16x512xf32> to vector<16x384xf32>
    %56 = arith.negf %55 : vector<16x384xf32>
    %57 = math.exp %56 : vector<16x384xf32>
    %cst_32 = arith.constant 1.000000e+00 : f32
    %58 = vector.broadcast %cst_32 : f32 to vector<16x384xf32>
    %59 = arith.addf %58, %57 : vector<16x384xf32>
    %60 = arith.divf %58, %59 : vector<16x384xf32>
    %61 = vector.extract_strided_slice %60 {offsets = [0, 0], sizes = [16, 128], strides = [1, 1]} : vector<16x384xf32> to vector<16x128xf32>
    %62 = vector.extract_strided_slice %60 {offsets = [0, 128], sizes = [16, 128], strides = [1, 1]} : vector<16x384xf32> to vector<16x128xf32>
    %63 = vector.extract_strided_slice %60 {offsets = [0, 256], sizes = [16, 128], strides = [1, 1]} : vector<16x384xf32> to vector<16x128xf32>
    %64 = vector.extract_strided_slice %54 {offsets = [0, 384], sizes = [16, 128], strides = [1, 1]} : vector<16x512xf32> to vector<16x128xf32>
    %65 = math.tanh %64 : vector<16x128xf32>
    %c0_33 = arith.constant 0 : index
    %c0_34 = arith.constant 0 : index
    %66 = vector.load %arg7[%c0_33, %c0_34] : memref<16x128xf32, #tpu.memory_space<vmem>>, vector<16x128xf32>
    %67 = arith.mulf %62, %66 : vector<16x128xf32>
    %68 = arith.mulf %61, %65 : vector<16x128xf32>
    %69 = arith.addf %67, %68 : vector<16x128xf32>
    %70 = math.tanh %69 : vector<16x128xf32>
    %71 = arith.mulf %63, %70 : vector<16x128xf32>
    %72 = arith.truncf %71 : vector<16x128xf32> to vector<16x128xbf16>
    %c0_35 = arith.constant 0 : index
    %c0_36 = arith.constant 0 : index
    %73 = vector.load %arg7[%c0_35, %c0_36] : memref<16x128xf32, #tpu.memory_space<vmem>>, vector<16x128xf32>
    tpu.vector_store %arg7[%c0_35, %c0_36], %69 {strides = array<i32>} : memref<16x128xf32, #tpu.memory_space<vmem>>, vector<16x128xf32>,
    %c0_37 = arith.constant 0 : index
    %c128_38 = arith.constant 128 : index
    %74 = vector.load %arg6[%c0_37, %c128_38] : memref<16x256xbf16, #tpu.memory_space<vmem>>, vector<16x128xbf16>
    tpu.vector_store %arg6[%c0_37, %c128_38], %72 {strides = array<i32>} : memref<16x256xbf16, #tpu.memory_space<vmem>>, vector<16x128xbf16>,
    %c0_39 = arith.constant 0 : index
    %75 = arith.index_cast %46 : i32 to index
    %c0_40 = arith.constant 0 : index
    %c0_41 = arith.constant 0 : index
    %76 = vector.load %arg5[%c0_39, %75, %c0_40, %c0_41] : memref<1x2x16x128xbf16, #tpu.memory_space<vmem>>, vector<1x1x16x128xbf16>
    %77 = vector.shape_cast %76 : vector<1x1x16x128xbf16> to vector<16x128xbf16>
    %78 = vector.shape_cast %72 : vector<16x128xbf16> to vector<1x1x16x128xbf16>
    tpu.vector_store %arg5[%c0_39, %75, %c0_40, %c0_41], %78 {strides = array<i32>} : memref<1x2x16x128xbf16, #tpu.memory_space<vmem>>, vector<1x1x16x128xbf16>,
    %c2_i32_42 = arith.constant 2 : i32
    return
  }
  func.func @transform_0(%arg0: i32, %arg1: i32) -> (i32, i32, i32) {
    %c2_i32 = arith.constant 2 : i32
    %0 = arith.muli %c2_i32, %arg1 : i32
    %c0_i32 = arith.constant 0 : i32
    %1 = arith.subi %c0_i32, %0 : i32
    %2 = arith.muli %arg0, %1 : i32
    %3 = arith.addi %arg1, %2 : i32
    %c0_i32_0 = arith.constant 0 : i32
    %c0_i32_1 = arith.constant 0 : i32
    %c0_i32_2 = arith.constant 0 : i32
    return %3, %c0_i32_0, %c0_i32_1 : i32, i32, i32
  }
  func.func @transform_1(%arg0: i32, %arg1: i32) -> (i32, i32, i32) {
    %c0_i32 = arith.constant 0 : i32
    %c0_i32_0 = arith.constant 0 : i32
    %c0_i32_1 = arith.constant 0 : i32
    return %arg0, %c0_i32, %c0_i32_0 : i32, i32, i32
  }
  func.func @transform_2(%arg0: i32, %arg1: i32) -> (i32, i32, i32) {
    %c0_i32 = arith.constant 0 : i32
    %c0_i32_0 = arith.constant 0 : i32
    %c0_i32_1 = arith.constant 0 : i32
    return %arg0, %c0_i32, %c0_i32_0 : i32, i32, i32
  }
  func.func @transform_3(%arg0: i32, %arg1: i32) -> (i32, i32, i32, i32) {
    %c2_i32 = arith.constant 2 : i32
    %0 = arith.muli %c2_i32, %arg1 : i32
    %c0_i32 = arith.constant 0 : i32
    %1 = arith.subi %c0_i32, %0 : i32
    %2 = arith.muli %arg0, %1 : i32
    %3 = arith.addi %arg1, %2 : i32
    %c0_i32_0 = arith.constant 0 : i32
    %c0_i32_1 = arith.constant 0 : i32
    %c0_i32_2 = arith.constant 0 : i32
    return %arg0, %3, %c0_i32_0, %c0_i32_1 : i32, i32, i32, i32
  }
}

module attributes {stable_mosaic.version = 11 : i64} {
  func.func @_lstm_seq_kernel(%arg0: i32, %arg1: i32, %arg2: memref<5x16x128xbf16, #tpu.memory_space<vmem>>, %arg3: memref<1x256x512xbf16, #tpu.memory_space<vmem>>, %arg4: memref<1x1x512xf32, #tpu.memory_space<vmem>>, %arg5: memref<1x5x16x128xbf16, #tpu.memory_space<vmem>>, %arg6: memref<16x256xbf16, #tpu.memory_space<vmem>>, %arg7: memref<16x128xf32, #tpu.memory_space<vmem>>) attributes {dimension_semantics = [#tpu.dimension_semantics<parallel>, #tpu.dimension_semantics<arbitrary>], iteration_bounds = array<i64: 1, 1>, scalar_prefetch = 0 : i64, scratch_operands = 2 : i64, tpu.core_type = #tpu.core_type<tc>, window_params = [{transform_indices = @transform_0, window_bounds = array<i64: 5, 16, 128>}, {transform_indices = @transform_1, window_bounds = array<i64: 1, 256, 512>}, {transform_indices = @transform_2, window_bounds = array<i64: 1, 1, 512>}, {transform_indices = @transform_3, window_bounds = array<i64: 1, 5, 16, 128>}]} {
    %c0_i32 = arith.constant 0 : i32
    %0 = arith.cmpi eq, %arg1, %c0_i32 : i32
    %1 = arith.extui %0 : i1 to i32
    %c0_i32_0 = arith.constant 0 : i32
    %2 = arith.cmpi ne, %1, %c0_i32_0 : i32
    scf.if %2 {
      %cst_100 = arith.constant 0.000000e+00 : bf16
      %187 = vector.broadcast %cst_100 : bf16 to vector<16x256xbf16>
      %c0_101 = arith.constant 0 : index
      %c0_102 = arith.constant 0 : index
      %188 = vector.load %arg6[%c0_101, %c0_102] : memref<16x256xbf16, #tpu.memory_space<vmem>>, vector<16x256xbf16>
      tpu.vector_store %arg6[%c0_101, %c0_102], %187 {strides = array<i32>} : memref<16x256xbf16, #tpu.memory_space<vmem>>, vector<16x256xbf16>,
      %cst_103 = arith.constant 0.000000e+00 : f32
      %189 = vector.broadcast %cst_103 : f32 to vector<16x128xf32>
      %c0_104 = arith.constant 0 : index
      %c0_105 = arith.constant 0 : index
      %190 = vector.load %arg7[%c0_104, %c0_105] : memref<16x128xf32, #tpu.memory_space<vmem>>, vector<16x128xf32>
      tpu.vector_store %arg7[%c0_104, %c0_105], %189 {strides = array<i32>} : memref<16x128xf32, #tpu.memory_space<vmem>>, vector<16x128xf32>,
    } else {
    }
    %c0 = arith.constant 0 : index
    %c0_1 = arith.constant 0 : index
    %c0_2 = arith.constant 0 : index
    %3 = vector.load %arg3[%c0, %c0_1, %c0_2] : memref<1x256x512xbf16, #tpu.memory_space<vmem>>, vector<1x256x512xbf16>
    %4 = vector.shape_cast %3 : vector<1x256x512xbf16> to vector<256x512xbf16>
    %c0_3 = arith.constant 0 : index
    %c0_4 = arith.constant 0 : index
    %c0_5 = arith.constant 0 : index
    %5 = vector.load %arg4[%c0_3, %c0_4, %c0_5] : memref<1x1x512xf32, #tpu.memory_space<vmem>>, vector<1x1x512xf32>
    %6 = vector.shape_cast %5 : vector<1x1x512xf32> to vector<1x512xf32>
    %c0_i32_6 = arith.constant 0 : i32
    %c2_i32 = arith.constant 2 : i32
    %7 = arith.muli %c2_i32, %c0_i32_6 : i32
    %c4_i32 = arith.constant 4 : i32
    %8 = arith.subi %c4_i32, %7 : i32
    %9 = arith.muli %arg0, %8 : i32
    %10 = arith.addi %c0_i32_6, %9 : i32
    %11 = arith.index_cast %10 : i32 to index
    %c0_7 = arith.constant 0 : index
    %c0_8 = arith.constant 0 : index
    %12 = vector.load %arg2[%11, %c0_7, %c0_8] : memref<5x16x128xbf16, #tpu.memory_space<vmem>>, vector<1x16x128xbf16>
    %13 = vector.shape_cast %12 : vector<1x16x128xbf16> to vector<16x128xbf16>
    %c0_9 = arith.constant 0 : index
    %c0_10 = arith.constant 0 : index
    %14 = vector.load %arg6[%c0_9, %c0_10] : memref<16x256xbf16, #tpu.memory_space<vmem>>, vector<16x128xbf16>
    tpu.vector_store %arg6[%c0_9, %c0_10], %13 {strides = array<i32>} : memref<16x256xbf16, #tpu.memory_space<vmem>>, vector<16x128xbf16>,
    %c0_11 = arith.constant 0 : index
    %c0_12 = arith.constant 0 : index
    %15 = vector.load %arg6[%c0_11, %c0_12] : memref<16x256xbf16, #tpu.memory_space<vmem>>, vector<16x256xbf16>
    %cst = arith.constant dense<0.000000e+00> : vector<16x512xf32>
    %16 = tpu.matmul %15, %4, %cst {dimension_numbers = #tpu.dot_dimension_numbers<[1], [0], [0], [1], [0, 0, 1, 1], [], []>} : vector<16x256xbf16>, vector<256x512xbf16>, vector<16x512xf32> -> vector<16x512xf32>
    %17 = vector.broadcast %6 : vector<1x512xf32> to vector<16x512xf32>
    %18 = arith.addf %16, %17 : vector<16x512xf32>
    %19 = vector.extract_strided_slice %18 {offsets = [0, 0], sizes = [16, 384], strides = [1, 1]} : vector<16x512xf32> to vector<16x384xf32>
    %20 = arith.negf %19 : vector<16x384xf32>
    %21 = math.exp %20 : vector<16x384xf32>
    %cst_13 = arith.constant 1.000000e+00 : f32
    %22 = vector.broadcast %cst_13 : f32 to vector<16x384xf32>
    %23 = arith.addf %22, %21 : vector<16x384xf32>
    %24 = arith.divf %22, %23 : vector<16x384xf32>
    %25 = vector.extract_strided_slice %24 {offsets = [0, 0], sizes = [16, 128], strides = [1, 1]} : vector<16x384xf32> to vector<16x128xf32>
    %26 = vector.extract_strided_slice %24 {offsets = [0, 128], sizes = [16, 128], strides = [1, 1]} : vector<16x384xf32> to vector<16x128xf32>
    %27 = vector.extract_strided_slice %24 {offsets = [0, 256], sizes = [16, 128], strides = [1, 1]} : vector<16x384xf32> to vector<16x128xf32>
    %28 = vector.extract_strided_slice %18 {offsets = [0, 384], sizes = [16, 128], strides = [1, 1]} : vector<16x512xf32> to vector<16x128xf32>
    %29 = math.tanh %28 : vector<16x128xf32>
    %c0_14 = arith.constant 0 : index
    %c0_15 = arith.constant 0 : index
    %30 = vector.load %arg7[%c0_14, %c0_15] : memref<16x128xf32, #tpu.memory_space<vmem>>, vector<16x128xf32>
    %31 = arith.mulf %26, %30 : vector<16x128xf32>
    %32 = arith.mulf %25, %29 : vector<16x128xf32>
    %33 = arith.addf %31, %32 : vector<16x128xf32>
    %34 = math.tanh %33 : vector<16x128xf32>
    %35 = arith.mulf %27, %34 : vector<16x128xf32>
    %36 = arith.truncf %35 : vector<16x128xf32> to vector<16x128xbf16>
    %c0_16 = arith.constant 0 : index
    %c0_17 = arith.constant 0 : index
    %37 = vector.load %arg7[%c0_16, %c0_17] : memref<16x128xf32, #tpu.memory_space<vmem>>, vector<16x128xf32>
    tpu.vector_store %arg7[%c0_16, %c0_17], %33 {strides = array<i32>} : memref<16x128xf32, #tpu.memory_space<vmem>>, vector<16x128xf32>,
    %c0_18 = arith.constant 0 : index
    %c128 = arith.constant 128 : index
    %38 = vector.load %arg6[%c0_18, %c128] : memref<16x256xbf16, #tpu.memory_space<vmem>>, vector<16x128xbf16>
    tpu.vector_store %arg6[%c0_18, %c128], %36 {strides = array<i32>} : memref<16x256xbf16, #tpu.memory_space<vmem>>, vector<16x128xbf16>,
    %c0_19 = arith.constant 0 : index
    %39 = arith.index_cast %10 : i32 to index
    %c0_20 = arith.constant 0 : index
    %c0_21 = arith.constant 0 : index
    %40 = vector.load %arg5[%c0_19, %39, %c0_20, %c0_21] : memref<1x5x16x128xbf16, #tpu.memory_space<vmem>>, vector<1x1x16x128xbf16>
    %41 = vector.shape_cast %40 : vector<1x1x16x128xbf16> to vector<16x128xbf16>
    %42 = vector.shape_cast %36 : vector<16x128xbf16> to vector<1x1x16x128xbf16>
    tpu.vector_store %arg5[%c0_19, %39, %c0_20, %c0_21], %42 {strides = array<i32>} : memref<1x5x16x128xbf16, #tpu.memory_space<vmem>>, vector<1x1x16x128xbf16>,
    %c1_i32 = arith.constant 1 : i32
    %c2_i32_22 = arith.constant 2 : i32
    %43 = arith.muli %c2_i32_22, %c1_i32 : i32
    %c4_i32_23 = arith.constant 4 : i32
    %44 = arith.subi %c4_i32_23, %43 : i32
    %45 = arith.muli %arg0, %44 : i32
    %46 = arith.addi %c1_i32, %45 : i32
    %47 = arith.index_cast %46 : i32 to index
    %c0_24 = arith.constant 0 : index
    %c0_25 = arith.constant 0 : index
    %48 = vector.load %arg2[%47, %c0_24, %c0_25] : memref<5x16x128xbf16, #tpu.memory_space<vmem>>, vector<1x16x128xbf16>
    %49 = vector.shape_cast %48 : vector<1x16x128xbf16> to vector<16x128xbf16>
    %c0_26 = arith.constant 0 : index
    %c0_27 = arith.constant 0 : index
    %50 = vector.load %arg6[%c0_26, %c0_27] : memref<16x256xbf16, #tpu.memory_space<vmem>>, vector<16x128xbf16>
    tpu.vector_store %arg6[%c0_26, %c0_27], %49 {strides = array<i32>} : memref<16x256xbf16, #tpu.memory_space<vmem>>, vector<16x128xbf16>,
    %c0_28 = arith.constant 0 : index
    %c0_29 = arith.constant 0 : index
    %51 = vector.load %arg6[%c0_28, %c0_29] : memref<16x256xbf16, #tpu.memory_space<vmem>>, vector<16x256xbf16>
    %cst_30 = arith.constant dense<0.000000e+00> : vector<16x512xf32>
    %52 = tpu.matmul %51, %4, %cst_30 {dimension_numbers = #tpu.dot_dimension_numbers<[1], [0], [0], [1], [0, 0, 1, 1], [], []>} : vector<16x256xbf16>, vector<256x512xbf16>, vector<16x512xf32> -> vector<16x512xf32>
    %53 = vector.broadcast %6 : vector<1x512xf32> to vector<16x512xf32>
    %54 = arith.addf %52, %53 : vector<16x512xf32>
    %55 = vector.extract_strided_slice %54 {offsets = [0, 0], sizes = [16, 384], strides = [1, 1]} : vector<16x512xf32> to vector<16x384xf32>
    %56 = arith.negf %55 : vector<16x384xf32>
    %57 = math.exp %56 : vector<16x384xf32>
    %cst_31 = arith.constant 1.000000e+00 : f32
    %58 = vector.broadcast %cst_31 : f32 to vector<16x384xf32>
    %59 = arith.addf %58, %57 : vector<16x384xf32>
    %60 = arith.divf %58, %59 : vector<16x384xf32>
    %61 = vector.extract_strided_slice %60 {offsets = [0, 0], sizes = [16, 128], strides = [1, 1]} : vector<16x384xf32> to vector<16x128xf32>
    %62 = vector.extract_strided_slice %60 {offsets = [0, 128], sizes = [16, 128], strides = [1, 1]} : vector<16x384xf32> to vector<16x128xf32>
    %63 = vector.extract_strided_slice %60 {offsets = [0, 256], sizes = [16, 128], strides = [1, 1]} : vector<16x384xf32> to vector<16x128xf32>
    %64 = vector.extract_strided_slice %54 {offsets = [0, 384], sizes = [16, 128], strides = [1, 1]} : vector<16x512xf32> to vector<16x128xf32>
    %65 = math.tanh %64 : vector<16x128xf32>
    %c0_32 = arith.constant 0 : index
    %c0_33 = arith.constant 0 : index
    %66 = vector.load %arg7[%c0_32, %c0_33] : memref<16x128xf32, #tpu.memory_space<vmem>>, vector<16x128xf32>
    %67 = arith.mulf %62, %66 : vector<16x128xf32>
    %68 = arith.mulf %61, %65 : vector<16x128xf32>
    %69 = arith.addf %67, %68 : vector<16x128xf32>
    %70 = math.tanh %69 : vector<16x128xf32>
    %71 = arith.mulf %63, %70 : vector<16x128xf32>
    %72 = arith.truncf %71 : vector<16x128xf32> to vector<16x128xbf16>
    %c0_34 = arith.constant 0 : index
    %c0_35 = arith.constant 0 : index
    %73 = vector.load %arg7[%c0_34, %c0_35] : memref<16x128xf32, #tpu.memory_space<vmem>>, vector<16x128xf32>
    tpu.vector_store %arg7[%c0_34, %c0_35], %69 {strides = array<i32>} : memref<16x128xf32, #tpu.memory_space<vmem>>, vector<16x128xf32>,
    %c0_36 = arith.constant 0 : index
    %c128_37 = arith.constant 128 : index
    %74 = vector.load %arg6[%c0_36, %c128_37] : memref<16x256xbf16, #tpu.memory_space<vmem>>, vector<16x128xbf16>
    tpu.vector_store %arg6[%c0_36, %c128_37], %72 {strides = array<i32>} : memref<16x256xbf16, #tpu.memory_space<vmem>>, vector<16x128xbf16>,
    %c0_38 = arith.constant 0 : index
    %75 = arith.index_cast %46 : i32 to index
    %c0_39 = arith.constant 0 : index
    %c0_40 = arith.constant 0 : index
    %76 = vector.load %arg5[%c0_38, %75, %c0_39, %c0_40] : memref<1x5x16x128xbf16, #tpu.memory_space<vmem>>, vector<1x1x16x128xbf16>
    %77 = vector.shape_cast %76 : vector<1x1x16x128xbf16> to vector<16x128xbf16>
    %78 = vector.shape_cast %72 : vector<16x128xbf16> to vector<1x1x16x128xbf16>
    tpu.vector_store %arg5[%c0_38, %75, %c0_39, %c0_40], %78 {strides = array<i32>} : memref<1x5x16x128xbf16, #tpu.memory_space<vmem>>, vector<1x1x16x128xbf16>,
    %c2_i32_41 = arith.constant 2 : i32
    %c2_i32_42 = arith.constant 2 : i32
    %79 = arith.muli %c2_i32_42, %c2_i32_41 : i32
    %c4_i32_43 = arith.constant 4 : i32
    %80 = arith.subi %c4_i32_43, %79 : i32
    %81 = arith.muli %arg0, %80 : i32
    %82 = arith.addi %c2_i32_41, %81 : i32
    %83 = arith.index_cast %82 : i32 to index
    %c0_44 = arith.constant 0 : index
    %c0_45 = arith.constant 0 : index
    %84 = vector.load %arg2[%83, %c0_44, %c0_45] : memref<5x16x128xbf16, #tpu.memory_space<vmem>>, vector<1x16x128xbf16>
    %85 = vector.shape_cast %84 : vector<1x16x128xbf16> to vector<16x128xbf16>
    %c0_46 = arith.constant 0 : index
    %c0_47 = arith.constant 0 : index
    %86 = vector.load %arg6[%c0_46, %c0_47] : memref<16x256xbf16, #tpu.memory_space<vmem>>, vector<16x128xbf16>
    tpu.vector_store %arg6[%c0_46, %c0_47], %85 {strides = array<i32>} : memref<16x256xbf16, #tpu.memory_space<vmem>>, vector<16x128xbf16>,
    %c0_48 = arith.constant 0 : index
    %c0_49 = arith.constant 0 : index
    %87 = vector.load %arg6[%c0_48, %c0_49] : memref<16x256xbf16, #tpu.memory_space<vmem>>, vector<16x256xbf16>
    %cst_50 = arith.constant dense<0.000000e+00> : vector<16x512xf32>
    %88 = tpu.matmul %87, %4, %cst_50 {dimension_numbers = #tpu.dot_dimension_numbers<[1], [0], [0], [1], [0, 0, 1, 1], [], []>} : vector<16x256xbf16>, vector<256x512xbf16>, vector<16x512xf32> -> vector<16x512xf32>
    %89 = vector.broadcast %6 : vector<1x512xf32> to vector<16x512xf32>
    %90 = arith.addf %88, %89 : vector<16x512xf32>
    %91 = vector.extract_strided_slice %90 {offsets = [0, 0], sizes = [16, 384], strides = [1, 1]} : vector<16x512xf32> to vector<16x384xf32>
    %92 = arith.negf %91 : vector<16x384xf32>
    %93 = math.exp %92 : vector<16x384xf32>
    %cst_51 = arith.constant 1.000000e+00 : f32
    %94 = vector.broadcast %cst_51 : f32 to vector<16x384xf32>
    %95 = arith.addf %94, %93 : vector<16x384xf32>
    %96 = arith.divf %94, %95 : vector<16x384xf32>
    %97 = vector.extract_strided_slice %96 {offsets = [0, 0], sizes = [16, 128], strides = [1, 1]} : vector<16x384xf32> to vector<16x128xf32>
    %98 = vector.extract_strided_slice %96 {offsets = [0, 128], sizes = [16, 128], strides = [1, 1]} : vector<16x384xf32> to vector<16x128xf32>
    %99 = vector.extract_strided_slice %96 {offsets = [0, 256], sizes = [16, 128], strides = [1, 1]} : vector<16x384xf32> to vector<16x128xf32>
    %100 = vector.extract_strided_slice %90 {offsets = [0, 384], sizes = [16, 128], strides = [1, 1]} : vector<16x512xf32> to vector<16x128xf32>
    %101 = math.tanh %100 : vector<16x128xf32>
    %c0_52 = arith.constant 0 : index
    %c0_53 = arith.constant 0 : index
    %102 = vector.load %arg7[%c0_52, %c0_53] : memref<16x128xf32, #tpu.memory_space<vmem>>, vector<16x128xf32>
    %103 = arith.mulf %98, %102 : vector<16x128xf32>
    %104 = arith.mulf %97, %101 : vector<16x128xf32>
    %105 = arith.addf %103, %104 : vector<16x128xf32>
    %106 = math.tanh %105 : vector<16x128xf32>
    %107 = arith.mulf %99, %106 : vector<16x128xf32>
    %108 = arith.truncf %107 : vector<16x128xf32> to vector<16x128xbf16>
    %c0_54 = arith.constant 0 : index
    %c0_55 = arith.constant 0 : index
    %109 = vector.load %arg7[%c0_54, %c0_55] : memref<16x128xf32, #tpu.memory_space<vmem>>, vector<16x128xf32>
    tpu.vector_store %arg7[%c0_54, %c0_55], %105 {strides = array<i32>} : memref<16x128xf32, #tpu.memory_space<vmem>>, vector<16x128xf32>,
    %c0_56 = arith.constant 0 : index
    %c128_57 = arith.constant 128 : index
    %110 = vector.load %arg6[%c0_56, %c128_57] : memref<16x256xbf16, #tpu.memory_space<vmem>>, vector<16x128xbf16>
    tpu.vector_store %arg6[%c0_56, %c128_57], %108 {strides = array<i32>} : memref<16x256xbf16, #tpu.memory_space<vmem>>, vector<16x128xbf16>,
    %c0_58 = arith.constant 0 : index
    %111 = arith.index_cast %82 : i32 to index
    %c0_59 = arith.constant 0 : index
    %c0_60 = arith.constant 0 : index
    %112 = vector.load %arg5[%c0_58, %111, %c0_59, %c0_60] : memref<1x5x16x128xbf16, #tpu.memory_space<vmem>>, vector<1x1x16x128xbf16>
    %113 = vector.shape_cast %112 : vector<1x1x16x128xbf16> to vector<16x128xbf16>
    %114 = vector.shape_cast %108 : vector<16x128xbf16> to vector<1x1x16x128xbf16>
    tpu.vector_store %arg5[%c0_58, %111, %c0_59, %c0_60], %114 {strides = array<i32>} : memref<1x5x16x128xbf16, #tpu.memory_space<vmem>>, vector<1x1x16x128xbf16>,
    %c3_i32 = arith.constant 3 : i32
    %c2_i32_61 = arith.constant 2 : i32
    %115 = arith.muli %c2_i32_61, %c3_i32 : i32
    %c4_i32_62 = arith.constant 4 : i32
    %116 = arith.subi %c4_i32_62, %115 : i32
    %117 = arith.muli %arg0, %116 : i32
    %118 = arith.addi %c3_i32, %117 : i32
    %119 = arith.index_cast %118 : i32 to index
    %c0_63 = arith.constant 0 : index
    %c0_64 = arith.constant 0 : index
    %120 = vector.load %arg2[%119, %c0_63, %c0_64] : memref<5x16x128xbf16, #tpu.memory_space<vmem>>, vector<1x16x128xbf16>
    %121 = vector.shape_cast %120 : vector<1x16x128xbf16> to vector<16x128xbf16>
    %c0_65 = arith.constant 0 : index
    %c0_66 = arith.constant 0 : index
    %122 = vector.load %arg6[%c0_65, %c0_66] : memref<16x256xbf16, #tpu.memory_space<vmem>>, vector<16x128xbf16>
    tpu.vector_store %arg6[%c0_65, %c0_66], %121 {strides = array<i32>} : memref<16x256xbf16, #tpu.memory_space<vmem>>, vector<16x128xbf16>,
    %c0_67 = arith.constant 0 : index
    %c0_68 = arith.constant 0 : index
    %123 = vector.load %arg6[%c0_67, %c0_68] : memref<16x256xbf16, #tpu.memory_space<vmem>>, vector<16x256xbf16>
    %cst_69 = arith.constant dense<0.000000e+00> : vector<16x512xf32>
    %124 = tpu.matmul %123, %4, %cst_69 {dimension_numbers = #tpu.dot_dimension_numbers<[1], [0], [0], [1], [0, 0, 1, 1], [], []>} : vector<16x256xbf16>, vector<256x512xbf16>, vector<16x512xf32> -> vector<16x512xf32>
    %125 = vector.broadcast %6 : vector<1x512xf32> to vector<16x512xf32>
    %126 = arith.addf %124, %125 : vector<16x512xf32>
    %127 = vector.extract_strided_slice %126 {offsets = [0, 0], sizes = [16, 384], strides = [1, 1]} : vector<16x512xf32> to vector<16x384xf32>
    %128 = arith.negf %127 : vector<16x384xf32>
    %129 = math.exp %128 : vector<16x384xf32>
    %cst_70 = arith.constant 1.000000e+00 : f32
    %130 = vector.broadcast %cst_70 : f32 to vector<16x384xf32>
    %131 = arith.addf %130, %129 : vector<16x384xf32>
    %132 = arith.divf %130, %131 : vector<16x384xf32>
    %133 = vector.extract_strided_slice %132 {offsets = [0, 0], sizes = [16, 128], strides = [1, 1]} : vector<16x384xf32> to vector<16x128xf32>
    %134 = vector.extract_strided_slice %132 {offsets = [0, 128], sizes = [16, 128], strides = [1, 1]} : vector<16x384xf32> to vector<16x128xf32>
    %135 = vector.extract_strided_slice %132 {offsets = [0, 256], sizes = [16, 128], strides = [1, 1]} : vector<16x384xf32> to vector<16x128xf32>
    %136 = vector.extract_strided_slice %126 {offsets = [0, 384], sizes = [16, 128], strides = [1, 1]} : vector<16x512xf32> to vector<16x128xf32>
    %137 = math.tanh %136 : vector<16x128xf32>
    %c0_71 = arith.constant 0 : index
    %c0_72 = arith.constant 0 : index
    %138 = vector.load %arg7[%c0_71, %c0_72] : memref<16x128xf32, #tpu.memory_space<vmem>>, vector<16x128xf32>
    %139 = arith.mulf %134, %138 : vector<16x128xf32>
    %140 = arith.mulf %133, %137 : vector<16x128xf32>
    %141 = arith.addf %139, %140 : vector<16x128xf32>
    %142 = math.tanh %141 : vector<16x128xf32>
    %143 = arith.mulf %135, %142 : vector<16x128xf32>
    %144 = arith.truncf %143 : vector<16x128xf32> to vector<16x128xbf16>
    %c0_73 = arith.constant 0 : index
    %c0_74 = arith.constant 0 : index
    %145 = vector.load %arg7[%c0_73, %c0_74] : memref<16x128xf32, #tpu.memory_space<vmem>>, vector<16x128xf32>
    tpu.vector_store %arg7[%c0_73, %c0_74], %141 {strides = array<i32>} : memref<16x128xf32, #tpu.memory_space<vmem>>, vector<16x128xf32>,
    %c0_75 = arith.constant 0 : index
    %c128_76 = arith.constant 128 : index
    %146 = vector.load %arg6[%c0_75, %c128_76] : memref<16x256xbf16, #tpu.memory_space<vmem>>, vector<16x128xbf16>
    tpu.vector_store %arg6[%c0_75, %c128_76], %144 {strides = array<i32>} : memref<16x256xbf16, #tpu.memory_space<vmem>>, vector<16x128xbf16>,
    %c0_77 = arith.constant 0 : index
    %147 = arith.index_cast %118 : i32 to index
    %c0_78 = arith.constant 0 : index
    %c0_79 = arith.constant 0 : index
    %148 = vector.load %arg5[%c0_77, %147, %c0_78, %c0_79] : memref<1x5x16x128xbf16, #tpu.memory_space<vmem>>, vector<1x1x16x128xbf16>
    %149 = vector.shape_cast %148 : vector<1x1x16x128xbf16> to vector<16x128xbf16>
    %150 = vector.shape_cast %144 : vector<16x128xbf16> to vector<1x1x16x128xbf16>
    tpu.vector_store %arg5[%c0_77, %147, %c0_78, %c0_79], %150 {strides = array<i32>} : memref<1x5x16x128xbf16, #tpu.memory_space<vmem>>, vector<1x1x16x128xbf16>,
    %c4_i32_80 = arith.constant 4 : i32
    %c2_i32_81 = arith.constant 2 : i32
    %151 = arith.muli %c2_i32_81, %c4_i32_80 : i32
    %c4_i32_82 = arith.constant 4 : i32
    %152 = arith.subi %c4_i32_82, %151 : i32
    %153 = arith.muli %arg0, %152 : i32
    %154 = arith.addi %c4_i32_80, %153 : i32
    %155 = arith.index_cast %154 : i32 to index
    %c0_83 = arith.constant 0 : index
    %c0_84 = arith.constant 0 : index
    %156 = vector.load %arg2[%155, %c0_83, %c0_84] : memref<5x16x128xbf16, #tpu.memory_space<vmem>>, vector<1x16x128xbf16>
    %157 = vector.shape_cast %156 : vector<1x16x128xbf16> to vector<16x128xbf16>
    %c0_85 = arith.constant 0 : index
    %c0_86 = arith.constant 0 : index
    %158 = vector.load %arg6[%c0_85, %c0_86] : memref<16x256xbf16, #tpu.memory_space<vmem>>, vector<16x128xbf16>
    tpu.vector_store %arg6[%c0_85, %c0_86], %157 {strides = array<i32>} : memref<16x256xbf16, #tpu.memory_space<vmem>>, vector<16x128xbf16>,
    %c0_87 = arith.constant 0 : index
    %c0_88 = arith.constant 0 : index
    %159 = vector.load %arg6[%c0_87, %c0_88] : memref<16x256xbf16, #tpu.memory_space<vmem>>, vector<16x256xbf16>
    %cst_89 = arith.constant dense<0.000000e+00> : vector<16x512xf32>
    %160 = tpu.matmul %159, %4, %cst_89 {dimension_numbers = #tpu.dot_dimension_numbers<[1], [0], [0], [1], [0, 0, 1, 1], [], []>} : vector<16x256xbf16>, vector<256x512xbf16>, vector<16x512xf32> -> vector<16x512xf32>
    %161 = vector.broadcast %6 : vector<1x512xf32> to vector<16x512xf32>
    %162 = arith.addf %160, %161 : vector<16x512xf32>
    %163 = vector.extract_strided_slice %162 {offsets = [0, 0], sizes = [16, 384], strides = [1, 1]} : vector<16x512xf32> to vector<16x384xf32>
    %164 = arith.negf %163 : vector<16x384xf32>
    %165 = math.exp %164 : vector<16x384xf32>
    %cst_90 = arith.constant 1.000000e+00 : f32
    %166 = vector.broadcast %cst_90 : f32 to vector<16x384xf32>
    %167 = arith.addf %166, %165 : vector<16x384xf32>
    %168 = arith.divf %166, %167 : vector<16x384xf32>
    %169 = vector.extract_strided_slice %168 {offsets = [0, 0], sizes = [16, 128], strides = [1, 1]} : vector<16x384xf32> to vector<16x128xf32>
    %170 = vector.extract_strided_slice %168 {offsets = [0, 128], sizes = [16, 128], strides = [1, 1]} : vector<16x384xf32> to vector<16x128xf32>
    %171 = vector.extract_strided_slice %168 {offsets = [0, 256], sizes = [16, 128], strides = [1, 1]} : vector<16x384xf32> to vector<16x128xf32>
    %172 = vector.extract_strided_slice %162 {offsets = [0, 384], sizes = [16, 128], strides = [1, 1]} : vector<16x512xf32> to vector<16x128xf32>
    %173 = math.tanh %172 : vector<16x128xf32>
    %c0_91 = arith.constant 0 : index
    %c0_92 = arith.constant 0 : index
    %174 = vector.load %arg7[%c0_91, %c0_92] : memref<16x128xf32, #tpu.memory_space<vmem>>, vector<16x128xf32>
    %175 = arith.mulf %170, %174 : vector<16x128xf32>
    %176 = arith.mulf %169, %173 : vector<16x128xf32>
    %177 = arith.addf %175, %176 : vector<16x128xf32>
    %178 = math.tanh %177 : vector<16x128xf32>
    %179 = arith.mulf %171, %178 : vector<16x128xf32>
    %180 = arith.truncf %179 : vector<16x128xf32> to vector<16x128xbf16>
    %c0_93 = arith.constant 0 : index
    %c0_94 = arith.constant 0 : index
    %181 = vector.load %arg7[%c0_93, %c0_94] : memref<16x128xf32, #tpu.memory_space<vmem>>, vector<16x128xf32>
    tpu.vector_store %arg7[%c0_93, %c0_94], %177 {strides = array<i32>} : memref<16x128xf32, #tpu.memory_space<vmem>>, vector<16x128xf32>,
    %c0_95 = arith.constant 0 : index
    %c128_96 = arith.constant 128 : index
    %182 = vector.load %arg6[%c0_95, %c128_96] : memref<16x256xbf16, #tpu.memory_space<vmem>>, vector<16x128xbf16>
    tpu.vector_store %arg6[%c0_95, %c128_96], %180 {strides = array<i32>} : memref<16x256xbf16, #tpu.memory_space<vmem>>, vector<16x128xbf16>,
    %c0_97 = arith.constant 0 : index
    %183 = arith.index_cast %154 : i32 to index
    %c0_98 = arith.constant 0 : index
    %c0_99 = arith.constant 0 : index
    %184 = vector.load %arg5[%c0_97, %183, %c0_98, %c0_99] : memref<1x5x16x128xbf16, #tpu.memory_space<vmem>>, vector<1x1x16x128xbf16>
    %185 = vector.shape_cast %184 : vector<1x1x16x128xbf16> to vector<16x128xbf16>
    %186 = vector.shape_cast %180 : vector<16x128xbf16> to vector<1x1x16x128xbf16>
    tpu.vector_store %arg5[%c0_97, %183, %c0_98, %c0_99], %186 {strides = array<i32>} : memref<1x5x16x128xbf16, #tpu.memory_space<vmem>>, vector<1x1x16x128xbf16>,
    %c5_i32 = arith.constant 5 : i32
    return
  }
  func.func @transform_0(%arg0: i32, %arg1: i32) -> (i32, i32, i32) {
    %c2_i32 = arith.constant 2 : i32
    %0 = arith.muli %c2_i32, %arg1 : i32
    %c0_i32 = arith.constant 0 : i32
    %1 = arith.subi %c0_i32, %0 : i32
    %2 = arith.muli %arg0, %1 : i32
    %3 = arith.addi %arg1, %2 : i32
    %c0_i32_0 = arith.constant 0 : i32
    %c0_i32_1 = arith.constant 0 : i32
    %c0_i32_2 = arith.constant 0 : i32
    return %3, %c0_i32_0, %c0_i32_1 : i32, i32, i32
  }
  func.func @transform_1(%arg0: i32, %arg1: i32) -> (i32, i32, i32) {
    %c0_i32 = arith.constant 0 : i32
    %c0_i32_0 = arith.constant 0 : i32
    %c0_i32_1 = arith.constant 0 : i32
    return %arg0, %c0_i32, %c0_i32_0 : i32, i32, i32
  }
  func.func @transform_2(%arg0: i32, %arg1: i32) -> (i32, i32, i32) {
    %c0_i32 = arith.constant 0 : i32
    %c0_i32_0 = arith.constant 0 : i32
    %c0_i32_1 = arith.constant 0 : i32
    return %arg0, %c0_i32, %c0_i32_0 : i32, i32, i32
  }
  func.func @transform_3(%arg0: i32, %arg1: i32) -> (i32, i32, i32, i32) {
    %c2_i32 = arith.constant 2 : i32
    %0 = arith.muli %c2_i32, %arg1 : i32
    %c0_i32 = arith.constant 0 : i32
    %1 = arith.subi %c0_i32, %0 : i32
    %2 = arith.muli %arg0, %1 : i32
    %3 = arith.addi %arg1, %2 : i32
    %c0_i32_0 = arith.constant 0 : i32
    %c0_i32_1 = arith.constant 0 : i32
    %c0_i32_2 = arith.constant 0 : i32
    return %arg0, %3, %c0_i32_0, %c0_i32_1 : i32, i32, i32, i32
  }
}

module attributes {stable_mosaic.version = 11 : i64} {
  func.func @_linear_softmax_kernel(%arg0: i32, %arg1: memref<64x128xbf16, #tpu.memory_space<vmem>>, %arg2: memref<128x128xbf16, #tpu.memory_space<vmem>>, %arg3: memref<1x128xf32, #tpu.memory_space<vmem>>, %arg4: memref<64x128xf32, #tpu.memory_space<vmem>>) attributes {dimension_semantics = [#tpu.dimension_semantics<parallel>], iteration_bounds = array<i64: 1>, scalar_prefetch = 0 : i64, scratch_operands = 0 : i64, tpu.core_type = #tpu.core_type<tc>, window_params = [{transform_indices = @transform_0, window_bounds = array<i64: 64, 128>}, {pipeline_mode = #tpu.pipeline_mode<synchronous>, transform_indices = @transform_1, window_bounds = array<i64: 128, 128>}, {pipeline_mode = #tpu.pipeline_mode<synchronous>, transform_indices = @transform_2, window_bounds = array<i64: 1, 128>}, {transform_indices = @transform_3, window_bounds = array<i64: 64, 128>}]} {
    %c0 = arith.constant 0 : index
    %c0_0 = arith.constant 0 : index
    %0 = vector.load %arg1[%c0, %c0_0] : memref<64x128xbf16, #tpu.memory_space<vmem>>, vector<64x128xbf16>
    %c0_1 = arith.constant 0 : index
    %c0_2 = arith.constant 0 : index
    %1 = vector.load %arg2[%c0_1, %c0_2] : memref<128x128xbf16, #tpu.memory_space<vmem>>, vector<128x128xbf16>
    %cst = arith.constant dense<0.000000e+00> : vector<64x128xf32>
    %2 = tpu.matmul %0, %1, %cst {dimension_numbers = #tpu.dot_dimension_numbers<[1], [0], [0], [1], [0, 0, 1, 1], [], []>} : vector<64x128xbf16>, vector<128x128xbf16>, vector<64x128xf32> -> vector<64x128xf32>
    %c0_3 = arith.constant 0 : index
    %c0_4 = arith.constant 0 : index
    %3 = vector.load %arg3[%c0_3, %c0_4] : memref<1x128xf32, #tpu.memory_space<vmem>>, vector<1x128xf32>
    %4 = vector.broadcast %3 : vector<1x128xf32> to vector<64x128xf32>
    %5 = arith.addf %2, %4 : vector<64x128xf32>
    %6 = tpu.iota {dimensions = array<i32: 1>} : vector<64x128xi32>
    %c16_i32 = arith.constant 16 : i32
    %7 = vector.broadcast %c16_i32 : i32 to vector<64x128xi32>
    %8 = arith.cmpi slt, %6, %7 : vector<64x128xi32>
    %cst_5 = arith.constant -1.000000e+30 : f32
    %9 = vector.broadcast %cst_5 : f32 to vector<64x128xf32>
    %10 = arith.select %8, %5, %9 : vector<64x128xi1>, vector<64x128xf32>
    %cst_6 = arith.constant dense<0xFF800000> : vector<64xf32>
    %11 = vector.multi_reduction <maximumf>, %10, %cst_6 [1] : vector<64x128xf32> to vector<64xf32>
    %12 = vector.shape_cast %11 : vector<64xf32> to vector<64x1xf32>
    %13 = vector.broadcast %12 : vector<64x1xf32> to vector<64x128xf32>
    %14 = arith.subf %10, %13 : vector<64x128xf32>
    %15 = math.exp %14 : vector<64x128xf32>
    %cst_7 = arith.constant dense<0.000000e+00> : vector<64xf32>
    %16 = vector.multi_reduction <add>, %15, %cst_7 [1] : vector<64x128xf32> to vector<64xf32>
    %17 = vector.shape_cast %16 : vector<64xf32> to vector<64x1xf32>
    %18 = vector.broadcast %17 : vector<64x1xf32> to vector<64x128xf32>
    %19 = arith.divf %15, %18 : vector<64x128xf32>
    %c0_8 = arith.constant 0 : index
    %c0_9 = arith.constant 0 : index
    %20 = vector.load %arg4[%c0_8, %c0_9] : memref<64x128xf32, #tpu.memory_space<vmem>>, vector<64x128xf32>
    tpu.vector_store %arg4[%c0_8, %c0_9], %19 {strides = array<i32>} : memref<64x128xf32, #tpu.memory_space<vmem>>, vector<64x128xf32>,
    return
  }
  func.func @transform_0(%arg0: i32) -> (i32, i32) {
    %c0_i32 = arith.constant 0 : i32
    %c0_i32_0 = arith.constant 0 : i32
    return %arg0, %c0_i32 : i32, i32
  }
  func.func @transform_1(%arg0: i32) -> (i32, i32) {
    %c0_i32 = arith.constant 0 : i32
    %c0_i32_0 = arith.constant 0 : i32
    %c0_i32_1 = arith.constant 0 : i32
    return %c0_i32, %c0_i32_0 : i32, i32
  }
  func.func @transform_2(%arg0: i32) -> (i32, i32) {
    %c0_i32 = arith.constant 0 : i32
    %c0_i32_0 = arith.constant 0 : i32
    %c0_i32_1 = arith.constant 0 : i32
    return %c0_i32, %c0_i32_0 : i32, i32
  }
  func.func @transform_3(%arg0: i32) -> (i32, i32) {
    %c0_i32 = arith.constant 0 : i32
    %c0_i32_0 = arith.constant 0 : i32
    return %arg0, %c0_i32 : i32, i32
  }
}

</mosaic_0001>

<llo_original>
// kernel: music_vae_forward.13
$region0: #{music_vae_forward.13}
  #allocation0 [shape = 'u32[]', space=smem, size = 0x4, offset = 0x4, fixed_abs, tag = 'smem constant byte address 0x4 - core index']
  #allocation1 [shape = 'u32[144,128]{1,0:T(1,128)}', space=vmem, size = 0x12000, scoped, tag = 'internal scratch']
  %s0 = inlined_call_operand.vmem [shape: bf16[16,128], index: 0, kind: input, shape index: {}]
  %s1 = inlined_call_operand.vmem [shape: bf16[128,128], index: 1, kind: input, shape index: {}]
  %s2 = inlined_call_operand.vmem [shape: f32[1,128], index: 2, kind: input, shape index: {}]
  %s3 = inlined_call_operand.vmem [shape: bf16[16,128], index: 3, kind: output, shape index: {}]
  %s4 = sld [smem:[#allocation0]]
  $region22: #{music_vae_forward.13} parent=0
    _
  %s6 = ssub.s32 1, %s4
  %s7 = scalar_select 0, %s6, %s4
  // Predicated region
  $region2: #{music_vae_forward.13} parent=0 // pred_check
    _
  $region3: #{music_vae_forward.13} parent=0 // pred_check_branch
    %9 = sbr.rel (0) target = $region5
  $region4: #{music_vae_forward.13} parent=0 // pred_region
    _
  $region5: #{music_vae_forward.13} parent=0 // pred_fallthru
    _
  // Predicated region
  $region6: #{music_vae_forward.13} parent=0 // pred_check
    _
  $region7: #{music_vae_forward.13} parent=0 // pred_check_branch
    %11 = sbr.rel (0) target = $region9
  $region8: #{music_vae_forward.13} parent=0 // pred_region
    _
  $region9: #{music_vae_forward.13} parent=0 // pred_fallthru
    _
  // Predicated region
  $region10: #{music_vae_forward.13} parent=0 // pred_check
    _
  $region11: #{music_vae_forward.13} parent=0 // pred_check_branch
    %13 = sbr.rel (0) target = $region13
  $region12: #{music_vae_forward.13} parent=0 // pred_region
    _
  $region13: #{music_vae_forward.13} parent=0 // pred_fallthru
    _
  %v15 = vld [vmem:[%s0] sm:$0xf]
  %v16 = vld [vmem:[%s0 + $0x4] sm:$0xf]
  %v17 = vld [vmem:[%s1] sm:$0xf]
  %v18 = vld [vmem:[%s1 + $0x4] sm:$0xf]
  %v19 = vld [vmem:[%s1 + $0x8] sm:$0xf]
  %v20 = vld [vmem:[%s1 + $0xc] sm:$0xf]
  %v21 = vld [vmem:[%s1 + $0x10] sm:$0xf]
  %v22 = vld [vmem:[%s1 + $0x14] sm:$0xf]
  %v23 = vld [vmem:[%s1 + $0x18] sm:$0xf]
  %v24 = vld [vmem:[%s1 + $0x1c] sm:$0xf]
  %v25 = vld [vmem:[%s1 + $0x20] sm:$0xf]
  %v26 = vld [vmem:[%s1 + $0x24] sm:$0xf]
  %v27 = vld [vmem:[%s1 + $0x28] sm:$0xf]
  %v28 = vld [vmem:[%s1 + $0x2c] sm:$0xf]
  %v29 = vld [vmem:[%s1 + $0x30] sm:$0xf]
  %v30 = vld [vmem:[%s1 + $0x34] sm:$0xf]
  %v31 = vld [vmem:[%s1 + $0x38] sm:$0xf]
  %v32 = vld [vmem:[%s1 + $0x3c] sm:$0xf]
  %v33 = vld [vmem:[%s2] sm:$0x1]
  %v35 = vlaneseq
  %v36 = vshrl.u32 %v35, 7
  %v37 = vsub.s32 0, %v36
  %v38 = vrot.slane %v33, %v37
  %v42 = vunpack.c.l.b16 %v15
  %v43 = vunpack.c.l.b16 %v16
  %v44 = vpack.c.b16 %v43, %v42
  %v62 = vunpack.c.l.b16 %v17
  %v63 = vunpack.c.l.b16 %v18
  %v64 = vunpack.c.l.b16 %v19
  %v65 = vunpack.c.l.b16 %v20
  %v66 = vunpack.c.l.b16 %v21
  %v67 = vunpack.c.l.b16 %v22
  %v68 = vunpack.c.l.b16 %v23
  %v69 = vunpack.c.l.b16 %v24
  %v70 = vunpack.c.l.b16 %v25
  %v71 = vunpack.c.l.b16 %v26
  %v72 = vunpack.c.l.b16 %v27
  %v73 = vunpack.c.l.b16 %v28
  %v74 = vunpack.c.l.b16 %v29
  %v75 = vunpack.c.l.b16 %v30
  %v76 = vunpack.c.l.b16 %v31
  %v77 = vunpack.c.l.b16 %v32
  %v78 = vpack.c.b16 %v63, %v62
  %v79 = vpack.c.b16 %v65, %v64
  %v80 = vpack.c.b16 %v67, %v66
  %v81 = vpack.c.b16 %v69, %v68
  %v82 = vpack.c.b16 %v71, %v70
  %v83 = vpack.c.b16 %v73, %v72
  %v84 = vpack.c.b16 %v75, %v74
  %v85 = vpack.c.b16 %v77, %v76
  %94 = vmatprep.subr.bf16.mxu0 0
  %95 = vmatpush1.bf16.msra.mxu0 %v85
  %96 = vmatprep.subr.bf16.mxu0 0
  %97 = vmatpush1.bf16.msra.mxu0 %v84
  %98 = vmatprep.subr.bf16.mxu0 0
  %99 = vmatpush1.bf16.msra.mxu0 %v83
  %100 = vmatprep.subr.bf16.mxu0 0
  %101 = vmatpush1.bf16.msra.mxu0 %v82
  %102 = vmatprep.subr.bf16.mxu0 0
  %103 = vmatpush1.bf16.msra.mxu0 %v81
  %104 = vmatprep.subr.bf16.mxu0 0
  %105 = vmatpush1.bf16.msra.mxu0 %v80
  %106 = vmatprep.subr.bf16.mxu0 0
  %107 = vmatpush1.bf16.msra.mxu0 %v79
  %108 = vmatprep.subr.bf16.mxu0 0
  %109 = vmatpush1.bf16.msra.mxu0 %v78
  %110 = vmatprep.subr.bf16.mxu0 0
  %111 = vmatpush2.bf16.msra.mxu0 0
  %112 = vmatprep.subr.bf16.mxu0 0
  %113 = vmatpush2.bf16.msra.mxu0 0
  %114 = vmatprep.subr.bf16.mxu0 0
  %115 = vmatpush2.bf16.msra.mxu0 0
  %116 = vmatprep.subr.bf16.mxu0 0
  %117 = vmatpush2.bf16.msra.mxu0 0
  %118 = vmatprep.subr.bf16.mxu0 0
  %119 = vmatpush2.bf16.msra.mxu0 0
  %120 = vmatprep.subr.bf16.mxu0 0
  %121 = vmatpush2.bf16.msra.mxu0 0
  %122 = vmatprep.subr.bf16.mxu0 0
  %123 = vmatpush2.bf16.msra.mxu0 0
  %124 = vmatprep.subr.bf16.mxu0 0
  %125 = vmatpush2.bf16.msra.mxu0 0
  %126 = vmatprep.mubr.bf16.mxu0 0
  %127 = vmatmul.mubr.bf16.gmra.mxu0 %v44
  %v128 = vpop.f32.mrf.mxu0
  %v129 = vadd.f32 %v38, %v128
  %v130 = vpop.f32.mrf.mxu0
  %v131 = vpop.f32.mrf.mxu0
  %v132 = vadd.f32 %v38, %v131
  %v133 = vpop.f32.mrf.mxu0
  %134 = vdwg.mxu0
  %v135 = vpack.c.bf16 %v132, %v129
  %v137 = vunpack.c.l.b16 %v135
  %v138 = vunpack.c.h.b16 %v135
  %v139 = vpack.c.b16 %v137, %v137
  %v140 = vpack.c.b16 %v138, %v138
  %143 = vst [vmem:[%s3] sm:$0xf] %v139
  %144 = vst [vmem:[%s3 + $0x4] sm:$0xf] %v140
  // Predicated region
  $region14: #{music_vae_forward.13} parent=0 // pred_check
    _
  $region15: #{music_vae_forward.13} parent=0 // pred_check_branch
    %146 = sbr.rel (0) target = $region17
  $region16: #{music_vae_forward.13} parent=0 // pred_region
    _
  $region17: #{music_vae_forward.13} parent=0 // pred_fallthru
    _
  // Predicated region
  $region18: #{music_vae_forward.13} parent=0 // pred_check
    _
  $region19: #{music_vae_forward.13} parent=0 // pred_check_branch
    %148 = sbr.rel (0) target = $region21
  $region20: #{music_vae_forward.13} parent=0 // pred_region
    _
  $region21: #{music_vae_forward.13} parent=0 // pred_fallthru
    _

// kernel: music_vae_forward.12
$region0: #{music_vae_forward.12}
  #allocation0 [shape = 'u32[]', space=smem, size = 0x4, offset = 0x4, fixed_abs, tag = 'smem constant byte address 0x4 - core index']
  #allocation1 [shape = 'u32[144,128]{1,0:T(1,128)}', space=vmem, size = 0x12000, scoped, tag = 'internal scratch']
  %s0 = inlined_call_operand.vmem [shape: bf16[16,512], index: 0, kind: input, shape index: {}]
  %s1 = inlined_call_operand.vmem [shape: bf16[512,256], index: 1, kind: input, shape index: {}]
  %s2 = inlined_call_operand.vmem [shape: f32[1,256], index: 2, kind: input, shape index: {}]
  %s3 = inlined_call_operand.vmem [shape: f32[16,128], index: 3, kind: output, shape index: {0}]
  %s4 = inlined_call_operand.vmem [shape: f32[16,128], index: 4, kind: output, shape index: {1}]
  %5 = xla_tuple %s3, %s4
  %s6 = sld [smem:[#allocation0]]
  $region30: #{music_vae_forward.12} parent=0
    _
  %s8 = ssub.s32 1, %s6
  %s9 = scalar_select 0, %s8, %s6
  // Predicated region
  $region2: #{music_vae_forward.12} parent=0 // pred_check
    _
  $region3: #{music_vae_forward.12} parent=0 // pred_check_branch
    %11 = sbr.rel (0) target = $region5
  $region4: #{music_vae_forward.12} parent=0 // pred_region
    _
  $region5: #{music_vae_forward.12} parent=0 // pred_fallthru
    _
  // Predicated region
  $region6: #{music_vae_forward.12} parent=0 // pred_check
    _
  $region7: #{music_vae_forward.12} parent=0 // pred_check_branch
    %13 = sbr.rel (0) target = $region9
  $region8: #{music_vae_forward.12} parent=0 // pred_region
    _
  $region9: #{music_vae_forward.12} parent=0 // pred_fallthru
    _
  // Predicated region
  $region10: #{music_vae_forward.12} parent=0 // pred_check
    _
  $region11: #{music_vae_forward.12} parent=0 // pred_check_branch
    %15 = sbr.rel (0) target = $region13
  $region12: #{music_vae_forward.12} parent=0 // pred_region
    _
  $region13: #{music_vae_forward.12} parent=0 // pred_fallthru
    _
  %v16 = vld [vmem:[%s0] sm:$0xff]
  %v17 = vld [vmem:[%s0 + $0x8] sm:$0xff]
  %v18 = vld [vmem:[%s0 + $0x10] sm:$0xff]
  %v19 = vld [vmem:[%s0 + $0x18] sm:$0xff]
  %v20 = vld [vmem:[%s1] sm:$0xff]
  %v21 = vld [vmem:[%s1 + $0x8] sm:$0xff]
  %v22 = vld [vmem:[%s1 + $0x10] sm:$0xff]
  %v23 = vld [vmem:[%s1 + $0x18] sm:$0xff]
  %v24 = vld [vmem:[%s1 + $0x20] sm:$0xff]
  %v25 = vld [vmem:[%s1 + $0x28] sm:$0xff]
  %v26 = vld [vmem:[%s1 + $0x30] sm:$0xff]
  %v27 = vld [vmem:[%s1 + $0x38] sm:$0xff]
  %v28 = vld [vmem:[%s1 + $0x40] sm:$0xff]
  %v29 = vld [vmem:[%s1 + $0x48] sm:$0xff]
  %v30 = vld [vmem:[%s1 + $0x50] sm:$0xff]
  %v31 = vld [vmem:[%s1 + $0x58] sm:$0xff]
  %v32 = vld [vmem:[%s1 + $0x60] sm:$0xff]
  %v33 = vld [vmem:[%s1 + $0x68] sm:$0xff]
  %v34 = vld [vmem:[%s1 + $0x70] sm:$0xff]
  %v35 = vld [vmem:[%s1 + $0x78] sm:$0xff]
  %v36 = vld [vmem:[%s1 + $0x80] sm:$0xff]
  %v37 = vld [vmem:[%s1 + $0x88] sm:$0xff]
  %v38 = vld [vmem:[%s1 + $0x90] sm:$0xff]
  %v39 = vld [vmem:[%s1 + $0x98] sm:$0xff]
  %v40 = vld [vmem:[%s1 + $0xa0] sm:$0xff]
  %v41 = vld [vmem:[%s1 + $0xa8] sm:$0xff]
  %v42 = vld [vmem:[%s1 + $0xb0] sm:$0xff]
  %v43 = vld [vmem:[%s1 + $0xb8] sm:$0xff]
  %v44 = vld [vmem:[%s1 + $0xc0] sm:$0xff]
  %v45 = vld [vmem:[%s1 + $0xc8] sm:$0xff]
  %v46 = vld [vmem:[%s1 + $0xd0] sm:$0xff]
  %v47 = vld [vmem:[%s1 + $0xd8] sm:$0xff]
  %v48 = vld [vmem:[%s1 + $0xe0] sm:$0xff]
  %v49 = vld [vmem:[%s1 + $0xe8] sm:$0xff]
  %v50 = vld [vmem:[%s1 + $0xf0] sm:$0xff]
  %v51 = vld [vmem:[%s1 + $0xf8] sm:$0xff]
  %v52 = vld [vmem:[%s1 + $0x100] sm:$0xff]
  %v53 = vld [vmem:[%s1 + $0x108] sm:$0xff]
  %v54 = vld [vmem:[%s1 + $0x110] sm:$0xff]
  %v55 = vld [vmem:[%s1 + $0x118] sm:$0xff]
  %v56 = vld [vmem:[%s1 + $0x120] sm:$0xff]
  %v57 = vld [vmem:[%s1 + $0x128] sm:$0xff]
  %v58 = vld [vmem:[%s1 + $0x130] sm:$0xff]
  %v59 = vld [vmem:[%s1 + $0x138] sm:$0xff]
  %v60 = vld [vmem:[%s1 + $0x140] sm:$0xff]
  %v61 = vld [vmem:[%s1 + $0x148] sm:$0xff]
  %v62 = vld [vmem:[%s1 + $0x150] sm:$0xff]
  %v63 = vld [vmem:[%s1 + $0x158] sm:$0xff]
  %v64 = vld [vmem:[%s1 + $0x160] sm:$0xff]
  %v65 = vld [vmem:[%s1 + $0x168] sm:$0xff]
  %v66 = vld [vmem:[%s1 + $0x170] sm:$0xff]
  %v67 = vld [vmem:[%s1 + $0x178] sm:$0xff]
  %v68 = vld [vmem:[%s1 + $0x180] sm:$0xff]
  %v69 = vld [vmem:[%s1 + $0x188] sm:$0xff]
  %v70 = vld [vmem:[%s1 + $0x190] sm:$0xff]
  %v71 = vld [vmem:[%s1 + $0x198] sm:$0xff]
  %v72 = vld [vmem:[%s1 + $0x1a0] sm:$0xff]
  %v73 = vld [vmem:[%s1 + $0x1a8] sm:$0xff]
  %v74 = vld [vmem:[%s1 + $0x1b0] sm:$0xff]
  %v75 = vld [vmem:[%s1 + $0x1b8] sm:$0xff]
  %v76 = vld [vmem:[%s1 + $0x1c0] sm:$0xff]
  %v77 = vld [vmem:[%s1 + $0x1c8] sm:$0xff]
  %v78 = vld [vmem:[%s1 + $0x1d0] sm:$0xff]
  %v79 = vld [vmem:[%s1 + $0x1d8] sm:$0xff]
  %v80 = vld [vmem:[%s1 + $0x1e0] sm:$0xff]
  %v81 = vld [vmem:[%s1 + $0x1e8] sm:$0xff]
  %v82 = vld [vmem:[%s1 + $0x1f0] sm:$0xff]
  %v83 = vld [vmem:[%s1 + $0x1f8] sm:$0xff]
  %v84 = vld [vmem:[%s2] sm:$0x3]
  %v86 = vlaneseq
  %v87 = vshrl.u32 %v86, 7
  %v88 = vsub.s32 0, %v87
  %v89 = vrot.slane %v84, %v88
  %v90 = vlaneseq
  %v91 = vshrl.u32 %v90, 7
  %v92 = vsub.s32 1, %v91
  %v93 = vrot.slane %v84, %v92
  %v100 = vunpack.c.l.b16 %v16
  %v101 = vunpack.c.h.b16 %v16
  %v102 = vunpack.c.l.b16 %v17
  %v103 = vunpack.c.h.b16 %v17
  %v104 = vunpack.c.l.b16 %v18
  %v105 = vunpack.c.h.b16 %v18
  %v106 = vunpack.c.l.b16 %v19
  %v107 = vunpack.c.h.b16 %v19
  %v108 = vpack.c.b16 %v104, %v100
  %v109 = vpack.c.b16 %v105, %v101
  %v110 = vpack.c.b16 %v106, %v102
  %v111 = vpack.c.b16 %v107, %v103
  %v180 = vunpack.c.l.b16 %v20
  %v181 = vunpack.c.h.b16 %v20
  %v182 = vunpack.c.l.b16 %v21
  %v183 = vunpack.c.h.b16 %v21
  %v184 = vunpack.c.l.b16 %v22
  %v185 = vunpack.c.h.b16 %v22
  %v186 = vunpack.c.l.b16 %v23
  %v187 = vunpack.c.h.b16 %v23
  %v188 = vunpack.c.l.b16 %v24
  %v189 = vunpack.c.h.b16 %v24
  %v190 = vunpack.c.l.b16 %v25
  %v191 = vunpack.c.h.b16 %v25
  %v192 = vunpack.c.l.b16 %v26
  %v193 = vunpack.c.h.b16 %v26
  %v194 = vunpack.c.l.b16 %v27
  %v195 = vunpack.c.h.b16 %v27
  %v196 = vunpack.c.l.b16 %v28
  %v197 = vunpack.c.h.b16 %v28
  %v198 = vunpack.c.l.b16 %v29
  %v199 = vunpack.c.h.b16 %v29
  %v200 = vunpack.c.l.b16 %v30
  %v201 = vunpack.c.h.b16 %v30
  %v202 = vunpack.c.l.b16 %v31
  %v203 = vunpack.c.h.b16 %v31
  %v204 = vunpack.c.l.b16 %v32
  %v205 = vunpack.c.h.b16 %v32
  %v206 = vunpack.c.l.b16 %v33
  %v207 = vunpack.c.h.b16 %v33
  %v208 = vunpack.c.l.b16 %v34
  %v209 = vunpack.c.h.b16 %v34
  %v210 = vunpack.c.l.b16 %v35
  %v211 = vunpack.c.h.b16 %v35
  %v212 = vunpack.c.l.b16 %v36
  %v213 = vunpack.c.h.b16 %v36
  %v214 = vunpack.c.l.b16 %v37
  %v215 = vunpack.c.h.b16 %v37
  %v216 = vunpack.c.l.b16 %v38
  %v217 = vunpack.c.h.b16 %v38
  %v218 = vunpack.c.l.b16 %v39
  %v219 = vunpack.c.h.b16 %v39
  %v220 = vunpack.c.l.b16 %v40
  %v221 = vunpack.c.h.b16 %v40
  %v222 = vunpack.c.l.b16 %v41
  %v223 = vunpack.c.h.b16 %v41
  %v224 = vunpack.c.l.b16 %v42
  %v225 = vunpack.c.h.b16 %v42
  %v226 = vunpack.c.l.b16 %v43
  %v227 = vunpack.c.h.b16 %v43
  %v228 = vunpack.c.l.b16 %v44
  %v229 = vunpack.c.h.b16 %v44
  %v230 = vunpack.c.l.b16 %v45
  %v231 = vunpack.c.h.b16 %v45
  %v232 = vunpack.c.l.b16 %v46
  %v233 = vunpack.c.h.b16 %v46
  %v234 = vunpack.c.l.b16 %v47
  %v235 = vunpack.c.h.b16 %v47
  %v236 = vunpack.c.l.b16 %v48
  %v237 = vunpack.c.h.b16 %v48
  %v238 = vunpack.c.l.b16 %v49
  %v239 = vunpack.c.h.b16 %v49
  %v240 = vunpack.c.l.b16 %v50
  %v241 = vunpack.c.h.b16 %v50
  %v242 = vunpack.c.l.b16 %v51
  %v243 = vunpack.c.h.b16 %v51
  %v244 = vunpack.c.l.b16 %v52
  %v245 = vunpack.c.h.b16 %v52
  %v246 = vunpack.c.l.b16 %v53
  %v247 = vunpack.c.h.b16 %v53
  %v248 = vunpack.c.l.b16 %v54
  %v249 = vunpack.c.h.b16 %v54
  %v250 = vunpack.c.l.b16 %v55
  %v251 = vunpack.c.h.b16 %v55
  %v252 = vunpack.c.l.b16 %v56
  %v253 = vunpack.c.h.b16 %v56
  %v254 = vunpack.c.l.b16 %v57
  %v255 = vunpack.c.h.b16 %v57
  %v256 = vunpack.c.l.b16 %v58
  %v257 = vunpack.c.h.b16 %v58
  %v258 = vunpack.c.l.b16 %v59
  %v259 = vunpack.c.h.b16 %v59
  %v260 = vunpack.c.l.b16 %v60
  %v261 = vunpack.c.h.b16 %v60
  %v262 = vunpack.c.l.b16 %v61
  %v263 = vunpack.c.h.b16 %v61
  %v264 = vunpack.c.l.b16 %v62
  %v265 = vunpack.c.h.b16 %v62
  %v266 = vunpack.c.l.b16 %v63
  %v267 = vunpack.c.h.b16 %v63
  %v268 = vunpack.c.l.b16 %v64
  %v269 = vunpack.c.h.b16 %v64
  %v270 = vunpack.c.l.b16 %v65
  %v271 = vunpack.c.h.b16 %v65
  %v272 = vunpack.c.l.b16 %v66
  %v273 = vunpack.c.h.b16 %v66
  %v274 = vunpack.c.l.b16 %v67
  %v275 = vunpack.c.h.b16 %v67
  %v276 = vunpack.c.l.b16 %v68
  %v277 = vunpack.c.h.b16 %v68
  %v278 = vunpack.c.l.b16 %v69
  %v279 = vunpack.c.h.b16 %v69
  %v280 = vunpack.c.l.b16 %v70
  %v281 = vunpack.c.h.b16 %v70
  %v282 = vunpack.c.l.b16 %v71
  %v283 = vunpack.c.h.b16 %v71
  %v284 = vunpack.c.l.b16 %v72
  %v285 = vunpack.c.h.b16 %v72
  %v286 = vunpack.c.l.b16 %v73
  %v287 = vunpack.c.h.b16 %v73
  %v288 = vunpack.c.l.b16 %v74
  %v289 = vunpack.c.h.b16 %v74
  %v290 = vunpack.c.l.b16 %v75
  %v291 = vunpack.c.h.b16 %v75
  %v292 = vunpack.c.l.b16 %v76
  %v293 = vunpack.c.h.b16 %v76
  %v294 = vunpack.c.l.b16 %v77
  %v295 = vunpack.c.h.b16 %v77
  %v296 = vunpack.c.l.b16 %v78
  %v297 = vunpack.c.h.b16 %v78
  %v298 = vunpack.c.l.b16 %v79
  %v299 = vunpack.c.h.b16 %v79
  %v300 = vunpack.c.l.b16 %v80
  %v301 = vunpack.c.h.b16 %v80
  %v302 = vunpack.c.l.b16 %v81
  %v303 = vunpack.c.h.b16 %v81
  %v304 = vunpack.c.l.b16 %v82
  %v305 = vunpack.c.h.b16 %v82
  %v306 = vunpack.c.l.b16 %v83
  %v307 = vunpack.c.h.b16 %v83
  %v308 = vpack.c.b16 %v182, %v180
  %v309 = vpack.c.b16 %v183, %v181
  %v310 = vpack.c.b16 %v186, %v184
  %v311 = vpack.c.b16 %v187, %v185
  %v312 = vpack.c.b16 %v190, %v188
  %v313 = vpack.c.b16 %v191, %v189
  %v314 = vpack.c.b16 %v194, %v192
  %v315 = vpack.c.b16 %v195, %v193
  %v316 = vpack.c.b16 %v198, %v196
  %v317 = vpack.c.b16 %v199, %v197
  %v318 = vpack.c.b16 %v202, %v200
  %v319 = vpack.c.b16 %v203, %v201
  %v320 = vpack.c.b16 %v206, %v204
  %v321 = vpack.c.b16 %v207, %v205
  %v322 = vpack.c.b16 %v210, %v208
  %v323 = vpack.c.b16 %v211, %v209
  %v324 = vpack.c.b16 %v214, %v212
  %v325 = vpack.c.b16 %v215, %v213
  %v326 = vpack.c.b16 %v218, %v216
  %v327 = vpack.c.b16 %v219, %v217
  %v328 = vpack.c.b16 %v222, %v220
  %v329 = vpack.c.b16 %v223, %v221
  %v330 = vpack.c.b16 %v226, %v224
  %v331 = vpack.c.b16 %v227, %v225
  %v332 = vpack.c.b16 %v230, %v228
  %v333 = vpack.c.b16 %v231, %v229
  %v334 = vpack.c.b16 %v234, %v232
  %v335 = vpack.c.b16 %v235, %v233
  %v336 = vpack.c.b16 %v238, %v236
  %v337 = vpack.c.b16 %v239, %v237
  %v338 = vpack.c.b16 %v242, %v240
  %v339 = vpack.c.b16 %v243, %v241
  %v340 = vpack.c.b16 %v246, %v244
  %v341 = vpack.c.b16 %v247, %v245
  %v342 = vpack.c.b16 %v250, %v248
  %v343 = vpack.c.b16 %v251, %v249
  %v344 = vpack.c.b16 %v254, %v252
  %v345 = vpack.c.b16 %v255, %v253
  %v346 = vpack.c.b16 %v258, %v256
  %v347 = vpack.c.b16 %v259, %v257
  %v348 = vpack.c.b16 %v262, %v260
  %v349 = vpack.c.b16 %v263, %v261
  %v350 = vpack.c.b16 %v266, %v264
  %v351 = vpack.c.b16 %v267, %v265
  %v352 = vpack.c.b16 %v270, %v268
  %v353 = vpack.c.b16 %v271, %v269
  %v354 = vpack.c.b16 %v274, %v272
  %v355 = vpack.c.b16 %v275, %v273
  %v356 = vpack.c.b16 %v278, %v276
  %v357 = vpack.c.b16 %v279, %v277
  %v358 = vpack.c.b16 %v282, %v280
  %v359 = vpack.c.b16 %v283, %v281
  %v360 = vpack.c.b16 %v286, %v284
  %v361 = vpack.c.b16 %v287, %v285
  %v362 = vpack.c.b16 %v290, %v288
  %v363 = vpack.c.b16 %v291, %v289
  %v364 = vpack.c.b16 %v294, %v292
  %v365 = vpack.c.b16 %v295, %v293
  %v366 = vpack.c.b16 %v298, %v296
  %v367 = vpack.c.b16 %v299, %v297
  %v368 = vpack.c.b16 %v302, %v300
  %v369 = vpack.c.b16 %v303, %v301
  %v370 = vpack.c.b16 %v306, %v304
  %v371 = vpack.c.b16 %v307, %v305
  %436 = vmatprep.subr.bf16.mxu0 %v323
  %437 = vmatpush1.bf16.msra.mxu0 %v322
  %438 = vmatprep.subr.bf16.mxu0 %v321
  %439 = vmatpush1.bf16.msra.mxu0 %v320
  %440 = vmatprep.subr.bf16.mxu0 %v319
  %441 = vmatpush1.bf16.msra.mxu0 %v318
  %442 = vmatprep.subr.bf16.mxu0 %v317
  %443 = vmatpush1.bf16.msra.mxu0 %v316
  %444 = vmatprep.subr.bf16.mxu0 %v315
  %445 = vmatpush1.bf16.msra.mxu0 %v314
  %446 = vmatprep.subr.bf16.mxu0 %v313
  %447 = vmatpush1.bf16.msra.mxu0 %v312
  %448 = vmatprep.subr.bf16.mxu0 %v311
  %449 = vmatpush1.bf16.msra.mxu0 %v310
  %450 = vmatprep.subr.bf16.mxu0 %v309
  %451 = vmatpush1.bf16.msra.mxu0 %v308
  %452 = vmatprep.subr.bf16.mxu0 %v339
  %453 = vmatpush2.bf16.msra.mxu0 %v338
  %454 = vmatprep.subr.bf16.mxu0 %v337
  %455 = vmatpush2.bf16.msra.mxu0 %v336
  %456 = vmatprep.subr.bf16.mxu0 %v335
  %457 = vmatpush2.bf16.msra.mxu0 %v334
  %458 = vmatprep.subr.bf16.mxu0 %v333
  %459 = vmatpush2.bf16.msra.mxu0 %v332
  %460 = vmatprep.subr.bf16.mxu0 %v331
  %461 = vmatpush2.bf16.msra.mxu0 %v330
  %462 = vmatprep.subr.bf16.mxu0 %v329
  %463 = vmatpush2.bf16.msra.mxu0 %v328
  %464 = vmatprep.subr.bf16.mxu0 %v327
  %465 = vmatpush2.bf16.msra.mxu0 %v326
  %466 = vmatprep.subr.bf16.mxu0 %v325
  %467 = vmatpush2.bf16.msra.mxu0 %v324
  %468 = vmatprep.mubr.bf16.mxu0 %v109
  %469 = vmatmul.mubr.bf16.gmra.mxu0 %v108
  %v470 = vpop.f32.mrf.mxu0
  %v471 = vadd.f32 %v89, %v470
  %v472 = vpop.f32.mrf.mxu0
  %v473 = vadd.f32 %v93, %v472
  %v474 = vpop.f32.mrf.mxu0
  %v475 = vadd.f32 %v89, %v474
  %v476 = vpop.f32.mrf.mxu0
  %v477 = vadd.f32 %v93, %v476
  %478 = vdwg.mxu0
  %479 = vmatprep.subr.bf16.mxu0 %v355
  %480 = vmatpush1.bf16.msra.mxu0 %v354
  %481 = vmatprep.subr.bf16.mxu0 %v353
  %482 = vmatpush1.bf16.msra.mxu0 %v352
  %483 = vmatprep.subr.bf16.mxu0 %v351
  %484 = vmatpush1.bf16.msra.mxu0 %v350
  %485 = vmatprep.subr.bf16.mxu0 %v349
  %486 = vmatpush1.bf16.msra.mxu0 %v348
  %487 = vmatprep.subr.bf16.mxu0 %v347
  %488 = vmatpush1.bf16.msra.mxu0 %v346
  %489 = vmatprep.subr.bf16.mxu0 %v345
  %490 = vmatpush1.bf16.msra.mxu0 %v344
  %491 = vmatprep.subr.bf16.mxu0 %v343
  %492 = vmatpush1.bf16.msra.mxu0 %v342
  %493 = vmatprep.subr.bf16.mxu0 %v341
  %494 = vmatpush1.bf16.msra.mxu0 %v340
  %495 = vmatprep.subr.bf16.mxu0 %v371
  %496 = vmatpush2.bf16.msra.mxu0 %v370
  %497 = vmatprep.subr.bf16.mxu0 %v369
  %498 = vmatpush2.bf16.msra.mxu0 %v368
  %499 = vmatprep.subr.bf16.mxu0 %v367
  %500 = vmatpush2.bf16.msra.mxu0 %v366
  %501 = vmatprep.subr.bf16.mxu0 %v365
  %502 = vmatpush2.bf16.msra.mxu0 %v364
  %503 = vmatprep.subr.bf16.mxu0 %v363
  %504 = vmatpush2.bf16.msra.mxu0 %v362
  %505 = vmatprep.subr.bf16.mxu0 %v361
  %506 = vmatpush2.bf16.msra.mxu0 %v360
  %507 = vmatprep.subr.bf16.mxu0 %v359
  %508 = vmatpush2.bf16.msra.mxu0 %v358
  %509 = vmatprep.subr.bf16.mxu0 %v357
  %510 = vmatpush2.bf16.msra.mxu0 %v356
  %511 = vmatprep.mubr.bf16.mxu0 %v111
  %512 = vmatmul.mubr.bf16.gmra.mxu0 %v110
  %v513 = vpop.f32.mrf.mxu0
  %v514 = vadd.f32 %v471, %v513
  %v515 = vpop.f32.mrf.mxu0
  %v516 = vadd.f32 %v473, %v515
  %v517 = vpop.f32.mrf.mxu0
  %v518 = vadd.f32 %v475, %v517
  %v519 = vpop.f32.mrf.mxu0
  %v520 = vadd.f32 %v477, %v519
  %521 = vdwg.mxu0
  %522 = vst [vmem:[%s3] sm:$0xff] %v514
  %523 = vst [vmem:[%s3 + $0x8] sm:$0xff] %v518
  %vm524 = vcmp.gt.f32.partialorder %v516, 20.0
  %vm525 = vcmp.gt.f32.partialorder %v520, 20.0
  %v526 = vmin.f32 %v516, 20.0
  %v527 = vmin.f32 %v520, 20.0
  %v528 = vmul.f32 %v526, 1.442695
  %v529 = vpow.pop %v528
  %v530 = vmul.f32 %v527, 1.442695
  %v531 = vpow.pop %v530
  %v532 = vadd.f32 %v529, 1.0
  %v533 = vadd.f32 %v531, 1.0
  %v534 = vlog2.pop %v532
  %v535 = vmul.f32 %v534, 0.6931472
  %v536 = vlog2.pop %v533
  %v537 = vmul.f32 %v536, 0.6931472
  %v538 = vsel %vm524, %v516, %v535
  %v539 = vsel %vm525, %v520, %v537
  %540 = vst [vmem:[%s4] sm:$0xff] %v538
  %541 = vst [vmem:[%s4 + $0x8] sm:$0xff] %v539
  // Predicated region
  $region14: #{music_vae_forward.12} parent=0 // pred_check
    _
  $region15: #{music_vae_forward.12} parent=0 // pred_check_branch
    %543 = sbr.rel (0) target = $region17
  $region16: #{music_vae_forward.12} parent=0 // pred_region
    _
  $region17: #{music_vae_forward.12} parent=0 // pred_fallthru
    _
  // Predicated region
  $region18: #{music_vae_forward.12} parent=0 // pred_check
    _
  $region19: #{music_vae_forward.12} parent=0 // pred_check_branch
    %545 = sbr.rel (0) target = $region21
  $region20: #{music_vae_forward.12} parent=0 // pred_region
    _
  $region21: #{music_vae_forward.12} parent=0 // pred_fallthru
    _
  // Predicated region
  $region22: #{music_vae_forward.12} parent=0 // pred_check
    _
  $region23: #{music_vae_forward.12} parent=0 // pred_check_branch
    %547 = sbr.rel (0) target = $region25
  $region24: #{music_vae_forward.12} parent=0 // pred_region
    _
  $region25: #{music_vae_forward.12} parent=0 // pred_fallthru
    _
  // Predicated region
  $region26: #{music_vae_forward.12} parent=0 // pred_check
    _
  $region27: #{music_vae_forward.12} parent=0 // pred_check_branch
    %549 = sbr.rel (0) target = $region29
  $region28: #{music_vae_forward.12} parent=0 // pred_region
    _
  $region29: #{music_vae_forward.12} parent=0 // pred_fallthru
    _

// kernel: music_vae_forward.16
$region0: #{music_vae_forward.16}
  #allocation0 [shape = 'u32[]', space=smem, size = 0x4, offset = 0x4, fixed_abs, tag = 'smem constant byte address 0x4 - core index']
  #allocation1 [shape = 'u32[144,128]{1,0:T(1,128)}', space=vmem, size = 0x12000, scoped, tag = 'internal scratch']
  %s0 = inlined_call_operand.vmem [shape: bf16[32,128], index: 0, kind: input, shape index: {}]
  %s1 = inlined_call_operand.vmem [shape: bf16[128,128], index: 1, kind: input, shape index: {}]
  %s2 = inlined_call_operand.vmem [shape: f32[1,128], index: 2, kind: input, shape index: {}]
  %s3 = inlined_call_operand.vmem [shape: bf16[32,128], index: 3, kind: output, shape index: {}]
  %s4 = sld [smem:[#allocation0]]
  $region22: #{music_vae_forward.16} parent=0
    _
  %s6 = ssub.s32 1, %s4
  %s7 = scalar_select 0, %s6, %s4
  // Predicated region
  $region2: #{music_vae_forward.16} parent=0 // pred_check
    _
  $region3: #{music_vae_forward.16} parent=0 // pred_check_branch
    %9 = sbr.rel (0) target = $region5
  $region4: #{music_vae_forward.16} parent=0 // pred_region
    _
  $region5: #{music_vae_forward.16} parent=0 // pred_fallthru
    _
  // Predicated region
  $region6: #{music_vae_forward.16} parent=0 // pred_check
    _
  $region7: #{music_vae_forward.16} parent=0 // pred_check_branch
    %11 = sbr.rel (0) target = $region9
  $region8: #{music_vae_forward.16} parent=0 // pred_region
    _
  $region9: #{music_vae_forward.16} parent=0 // pred_fallthru
    _
  // Predicated region
  $region10: #{music_vae_forward.16} parent=0 // pred_check
    _
  $region11: #{music_vae_forward.16} parent=0 // pred_check_branch
    %13 = sbr.rel (0) target = $region13
  $region12: #{music_vae_forward.16} parent=0 // pred_region
    _
  $region13: #{music_vae_forward.16} parent=0 // pred_fallthru
    _
  %v15 = vld [vmem:[%s0] sm:$0xf]
  %v16 = vld [vmem:[%s0 + $0x4] sm:$0xf]
  %v17 = vld [vmem:[%s0 + $0x8] sm:$0xf]
  %v18 = vld [vmem:[%s0 + $0xc] sm:$0xf]
  %v19 = vld [vmem:[%s1] sm:$0xf]
  %v20 = vld [vmem:[%s1 + $0x4] sm:$0xf]
  %v21 = vld [vmem:[%s1 + $0x8] sm:$0xf]
  %v22 = vld [vmem:[%s1 + $0xc] sm:$0xf]
  %v23 = vld [vmem:[%s1 + $0x10] sm:$0xf]
  %v24 = vld [vmem:[%s1 + $0x14] sm:$0xf]
  %v25 = vld [vmem:[%s1 + $0x18] sm:$0xf]
  %v26 = vld [vmem:[%s1 + $0x1c] sm:$0xf]
  %v27 = vld [vmem:[%s1 + $0x20] sm:$0xf]
  %v28 = vld [vmem:[%s1 + $0x24] sm:$0xf]
  %v29 = vld [vmem:[%s1 + $0x28] sm:$0xf]
  %v30 = vld [vmem:[%s1 + $0x2c] sm:$0xf]
  %v31 = vld [vmem:[%s1 + $0x30] sm:$0xf]
  %v32 = vld [vmem:[%s1 + $0x34] sm:$0xf]
  %v33 = vld [vmem:[%s1 + $0x38] sm:$0xf]
  %v34 = vld [vmem:[%s1 + $0x3c] sm:$0xf]
  %v35 = vld [vmem:[%s2] sm:$0x1]
  %v37 = vlaneseq
  %v38 = vshrl.u32 %v37, 7
  %v39 = vsub.s32 0, %v38
  %v40 = vrot.slane %v35, %v39
  %v46 = vunpack.c.l.b16 %v15
  %v47 = vunpack.c.l.b16 %v16
  %v48 = vunpack.c.l.b16 %v17
  %v49 = vunpack.c.l.b16 %v18
  %v50 = vpack.c.b16 %v47, %v46
  %v51 = vpack.c.b16 %v49, %v48
  %v70 = vunpack.c.l.b16 %v19
  %v71 = vunpack.c.l.b16 %v20
  %v72 = vunpack.c.l.b16 %v21
  %v73 = vunpack.c.l.b16 %v22
  %v74 = vunpack.c.l.b16 %v23
  %v75 = vunpack.c.l.b16 %v24
  %v76 = vunpack.c.l.b16 %v25
  %v77 = vunpack.c.l.b16 %v26
  %v78 = vunpack.c.l.b16 %v27
  %v79 = vunpack.c.l.b16 %v28
  %v80 = vunpack.c.l.b16 %v29
  %v81 = vunpack.c.l.b16 %v30
  %v82 = vunpack.c.l.b16 %v31
  %v83 = vunpack.c.l.b16 %v32
  %v84 = vunpack.c.l.b16 %v33
  %v85 = vunpack.c.l.b16 %v34
  %v86 = vpack.c.b16 %v71, %v70
  %v87 = vpack.c.b16 %v73, %v72
  %v88 = vpack.c.b16 %v75, %v74
  %v89 = vpack.c.b16 %v77, %v76
  %v90 = vpack.c.b16 %v79, %v78
  %v91 = vpack.c.b16 %v81, %v80
  %v92 = vpack.c.b16 %v83, %v82
  %v93 = vpack.c.b16 %v85, %v84
  %102 = vmatprep.subr.bf16.mxu0 0
  %103 = vmatpush1.bf16.msra.mxu0 %v93
  %104 = vmatprep.subr.bf16.mxu0 0
  %105 = vmatpush1.bf16.msra.mxu0 %v92
  %106 = vmatprep.subr.bf16.mxu0 0
  %107 = vmatpush1.bf16.msra.mxu0 %v91
  %108 = vmatprep.subr.bf16.mxu0 0
  %109 = vmatpush1.bf16.msra.mxu0 %v90
  %110 = vmatprep.subr.bf16.mxu0 0
  %111 = vmatpush1.bf16.msra.mxu0 %v89
  %112 = vmatprep.subr.bf16.mxu0 0
  %113 = vmatpush1.bf16.msra.mxu0 %v88
  %114 = vmatprep.subr.bf16.mxu0 0
  %115 = vmatpush1.bf16.msra.mxu0 %v87
  %116 = vmatprep.subr.bf16.mxu0 0
  %117 = vmatpush1.bf16.msra.mxu0 %v86
  %118 = vmatprep.subr.bf16.mxu0 0
  %119 = vmatpush2.bf16.msra.mxu0 0
  %120 = vmatprep.subr.bf16.mxu0 0
  %121 = vmatpush2.bf16.msra.mxu0 0
  %122 = vmatprep.subr.bf16.mxu0 0
  %123 = vmatpush2.bf16.msra.mxu0 0
  %124 = vmatprep.subr.bf16.mxu0 0
  %125 = vmatpush2.bf16.msra.mxu0 0
  %126 = vmatprep.subr.bf16.mxu0 0
  %127 = vmatpush2.bf16.msra.mxu0 0
  %128 = vmatprep.subr.bf16.mxu0 0
  %129 = vmatpush2.bf16.msra.mxu0 0
  %130 = vmatprep.subr.bf16.mxu0 0
  %131 = vmatpush2.bf16.msra.mxu0 0
  %132 = vmatprep.subr.bf16.mxu0 0
  %133 = vmatpush2.bf16.msra.mxu0 0
  %134 = vmatprep.mubr.bf16.mxu0 0
  %135 = vmatmul.mubr.bf16.gmra.mxu0 %v50
  %v136 = vpop.f32.mrf.mxu0
  %v137 = vadd.f32 %v40, %v136
  %v138 = vpop.f32.mrf.mxu0
  %v139 = vpop.f32.mrf.mxu0
  %v140 = vadd.f32 %v40, %v139
  %v141 = vpop.f32.mrf.mxu0
  %142 = vmatprep.mubr.bf16.mxu0 0
  %143 = vmatmul.mubr.bf16.gmra.mxu0 %v51
  %v144 = vpop.f32.mrf.mxu0
  %v145 = vadd.f32 %v40, %v144
  %v146 = vpop.f32.mrf.mxu0
  %v147 = vpop.f32.mrf.mxu0
  %v148 = vadd.f32 %v40, %v147
  %v149 = vpop.f32.mrf.mxu0
  %150 = vdwg.mxu0
  %v151 = vpack.c.bf16 %v140, %v137
  %v152 = vpack.c.bf16 %v148, %v145
  %v155 = vunpack.c.l.b16 %v151
  %v156 = vunpack.c.h.b16 %v151
  %v157 = vunpack.c.l.b16 %v152
  %v158 = vunpack.c.h.b16 %v152
  %v159 = vpack.c.b16 %v155, %v155
  %v160 = vpack.c.b16 %v156, %v156
  %v161 = vpack.c.b16 %v157, %v157
  %v162 = vpack.c.b16 %v158, %v158
  %167 = vst [vmem:[%s3] sm:$0xf] %v159
  %168 = vst [vmem:[%s3 + $0x4] sm:$0xf] %v160
  %169 = vst [vmem:[%s3 + $0x8] sm:$0xf] %v161
  %170 = vst [vmem:[%s3 + $0xc] sm:$0xf] %v162
  // Predicated region
  $region14: #{music_vae_forward.16} parent=0 // pred_check
    _
  $region15: #{music_vae_forward.16} parent=0 // pred_check_branch
    %172 = sbr.rel (0) target = $region17
  $region16: #{music_vae_forward.16} parent=0 // pred_region
    _
  $region17: #{music_vae_forward.16} parent=0 // pred_fallthru
    _
  // Predicated region
  $region18: #{music_vae_forward.16} parent=0 // pred_check
    _
  $region19: #{music_vae_forward.16} parent=0 // pred_check_branch
    %174 = sbr.rel (0) target = $region21
  $region20: #{music_vae_forward.16} parent=0 // pred_region
    _
  $region21: #{music_vae_forward.16} parent=0 // pred_fallthru
    _

// kernel: music_vae_forward.10
$region0: #{music_vae_forward.10}
  #allocation0 [shape = 'u32[]', space=smem, size = 0x4, offset = 0x4, fixed_abs, tag = 'smem constant byte address 0x4 - core index']
  #allocation1 [shape = 'u32[144,128]{1,0:T(1,128)}', space=vmem, size = 0x12000, scoped, tag = 'internal scratch']
  #allocation2 [shape = 'bf16[16,256]{1,0:T(8,128)(2,1)}', space=vmem, size = 0x2000, scoped, tag = 'scratch operand']
  #allocation3 [shape = 'f32[16,128]{1,0:T(8,128)}', space=vmem, size = 0x2000, scoped, tag = 'scratch operand']
  %s0 = inlined_call_operand.vmem [shape: bf16[8,16,128], index: 0, kind: input, shape index: {}]
  %s1 = inlined_call_operand.hbm [shape: bf16[2,256,512], index: 1, kind: input, shape index: {}]
  %s2 = inlined_call_operand.vmem [shape: f32[2,1,512], index: 2, kind: input, shape index: {}]
  %s3 = inlined_call_operand.vmem [shape: bf16[2,8,16,128], index: 3, kind: output, shape index: {}]
  %s4 = sld [smem:[#allocation0]]
  $region53: #{music_vae_forward.10} parent=0
    _
  %s6 = ssub.s32 1, %s4
  %s7 = scalar_select 0, %s6, %s4
  $region1: #{music_vae_forward.10} parent=0
    #allocation4 [shape = 'u8[524288]{0}', space=vmem, size = 0x80000, scoped, tag = 'input window, operand 1']
    #allocation5 [shape = 's32[2]{0}', space=sflag, size = 0x8, scoped, tag = 'scoped memory for music_vae_forward.10']
    %8 = vsyncpa [#allocation5], 0
    %s9 = scalar_lea.sflag [#allocation5], 1
    %10 = vsyncpa %s9, 0
    loop: start=0, step=1, limit=4
    $region2: #{music_vae_forward.10} parent=1 // loop_pre_header
      _
    $region3: #{music_vae_forward.10} parent=1 // loop_header
      %s12 = sphi 0, %s16
      %p13 = scmp.ge.s32.totalorder %s12, 4
      %s19 = sphi 0, %s31
      %s20 = sphi 0, %s27
      %s21 = sphi 0, %s19
      %s22 = sphi 0, %s20
      %s23 = sphi 0, %s21
      %s24 = sphi 0, %s22
      %s42 = sphi 0, %s44
      %s45 = sphi 0, %s42
      %s46 = sphi 0, %s45
      %s62 = sphi 0, %s46
      %s68 = sphi 0, %s70
      %s71 = sphi 0, %s68
      %s72 = sphi 0, %s71
      %s88 = sphi 0, %s72
      %s94 = sphi 0, %s96
      %s97 = sphi 0, %s94
      %s98 = sphi 0, %s97
      %s114 = sphi 0, %s98
      %s130 = sphi 0, %s132
      %s133 = sphi 0, %s130
      %s134 = sphi 0, %s133
      %s150 = sphi 0, %s134
    $region4: #{music_vae_forward.10} parent=1 // loop_header_branch
      %15 = sbr.rel (%p13) target = $region8
    $region5: #{music_vae_forward.10} parent=1 // loop_body
      %s17 = ssub.s32 %s12, 1
      %s18 = ssub.s32 %s12, 2
      %s25 = sadd.s32 1, %s20
      %p26 = scmp.ge.s32.totalorder %s25, 1
      %s27 = scalar_select %p26, 0, %s25
      %s28 = sadd.s32 1, %s19
      %s29 = scalar_select %p26, %s28, %s19
      %p30 = scmp.ge.s32.totalorder %s29, 2
      %s31 = scalar_select %p30, 0, %s29
      %s32 = smul.u32 %s20, 2
      %s33 = ssub.s32 0, %s32
      %s34 = smul.u32 %s19, %s33
      %s35 = sadd.s32 %s20, %s34
      %s36 = smul.u32 %s27, 2
      %s37 = ssub.s32 0, %s36
      %s38 = smul.u32 %s31, %s37
      %s39 = sadd.s32 %s27, %s38
      %s40 = ssub.s32 %s35, %s39
      %p41 = scmp.eq.s32.totalorder %s40, 0
      %s43 = sadd.s32 %s42, 1
      %s44 = scalar_select %p41, %s42, %s43
      %p47 = pneg %p41
      %p48 = scmp.eq.s32.totalorder %s12, 1
      %p49 = por %p47, %p48
      %p50 = scmp.ne.s32.totalorder %s42, %s45
      %p51 = scmp.eq.s32.totalorder %s12, 0
      %p52 = por %p50, %p51
      %p53 = scmp.ne.s32.totalorder %s42, %s45
      %p54 = scmp.eq.s32.totalorder %s17, 1
      %p55 = por %p53, %p54
      %p56 = scmp.ne.s32.totalorder %s45, %s46
      %p57 = scmp.eq.s32.totalorder %s17, 0
      %p58 = por %p56, %p57
      %p59 = scmp.ne.s32.totalorder %s45, %s46
      %p60 = scmp.eq.s32.totalorder %s18, 1
      %p61 = por %p59, %p60
      %p63 = scmp.ne.s32.totalorder %s46, %s62
      %p64 = scmp.eq.s32.totalorder %s18, 0
      %p65 = por %p63, %p64
      %s66 = ssub.s32 %s19, %s31
      %p67 = scmp.eq.s32.totalorder %s66, 0
      %s69 = sadd.s32 %s68, 1
      %s70 = scalar_select %p67, %s68, %s69
      %p73 = pneg %p67
      %p74 = scmp.eq.s32.totalorder %s12, 1
      %p75 = por %p73, %p74
      %p76 = scmp.ne.s32.totalorder %s68, %s71
      %p77 = scmp.eq.s32.totalorder %s12, 0
      %p78 = por %p76, %p77
      %p79 = scmp.ne.s32.totalorder %s68, %s71
      %p80 = scmp.eq.s32.totalorder %s17, 1
      %p81 = por %p79, %p80
      %p82 = scmp.ne.s32.totalorder %s71, %s72
      %p83 = scmp.eq.s32.totalorder %s17, 0
      %p84 = por %p82, %p83
      %p85 = scmp.ne.s32.totalorder %s71, %s72
      %p86 = scmp.eq.s32.totalorder %s18, 1
      %p87 = por %p85, %p86
      %p89 = scmp.ne.s32.totalorder %s72, %s88
      %p90 = scmp.eq.s32.totalorder %s18, 0
      %p91 = por %p89, %p90
      %s92 = ssub.s32 %s19, %s31
      %p93 = scmp.eq.s32.totalorder %s92, 0
      %s95 = sadd.s32 %s94, 1
      %s96 = scalar_select %p93, %s94, %s95
      %p99 = pneg %p93
      %p100 = scmp.eq.s32.totalorder %s12, 1
      %p101 = por %p99, %p100
      %p102 = scmp.ne.s32.totalorder %s94, %s97
      %p103 = scmp.eq.s32.totalorder %s12, 0
      %p104 = por %p102, %p103
      %p105 = scmp.ne.s32.totalorder %s94, %s97
      %p106 = scmp.eq.s32.totalorder %s17, 1
      %p107 = por %p105, %p106
      %p108 = scmp.ne.s32.totalorder %s97, %s98
      %p109 = scmp.eq.s32.totalorder %s17, 0
      %p110 = por %p108, %p109
      %p111 = scmp.ne.s32.totalorder %s97, %s98
      %p112 = scmp.eq.s32.totalorder %s18, 1
      %p113 = por %p111, %p112
      %p115 = scmp.ne.s32.totalorder %s98, %s114
      %p116 = scmp.eq.s32.totalorder %s18, 0
      %p117 = por %p115, %p116
      %s118 = smul.u32 %s20, 2
      %s119 = ssub.s32 0, %s118
      %s120 = smul.u32 %s19, %s119
      %s121 = sadd.s32 %s20, %s120
      %s122 = smul.u32 %s27, 2
      %s123 = ssub.s32 0, %s122
      %s124 = smul.u32 %s31, %s123
      %s125 = sadd.s32 %s27, %s124
      %s126 = ssub.s32 %s19, %s31
      %s127 = ssub.s32 %s121, %s125
      %s128 = sor.u32 %s126, %s127
      %p129 = scmp.eq.s32.totalorder %s128, 0
      %s131 = sadd.s32 %s130, 1
      %s132 = scalar_select %p129, %s130, %s131
      %p135 = pneg %p129
      %p136 = scmp.eq.s32.totalorder %s12, 1
      %p137 = por %p135, %p136
      %p138 = scmp.ne.s32.totalorder %s130, %s133
      %p139 = scmp.eq.s32.totalorder %s12, 0
      %p140 = por %p138, %p139
      %p141 = scmp.ne.s32.totalorder %s130, %s133
      %p142 = scmp.eq.s32.totalorder %s17, 1
      %p143 = por %p141, %p142
      %p144 = scmp.ne.s32.totalorder %s133, %s134
      %p145 = scmp.eq.s32.totalorder %s17, 0
      %p146 = por %p144, %p145
      %p147 = scmp.ne.s32.totalorder %s133, %s134
      %p148 = scmp.eq.s32.totalorder %s18, 1
      %p149 = por %p147, %p148
      %p151 = scmp.ne.s32.totalorder %s134, %s150
      %p152 = scmp.eq.s32.totalorder %s18, 0
      %p153 = por %p151, %p152
      %p154 = scmp.le.s32.totalorder 1, %s12
      %p155 = scmp.lt.s32.totalorder %s12, 3
      %p156 = pnand %p154, %p155
      %p157 = pneg %p156
      // Predicated region
      $region9: #{music_vae_forward.10} parent=5 // pred_check
        _
      $region10: #{music_vae_forward.10} parent=5 // pred_check_branch
        %159 = sbr.rel (%p156) target = $region12
      $region11: #{music_vae_forward.10} parent=5 // pred_region
        %s160 = ssub.s32 %s12, 1
      $region12: #{music_vae_forward.10} parent=5 // pred_fallthru
        _
      %p161 = scmp.lt.s32.totalorder %s12, 2
      // Predicated region
      $region13: #{music_vae_forward.10} parent=5 // pred_check
        %p162 = pneg %p161
      $region14: #{music_vae_forward.10} parent=5 // pred_check_branch
        %164 = sbr.rel (%p162) target = $region16
      $region15: #{music_vae_forward.10} parent=5 // pred_region
        // Predicated region
        $region17: #{music_vae_forward.10} parent=15 // pred_check
          %p165 = pneg %p52
        $region18: #{music_vae_forward.10} parent=15 // pred_check_branch
          %167 = sbr.rel (%p165) target = $region20
        $region19: #{music_vae_forward.10} parent=15 // pred_region
          %s168 = smul.u32 %s20, 2
          %s169 = ssub.s32 0, %s168
          %s170 = smul.u32 %s19, %s169
          %s171 = sadd.s32 %s20, %s170
          %s172 = smul.u32 8, %s171
          %p173 = scmp.lt.s32.totalorder %s172, 7
          %s174 = scalar_select %p173, %s172, 7
          %s175 = smul.addr %s174, 2
          %s176 = smul.addr %s175, 4
          %s177 = scalar_lea.vmem %s0, %s176
          %s178 = smul.u32 %s20, 2
          %s179 = ssub.s32 0, %s178
          %s180 = smul.u32 %s19, %s179
          %s181 = sadd.s32 %s20, %s180
          %s182 = smul.u32 8, %s181
        $region20: #{music_vae_forward.10} parent=15 // pred_fallthru
          _
        // Predicated region
        $region21: #{music_vae_forward.10} parent=15 // pred_check
          %p183 = pneg %p78
        $region22: #{music_vae_forward.10} parent=15 // pred_check_branch
          %185 = sbr.rel (%p183) target = $region24
        $region23: #{music_vae_forward.10} parent=15 // pred_region
          %s186 = sand.u32 %s68, 1
          %s187 = scalar_lea.sflag [#allocation5], %s186
          %s188 = sand.u32 %s68, 1
          %s189 = smul.addr %s188, 512
          %s190 = scalar_lea.vmem [#allocation4], %s189
          %s192 = ssub.s32 8192, 8192
          %193 = vsyncadd %s187, %s192
          %s194 = smul.addr %s19, 128
          %s195 = smul.addr %s194, 64
          %s196 = scalar_lea.hbm %s1, %s195
          %s197 = sshll.u32 %s190, 4
          %s198 = int_to_ptr.vmem [resolvable:$true] %s197
          %203 = dma.hbm_to_vmem [thread:$0]  %s196, 8192, %s198, %s187, 256, 256, 16
        $region24: #{music_vae_forward.10} parent=15 // pred_fallthru
          _
        // Predicated region
        $region25: #{music_vae_forward.10} parent=15 // pred_check
          %p204 = pneg %p104
        $region26: #{music_vae_forward.10} parent=15 // pred_check_branch
          %206 = sbr.rel (%p204) target = $region28
        $region27: #{music_vae_forward.10} parent=15 // pred_region
          %p207 = scmp.lt.s32.totalorder %s19, 1
          %s208 = scalar_select %p207, %s19, 1
          %s209 = smul.addr %s208, 4
          %s210 = scalar_lea.vmem %s2, %s209
        $region28: #{music_vae_forward.10} parent=15 // pred_fallthru
          _
      $region16: #{music_vae_forward.10} parent=5 // pred_fallthru
        _
      %p211 = scmp.le.s32.totalorder 1, %s12
      %p212 = scmp.lt.s32.totalorder %s12, 3
      %p213 = pnand %p211, %p212
      %p214 = pneg %p213
      // Predicated region
      $region29: #{music_vae_forward.10} parent=5 // pred_check
        _
      $region30: #{music_vae_forward.10} parent=5 // pred_check_branch
        %216 = sbr.rel (%p213) target = $region32
      $region31: #{music_vae_forward.10} parent=5 // pred_region
        %s217 = ssub.s32 %s12, 1
        %s218 = sand.u32 %s71, 1
        %s219 = scalar_lea.sflag [#allocation5], %s218
        %s220 = sand.u32 %s71, 1
        %s221 = smul.addr %s220, 512
        %s222 = scalar_lea.vmem [#allocation4], %s221
        // Predicated region
        $region33: #{music_vae_forward.10} parent=31 // pred_check
          %p223 = pneg %p84
        $region34: #{music_vae_forward.10} parent=31 // pred_check_branch
          %225 = sbr.rel (%p223) target = $region36
        $region35: #{music_vae_forward.10} parent=31 // pred_region
          %226 = dma.done %s219, 8192
        $region36: #{music_vae_forward.10} parent=31 // pred_fallthru
          _
        %s227 = smul.u32 %s22, 2
        %s228 = ssub.s32 0, %s227
        %s229 = smul.u32 %s21, %s228
        %s230 = sadd.s32 %s22, %s229
        %s231 = smul.u32 8, %s230
        %p232 = scmp.lt.s32.totalorder %s231, 7
        %s233 = scalar_select %p232, %s231, 7
        %s234 = smul.addr %s233, 2
        %s235 = smul.addr %s234, 4
        %s236 = scalar_lea.vmem %s0, %s235
        %p237 = pneg %p58
        %p238 = pneg %p55
        %s239 = sand.u32 %s71, 1
        %s240 = scalar_lea.sflag [#allocation5], %s239
        %s241 = sand.u32 %s71, 1
        %s242 = smul.addr %s241, 512
        %s243 = scalar_lea.vmem [#allocation4], %s242
        %p244 = pneg %p84
        %p245 = pneg %p81
        %p246 = scmp.lt.s32.totalorder %s21, 1
        %s247 = scalar_select %p246, %s21, 1
        %s248 = smul.addr %s247, 4
        %s249 = scalar_lea.vmem %s2, %s248
        %p250 = pneg %p110
        %p251 = pneg %p107
        %p252 = pneg %p146
        %p253 = pneg %p143
        %s254 = smul.u32 %s22, 2
        %s255 = ssub.s32 0, %s254
        %s256 = smul.u32 %s21, %s255
        %s257 = sadd.s32 %s22, %s256
        %s258 = smul.u32 8, %s257
        %p259 = scmp.lt.s32.totalorder %s21, 1
        %s260 = scalar_select %p259, %s21, 1
        %p261 = scmp.lt.s32.totalorder %s258, 7
        %s262 = scalar_select %p261, %s258, 7
        %s263 = smul.addr %s262, 2
        %s264 = smul.addr %s260, 16
        %s265 = sadd.s32 %s263, %s264
        %s266 = smul.addr %s265, 4
        %s267 = scalar_lea.vmem %s3, %s266
        %s268 = smul.u32 %s22, 2
        %s269 = ssub.s32 0, %s268
        %s270 = smul.u32 %s21, %s269
        %s271 = sadd.s32 %s22, %s270
        %s272 = smul.u32 8, %s271
        %p273 = scmp.lt.s32.totalorder %s272, 7
        %s274 = scalar_select %p273, %s272, 7
        %s275 = smul.addr %s274, 2
        %s276 = smul.addr %s275, 4
        %s277 = scalar_lea.vmem %s0, %s276
        %s278 = smul.u32 %s22, 2
        %s279 = ssub.s32 0, %s278
        %s280 = smul.u32 %s21, %s279
        %s281 = sadd.s32 %s22, %s280
        %s282 = smul.u32 8, %s281
        %p283 = scmp.lt.s32.totalorder %s21, 1
        %s284 = scalar_select %p283, %s21, 1
        %s285 = smul.addr %s284, 4
        %s286 = scalar_lea.vmem %s2, %s285
        %s287 = smul.u32 %s22, 2
        %s288 = ssub.s32 0, %s287
        %s289 = smul.u32 %s21, %s288
        %s290 = sadd.s32 %s22, %s289
        %s291 = smul.u32 8, %s290
        %p292 = scmp.lt.s32.totalorder %s21, 1
        %s293 = scalar_select %p292, %s21, 1
        %p294 = scmp.lt.s32.totalorder %s291, 7
        %s295 = scalar_select %p294, %s291, 7
        %s296 = smul.addr %s295, 2
        %s297 = smul.addr %s293, 16
        %s298 = sadd.s32 %s296, %s297
        %s299 = smul.addr %s298, 4
        %s300 = scalar_lea.vmem %s3, %s299
        %s301 = smul.u32 %s22, 2
        %s302 = ssub.s32 0, %s301
        %s303 = smul.u32 %s21, %s302
        %s304 = sadd.s32 %s22, %s303
        %s305 = smul.u32 8, %s304
        %p307 = scmp.eq.s32.totalorder %s22, 0
        // Predicated region
        $region37: #{music_vae_forward.10} parent=31 // pred_check
          %p308 = pneg %p307
        $region38: #{music_vae_forward.10} parent=31 // pred_check_branch
          %310 = sbr.rel (%p308) target = $region40
        $region39: #{music_vae_forward.10} parent=31 // pred_region
          %311 = vst [vmem:[#allocation2] sm:$0xff] 0
          %312 = vst [vmem:[#allocation2 + $0x8] sm:$0xff] 0
          %313 = vst [vmem:[#allocation3] sm:$0xff] 0.0
          %314 = vst [vmem:[#allocation3 + $0x8] sm:$0xff] 0.0
        $region40: #{music_vae_forward.10} parent=31 // pred_fallthru
          _
        %v315 = vld [vmem:[%s222] sm:$0xff]
        %v316 = vld [vmem:[%s222 + $0x8] sm:$0xff]
        %v317 = vld [vmem:[%s222 + $0x10] sm:$0xff]
        %v318 = vld [vmem:[%s222 + $0x18] sm:$0xff]
        %v319 = vld [vmem:[%s222 + $0x20] sm:$0xff]
        %v320 = vld [vmem:[%s222 + $0x28] sm:$0xff]
        %v321 = vld [vmem:[%s222 + $0x30] sm:$0xff]
        %v322 = vld [vmem:[%s222 + $0x38] sm:$0xff]
        %v323 = vld [vmem:[%s222 + $0x40] sm:$0xff]
        %v324 = vld [vmem:[%s222 + $0x48] sm:$0xff]
        %v325 = vld [vmem:[%s222 + $0x50] sm:$0xff]
        %v326 = vld [vmem:[%s222 + $0x58] sm:$0xff]
        %v327 = vld [vmem:[%s222 + $0x60] sm:$0xff]
        %v328 = vld [vmem:[%s222 + $0x68] sm:$0xff]
        %v329 = vld [vmem:[%s222 + $0x70] sm:$0xff]
        %v330 = vld [vmem:[%s222 + $0x78] sm:$0xff]
        %v331 = vld [vmem:[%s222 + $0x80] sm:$0xff]
        %v332 = vld [vmem:[%s222 + $0x88] sm:$0xff]
        %v333 = vld [vmem:[%s222 + $0x90] sm:$0xff]
        %v334 = vld [vmem:[%s222 + $0x98] sm:$0xff]
        %v335 = vld [vmem:[%s222 + $0xa0] sm:$0xff]
        %v336 = vld [vmem:[%s222 + $0xa8] sm:$0xff]
        %v337 = vld [vmem:[%s222 + $0xb0] sm:$0xff]
        %v338 = vld [vmem:[%s222 + $0xb8] sm:$0xff]
        %v339 = vld [vmem:[%s222 + $0xc0] sm:$0xff]
        %v340 = vld [vmem:[%s222 + $0xc8] sm:$0xff]
        %v341 = vld [vmem:[%s222 + $0xd0] sm:$0xff]
        %v342 = vld [vmem:[%s222 + $0xd8] sm:$0xff]
        %v343 = vld [vmem:[%s222 + $0xe0] sm:$0xff]
        %v344 = vld [vmem:[%s222 + $0xe8] sm:$0xff]
        %v345 = vld [vmem:[%s222 + $0xf0] sm:$0xff]
        %v346 = vld [vmem:[%s222 + $0xf8] sm:$0xff]
        %v347 = vld [vmem:[%s222 + $0x100] sm:$0xff]
        %v348 = vld [vmem:[%s222 + $0x108] sm:$0xff]
        %v349 = vld [vmem:[%s222 + $0x110] sm:$0xff]
        %v350 = vld [vmem:[%s222 + $0x118] sm:$0xff]
        %v351 = vld [vmem:[%s222 + $0x120] sm:$0xff]
        %v352 = vld [vmem:[%s222 + $0x128] sm:$0xff]
        %v353 = vld [vmem:[%s222 + $0x130] sm:$0xff]
        %v354 = vld [vmem:[%s222 + $0x138] sm:$0xff]
        %v355 = vld [vmem:[%s222 + $0x140] sm:$0xff]
        %v356 = vld [vmem:[%s222 + $0x148] sm:$0xff]
        %v357 = vld [vmem:[%s222 + $0x150] sm:$0xff]
        %v358 = vld [vmem:[%s222 + $0x158] sm:$0xff]
        %v359 = vld [vmem:[%s222 + $0x160] sm:$0xff]
        %v360 = vld [vmem:[%s222 + $0x168] sm:$0xff]
        %v361 = vld [vmem:[%s222 + $0x170] sm:$0xff]
        %v362 = vld [vmem:[%s222 + $0x178] sm:$0xff]
        %v363 = vld [vmem:[%s222 + $0x180] sm:$0xff]
        %v364 = vld [vmem:[%s222 + $0x188] sm:$0xff]
        %v365 = vld [vmem:[%s222 + $0x190] sm:$0xff]
        %v366 = vld [vmem:[%s222 + $0x198] sm:$0xff]
        %v367 = vld [vmem:[%s222 + $0x1a0] sm:$0xff]
        %v368 = vld [vmem:[%s222 + $0x1a8] sm:$0xff]
        %v369 = vld [vmem:[%s222 + $0x1b0] sm:$0xff]
        %v370 = vld [vmem:[%s222 + $0x1b8] sm:$0xff]
        %v371 = vld [vmem:[%s222 + $0x1c0] sm:$0xff]
        %v372 = vld [vmem:[%s222 + $0x1c8] sm:$0xff]
        %v373 = vld [vmem:[%s222 + $0x1d0] sm:$0xff]
        %v374 = vld [vmem:[%s222 + $0x1d8] sm:$0xff]
        %v375 = vld [vmem:[%s222 + $0x1e0] sm:$0xff]
        %v376 = vld [vmem:[%s222 + $0x1e8] sm:$0xff]
        %v377 = vld [vmem:[%s222 + $0x1f0] sm:$0xff]
        %v378 = vld [vmem:[%s222 + $0x1f8] sm:$0xff]
        %v379 = vld [vmem:[%s286] sm:$0xf]
        %s380 = smul.u32 %s21, 7
        %s381 = smul.u32 %s380, 2
        %s382 = smul.addr %s381, 4
        %s383 = scalar_lea.vmem %s277, %s382
        %v384 = vld [vmem:[%s383] sm:$0xf]
        %v385 = vld [vmem:[%s383 + $0x4] sm:$0xf]
        %386 = vst [vmem:[#allocation2] sm:$0xf] %v384
        %387 = vst [vmem:[#allocation2 + $0x8] sm:$0xf] %v385
        %v388 = vld [vmem:[#allocation2] sm:$0xff]
        %v389 = vld [vmem:[#allocation2 + $0x8] sm:$0xff]
        %v391 = vlaneseq
        %v392 = vshrl.u32 %v391, 7
        %v393 = vsub.s32 0, %v392
        %v394 = vrot.slane %v379, %v393
        %v395 = vlaneseq
        %v396 = vshrl.u32 %v395, 7
        %v397 = vsub.s32 1, %v396
        %v398 = vrot.slane %v379, %v397
        %v399 = vlaneseq
        %v400 = vshrl.u32 %v399, 7
        %v401 = vsub.s32 2, %v400
        %v402 = vrot.slane %v379, %v401
        %v403 = vlaneseq
        %v404 = vshrl.u32 %v403, 7
        %v405 = vsub.s32 3, %v404
        %v406 = vrot.slane %v379, %v405
        %v413 = vunpack.c.l.b16 %v388
        %v414 = vunpack.c.h.b16 %v388
        %v415 = vunpack.c.l.b16 %v389
        %v416 = vunpack.c.h.b16 %v389
        %v417 = vpack.c.b16 %v415, %v413
        %v418 = vpack.c.b16 %v416, %v414
        %v485 = vunpack.c.l.b16 %v315
        %v486 = vunpack.c.h.b16 %v315
        %v487 = vunpack.c.l.b16 %v316
        %v488 = vunpack.c.h.b16 %v316
        %v489 = vunpack.c.l.b16 %v317
        %v490 = vunpack.c.h.b16 %v317
        %v491 = vunpack.c.l.b16 %v318
        %v492 = vunpack.c.h.b16 %v318
        %v493 = vunpack.c.l.b16 %v319
        %v494 = vunpack.c.h.b16 %v319
        %v495 = vunpack.c.l.b16 %v320
        %v496 = vunpack.c.h.b16 %v320
        %v497 = vunpack.c.l.b16 %v321
        %v498 = vunpack.c.h.b16 %v321
        %v499 = vunpack.c.l.b16 %v322
        %v500 = vunpack.c.h.b16 %v322
        %v501 = vunpack.c.l.b16 %v323
        %v502 = vunpack.c.h.b16 %v323
        %v503 = vunpack.c.l.b16 %v324
        %v504 = vunpack.c.h.b16 %v324
        %v505 = vunpack.c.l.b16 %v325
        %v506 = vunpack.c.h.b16 %v325
        %v507 = vunpack.c.l.b16 %v326
        %v508 = vunpack.c.h.b16 %v326
        %v509 = vunpack.c.l.b16 %v327
        %v510 = vunpack.c.h.b16 %v327
        %v511 = vunpack.c.l.b16 %v328
        %v512 = vunpack.c.h.b16 %v328
        %v513 = vunpack.c.l.b16 %v329
        %v514 = vunpack.c.h.b16 %v329
        %v515 = vunpack.c.l.b16 %v330
        %v516 = vunpack.c.h.b16 %v330
        %v517 = vunpack.c.l.b16 %v331
        %v518 = vunpack.c.h.b16 %v331
        %v519 = vunpack.c.l.b16 %v332
        %v520 = vunpack.c.h.b16 %v332
        %v521 = vunpack.c.l.b16 %v333
        %v522 = vunpack.c.h.b16 %v333
        %v523 = vunpack.c.l.b16 %v334
        %v524 = vunpack.c.h.b16 %v334
        %v525 = vunpack.c.l.b16 %v335
        %v526 = vunpack.c.h.b16 %v335
        %v527 = vunpack.c.l.b16 %v336
        %v528 = vunpack.c.h.b16 %v336
        %v529 = vunpack.c.l.b16 %v337
        %v530 = vunpack.c.h.b16 %v337
        %v531 = vunpack.c.l.b16 %v338
        %v532 = vunpack.c.h.b16 %v338
        %v533 = vunpack.c.l.b16 %v339
        %v534 = vunpack.c.h.b16 %v339
        %v535 = vunpack.c.l.b16 %v340
        %v536 = vunpack.c.h.b16 %v340
        %v537 = vunpack.c.l.b16 %v341
        %v538 = vunpack.c.h.b16 %v341
        %v539 = vunpack.c.l.b16 %v342
        %v540 = vunpack.c.h.b16 %v342
        %v541 = vunpack.c.l.b16 %v343
        %v542 = vunpack.c.h.b16 %v343
        %v543 = vunpack.c.l.b16 %v344
        %v544 = vunpack.c.h.b16 %v344
        %v545 = vunpack.c.l.b16 %v345
        %v546 = vunpack.c.h.b16 %v345
        %v547 = vunpack.c.l.b16 %v346
        %v548 = vunpack.c.h.b16 %v346
        %v549 = vunpack.c.l.b16 %v347
        %v550 = vunpack.c.h.b16 %v347
        %v551 = vunpack.c.l.b16 %v348
        %v552 = vunpack.c.h.b16 %v348
        %v553 = vunpack.c.l.b16 %v349
        %v554 = vunpack.c.h.b16 %v349
        %v555 = vunpack.c.l.b16 %v350
        %v556 = vunpack.c.h.b16 %v350
        %v557 = vunpack.c.l.b16 %v351
        %v558 = vunpack.c.h.b16 %v351
        %v559 = vunpack.c.l.b16 %v352
        %v560 = vunpack.c.h.b16 %v352
        %v561 = vunpack.c.l.b16 %v353
        %v562 = vunpack.c.h.b16 %v353
        %v563 = vunpack.c.l.b16 %v354
        %v564 = vunpack.c.h.b16 %v354
        %v565 = vunpack.c.l.b16 %v355
        %v566 = vunpack.c.h.b16 %v355
        %v567 = vunpack.c.l.b16 %v356
        %v568 = vunpack.c.h.b16 %v356
        %v569 = vunpack.c.l.b16 %v357
        %v570 = vunpack.c.h.b16 %v357
        %v571 = vunpack.c.l.b16 %v358
        %v572 = vunpack.c.h.b16 %v358
        %v573 = vunpack.c.l.b16 %v359
        %v574 = vunpack.c.h.b16 %v359
        %v575 = vunpack.c.l.b16 %v360
        %v576 = vunpack.c.h.b16 %v360
        %v577 = vunpack.c.l.b16 %v361
        %v578 = vunpack.c.h.b16 %v361
        %v579 = vunpack.c.l.b16 %v362
        %v580 = vunpack.c.h.b16 %v362
        %v581 = vunpack.c.l.b16 %v363
        %v582 = vunpack.c.h.b16 %v363
        %v583 = vunpack.c.l.b16 %v364
        %v584 = vunpack.c.h.b16 %v364
        %v585 = vunpack.c.l.b16 %v365
        %v586 = vunpack.c.h.b16 %v365
        %v587 = vunpack.c.l.b16 %v366
        %v588 = vunpack.c.h.b16 %v366
        %v589 = vunpack.c.l.b16 %v367
        %v590 = vunpack.c.h.b16 %v367
        %v591 = vunpack.c.l.b16 %v368
        %v592 = vunpack.c.h.b16 %v368
        %v593 = vunpack.c.l.b16 %v369
        %v594 = vunpack.c.h.b16 %v369
        %v595 = vunpack.c.l.b16 %v370
        %v596 = vunpack.c.h.b16 %v370
        %v597 = vunpack.c.l.b16 %v371
        %v598 = vunpack.c.h.b16 %v371
        %v599 = vunpack.c.l.b16 %v372
        %v600 = vunpack.c.h.b16 %v372
        %v601 = vunpack.c.l.b16 %v373
        %v602 = vunpack.c.h.b16 %v373
        %v603 = vunpack.c.l.b16 %v374
        %v604 = vunpack.c.h.b16 %v374
        %v605 = vunpack.c.l.b16 %v375
        %v606 = vunpack.c.h.b16 %v375
        %v607 = vunpack.c.l.b16 %v376
        %v608 = vunpack.c.h.b16 %v376
        %v609 = vunpack.c.l.b16 %v377
        %v610 = vunpack.c.h.b16 %v377
        %v611 = vunpack.c.l.b16 %v378
        %v612 = vunpack.c.h.b16 %v378
        %v613 = vpack.c.b16 %v489, %v485
        %v614 = vpack.c.b16 %v490, %v486
        %v615 = vpack.c.b16 %v491, %v487
        %v616 = vpack.c.b16 %v492, %v488
        %v617 = vpack.c.b16 %v497, %v493
        %v618 = vpack.c.b16 %v498, %v494
        %v619 = vpack.c.b16 %v499, %v495
        %v620 = vpack.c.b16 %v500, %v496
        %v621 = vpack.c.b16 %v505, %v501
        %v622 = vpack.c.b16 %v506, %v502
        %v623 = vpack.c.b16 %v507, %v503
        %v624 = vpack.c.b16 %v508, %v504
        %v625 = vpack.c.b16 %v513, %v509
        %v626 = vpack.c.b16 %v514, %v510
        %v627 = vpack.c.b16 %v515, %v511
        %v628 = vpack.c.b16 %v516, %v512
        %v629 = vpack.c.b16 %v521, %v517
        %v630 = vpack.c.b16 %v522, %v518
        %v631 = vpack.c.b16 %v523, %v519
        %v632 = vpack.c.b16 %v524, %v520
        %v633 = vpack.c.b16 %v529, %v525
        %v634 = vpack.c.b16 %v530, %v526
        %v635 = vpack.c.b16 %v531, %v527
        %v636 = vpack.c.b16 %v532, %v528
        %v637 = vpack.c.b16 %v537, %v533
        %v638 = vpack.c.b16 %v538, %v534
        %v639 = vpack.c.b16 %v539, %v535
        %v640 = vpack.c.b16 %v540, %v536
        %v641 = vpack.c.b16 %v545, %v541
        %v642 = vpack.c.b16 %v546, %v542
        %v643 = vpack.c.b16 %v547, %v543
        %v644 = vpack.c.b16 %v548, %v544
        %v645 = vpack.c.b16 %v553, %v549
        %v646 = vpack.c.b16 %v554, %v550
        %v647 = vpack.c.b16 %v555, %v551
        %v648 = vpack.c.b16 %v556, %v552
        %v649 = vpack.c.b16 %v561, %v557
        %v650 = vpack.c.b16 %v562, %v558
        %v651 = vpack.c.b16 %v563, %v559
        %v652 = vpack.c.b16 %v564, %v560
        %v653 = vpack.c.b16 %v569, %v565
        %v654 = vpack.c.b16 %v570, %v566
        %v655 = vpack.c.b16 %v571, %v567
        %v656 = vpack.c.b16 %v572, %v568
        %v657 = vpack.c.b16 %v577, %v573
        %v658 = vpack.c.b16 %v578, %v574
        %v659 = vpack.c.b16 %v579, %v575
        %v660 = vpack.c.b16 %v580, %v576
        %v661 = vpack.c.b16 %v585, %v581
        %v662 = vpack.c.b16 %v586, %v582
        %v663 = vpack.c.b16 %v587, %v583
        %v664 = vpack.c.b16 %v588, %v584
        %v665 = vpack.c.b16 %v593, %v589
        %v666 = vpack.c.b16 %v594, %v590
        %v667 = vpack.c.b16 %v595, %v591
        %v668 = vpack.c.b16 %v596, %v592
        %v669 = vpack.c.b16 %v601, %v597
        %v670 = vpack.c.b16 %v602, %v598
        %v671 = vpack.c.b16 %v603, %v599
        %v672 = vpack.c.b16 %v604, %v600
        %v673 = vpack.c.b16 %v609, %v605
        %v674 = vpack.c.b16 %v610, %v606
        %v675 = vpack.c.b16 %v611, %v607
        %v676 = vpack.c.b16 %v612, %v608
        %741 = vmatprep.subr.bf16.mxu0 %v642
        %742 = vmatpush1.bf16.msra.mxu0 %v641
        %743 = vmatprep.subr.bf16.mxu0 %v638
        %744 = vmatpush1.bf16.msra.mxu0 %v637
        %745 = vmatprep.subr.bf16.mxu0 %v634
        %746 = vmatpush1.bf16.msra.mxu0 %v633
        %747 = vmatprep.subr.bf16.mxu0 %v630
        %748 = vmatpush1.bf16.msra.mxu0 %v629
        %749 = vmatprep.subr.bf16.mxu0 %v626
        %750 = vmatpush1.bf16.msra.mxu0 %v625
        %751 = vmatprep.subr.bf16.mxu0 %v622
        %752 = vmatpush1.bf16.msra.mxu0 %v621
        %753 = vmatprep.subr.bf16.mxu0 %v618
        %754 = vmatpush1.bf16.msra.mxu0 %v617
        %755 = vmatprep.subr.bf16.mxu0 %v614
        %756 = vmatpush1.bf16.msra.mxu0 %v613
        %757 = vmatprep.subr.bf16.mxu0 %v674
        %758 = vmatpush2.bf16.msra.mxu0 %v673
        %759 = vmatprep.subr.bf16.mxu0 %v670
        %760 = vmatpush2.bf16.msra.mxu0 %v669
        %761 = vmatprep.subr.bf16.mxu0 %v666
        %762 = vmatpush2.bf16.msra.mxu0 %v665
        %763 = vmatprep.subr.bf16.mxu0 %v662
        %764 = vmatpush2.bf16.msra.mxu0 %v661
        %765 = vmatprep.subr.bf16.mxu0 %v658
        %766 = vmatpush2.bf16.msra.mxu0 %v657
        %767 = vmatprep.subr.bf16.mxu0 %v654
        %768 = vmatpush2.bf16.msra.mxu0 %v653
        %769 = vmatprep.subr.bf16.mxu0 %v650
        %770 = vmatpush2.bf16.msra.mxu0 %v649
        %771 = vmatprep.subr.bf16.mxu0 %v646
        %772 = vmatpush2.bf16.msra.mxu0 %v645
        %773 = vmatprep.mubr.bf16.mxu0 %v418
        %774 = vmatmul.mubr.bf16.gmra.mxu0 %v417
        %v775 = vpop.f32.mrf.mxu0
        %v776 = vadd.f32 %v394, %v775
        %v777 = vpop.f32.mrf.mxu0
        %v778 = vadd.f32 %v398, %v777
        %v779 = vpop.f32.mrf.mxu0
        %v780 = vadd.f32 %v394, %v779
        %v781 = vpop.f32.mrf.mxu0
        %v782 = vadd.f32 %v398, %v781
        %783 = vdwg.mxu0
        %784 = vmatprep.subr.bf16.mxu0 %v644
        %785 = vmatpush1.bf16.msra.mxu0 %v643
        %786 = vmatprep.subr.bf16.mxu0 %v640
        %787 = vmatpush1.bf16.msra.mxu0 %v639
        %788 = vmatprep.subr.bf16.mxu0 %v636
        %789 = vmatpush1.bf16.msra.mxu0 %v635
        %790 = vmatprep.subr.bf16.mxu0 %v632
        %791 = vmatpush1.bf16.msra.mxu0 %v631
        %792 = vmatprep.subr.bf16.mxu0 %v628
        %793 = vmatpush1.bf16.msra.mxu0 %v627
        %794 = vmatprep.subr.bf16.mxu0 %v624
        %795 = vmatpush1.bf16.msra.mxu0 %v623
        %796 = vmatprep.subr.bf16.mxu0 %v620
        %797 = vmatpush1.bf16.msra.mxu0 %v619
        %798 = vmatprep.subr.bf16.mxu0 %v616
        %799 = vmatpush1.bf16.msra.mxu0 %v615
        %800 = vmatprep.subr.bf16.mxu0 %v676
        %801 = vmatpush2.bf16.msra.mxu0 %v675
        %802 = vmatprep.subr.bf16.mxu0 %v672
        %803 = vmatpush2.bf16.msra.mxu0 %v671
        %804 = vmatprep.subr.bf16.mxu0 %v668
        %805 = vmatpush2.bf16.msra.mxu0 %v667
        %806 = vmatprep.subr.bf16.mxu0 %v664
        %807 = vmatpush2.bf16.msra.mxu0 %v663
        %808 = vmatprep.subr.bf16.mxu0 %v660
        %809 = vmatpush2.bf16.msra.mxu0 %v659
        %810 = vmatprep.subr.bf16.mxu0 %v656
        %811 = vmatpush2.bf16.msra.mxu0 %v655
        %812 = vmatprep.subr.bf16.mxu0 %v652
        %813 = vmatpush2.bf16.msra.mxu0 %v651
        %814 = vmatprep.subr.bf16.mxu0 %v648
        %815 = vmatpush2.bf16.msra.mxu0 %v647
        %816 = vmatprep.mubr.bf16.mxu0 %v418
        %817 = vmatmul.mubr.bf16.gmra.mxu0 %v417
        %v818 = vpop.f32.mrf.mxu0
        %v819 = vadd.f32 %v402, %v818
        %v820 = vpop.f32.mrf.mxu0
        %v821 = vadd.f32 %v406, %v820
        %v822 = vpop.f32.mrf.mxu0
        %v823 = vadd.f32 %v402, %v822
        %v824 = vpop.f32.mrf.mxu0
        %v825 = vadd.f32 %v406, %v824
        %826 = vdwg.mxu0
        %v827 = vxor.u32 %v776, 2147483648
        %v828 = vxor.u32 %v778, 2147483648
        %v829 = vxor.u32 %v819, 2147483648
        %v830 = vxor.u32 %v780, 2147483648
        %v831 = vxor.u32 %v782, 2147483648
        %v832 = vxor.u32 %v823, 2147483648
        %v833 = vmul.f32 %v827, 1.442695
        %v834 = vpow.pop %v833
        %v835 = vmul.f32 %v828, 1.442695
        %v836 = vpow.pop %v835
        %v837 = vmul.f32 %v829, 1.442695
        %v838 = vpow.pop %v837
        %v839 = vmul.f32 %v830, 1.442695
        %v840 = vpow.pop %v839
        %v841 = vmul.f32 %v831, 1.442695
        %v842 = vpow.pop %v841
        %v843 = vmul.f32 %v832, 1.442695
        %v844 = vpow.pop %v843
        %v845 = vadd.f32 %v834, 1.0
        %v846 = vadd.f32 %v836, 1.0
        %v847 = vadd.f32 %v838, 1.0
        %v848 = vadd.f32 %v840, 1.0
        %v849 = vadd.f32 %v842, 1.0
        %v850 = vadd.f32 %v844, 1.0
        %v851 = vrcp.pop %v845
        %v852 = vmul.f32 1.0, %v851
        %v853 = vrcp.pop %v846
        %v854 = vmul.f32 1.0, %v853
        %v855 = vrcp.pop %v847
        %v856 = vmul.f32 1.0, %v855
        %v857 = vrcp.pop %v848
        %v858 = vmul.f32 1.0, %v857
        %v859 = vrcp.pop %v849
        %v860 = vmul.f32 1.0, %v859
        %v861 = vrcp.pop %v850
        %v862 = vmul.f32 1.0, %v861
        %v863 = vtanh.pop %v821
        %v864 = vtanh.pop %v825
        %v865 = vld [vmem:[#allocation3] sm:$0xff]
        %v866 = vld [vmem:[#allocation3 + $0x8] sm:$0xff]
        %v867 = vmul.f32 %v854, %v865
        %v868 = vmul.f32 %v860, %v866
        %v869 = vmul.f32 %v852, %v863
        %v870 = vmul.f32 %v858, %v864
        %v871 = vadd.f32 %v867, %v869
        %v872 = vadd.f32 %v868, %v870
        %v873 = vtanh.pop %v871
        %v874 = vtanh.pop %v872
        %v875 = vmul.f32 %v856, %v873
        %v876 = vmul.f32 %v862, %v874
        %v877 = vpack.c.bf16 %v876, %v875
        %878 = vst [vmem:[#allocation3] sm:$0xff] %v871
        %879 = vst [vmem:[#allocation3 + $0x8] sm:$0xff] %v872
        %v881 = vunpack.c.l.b16 %v877
        %v882 = vunpack.c.h.b16 %v877
        %v883 = vpack.c.b16 %v881, %v881
        %v884 = vpack.c.b16 %v882, %v882
        %887 = vst [vmem:[#allocation2 + $0x4] sm:$0xf] %v883
        %888 = vst [vmem:[#allocation2 + $0xc] sm:$0xf] %v884
        %s889 = smul.addr %s381, 4
        %s890 = scalar_lea.vmem %s300, %s889
        %891 = vst [vmem:[%s890] sm:$0xf] %v883
        %892 = vst [vmem:[%s890 + $0x4] sm:$0xf] %v884
        %s893 = smul.u32 %s21, 5
        %s894 = sadd.s32 %s893, 1
        %s895 = smul.u32 %s894, 2
        %s896 = smul.addr %s895, 4
        %s897 = scalar_lea.vmem %s277, %s896
        %v898 = vld [vmem:[%s897] sm:$0xf]
        %v899 = vld [vmem:[%s897 + $0x4] sm:$0xf]
        %900 = vst [vmem:[#allocation2] sm:$0xf] %v898
        %901 = vst [vmem:[#allocation2 + $0x8] sm:$0xf] %v899
        %v902 = vld [vmem:[#allocation2] sm:$0xff]
        %v903 = vld [vmem:[#allocation2 + $0x8] sm:$0xff]
        %v906 = vunpack.c.l.b16 %v902
        %v907 = vunpack.c.h.b16 %v902
        %v908 = vunpack.c.l.b16 %v903
        %v909 = vunpack.c.h.b16 %v903
        %v910 = vpack.c.b16 %v908, %v906
        %v911 = vpack.c.b16 %v909, %v907
        %914 = vmatprep.subr.bf16.mxu0 %v642
        %915 = vmatpush1.bf16.msra.mxu0 %v641
        %916 = vmatprep.subr.bf16.mxu0 %v638
        %917 = vmatpush1.bf16.msra.mxu0 %v637
        %918 = vmatprep.subr.bf16.mxu0 %v634
        %919 = vmatpush1.bf16.msra.mxu0 %v633
        %920 = vmatprep.subr.bf16.mxu0 %v630
        %921 = vmatpush1.bf16.msra.mxu0 %v629
        %922 = vmatprep.subr.bf16.mxu0 %v626
        %923 = vmatpush1.bf16.msra.mxu0 %v625
        %924 = vmatprep.subr.bf16.mxu0 %v622
        %925 = vmatpush1.bf16.msra.mxu0 %v621
        %926 = vmatprep.subr.bf16.mxu0 %v618
        %927 = vmatpush1.bf16.msra.mxu0 %v617
        %928 = vmatprep.subr.bf16.mxu0 %v614
        %929 = vmatpush1.bf16.msra.mxu0 %v613
        %930 = vmatprep.subr.bf16.mxu0 %v674
        %931 = vmatpush2.bf16.msra.mxu0 %v673
        %932 = vmatprep.subr.bf16.mxu0 %v670
        %933 = vmatpush2.bf16.msra.mxu0 %v669
        %934 = vmatprep.subr.bf16.mxu0 %v666
        %935 = vmatpush2.bf16.msra.mxu0 %v665
        %936 = vmatprep.subr.bf16.mxu0 %v662
        %937 = vmatpush2.bf16.msra.mxu0 %v661
        %938 = vmatprep.subr.bf16.mxu0 %v658
        %939 = vmatpush2.bf16.msra.mxu0 %v657
        %940 = vmatprep.subr.bf16.mxu0 %v654
        %941 = vmatpush2.bf16.msra.mxu0 %v653
        %942 = vmatprep.subr.bf16.mxu0 %v650
        %943 = vmatpush2.bf16.msra.mxu0 %v649
        %944 = vmatprep.subr.bf16.mxu0 %v646
        %945 = vmatpush2.bf16.msra.mxu0 %v645
        %946 = vmatprep.mubr.bf16.mxu0 %v911
        %947 = vmatmul.mubr.bf16.gmra.mxu0 %v910
        %v948 = vpop.f32.mrf.mxu0
        %v949 = vadd.f32 %v394, %v948
        %v950 = vpop.f32.mrf.mxu0
        %v951 = vadd.f32 %v398, %v950
        %v952 = vpop.f32.mrf.mxu0
        %v953 = vadd.f32 %v394, %v952
        %v954 = vpop.f32.mrf.mxu0
        %v955 = vadd.f32 %v398, %v954
        %956 = vdwg.mxu0
        %957 = vmatprep.subr.bf16.mxu0 %v644
        %958 = vmatpush1.bf16.msra.mxu0 %v643
        %959 = vmatprep.subr.bf16.mxu0 %v640
        %960 = vmatpush1.bf16.msra.mxu0 %v639
        %961 = vmatprep.subr.bf16.mxu0 %v636
        %962 = vmatpush1.bf16.msra.mxu0 %v635
        %963 = vmatprep.subr.bf16.mxu0 %v632
        %964 = vmatpush1.bf16.msra.mxu0 %v631
        %965 = vmatprep.subr.bf16.mxu0 %v628
        %966 = vmatpush1.bf16.msra.mxu0 %v627
        %967 = vmatprep.subr.bf16.mxu0 %v624
        %968 = vmatpush1.bf16.msra.mxu0 %v623
        %969 = vmatprep.subr.bf16.mxu0 %v620
        %970 = vmatpush1.bf16.msra.mxu0 %v619
        %971 = vmatprep.subr.bf16.mxu0 %v616
        %972 = vmatpush1.bf16.msra.mxu0 %v615
        %973 = vmatprep.subr.bf16.mxu0 %v676
        %974 = vmatpush2.bf16.msra.mxu0 %v675
        %975 = vmatprep.subr.bf16.mxu0 %v672
        %976 = vmatpush2.bf16.msra.mxu0 %v671
        %977 = vmatprep.subr.bf16.mxu0 %v668
        %978 = vmatpush2.bf16.msra.mxu0 %v667
        %979 = vmatprep.subr.bf16.mxu0 %v664
        %980 = vmatpush2.bf16.msra.mxu0 %v663
        %981 = vmatprep.subr.bf16.mxu0 %v660
        %982 = vmatpush2.bf16.msra.mxu0 %v659
        %983 = vmatprep.subr.bf16.mxu0 %v656
        %984 = vmatpush2.bf16.msra.mxu0 %v655
        %985 = vmatprep.subr.bf16.mxu0 %v652
        %986 = vmatpush2.bf16.msra.mxu0 %v651
        %987 = vmatprep.subr.bf16.mxu0 %v648
        %988 = vmatpush2.bf16.msra.mxu0 %v647
        %989 = vmatprep.mubr.bf16.mxu0 %v911
        %990 = vmatmul.mubr.bf16.gmra.mxu0 %v910
        %v991 = vpop.f32.mrf.mxu0
        %v992 = vadd.f32 %v402, %v991
        %v993 = vpop.f32.mrf.mxu0
        %v994 = vadd.f32 %v406, %v993
        %v995 = vpop.f32.mrf.mxu0
        %v996 = vadd.f32 %v402, %v995
        %v997 = vpop.f32.mrf.mxu0
        %v998 = vadd.f32 %v406, %v997
        %999 = vdwg.mxu0
        %v1000 = vxor.u32 %v949, 2147483648
        %v1001 = vxor.u32 %v951, 2147483648
        %v1002 = vxor.u32 %v992, 2147483648
        %v1003 = vxor.u32 %v953, 2147483648
        %v1004 = vxor.u32 %v955, 2147483648
        %v1005 = vxor.u32 %v996, 2147483648
        %v1006 = vmul.f32 %v1000, 1.442695
        %v1007 = vpow.pop %v1006
        %v1008 = vmul.f32 %v1001, 1.442695
        %v1009 = vpow.pop %v1008
        %v1010 = vmul.f32 %v1002, 1.442695
        %v1011 = vpow.pop %v1010
        %v1012 = vmul.f32 %v1003, 1.442695
        %v1013 = vpow.pop %v1012
        %v1014 = vmul.f32 %v1004, 1.442695
        %v1015 = vpow.pop %v1014
        %v1016 = vmul.f32 %v1005, 1.442695
        %v1017 = vpow.pop %v1016
        %v1018 = vadd.f32 %v1007, 1.0
        %v1019 = vadd.f32 %v1009, 1.0
        %v1020 = vadd.f32 %v1011, 1.0
        %v1021 = vadd.f32 %v1013, 1.0
        %v1022 = vadd.f32 %v1015, 1.0
        %v1023 = vadd.f32 %v1017, 1.0
        %v1024 = vrcp.pop %v1018
        %v1025 = vmul.f32 1.0, %v1024
        %v1026 = vrcp.pop %v1019
        %v1027 = vmul.f32 1.0, %v1026
        %v1028 = vrcp.pop %v1020
        %v1029 = vmul.f32 1.0, %v1028
        %v1030 = vrcp.pop %v1021
        %v1031 = vmul.f32 1.0, %v1030
        %v1032 = vrcp.pop %v1022
        %v1033 = vmul.f32 1.0, %v1032
        %v1034 = vrcp.pop %v1023
        %v1035 = vmul.f32 1.0, %v1034
        %v1036 = vtanh.pop %v994
        %v1037 = vtanh.pop %v998
        %v1038 = vld [vmem:[#allocation3] sm:$0xff]
        %v1039 = vld [vmem:[#allocation3 + $0x8] sm:$0xff]
        %v1040 = vmul.f32 %v1027, %v1038
        %v1041 = vmul.f32 %v1033, %v1039
        %v1042 = vmul.f32 %v1025, %v1036
        %v1043 = vmul.f32 %v1031, %v1037
        %v1044 = vadd.f32 %v1040, %v1042
        %v1045 = vadd.f32 %v1041, %v1043
        %v1046 = vtanh.pop %v1044
        %v1047 = vtanh.pop %v1045
        %v1048 = vmul.f32 %v1029, %v1046
        %v1049 = vmul.f32 %v1035, %v1047
        %v1050 = vpack.c.bf16 %v1049, %v1048
        %1051 = vst [vmem:[#allocation3] sm:$0xff] %v1044
        %1052 = vst [vmem:[#allocation3 + $0x8] sm:$0xff] %v1045
        %v1054 = vunpack.c.l.b16 %v1050
        %v1055 = vunpack.c.h.b16 %v1050
        %v1056 = vpack.c.b16 %v1054, %v1054
        %v1057 = vpack.c.b16 %v1055, %v1055
        %1060 = vst [vmem:[#allocation2 + $0x4] sm:$0xf] %v1056
        %1061 = vst [vmem:[#allocation2 + $0xc] sm:$0xf] %v1057
        %s1062 = smul.addr %s895, 4
        %s1063 = scalar_lea.vmem %s300, %s1062
        %1064 = vst [vmem:[%s1063] sm:$0xf] %v1056
        %1065 = vst [vmem:[%s1063 + $0x4] sm:$0xf] %v1057
        %s1066 = smul.u32 %s21, 3
        %s1067 = sadd.s32 %s1066, 2
        %s1068 = smul.u32 %s1067, 2
        %s1069 = smul.addr %s1068, 4
        %s1070 = scalar_lea.vmem %s277, %s1069
        %v1071 = vld [vmem:[%s1070] sm:$0xf]
        %v1072 = vld [vmem:[%s1070 + $0x4] sm:$0xf]
        %1073 = vst [vmem:[#allocation2] sm:$0xf] %v1071
        %1074 = vst [vmem:[#allocation2 + $0x8] sm:$0xf] %v1072
        %v1075 = vld [vmem:[#allocation2] sm:$0xff]
        %v1076 = vld [vmem:[#allocation2 + $0x8] sm:$0xff]
        %v1079 = vunpack.c.l.b16 %v1075
        %v1080 = vunpack.c.h.b16 %v1075
        %v1081 = vunpack.c.l.b16 %v1076
        %v1082 = vunpack.c.h.b16 %v1076
        %v1083 = vpack.c.b16 %v1081, %v1079
        %v1084 = vpack.c.b16 %v1082, %v1080
        %1087 = vmatprep.subr.bf16.mxu0 %v642
        %1088 = vmatpush1.bf16.msra.mxu0 %v641
        %1089 = vmatprep.subr.bf16.mxu0 %v638
        %1090 = vmatpush1.bf16.msra.mxu0 %v637
        %1091 = vmatprep.subr.bf16.mxu0 %v634
        %1092 = vmatpush1.bf16.msra.mxu0 %v633
        %1093 = vmatprep.subr.bf16.mxu0 %v630
        %1094 = vmatpush1.bf16.msra.mxu0 %v629
        %1095 = vmatprep.subr.bf16.mxu0 %v626
        %1096 = vmatpush1.bf16.msra.mxu0 %v625
        %1097 = vmatprep.subr.bf16.mxu0 %v622
        %1098 = vmatpush1.bf16.msra.mxu0 %v621
        %1099 = vmatprep.subr.bf16.mxu0 %v618
        %1100 = vmatpush1.bf16.msra.mxu0 %v617
        %1101 = vmatprep.subr.bf16.mxu0 %v614
        %1102 = vmatpush1.bf16.msra.mxu0 %v613
        %1103 = vmatprep.subr.bf16.mxu0 %v674
        %1104 = vmatpush2.bf16.msra.mxu0 %v673
        %1105 = vmatprep.subr.bf16.mxu0 %v670
        %1106 = vmatpush2.bf16.msra.mxu0 %v669
        %1107 = vmatprep.subr.bf16.mxu0 %v666
        %1108 = vmatpush2.bf16.msra.mxu0 %v665
        %1109 = vmatprep.subr.bf16.mxu0 %v662
        %1110 = vmatpush2.bf16.msra.mxu0 %v661
        %1111 = vmatprep.subr.bf16.mxu0 %v658
        %1112 = vmatpush2.bf16.msra.mxu0 %v657
        %1113 = vmatprep.subr.bf16.mxu0 %v654
        %1114 = vmatpush2.bf16.msra.mxu0 %v653
        %1115 = vmatprep.subr.bf16.mxu0 %v650
        %1116 = vmatpush2.bf16.msra.mxu0 %v649
        %1117 = vmatprep.subr.bf16.mxu0 %v646
        %1118 = vmatpush2.bf16.msra.mxu0 %v645
        %1119 = vmatprep.mubr.bf16.mxu0 %v1084
        %1120 = vmatmul.mubr.bf16.gmra.mxu0 %v1083
        %v1121 = vpop.f32.mrf.mxu0
        %v1122 = vadd.f32 %v394, %v1121
        %v1123 = vpop.f32.mrf.mxu0
        %v1124 = vadd.f32 %v398, %v1123
        %v1125 = vpop.f32.mrf.mxu0
        %v1126 = vadd.f32 %v394, %v1125
        %v1127 = vpop.f32.mrf.mxu0
        %v1128 = vadd.f32 %v398, %v1127
        %1129 = vdwg.mxu0
        %1130 = vmatprep.subr.bf16.mxu0 %v644
        %1131 = vmatpush1.bf16.msra.mxu0 %v643
        %1132 = vmatprep.subr.bf16.mxu0 %v640
        %1133 = vmatpush1.bf16.msra.mxu0 %v639
        %1134 = vmatprep.subr.bf16.mxu0 %v636
        %1135 = vmatpush1.bf16.msra.mxu0 %v635
        %1136 = vmatprep.subr.bf16.mxu0 %v632
        %1137 = vmatpush1.bf16.msra.mxu0 %v631
        %1138 = vmatprep.subr.bf16.mxu0 %v628
        %1139 = vmatpush1.bf16.msra.mxu0 %v627
        %1140 = vmatprep.subr.bf16.mxu0 %v624
        %1141 = vmatpush1.bf16.msra.mxu0 %v623
        %1142 = vmatprep.subr.bf16.mxu0 %v620
        %1143 = vmatpush1.bf16.msra.mxu0 %v619
        %1144 = vmatprep.subr.bf16.mxu0 %v616
        %1145 = vmatpush1.bf16.msra.mxu0 %v615
        %1146 = vmatprep.subr.bf16.mxu0 %v676
        %1147 = vmatpush2.bf16.msra.mxu0 %v675
        %1148 = vmatprep.subr.bf16.mxu0 %v672
        %1149 = vmatpush2.bf16.msra.mxu0 %v671
        %1150 = vmatprep.subr.bf16.mxu0 %v668
        %1151 = vmatpush2.bf16.msra.mxu0 %v667
        %1152 = vmatprep.subr.bf16.mxu0 %v664
        %1153 = vmatpush2.bf16.msra.mxu0 %v663
        %1154 = vmatprep.subr.bf16.mxu0 %v660
        %1155 = vmatpush2.bf16.msra.mxu0 %v659
        %1156 = vmatprep.subr.bf16.mxu0 %v656
        %1157 = vmatpush2.bf16.msra.mxu0 %v655
        %1158 = vmatprep.subr.bf16.mxu0 %v652
        %1159 = vmatpush2.bf16.msra.mxu0 %v651
        %1160 = vmatprep.subr.bf16.mxu0 %v648
        %1161 = vmatpush2.bf16.msra.mxu0 %v647
        %1162 = vmatprep.mubr.bf16.mxu0 %v1084
        %1163 = vmatmul.mubr.bf16.gmra.mxu0 %v1083
        %v1164 = vpop.f32.mrf.mxu0
        %v1165 = vadd.f32 %v402, %v1164
        %v1166 = vpop.f32.mrf.mxu0
        %v1167 = vadd.f32 %v406, %v1166
        %v1168 = vpop.f32.mrf.mxu0
        %v1169 = vadd.f32 %v402, %v1168
        %v1170 = vpop.f32.mrf.mxu0
        %v1171 = vadd.f32 %v406, %v1170
        %1172 = vdwg.mxu0
        %v1173 = vxor.u32 %v1122, 2147483648
        %v1174 = vxor.u32 %v1124, 2147483648
        %v1175 = vxor.u32 %v1165, 2147483648
        %v1176 = vxor.u32 %v1126, 2147483648
        %v1177 = vxor.u32 %v1128, 2147483648
        %v1178 = vxor.u32 %v1169, 2147483648
        %v1179 = vmul.f32 %v1173, 1.442695
        %v1180 = vpow.pop %v1179
        %v1181 = vmul.f32 %v1174, 1.442695
        %v1182 = vpow.pop %v1181
        %v1183 = vmul.f32 %v1175, 1.442695
        %v1184 = vpow.pop %v1183
        %v1185 = vmul.f32 %v1176, 1.442695
        %v1186 = vpow.pop %v1185
        %v1187 = vmul.f32 %v1177, 1.442695
        %v1188 = vpow.pop %v1187
        %v1189 = vmul.f32 %v1178, 1.442695
        %v1190 = vpow.pop %v1189
        %v1191 = vadd.f32 %v1180, 1.0
        %v1192 = vadd.f32 %v1182, 1.0
        %v1193 = vadd.f32 %v1184, 1.0
        %v1194 = vadd.f32 %v1186, 1.0
        %v1195 = vadd.f32 %v1188, 1.0
        %v1196 = vadd.f32 %v1190, 1.0
        %v1197 = vrcp.pop %v1191
        %v1198 = vmul.f32 1.0, %v1197
        %v1199 = vrcp.pop %v1192
        %v1200 = vmul.f32 1.0, %v1199
        %v1201 = vrcp.pop %v1193
        %v1202 = vmul.f32 1.0, %v1201
        %v1203 = vrcp.pop %v1194
        %v1204 = vmul.f32 1.0, %v1203
        %v1205 = vrcp.pop %v1195
        %v1206 = vmul.f32 1.0, %v1205
        %v1207 = vrcp.pop %v1196
        %v1208 = vmul.f32 1.0, %v1207
        %v1209 = vtanh.pop %v1167
        %v1210 = vtanh.pop %v1171
        %v1211 = vld [vmem:[#allocation3] sm:$0xff]
        %v1212 = vld [vmem:[#allocation3 + $0x8] sm:$0xff]
        %v1213 = vmul.f32 %v1200, %v1211
        %v1214 = vmul.f32 %v1206, %v1212
        %v1215 = vmul.f32 %v1198, %v1209
        %v1216 = vmul.f32 %v1204, %v1210
        %v1217 = vadd.f32 %v1213, %v1215
        %v1218 = vadd.f32 %v1214, %v1216
        %v1219 = vtanh.pop %v1217
        %v1220 = vtanh.pop %v1218
        %v1221 = vmul.f32 %v1202, %v1219
        %v1222 = vmul.f32 %v1208, %v1220
        %v1223 = vpack.c.bf16 %v1222, %v1221
        %1224 = vst [vmem:[#allocation3] sm:$0xff] %v1217
        %1225 = vst [vmem:[#allocation3 + $0x8] sm:$0xff] %v1218
        %v1227 = vunpack.c.l.b16 %v1223
        %v1228 = vunpack.c.h.b16 %v1223
        %v1229 = vpack.c.b16 %v1227, %v1227
        %v1230 = vpack.c.b16 %v1228, %v1228
        %1233 = vst [vmem:[#allocation2 + $0x4] sm:$0xf] %v1229
        %1234 = vst [vmem:[#allocation2 + $0xc] sm:$0xf] %v1230
        %s1235 = smul.addr %s1068, 4
        %s1236 = scalar_lea.vmem %s300, %s1235
        %1237 = vst [vmem:[%s1236] sm:$0xf] %v1229
        %1238 = vst [vmem:[%s1236 + $0x4] sm:$0xf] %v1230
        %s1239 = sadd.s32 %s21, 3
        %s1240 = smul.u32 %s1239, 2
        %s1241 = smul.addr %s1240, 4
        %s1242 = scalar_lea.vmem %s277, %s1241
        %v1243 = vld [vmem:[%s1242] sm:$0xf]
        %v1244 = vld [vmem:[%s1242 + $0x4] sm:$0xf]
        %1245 = vst [vmem:[#allocation2] sm:$0xf] %v1243
        %1246 = vst [vmem:[#allocation2 + $0x8] sm:$0xf] %v1244
        %v1247 = vld [vmem:[#allocation2] sm:$0xff]
        %v1248 = vld [vmem:[#allocation2 + $0x8] sm:$0xff]
        %v1251 = vunpack.c.l.b16 %v1247
        %v1252 = vunpack.c.h.b16 %v1247
        %v1253 = vunpack.c.l.b16 %v1248
        %v1254 = vunpack.c.h.b16 %v1248
        %v1255 = vpack.c.b16 %v1253, %v1251
        %v1256 = vpack.c.b16 %v1254, %v1252
        %1259 = vmatprep.subr.bf16.mxu0 %v642
        %1260 = vmatpush1.bf16.msra.mxu0 %v641
        %1261 = vmatprep.subr.bf16.mxu0 %v638
        %1262 = vmatpush1.bf16.msra.mxu0 %v637
        %1263 = vmatprep.subr.bf16.mxu0 %v634
        %1264 = vmatpush1.bf16.msra.mxu0 %v633
        %1265 = vmatprep.subr.bf16.mxu0 %v630
        %1266 = vmatpush1.bf16.msra.mxu0 %v629
        %1267 = vmatprep.subr.bf16.mxu0 %v626
        %1268 = vmatpush1.bf16.msra.mxu0 %v625
        %1269 = vmatprep.subr.bf16.mxu0 %v622
        %1270 = vmatpush1.bf16.msra.mxu0 %v621
        %1271 = vmatprep.subr.bf16.mxu0 %v618
        %1272 = vmatpush1.bf16.msra.mxu0 %v617
        %1273 = vmatprep.subr.bf16.mxu0 %v614
        %1274 = vmatpush1.bf16.msra.mxu0 %v613
        %1275 = vmatprep.subr.bf16.mxu0 %v674
        %1276 = vmatpush2.bf16.msra.mxu0 %v673
        %1277 = vmatprep.subr.bf16.mxu0 %v670
        %1278 = vmatpush2.bf16.msra.mxu0 %v669
        %1279 = vmatprep.subr.bf16.mxu0 %v666
        %1280 = vmatpush2.bf16.msra.mxu0 %v665
        %1281 = vmatprep.subr.bf16.mxu0 %v662
        %1282 = vmatpush2.bf16.msra.mxu0 %v661
        %1283 = vmatprep.subr.bf16.mxu0 %v658
        %1284 = vmatpush2.bf16.msra.mxu0 %v657
        %1285 = vmatprep.subr.bf16.mxu0 %v654
        %1286 = vmatpush2.bf16.msra.mxu0 %v653
        %1287 = vmatprep.subr.bf16.mxu0 %v650
        %1288 = vmatpush2.bf16.msra.mxu0 %v649
        %1289 = vmatprep.subr.bf16.mxu0 %v646
        %1290 = vmatpush2.bf16.msra.mxu0 %v645
        %1291 = vmatprep.mubr.bf16.mxu0 %v1256
        %1292 = vmatmul.mubr.bf16.gmra.mxu0 %v1255
        %v1293 = vpop.f32.mrf.mxu0
        %v1294 = vadd.f32 %v394, %v1293
        %v1295 = vpop.f32.mrf.mxu0
        %v1296 = vadd.f32 %v398, %v1295
        %v1297 = vpop.f32.mrf.mxu0
        %v1298 = vadd.f32 %v394, %v1297
        %v1299 = vpop.f32.mrf.mxu0
        %v1300 = vadd.f32 %v398, %v1299
        %1301 = vdwg.mxu0
        %1302 = vmatprep.subr.bf16.mxu0 %v644
        %1303 = vmatpush1.bf16.msra.mxu0 %v643
        %1304 = vmatprep.subr.bf16.mxu0 %v640
        %1305 = vmatpush1.bf16.msra.mxu0 %v639
        %1306 = vmatprep.subr.bf16.mxu0 %v636
        %1307 = vmatpush1.bf16.msra.mxu0 %v635
        %1308 = vmatprep.subr.bf16.mxu0 %v632
        %1309 = vmatpush1.bf16.msra.mxu0 %v631
        %1310 = vmatprep.subr.bf16.mxu0 %v628
        %1311 = vmatpush1.bf16.msra.mxu0 %v627
        %1312 = vmatprep.subr.bf16.mxu0 %v624
        %1313 = vmatpush1.bf16.msra.mxu0 %v623
        %1314 = vmatprep.subr.bf16.mxu0 %v620
        %1315 = vmatpush1.bf16.msra.mxu0 %v619
        %1316 = vmatprep.subr.bf16.mxu0 %v616
        %1317 = vmatpush1.bf16.msra.mxu0 %v615
        %1318 = vmatprep.subr.bf16.mxu0 %v676
        %1319 = vmatpush2.bf16.msra.mxu0 %v675
        %1320 = vmatprep.subr.bf16.mxu0 %v672
        %1321 = vmatpush2.bf16.msra.mxu0 %v671
        %1322 = vmatprep.subr.bf16.mxu0 %v668
        %1323 = vmatpush2.bf16.msra.mxu0 %v667
        %1324 = vmatprep.subr.bf16.mxu0 %v664
        %1325 = vmatpush2.bf16.msra.mxu0 %v663
        %1326 = vmatprep.subr.bf16.mxu0 %v660
        %1327 = vmatpush2.bf16.msra.mxu0 %v659
        %1328 = vmatprep.subr.bf16.mxu0 %v656
        %1329 = vmatpush2.bf16.msra.mxu0 %v655
        %1330 = vmatprep.subr.bf16.mxu0 %v652
        %1331 = vmatpush2.bf16.msra.mxu0 %v651
        %1332 = vmatprep.subr.bf16.mxu0 %v648
        %1333 = vmatpush2.bf16.msra.mxu0 %v647
        %1334 = vmatprep.mubr.bf16.mxu0 %v1256
        %1335 = vmatmul.mubr.bf16.gmra.mxu0 %v1255
        %v1336 = vpop.f32.mrf.mxu0
        %v1337 = vadd.f32 %v402, %v1336
        %v1338 = vpop.f32.mrf.mxu0
        %v1339 = vadd.f32 %v406, %v1338
        %v1340 = vpop.f32.mrf.mxu0
        %v1341 = vadd.f32 %v402, %v1340
        %v1342 = vpop.f32.mrf.mxu0
        %v1343 = vadd.f32 %v406, %v1342
        %1344 = vdwg.mxu0
        %v1345 = vxor.u32 %v1294, 2147483648
        %v1346 = vxor.u32 %v1296, 2147483648
        %v1347 = vxor.u32 %v1337, 2147483648
        %v1348 = vxor.u32 %v1298, 2147483648
        %v1349 = vxor.u32 %v1300, 2147483648
        %v1350 = vxor.u32 %v1341, 2147483648
        %v1351 = vmul.f32 %v1345, 1.442695
        %v1352 = vpow.pop %v1351
        %v1353 = vmul.f32 %v1346, 1.442695
        %v1354 = vpow.pop %v1353
        %v1355 = vmul.f32 %v1347, 1.442695
        %v1356 = vpow.pop %v1355
        %v1357 = vmul.f32 %v1348, 1.442695
        %v1358 = vpow.pop %v1357
        %v1359 = vmul.f32 %v1349, 1.442695
        %v1360 = vpow.pop %v1359
        %v1361 = vmul.f32 %v1350, 1.442695
        %v1362 = vpow.pop %v1361
        %v1363 = vadd.f32 %v1352, 1.0
        %v1364 = vadd.f32 %v1354, 1.0
        %v1365 = vadd.f32 %v1356, 1.0
        %v1366 = vadd.f32 %v1358, 1.0
        %v1367 = vadd.f32 %v1360, 1.0
        %v1368 = vadd.f32 %v1362, 1.0
        %v1369 = vrcp.pop %v1363
        %v1370 = vmul.f32 1.0, %v1369
        %v1371 = vrcp.pop %v1364
        %v1372 = vmul.f32 1.0, %v1371
        %v1373 = vrcp.pop %v1365
        %v1374 = vmul.f32 1.0, %v1373
        %v1375 = vrcp.pop %v1366
        %v1376 = vmul.f32 1.0, %v1375
        %v1377 = vrcp.pop %v1367
        %v1378 = vmul.f32 1.0, %v1377
        %v1379 = vrcp.pop %v1368
        %v1380 = vmul.f32 1.0, %v1379
        %v1381 = vtanh.pop %v1339
        %v1382 = vtanh.pop %v1343
        %v1383 = vld [vmem:[#allocation3] sm:$0xff]
        %v1384 = vld [vmem:[#allocation3 + $0x8] sm:$0xff]
        %v1385 = vmul.f32 %v1372, %v1383
        %v1386 = vmul.f32 %v1378, %v1384
        %v1387 = vmul.f32 %v1370, %v1381
        %v1388 = vmul.f32 %v1376, %v1382
        %v1389 = vadd.f32 %v1385, %v1387
        %v1390 = vadd.f32 %v1386, %v1388
        %v1391 = vtanh.pop %v1389
        %v1392 = vtanh.pop %v1390
        %v1393 = vmul.f32 %v1374, %v1391
        %v1394 = vmul.f32 %v1380, %v1392
        %v1395 = vpack.c.bf16 %v1394, %v1393
        %1396 = vst [vmem:[#allocation3] sm:$0xff] %v1389
        %1397 = vst [vmem:[#allocation3 + $0x8] sm:$0xff] %v1390
        %v1399 = vunpack.c.l.b16 %v1395
        %v1400 = vunpack.c.h.b16 %v1395
        %v1401 = vpack.c.b16 %v1399, %v1399
        %v1402 = vpack.c.b16 %v1400, %v1400
        %1405 = vst [vmem:[#allocation2 + $0x4] sm:$0xf] %v1401
        %1406 = vst [vmem:[#allocation2 + $0xc] sm:$0xf] %v1402
        %s1407 = smul.addr %s1240, 4
        %s1408 = scalar_lea.vmem %s300, %s1407
        %1409 = vst [vmem:[%s1408] sm:$0xf] %v1401
        %1410 = vst [vmem:[%s1408 + $0x4] sm:$0xf] %v1402
        %s1411 = ssub.s32 4, %s21
        %s1412 = smul.u32 %s1411, 2
        %s1413 = smul.addr %s1412, 4
        %s1414 = scalar_lea.vmem %s277, %s1413
        %v1415 = vld [vmem:[%s1414] sm:$0xf]
        %v1416 = vld [vmem:[%s1414 + $0x4] sm:$0xf]
        %1417 = vst [vmem:[#allocation2] sm:$0xf] %v1415
        %1418 = vst [vmem:[#allocation2 + $0x8] sm:$0xf] %v1416
        %v1419 = vld [vmem:[#allocation2] sm:$0xff]
        %v1420 = vld [vmem:[#allocation2 + $0x8] sm:$0xff]
        %v1423 = vunpack.c.l.b16 %v1419
        %v1424 = vunpack.c.h.b16 %v1419
        %v1425 = vunpack.c.l.b16 %v1420
        %v1426 = vunpack.c.h.b16 %v1420
        %v1427 = vpack.c.b16 %v1425, %v1423
        %v1428 = vpack.c.b16 %v1426, %v1424
        %1431 = vmatprep.subr.bf16.mxu0 %v642
        %1432 = vmatpush1.bf16.msra.mxu0 %v641
        %1433 = vmatprep.subr.bf16.mxu0 %v638
        %1434 = vmatpush1.bf16.msra.mxu0 %v637
        %1435 = vmatprep.subr.bf16.mxu0 %v634
        %1436 = vmatpush1.bf16.msra.mxu0 %v633
        %1437 = vmatprep.subr.bf16.mxu0 %v630
        %1438 = vmatpush1.bf16.msra.mxu0 %v629
        %1439 = vmatprep.subr.bf16.mxu0 %v626
        %1440 = vmatpush1.bf16.msra.mxu0 %v625
        %1441 = vmatprep.subr.bf16.mxu0 %v622
        %1442 = vmatpush1.bf16.msra.mxu0 %v621
        %1443 = vmatprep.subr.bf16.mxu0 %v618
        %1444 = vmatpush1.bf16.msra.mxu0 %v617
        %1445 = vmatprep.subr.bf16.mxu0 %v614
        %1446 = vmatpush1.bf16.msra.mxu0 %v613
        %1447 = vmatprep.subr.bf16.mxu0 %v674
        %1448 = vmatpush2.bf16.msra.mxu0 %v673
        %1449 = vmatprep.subr.bf16.mxu0 %v670
        %1450 = vmatpush2.bf16.msra.mxu0 %v669
        %1451 = vmatprep.subr.bf16.mxu0 %v666
        %1452 = vmatpush2.bf16.msra.mxu0 %v665
        %1453 = vmatprep.subr.bf16.mxu0 %v662
        %1454 = vmatpush2.bf16.msra.mxu0 %v661
        %1455 = vmatprep.subr.bf16.mxu0 %v658
        %1456 = vmatpush2.bf16.msra.mxu0 %v657
        %1457 = vmatprep.subr.bf16.mxu0 %v654
        %1458 = vmatpush2.bf16.msra.mxu0 %v653
        %1459 = vmatprep.subr.bf16.mxu0 %v650
        %1460 = vmatpush2.bf16.msra.mxu0 %v649
        %1461 = vmatprep.subr.bf16.mxu0 %v646
        %1462 = vmatpush2.bf16.msra.mxu0 %v645
        %1463 = vmatprep.mubr.bf16.mxu0 %v1428
        %1464 = vmatmul.mubr.bf16.gmra.mxu0 %v1427
        %v1465 = vpop.f32.mrf.mxu0
        %v1466 = vadd.f32 %v394, %v1465
        %v1467 = vpop.f32.mrf.mxu0
        %v1468 = vadd.f32 %v398, %v1467
        %v1469 = vpop.f32.mrf.mxu0
        %v1470 = vadd.f32 %v394, %v1469
        %v1471 = vpop.f32.mrf.mxu0
        %v1472 = vadd.f32 %v398, %v1471
        %1473 = vdwg.mxu0
        %1474 = vmatprep.subr.bf16.mxu0 %v644
        %1475 = vmatpush1.bf16.msra.mxu0 %v643
        %1476 = vmatprep.subr.bf16.mxu0 %v640
        %1477 = vmatpush1.bf16.msra.mxu0 %v639
        %1478 = vmatprep.subr.bf16.mxu0 %v636
        %1479 = vmatpush1.bf16.msra.mxu0 %v635
        %1480 = vmatprep.subr.bf16.mxu0 %v632
        %1481 = vmatpush1.bf16.msra.mxu0 %v631
        %1482 = vmatprep.subr.bf16.mxu0 %v628
        %1483 = vmatpush1.bf16.msra.mxu0 %v627
        %1484 = vmatprep.subr.bf16.mxu0 %v624
        %1485 = vmatpush1.bf16.msra.mxu0 %v623
        %1486 = vmatprep.subr.bf16.mxu0 %v620
        %1487 = vmatpush1.bf16.msra.mxu0 %v619
        %1488 = vmatprep.subr.bf16.mxu0 %v616
        %1489 = vmatpush1.bf16.msra.mxu0 %v615
        %1490 = vmatprep.subr.bf16.mxu0 %v676
        %1491 = vmatpush2.bf16.msra.mxu0 %v675
        %1492 = vmatprep.subr.bf16.mxu0 %v672
        %1493 = vmatpush2.bf16.msra.mxu0 %v671
        %1494 = vmatprep.subr.bf16.mxu0 %v668
        %1495 = vmatpush2.bf16.msra.mxu0 %v667
        %1496 = vmatprep.subr.bf16.mxu0 %v664
        %1497 = vmatpush2.bf16.msra.mxu0 %v663
        %1498 = vmatprep.subr.bf16.mxu0 %v660
        %1499 = vmatpush2.bf16.msra.mxu0 %v659
        %1500 = vmatprep.subr.bf16.mxu0 %v656
        %1501 = vmatpush2.bf16.msra.mxu0 %v655
        %1502 = vmatprep.subr.bf16.mxu0 %v652
        %1503 = vmatpush2.bf16.msra.mxu0 %v651
        %1504 = vmatprep.subr.bf16.mxu0 %v648
        %1505 = vmatpush2.bf16.msra.mxu0 %v647
        %1506 = vmatprep.mubr.bf16.mxu0 %v1428
        %1507 = vmatmul.mubr.bf16.gmra.mxu0 %v1427
        %v1508 = vpop.f32.mrf.mxu0
        %v1509 = vadd.f32 %v402, %v1508
        %v1510 = vpop.f32.mrf.mxu0
        %v1511 = vadd.f32 %v406, %v1510
        %v1512 = vpop.f32.mrf.mxu0
        %v1513 = vadd.f32 %v402, %v1512
        %v1514 = vpop.f32.mrf.mxu0
        %v1515 = vadd.f32 %v406, %v1514
        %1516 = vdwg.mxu0
        %v1517 = vxor.u32 %v1466, 2147483648
        %v1518 = vxor.u32 %v1468, 2147483648
        %v1519 = vxor.u32 %v1509, 2147483648
        %v1520 = vxor.u32 %v1470, 2147483648
        %v1521 = vxor.u32 %v1472, 2147483648
        %v1522 = vxor.u32 %v1513, 2147483648
        %v1523 = vmul.f32 %v1517, 1.442695
        %v1524 = vpow.pop %v1523
        %v1525 = vmul.f32 %v1518, 1.442695
        %v1526 = vpow.pop %v1525
        %v1527 = vmul.f32 %v1519, 1.442695
        %v1528 = vpow.pop %v1527
        %v1529 = vmul.f32 %v1520, 1.442695
        %v1530 = vpow.pop %v1529
        %v1531 = vmul.f32 %v1521, 1.442695
        %v1532 = vpow.pop %v1531
        %v1533 = vmul.f32 %v1522, 1.442695
        %v1534 = vpow.pop %v1533
        %v1535 = vadd.f32 %v1524, 1.0
        %v1536 = vadd.f32 %v1526, 1.0
        %v1537 = vadd.f32 %v1528, 1.0
        %v1538 = vadd.f32 %v1530, 1.0
        %v1539 = vadd.f32 %v1532, 1.0
        %v1540 = vadd.f32 %v1534, 1.0
        %v1541 = vrcp.pop %v1535
        %v1542 = vmul.f32 1.0, %v1541
        %v1543 = vrcp.pop %v1536
        %v1544 = vmul.f32 1.0, %v1543
        %v1545 = vrcp.pop %v1537
        %v1546 = vmul.f32 1.0, %v1545
        %v1547 = vrcp.pop %v1538
        %v1548 = vmul.f32 1.0, %v1547
        %v1549 = vrcp.pop %v1539
        %v1550 = vmul.f32 1.0, %v1549
        %v1551 = vrcp.pop %v1540
        %v1552 = vmul.f32 1.0, %v1551
        %v1553 = vtanh.pop %v1511
        %v1554 = vtanh.pop %v1515
        %v1555 = vld [vmem:[#allocation3] sm:$0xff]
        %v1556 = vld [vmem:[#allocation3 + $0x8] sm:$0xff]
        %v1557 = vmul.f32 %v1544, %v1555
        %v1558 = vmul.f32 %v1550, %v1556
        %v1559 = vmul.f32 %v1542, %v1553
        %v1560 = vmul.f32 %v1548, %v1554
        %v1561 = vadd.f32 %v1557, %v1559
        %v1562 = vadd.f32 %v1558, %v1560
        %v1563 = vtanh.pop %v1561
        %v1564 = vtanh.pop %v1562
        %v1565 = vmul.f32 %v1546, %v1563
        %v1566 = vmul.f32 %v1552, %v1564
        %v1567 = vpack.c.bf16 %v1566, %v1565
        %1568 = vst [vmem:[#allocation3] sm:$0xff] %v1561
        %1569 = vst [vmem:[#allocation3 + $0x8] sm:$0xff] %v1562
        %v1571 = vunpack.c.l.b16 %v1567
        %v1572 = vunpack.c.h.b16 %v1567
        %v1573 = vpack.c.b16 %v1571, %v1571
        %v1574 = vpack.c.b16 %v1572, %v1572
        %1577 = vst [vmem:[#allocation2 + $0x4] sm:$0xf] %v1573
        %1578 = vst [vmem:[#allocation2 + $0xc] sm:$0xf] %v1574
        %s1579 = smul.addr %s1412, 4
        %s1580 = scalar_lea.vmem %s300, %s1579
        %1581 = vst [vmem:[%s1580] sm:$0xf] %v1573
        %1582 = vst [vmem:[%s1580 + $0x4] sm:$0xf] %v1574
        %s1583 = smul.u32 %s21, 4294967293
        %s1584 = sadd.s32 %s1583, 5
        %s1585 = smul.u32 %s1584, 2
        %s1586 = smul.addr %s1585, 4
        %s1587 = scalar_lea.vmem %s277, %s1586
        %v1588 = vld [vmem:[%s1587] sm:$0xf]
        %v1589 = vld [vmem:[%s1587 + $0x4] sm:$0xf]
        %1590 = vst [vmem:[#allocation2] sm:$0xf] %v1588
        %1591 = vst [vmem:[#allocation2 + $0x8] sm:$0xf] %v1589
        %v1592 = vld [vmem:[#allocation2] sm:$0xff]
        %v1593 = vld [vmem:[#allocation2 + $0x8] sm:$0xff]
        %v1596 = vunpack.c.l.b16 %v1592
        %v1597 = vunpack.c.h.b16 %v1592
        %v1598 = vunpack.c.l.b16 %v1593
        %v1599 = vunpack.c.h.b16 %v1593
        %v1600 = vpack.c.b16 %v1598, %v1596
        %v1601 = vpack.c.b16 %v1599, %v1597
        %1604 = vmatprep.subr.bf16.mxu0 %v642
        %1605 = vmatpush1.bf16.msra.mxu0 %v641
        %1606 = vmatprep.subr.bf16.mxu0 %v638
        %1607 = vmatpush1.bf16.msra.mxu0 %v637
        %1608 = vmatprep.subr.bf16.mxu0 %v634
        %1609 = vmatpush1.bf16.msra.mxu0 %v633
        %1610 = vmatprep.subr.bf16.mxu0 %v630
        %1611 = vmatpush1.bf16.msra.mxu0 %v629
        %1612 = vmatprep.subr.bf16.mxu0 %v626
        %1613 = vmatpush1.bf16.msra.mxu0 %v625
        %1614 = vmatprep.subr.bf16.mxu0 %v622
        %1615 = vmatpush1.bf16.msra.mxu0 %v621
        %1616 = vmatprep.subr.bf16.mxu0 %v618
        %1617 = vmatpush1.bf16.msra.mxu0 %v617
        %1618 = vmatprep.subr.bf16.mxu0 %v614
        %1619 = vmatpush1.bf16.msra.mxu0 %v613
        %1620 = vmatprep.subr.bf16.mxu0 %v674
        %1621 = vmatpush2.bf16.msra.mxu0 %v673
        %1622 = vmatprep.subr.bf16.mxu0 %v670
        %1623 = vmatpush2.bf16.msra.mxu0 %v669
        %1624 = vmatprep.subr.bf16.mxu0 %v666
        %1625 = vmatpush2.bf16.msra.mxu0 %v665
        %1626 = vmatprep.subr.bf16.mxu0 %v662
        %1627 = vmatpush2.bf16.msra.mxu0 %v661
        %1628 = vmatprep.subr.bf16.mxu0 %v658
        %1629 = vmatpush2.bf16.msra.mxu0 %v657
        %1630 = vmatprep.subr.bf16.mxu0 %v654
        %1631 = vmatpush2.bf16.msra.mxu0 %v653
        %1632 = vmatprep.subr.bf16.mxu0 %v650
        %1633 = vmatpush2.bf16.msra.mxu0 %v649
        %1634 = vmatprep.subr.bf16.mxu0 %v646
        %1635 = vmatpush2.bf16.msra.mxu0 %v645
        %1636 = vmatprep.mubr.bf16.mxu0 %v1601
        %1637 = vmatmul.mubr.bf16.gmra.mxu0 %v1600
        %v1638 = vpop.f32.mrf.mxu0
        %v1639 = vadd.f32 %v394, %v1638
        %v1640 = vpop.f32.mrf.mxu0
        %v1641 = vadd.f32 %v398, %v1640
        %v1642 = vpop.f32.mrf.mxu0
        %v1643 = vadd.f32 %v394, %v1642
        %v1644 = vpop.f32.mrf.mxu0
        %v1645 = vadd.f32 %v398, %v1644
        %1646 = vdwg.mxu0
        %1647 = vmatprep.subr.bf16.mxu0 %v644
        %1648 = vmatpush1.bf16.msra.mxu0 %v643
        %1649 = vmatprep.subr.bf16.mxu0 %v640
        %1650 = vmatpush1.bf16.msra.mxu0 %v639
        %1651 = vmatprep.subr.bf16.mxu0 %v636
        %1652 = vmatpush1.bf16.msra.mxu0 %v635
        %1653 = vmatprep.subr.bf16.mxu0 %v632
        %1654 = vmatpush1.bf16.msra.mxu0 %v631
        %1655 = vmatprep.subr.bf16.mxu0 %v628
        %1656 = vmatpush1.bf16.msra.mxu0 %v627
        %1657 = vmatprep.subr.bf16.mxu0 %v624
        %1658 = vmatpush1.bf16.msra.mxu0 %v623
        %1659 = vmatprep.subr.bf16.mxu0 %v620
        %1660 = vmatpush1.bf16.msra.mxu0 %v619
        %1661 = vmatprep.subr.bf16.mxu0 %v616
        %1662 = vmatpush1.bf16.msra.mxu0 %v615
        %1663 = vmatprep.subr.bf16.mxu0 %v676
        %1664 = vmatpush2.bf16.msra.mxu0 %v675
        %1665 = vmatprep.subr.bf16.mxu0 %v672
        %1666 = vmatpush2.bf16.msra.mxu0 %v671
        %1667 = vmatprep.subr.bf16.mxu0 %v668
        %1668 = vmatpush2.bf16.msra.mxu0 %v667
        %1669 = vmatprep.subr.bf16.mxu0 %v664
        %1670 = vmatpush2.bf16.msra.mxu0 %v663
        %1671 = vmatprep.subr.bf16.mxu0 %v660
        %1672 = vmatpush2.bf16.msra.mxu0 %v659
        %1673 = vmatprep.subr.bf16.mxu0 %v656
        %1674 = vmatpush2.bf16.msra.mxu0 %v655
        %1675 = vmatprep.subr.bf16.mxu0 %v652
        %1676 = vmatpush2.bf16.msra.mxu0 %v651
        %1677 = vmatprep.subr.bf16.mxu0 %v648
        %1678 = vmatpush2.bf16.msra.mxu0 %v647
        %1679 = vmatprep.mubr.bf16.mxu0 %v1601
        %1680 = vmatmul.mubr.bf16.gmra.mxu0 %v1600
        %v1681 = vpop.f32.mrf.mxu0
        %v1682 = vadd.f32 %v402, %v1681
        %v1683 = vpop.f32.mrf.mxu0
        %v1684 = vadd.f32 %v406, %v1683
        %v1685 = vpop.f32.mrf.mxu0
        %v1686 = vadd.f32 %v402, %v1685
        %v1687 = vpop.f32.mrf.mxu0
        %v1688 = vadd.f32 %v406, %v1687
        %1689 = vdwg.mxu0
        %v1690 = vxor.u32 %v1639, 2147483648
        %v1691 = vxor.u32 %v1641, 2147483648
        %v1692 = vxor.u32 %v1682, 2147483648
        %v1693 = vxor.u32 %v1643, 2147483648
        %v1694 = vxor.u32 %v1645, 2147483648
        %v1695 = vxor.u32 %v1686, 2147483648
        %v1696 = vmul.f32 %v1690, 1.442695
        %v1697 = vpow.pop %v1696
        %v1698 = vmul.f32 %v1691, 1.442695
        %v1699 = vpow.pop %v1698
        %v1700 = vmul.f32 %v1692, 1.442695
        %v1701 = vpow.pop %v1700
        %v1702 = vmul.f32 %v1693, 1.442695
        %v1703 = vpow.pop %v1702
        %v1704 = vmul.f32 %v1694, 1.442695
        %v1705 = vpow.pop %v1704
        %v1706 = vmul.f32 %v1695, 1.442695
        %v1707 = vpow.pop %v1706
        %v1708 = vadd.f32 %v1697, 1.0
        %v1709 = vadd.f32 %v1699, 1.0
        %v1710 = vadd.f32 %v1701, 1.0
        %v1711 = vadd.f32 %v1703, 1.0
        %v1712 = vadd.f32 %v1705, 1.0
        %v1713 = vadd.f32 %v1707, 1.0
        %v1714 = vrcp.pop %v1708
        %v1715 = vmul.f32 1.0, %v1714
        %v1716 = vrcp.pop %v1709
        %v1717 = vmul.f32 1.0, %v1716
        %v1718 = vrcp.pop %v1710
        %v1719 = vmul.f32 1.0, %v1718
        %v1720 = vrcp.pop %v1711
        %v1721 = vmul.f32 1.0, %v1720
        %v1722 = vrcp.pop %v1712
        %v1723 = vmul.f32 1.0, %v1722
        %v1724 = vrcp.pop %v1713
        %v1725 = vmul.f32 1.0, %v1724
        %v1726 = vtanh.pop %v1684
        %v1727 = vtanh.pop %v1688
        %v1728 = vld [vmem:[#allocation3] sm:$0xff]
        %v1729 = vld [vmem:[#allocation3 + $0x8] sm:$0xff]
        %v1730 = vmul.f32 %v1717, %v1728
        %v1731 = vmul.f32 %v1723, %v1729
        %v1732 = vmul.f32 %v1715, %v1726
        %v1733 = vmul.f32 %v1721, %v1727
        %v1734 = vadd.f32 %v1730, %v1732
        %v1735 = vadd.f32 %v1731, %v1733
        %v1736 = vtanh.pop %v1734
        %v1737 = vtanh.pop %v1735
        %v1738 = vmul.f32 %v1719, %v1736
        %v1739 = vmul.f32 %v1725, %v1737
        %v1740 = vpack.c.bf16 %v1739, %v1738
        %1741 = vst [vmem:[#allocation3] sm:$0xff] %v1734
        %1742 = vst [vmem:[#allocation3 + $0x8] sm:$0xff] %v1735
        %v1744 = vunpack.c.l.b16 %v1740
        %v1745 = vunpack.c.h.b16 %v1740
        %v1746 = vpack.c.b16 %v1744, %v1744
        %v1747 = vpack.c.b16 %v1745, %v1745
        %1750 = vst [vmem:[#allocation2 + $0x4] sm:$0xf] %v1746
        %1751 = vst [vmem:[#allocation2 + $0xc] sm:$0xf] %v1747
        %s1752 = smul.addr %s1585, 4
        %s1753 = scalar_lea.vmem %s300, %s1752
        %1754 = vst [vmem:[%s1753] sm:$0xf] %v1746
        %1755 = vst [vmem:[%s1753 + $0x4] sm:$0xf] %v1747
        %s1756 = smul.u32 %s21, 4294967291
        %s1757 = sadd.s32 %s1756, 6
        %s1758 = smul.u32 %s1757, 2
        %s1759 = smul.addr %s1758, 4
        %s1760 = scalar_lea.vmem %s277, %s1759
        %v1761 = vld [vmem:[%s1760] sm:$0xf]
        %v1762 = vld [vmem:[%s1760 + $0x4] sm:$0xf]
        %1763 = vst [vmem:[#allocation2] sm:$0xf] %v1761
        %1764 = vst [vmem:[#allocation2 + $0x8] sm:$0xf] %v1762
        %v1765 = vld [vmem:[#allocation2] sm:$0xff]
        %v1766 = vld [vmem:[#allocation2 + $0x8] sm:$0xff]
        %v1769 = vunpack.c.l.b16 %v1765
        %v1770 = vunpack.c.h.b16 %v1765
        %v1771 = vunpack.c.l.b16 %v1766
        %v1772 = vunpack.c.h.b16 %v1766
        %v1773 = vpack.c.b16 %v1771, %v1769
        %v1774 = vpack.c.b16 %v1772, %v1770
        %1777 = vmatprep.subr.bf16.mxu0 %v642
        %1778 = vmatpush1.bf16.msra.mxu0 %v641
        %1779 = vmatprep.subr.bf16.mxu0 %v638
        %1780 = vmatpush1.bf16.msra.mxu0 %v637
        %1781 = vmatprep.subr.bf16.mxu0 %v634
        %1782 = vmatpush1.bf16.msra.mxu0 %v633
        %1783 = vmatprep.subr.bf16.mxu0 %v630
        %1784 = vmatpush1.bf16.msra.mxu0 %v629
        %1785 = vmatprep.subr.bf16.mxu0 %v626
        %1786 = vmatpush1.bf16.msra.mxu0 %v625
        %1787 = vmatprep.subr.bf16.mxu0 %v622
        %1788 = vmatpush1.bf16.msra.mxu0 %v621
        %1789 = vmatprep.subr.bf16.mxu0 %v618
        %1790 = vmatpush1.bf16.msra.mxu0 %v617
        %1791 = vmatprep.subr.bf16.mxu0 %v614
        %1792 = vmatpush1.bf16.msra.mxu0 %v613
        %1793 = vmatprep.subr.bf16.mxu0 %v674
        %1794 = vmatpush2.bf16.msra.mxu0 %v673
        %1795 = vmatprep.subr.bf16.mxu0 %v670
        %1796 = vmatpush2.bf16.msra.mxu0 %v669
        %1797 = vmatprep.subr.bf16.mxu0 %v666
        %1798 = vmatpush2.bf16.msra.mxu0 %v665
        %1799 = vmatprep.subr.bf16.mxu0 %v662
        %1800 = vmatpush2.bf16.msra.mxu0 %v661
        %1801 = vmatprep.subr.bf16.mxu0 %v658
        %1802 = vmatpush2.bf16.msra.mxu0 %v657
        %1803 = vmatprep.subr.bf16.mxu0 %v654
        %1804 = vmatpush2.bf16.msra.mxu0 %v653
        %1805 = vmatprep.subr.bf16.mxu0 %v650
        %1806 = vmatpush2.bf16.msra.mxu0 %v649
        %1807 = vmatprep.subr.bf16.mxu0 %v646
        %1808 = vmatpush2.bf16.msra.mxu0 %v645
        %1809 = vmatprep.mubr.bf16.mxu0 %v1774
        %1810 = vmatmul.mubr.bf16.gmra.mxu0 %v1773
        %v1811 = vpop.f32.mrf.mxu0
        %v1812 = vadd.f32 %v394, %v1811
        %v1813 = vpop.f32.mrf.mxu0
        %v1814 = vadd.f32 %v398, %v1813
        %v1815 = vpop.f32.mrf.mxu0
        %v1816 = vadd.f32 %v394, %v1815
        %v1817 = vpop.f32.mrf.mxu0
        %v1818 = vadd.f32 %v398, %v1817
        %1819 = vdwg.mxu0
        %1820 = vmatprep.subr.bf16.mxu0 %v644
        %1821 = vmatpush1.bf16.msra.mxu0 %v643
        %1822 = vmatprep.subr.bf16.mxu0 %v640
        %1823 = vmatpush1.bf16.msra.mxu0 %v639
        %1824 = vmatprep.subr.bf16.mxu0 %v636
        %1825 = vmatpush1.bf16.msra.mxu0 %v635
        %1826 = vmatprep.subr.bf16.mxu0 %v632
        %1827 = vmatpush1.bf16.msra.mxu0 %v631
        %1828 = vmatprep.subr.bf16.mxu0 %v628
        %1829 = vmatpush1.bf16.msra.mxu0 %v627
        %1830 = vmatprep.subr.bf16.mxu0 %v624
        %1831 = vmatpush1.bf16.msra.mxu0 %v623
        %1832 = vmatprep.subr.bf16.mxu0 %v620
        %1833 = vmatpush1.bf16.msra.mxu0 %v619
        %1834 = vmatprep.subr.bf16.mxu0 %v616
        %1835 = vmatpush1.bf16.msra.mxu0 %v615
        %1836 = vmatprep.subr.bf16.mxu0 %v676
        %1837 = vmatpush2.bf16.msra.mxu0 %v675
        %1838 = vmatprep.subr.bf16.mxu0 %v672
        %1839 = vmatpush2.bf16.msra.mxu0 %v671
        %1840 = vmatprep.subr.bf16.mxu0 %v668
        %1841 = vmatpush2.bf16.msra.mxu0 %v667
        %1842 = vmatprep.subr.bf16.mxu0 %v664
        %1843 = vmatpush2.bf16.msra.mxu0 %v663
        %1844 = vmatprep.subr.bf16.mxu0 %v660
        %1845 = vmatpush2.bf16.msra.mxu0 %v659
        %1846 = vmatprep.subr.bf16.mxu0 %v656
        %1847 = vmatpush2.bf16.msra.mxu0 %v655
        %1848 = vmatprep.subr.bf16.mxu0 %v652
        %1849 = vmatpush2.bf16.msra.mxu0 %v651
        %1850 = vmatprep.subr.bf16.mxu0 %v648
        %1851 = vmatpush2.bf16.msra.mxu0 %v647
        %1852 = vmatprep.mubr.bf16.mxu0 %v1774
        %1853 = vmatmul.mubr.bf16.gmra.mxu0 %v1773
        %v1854 = vpop.f32.mrf.mxu0
        %v1855 = vadd.f32 %v402, %v1854
        %v1856 = vpop.f32.mrf.mxu0
        %v1857 = vadd.f32 %v406, %v1856
        %v1858 = vpop.f32.mrf.mxu0
        %v1859 = vadd.f32 %v402, %v1858
        %v1860 = vpop.f32.mrf.mxu0
        %v1861 = vadd.f32 %v406, %v1860
        %1862 = vdwg.mxu0
        %v1863 = vxor.u32 %v1812, 2147483648
        %v1864 = vxor.u32 %v1814, 2147483648
        %v1865 = vxor.u32 %v1855, 2147483648
        %v1866 = vxor.u32 %v1816, 2147483648
        %v1867 = vxor.u32 %v1818, 2147483648
        %v1868 = vxor.u32 %v1859, 2147483648
        %v1869 = vmul.f32 %v1863, 1.442695
        %v1870 = vpow.pop %v1869
        %v1871 = vmul.f32 %v1864, 1.442695
        %v1872 = vpow.pop %v1871
        %v1873 = vmul.f32 %v1865, 1.442695
        %v1874 = vpow.pop %v1873
        %v1875 = vmul.f32 %v1866, 1.442695
        %v1876 = vpow.pop %v1875
        %v1877 = vmul.f32 %v1867, 1.442695
        %v1878 = vpow.pop %v1877
        %v1879 = vmul.f32 %v1868, 1.442695
        %v1880 = vpow.pop %v1879
        %v1881 = vadd.f32 %v1870, 1.0
        %v1882 = vadd.f32 %v1872, 1.0
        %v1883 = vadd.f32 %v1874, 1.0
        %v1884 = vadd.f32 %v1876, 1.0
        %v1885 = vadd.f32 %v1878, 1.0
        %v1886 = vadd.f32 %v1880, 1.0
        %v1887 = vrcp.pop %v1881
        %v1888 = vmul.f32 1.0, %v1887
        %v1889 = vrcp.pop %v1882
        %v1890 = vmul.f32 1.0, %v1889
        %v1891 = vrcp.pop %v1883
        %v1892 = vmul.f32 1.0, %v1891
        %v1893 = vrcp.pop %v1884
        %v1894 = vmul.f32 1.0, %v1893
        %v1895 = vrcp.pop %v1885
        %v1896 = vmul.f32 1.0, %v1895
        %v1897 = vrcp.pop %v1886
        %v1898 = vmul.f32 1.0, %v1897
        %v1899 = vtanh.pop %v1857
        %v1900 = vtanh.pop %v1861
        %v1901 = vld [vmem:[#allocation3] sm:$0xff]
        %v1902 = vld [vmem:[#allocation3 + $0x8] sm:$0xff]
        %v1903 = vmul.f32 %v1890, %v1901
        %v1904 = vmul.f32 %v1896, %v1902
        %v1905 = vmul.f32 %v1888, %v1899
        %v1906 = vmul.f32 %v1894, %v1900
        %v1907 = vadd.f32 %v1903, %v1905
        %v1908 = vadd.f32 %v1904, %v1906
        %v1909 = vtanh.pop %v1907
        %v1910 = vtanh.pop %v1908
        %v1911 = vmul.f32 %v1892, %v1909
        %v1912 = vmul.f32 %v1898, %v1910
        %v1913 = vpack.c.bf16 %v1912, %v1911
        %1914 = vst [vmem:[#allocation3] sm:$0xff] %v1907
        %1915 = vst [vmem:[#allocation3 + $0x8] sm:$0xff] %v1908
        %v1917 = vunpack.c.l.b16 %v1913
        %v1918 = vunpack.c.h.b16 %v1913
        %v1919 = vpack.c.b16 %v1917, %v1917
        %v1920 = vpack.c.b16 %v1918, %v1918
        %1923 = vst [vmem:[#allocation2 + $0x4] sm:$0xf] %v1919
        %1924 = vst [vmem:[#allocation2 + $0xc] sm:$0xf] %v1920
        %s1925 = smul.addr %s1758, 4
        %s1926 = scalar_lea.vmem %s300, %s1925
        %1927 = vst [vmem:[%s1926] sm:$0xf] %v1919
        %1928 = vst [vmem:[%s1926 + $0x4] sm:$0xf] %v1920
        %s1929 = smul.u32 %s21, 4294967289
        %s1930 = sadd.s32 %s1929, 7
        %s1931 = smul.u32 %s1930, 2
        %s1932 = smul.addr %s1931, 4
        %s1933 = scalar_lea.vmem %s277, %s1932
        %v1934 = vld [vmem:[%s1933] sm:$0xf]
        %v1935 = vld [vmem:[%s1933 + $0x4] sm:$0xf]
        %1936 = vst [vmem:[#allocation2] sm:$0xf] %v1934
        %1937 = vst [vmem:[#allocation2 + $0x8] sm:$0xf] %v1935
        %v1938 = vld [vmem:[#allocation2] sm:$0xff]
        %v1939 = vld [vmem:[#allocation2 + $0x8] sm:$0xff]
        %v1942 = vunpack.c.l.b16 %v1938
        %v1943 = vunpack.c.h.b16 %v1938
        %v1944 = vunpack.c.l.b16 %v1939
        %v1945 = vunpack.c.h.b16 %v1939
        %v1946 = vpack.c.b16 %v1944, %v1942
        %v1947 = vpack.c.b16 %v1945, %v1943
        %1950 = vmatprep.subr.bf16.mxu0 %v642
        %1951 = vmatpush1.bf16.msra.mxu0 %v641
        %1952 = vmatprep.subr.bf16.mxu0 %v638
        %1953 = vmatpush1.bf16.msra.mxu0 %v637
        %1954 = vmatprep.subr.bf16.mxu0 %v634
        %1955 = vmatpush1.bf16.msra.mxu0 %v633
        %1956 = vmatprep.subr.bf16.mxu0 %v630
        %1957 = vmatpush1.bf16.msra.mxu0 %v629
        %1958 = vmatprep.subr.bf16.mxu0 %v626
        %1959 = vmatpush1.bf16.msra.mxu0 %v625
        %1960 = vmatprep.subr.bf16.mxu0 %v622
        %1961 = vmatpush1.bf16.msra.mxu0 %v621
        %1962 = vmatprep.subr.bf16.mxu0 %v618
        %1963 = vmatpush1.bf16.msra.mxu0 %v617
        %1964 = vmatprep.subr.bf16.mxu0 %v614
        %1965 = vmatpush1.bf16.msra.mxu0 %v613
        %1966 = vmatprep.subr.bf16.mxu0 %v674
        %1967 = vmatpush2.bf16.msra.mxu0 %v673
        %1968 = vmatprep.subr.bf16.mxu0 %v670
        %1969 = vmatpush2.bf16.msra.mxu0 %v669
        %1970 = vmatprep.subr.bf16.mxu0 %v666
        %1971 = vmatpush2.bf16.msra.mxu0 %v665
        %1972 = vmatprep.subr.bf16.mxu0 %v662
        %1973 = vmatpush2.bf16.msra.mxu0 %v661
        %1974 = vmatprep.subr.bf16.mxu0 %v658
        %1975 = vmatpush2.bf16.msra.mxu0 %v657
        %1976 = vmatprep.subr.bf16.mxu0 %v654
        %1977 = vmatpush2.bf16.msra.mxu0 %v653
        %1978 = vmatprep.subr.bf16.mxu0 %v650
        %1979 = vmatpush2.bf16.msra.mxu0 %v649
        %1980 = vmatprep.subr.bf16.mxu0 %v646
        %1981 = vmatpush2.bf16.msra.mxu0 %v645
        %1982 = vmatprep.mubr.bf16.mxu0 %v1947
        %1983 = vmatmul.mubr.bf16.gmra.mxu0 %v1946
        %v1984 = vpop.f32.mrf.mxu0
        %v1985 = vadd.f32 %v394, %v1984
        %v1986 = vpop.f32.mrf.mxu0
        %v1987 = vadd.f32 %v398, %v1986
        %v1988 = vpop.f32.mrf.mxu0
        %v1989 = vadd.f32 %v394, %v1988
        %v1990 = vpop.f32.mrf.mxu0
        %v1991 = vadd.f32 %v398, %v1990
        %1992 = vdwg.mxu0
        %1993 = vmatprep.subr.bf16.mxu0 %v644
        %1994 = vmatpush1.bf16.msra.mxu0 %v643
        %1995 = vmatprep.subr.bf16.mxu0 %v640
        %1996 = vmatpush1.bf16.msra.mxu0 %v639
        %1997 = vmatprep.subr.bf16.mxu0 %v636
        %1998 = vmatpush1.bf16.msra.mxu0 %v635
        %1999 = vmatprep.subr.bf16.mxu0 %v632
        %2000 = vmatpush1.bf16.msra.mxu0 %v631
        %2001 = vmatprep.subr.bf16.mxu0 %v628
        %2002 = vmatpush1.bf16.msra.mxu0 %v627
        %2003 = vmatprep.subr.bf16.mxu0 %v624
        %2004 = vmatpush1.bf16.msra.mxu0 %v623
        %2005 = vmatprep.subr.bf16.mxu0 %v620
        %2006 = vmatpush1.bf16.msra.mxu0 %v619
        %2007 = vmatprep.subr.bf16.mxu0 %v616
        %2008 = vmatpush1.bf16.msra.mxu0 %v615
        %2009 = vmatprep.subr.bf16.mxu0 %v676
        %2010 = vmatpush2.bf16.msra.mxu0 %v675
        %2011 = vmatprep.subr.bf16.mxu0 %v672
        %2012 = vmatpush2.bf16.msra.mxu0 %v671
        %2013 = vmatprep.subr.bf16.mxu0 %v668
        %2014 = vmatpush2.bf16.msra.mxu0 %v667
        %2015 = vmatprep.subr.bf16.mxu0 %v664
        %2016 = vmatpush2.bf16.msra.mxu0 %v663
        %2017 = vmatprep.subr.bf16.mxu0 %v660
        %2018 = vmatpush2.bf16.msra.mxu0 %v659
        %2019 = vmatprep.subr.bf16.mxu0 %v656
        %2020 = vmatpush2.bf16.msra.mxu0 %v655
        %2021 = vmatprep.subr.bf16.mxu0 %v652
        %2022 = vmatpush2.bf16.msra.mxu0 %v651
        %2023 = vmatprep.subr.bf16.mxu0 %v648
        %2024 = vmatpush2.bf16.msra.mxu0 %v647
        %2025 = vmatprep.mubr.bf16.mxu0 %v1947
        %2026 = vmatmul.mubr.bf16.gmra.mxu0 %v1946
        %v2027 = vpop.f32.mrf.mxu0
        %v2028 = vadd.f32 %v402, %v2027
        %v2029 = vpop.f32.mrf.mxu0
        %v2030 = vadd.f32 %v406, %v2029
        %v2031 = vpop.f32.mrf.mxu0
        %v2032 = vadd.f32 %v402, %v2031
        %v2033 = vpop.f32.mrf.mxu0
        %v2034 = vadd.f32 %v406, %v2033
        %2035 = vdwg.mxu0
        %v2036 = vxor.u32 %v1985, 2147483648
        %v2037 = vxor.u32 %v1987, 2147483648
        %v2038 = vxor.u32 %v2028, 2147483648
        %v2039 = vxor.u32 %v1989, 2147483648
        %v2040 = vxor.u32 %v1991, 2147483648
        %v2041 = vxor.u32 %v2032, 2147483648
        %v2042 = vmul.f32 %v2036, 1.442695
        %v2043 = vpow.pop %v2042
        %v2044 = vmul.f32 %v2037, 1.442695
        %v2045 = vpow.pop %v2044
        %v2046 = vmul.f32 %v2038, 1.442695
        %v2047 = vpow.pop %v2046
        %v2048 = vmul.f32 %v2039, 1.442695
        %v2049 = vpow.pop %v2048
        %v2050 = vmul.f32 %v2040, 1.442695
        %v2051 = vpow.pop %v2050
        %v2052 = vmul.f32 %v2041, 1.442695
        %v2053 = vpow.pop %v2052
        %v2054 = vadd.f32 %v2043, 1.0
        %v2055 = vadd.f32 %v2045, 1.0
        %v2056 = vadd.f32 %v2047, 1.0
        %v2057 = vadd.f32 %v2049, 1.0
        %v2058 = vadd.f32 %v2051, 1.0
        %v2059 = vadd.f32 %v2053, 1.0
        %v2060 = vrcp.pop %v2054
        %v2061 = vmul.f32 1.0, %v2060
        %v2062 = vrcp.pop %v2055
        %v2063 = vmul.f32 1.0, %v2062
        %v2064 = vrcp.pop %v2056
        %v2065 = vmul.f32 1.0, %v2064
        %v2066 = vrcp.pop %v2057
        %v2067 = vmul.f32 1.0, %v2066
        %v2068 = vrcp.pop %v2058
        %v2069 = vmul.f32 1.0, %v2068
        %v2070 = vrcp.pop %v2059
        %v2071 = vmul.f32 1.0, %v2070
        %v2072 = vtanh.pop %v2030
        %v2073 = vtanh.pop %v2034
        %v2074 = vld [vmem:[#allocation3] sm:$0xff]
        %v2075 = vld [vmem:[#allocation3 + $0x8] sm:$0xff]
        %v2076 = vmul.f32 %v2063, %v2074
        %v2077 = vmul.f32 %v2069, %v2075
        %v2078 = vmul.f32 %v2061, %v2072
        %v2079 = vmul.f32 %v2067, %v2073
        %v2080 = vadd.f32 %v2076, %v2078
        %v2081 = vadd.f32 %v2077, %v2079
        %v2082 = vtanh.pop %v2080
        %v2083 = vtanh.pop %v2081
        %v2084 = vmul.f32 %v2065, %v2082
        %v2085 = vmul.f32 %v2071, %v2083
        %v2086 = vpack.c.bf16 %v2085, %v2084
        %2087 = vst [vmem:[#allocation3] sm:$0xff] %v2080
        %2088 = vst [vmem:[#allocation3 + $0x8] sm:$0xff] %v2081
        %v2090 = vunpack.c.l.b16 %v2086
        %v2091 = vunpack.c.h.b16 %v2086
        %v2092 = vpack.c.b16 %v2090, %v2090
        %v2093 = vpack.c.b16 %v2091, %v2091
        %2096 = vst [vmem:[#allocation2 + $0x4] sm:$0xf] %v2092
        %2097 = vst [vmem:[#allocation2 + $0xc] sm:$0xf] %v2093
        %s2098 = smul.addr %s1931, 4
        %s2099 = scalar_lea.vmem %s300, %s2098
        %2100 = vst [vmem:[%s2099] sm:$0xf] %v2092
        %2101 = vst [vmem:[%s2099 + $0x4] sm:$0xf] %v2093
        %s2102 = smul.u32 %s22, 2
        %s2103 = ssub.s32 0, %s2102
        %s2104 = smul.u32 %s21, %s2103
        %s2105 = sadd.s32 %s22, %s2104
        %s2106 = smul.u32 8, %s2105
        %p2107 = scmp.lt.s32.totalorder %s21, 1
        %s2108 = scalar_select %p2107, %s21, 1
        %p2109 = scmp.lt.s32.totalorder %s2106, 7
        %s2110 = scalar_select %p2109, %s2106, 7
        %s2111 = smul.addr %s2110, 2
        %s2112 = smul.addr %s2108, 16
        %s2113 = sadd.s32 %s2111, %s2112
        %s2114 = smul.addr %s2113, 4
        %s2115 = scalar_lea.vmem %s3, %s2114
        // Predicated region
        $region41: #{music_vae_forward.10} parent=31 // pred_check
          %p2116 = pneg %p143
        $region42: #{music_vae_forward.10} parent=31 // pred_check_branch
          %2118 = sbr.rel (%p2116) target = $region44
        $region43: #{music_vae_forward.10} parent=31 // pred_region
          %s2119 = smul.u32 %s22, 2
          %s2120 = ssub.s32 0, %s2119
          %s2121 = smul.u32 %s21, %s2120
          %s2122 = sadd.s32 %s22, %s2121
          %s2123 = smul.u32 8, %s2122
        $region44: #{music_vae_forward.10} parent=31 // pred_fallthru
          _
      $region32: #{music_vae_forward.10} parent=5 // pred_fallthru
        _
      %p2124 = scmp.le.s32.totalorder 2, %s12
      // Predicated region
      $region45: #{music_vae_forward.10} parent=5 // pred_check
        %p2125 = pneg %p2124
      $region46: #{music_vae_forward.10} parent=5 // pred_check_branch
        %2127 = sbr.rel (%p2125) target = $region48
      $region47: #{music_vae_forward.10} parent=5 // pred_region
        %s2128 = ssub.s32 %s12, 2
        // Predicated region
        $region49: #{music_vae_forward.10} parent=47 // pred_check
          %p2129 = pneg %p149
        $region50: #{music_vae_forward.10} parent=47 // pred_check_branch
          %2131 = sbr.rel (%p2129) target = $region52
        $region51: #{music_vae_forward.10} parent=47 // pred_region
          %s2132 = smul.u32 %s24, 2
          %s2133 = ssub.s32 0, %s2132
          %s2134 = smul.u32 %s23, %s2133
          %s2135 = sadd.s32 %s24, %s2134
          %s2136 = smul.u32 8, %s2135
          %p2137 = scmp.lt.s32.totalorder %s23, 1
          %s2138 = scalar_select %p2137, %s23, 1
          %p2139 = scmp.lt.s32.totalorder %s2136, 7
          %s2140 = scalar_select %p2139, %s2136, 7
          %s2141 = smul.addr %s2140, 2
          %s2142 = smul.addr %s2138, 16
          %s2143 = sadd.s32 %s2141, %s2142
          %s2144 = smul.addr %s2143, 4
          %s2145 = scalar_lea.vmem %s3, %s2144
        $region52: #{music_vae_forward.10} parent=47 // pred_fallthru
          _
      $region48: #{music_vae_forward.10} parent=5 // pred_fallthru
        _
    $region6: #{music_vae_forward.10} parent=1 // loop_footer
      %s16 = sadd.s32 1, %s12
    $region7: #{music_vae_forward.10} parent=1 // loop_footer_branch
      %11 = sbr.rel target = $region3
    $region8: #{music_vae_forward.10} parent=1 // loop_exit
      _
    %2146 = vsyncpa [#allocation5], 1
    %s2147 = scalar_lea.sflag [#allocation5], 1
    %2148 = vsyncpa %s2147, 1

// kernel: music_vae_forward.14
$region0: #{music_vae_forward.14}
  #allocation0 [shape = 'u32[]', space=smem, size = 0x4, offset = 0x4, fixed_abs, tag = 'smem constant byte address 0x4 - core index']
  #allocation1 [shape = 'u32[144,128]{1,0:T(1,128)}', space=vmem, size = 0x12000, scoped, tag = 'internal scratch']
  #allocation2 [shape = 'bf16[16,256]{1,0:T(8,128)(2,1)}', space=vmem, size = 0x2000, scoped, tag = 'scratch operand']
  #allocation3 [shape = 'f32[16,128]{1,0:T(8,128)}', space=vmem, size = 0x2000, scoped, tag = 'scratch operand']
  %s0 = inlined_call_operand.vmem [shape: bf16[2,16,128], index: 0, kind: input, shape index: {}]
  %s1 = inlined_call_operand.vmem [shape: bf16[1,256,512], index: 1, kind: input, shape index: {}]
  %s2 = inlined_call_operand.vmem [shape: f32[1,1,512], index: 2, kind: input, shape index: {}]
  %s3 = inlined_call_operand.vmem [shape: bf16[1,2,16,128], index: 3, kind: output, shape index: {}]
  %s4 = sld [smem:[#allocation0]]
  $region26: #{music_vae_forward.14} parent=0
    _
  %s6 = ssub.s32 1, %s4
  %s7 = scalar_select 0, %s6, %s4
  // Predicated region
  $region2: #{music_vae_forward.14} parent=0 // pred_check
    _
  $region3: #{music_vae_forward.14} parent=0 // pred_check_branch
    %9 = sbr.rel (0) target = $region5
  $region4: #{music_vae_forward.14} parent=0 // pred_region
    %s10 = smul.u32 0, 2
    %s11 = ssub.s32 0, %s10
    %s12 = smul.u32 0, %s11
    %s13 = sadd.s32 0, %s12
    %s14 = smul.u32 2, %s13
    %p15 = scmp.lt.s32.totalorder %s14, 1
    %s16 = scalar_select %p15, %s14, 1
    %s17 = smul.addr %s16, 2
    %s18 = smul.addr %s17, 4
    %s19 = scalar_lea.vmem %s0, %s18
    %s20 = smul.u32 0, 2
    %s21 = ssub.s32 0, %s20
    %s22 = smul.u32 0, %s21
    %s23 = sadd.s32 0, %s22
    %s24 = smul.u32 2, %s23
  $region5: #{music_vae_forward.14} parent=0 // pred_fallthru
    _
  // Predicated region
  $region6: #{music_vae_forward.14} parent=0 // pred_check
    _
  $region7: #{music_vae_forward.14} parent=0 // pred_check_branch
    %26 = sbr.rel (0) target = $region9
  $region8: #{music_vae_forward.14} parent=0 // pred_region
    _
  $region9: #{music_vae_forward.14} parent=0 // pred_fallthru
    _
  // Predicated region
  $region10: #{music_vae_forward.14} parent=0 // pred_check
    _
  $region11: #{music_vae_forward.14} parent=0 // pred_check_branch
    %28 = sbr.rel (0) target = $region13
  $region12: #{music_vae_forward.14} parent=0 // pred_region
    _
  $region13: #{music_vae_forward.14} parent=0 // pred_fallthru
    _
  %s29 = smul.u32 0, 2
  %s30 = ssub.s32 0, %s29
  %s31 = smul.u32 0, %s30
  %s32 = sadd.s32 0, %s31
  %s33 = smul.u32 2, %s32
  %p34 = scmp.lt.s32.totalorder %s33, 1
  %s35 = scalar_select %p34, %s33, 1
  %s36 = smul.addr %s35, 2
  %s37 = smul.addr %s36, 4
  %s38 = scalar_lea.vmem %s0, %s37
  %s39 = smul.u32 0, 2
  %s40 = ssub.s32 0, %s39
  %s41 = smul.u32 0, %s40
  %s42 = sadd.s32 0, %s41
  %s43 = smul.u32 2, %s42
  %p44 = scmp.lt.s32.totalorder %s43, 1
  %s45 = scalar_select %p44, %s43, 1
  %s46 = smul.addr %s45, 2
  %s47 = smul.addr %s46, 4
  %s48 = scalar_lea.vmem %s3, %s47
  %s49 = smul.u32 0, 2
  %s50 = ssub.s32 0, %s49
  %s51 = smul.u32 0, %s50
  %s52 = sadd.s32 0, %s51
  %s53 = smul.u32 2, %s52
  %p54 = scmp.lt.s32.totalorder %s53, 1
  %s55 = scalar_select %p54, %s53, 1
  %s56 = smul.addr %s55, 2
  %s57 = smul.addr %s56, 4
  %s58 = scalar_lea.vmem %s0, %s57
  %s59 = smul.u32 0, 2
  %s60 = ssub.s32 0, %s59
  %s61 = smul.u32 0, %s60
  %s62 = sadd.s32 0, %s61
  %s63 = smul.u32 2, %s62
  %s64 = smul.u32 0, 2
  %s65 = ssub.s32 0, %s64
  %s66 = smul.u32 0, %s65
  %s67 = sadd.s32 0, %s66
  %s68 = smul.u32 2, %s67
  %p69 = scmp.lt.s32.totalorder %s68, 1
  %s70 = scalar_select %p69, %s68, 1
  %s71 = smul.addr %s70, 2
  %s72 = smul.addr %s71, 4
  %s73 = scalar_lea.vmem %s3, %s72
  %s74 = smul.u32 0, 2
  %s75 = ssub.s32 0, %s74
  %s76 = smul.u32 0, %s75
  %s77 = sadd.s32 0, %s76
  %s78 = smul.u32 2, %s77
  %p80 = scmp.eq.s32.totalorder 0, 0
  // Predicated region
  $region14: #{music_vae_forward.14} parent=0 // pred_check
    %p81 = pneg %p80
  $region15: #{music_vae_forward.14} parent=0 // pred_check_branch
    %83 = sbr.rel (%p81) target = $region17
  $region16: #{music_vae_forward.14} parent=0 // pred_region
    %84 = vst [vmem:[#allocation2] sm:$0xff] 0
    %85 = vst [vmem:[#allocation2 + $0x8] sm:$0xff] 0
    %86 = vst [vmem:[#allocation3] sm:$0xff] 0.0
    %87 = vst [vmem:[#allocation3 + $0x8] sm:$0xff] 0.0
  $region17: #{music_vae_forward.14} parent=0 // pred_fallthru
    _
  %v88 = vld [vmem:[%s1] sm:$0xff]
  %v89 = vld [vmem:[%s1 + $0x8] sm:$0xff]
  %v90 = vld [vmem:[%s1 + $0x10] sm:$0xff]
  %v91 = vld [vmem:[%s1 + $0x18] sm:$0xff]
  %v92 = vld [vmem:[%s1 + $0x20] sm:$0xff]
  %v93 = vld [vmem:[%s1 + $0x28] sm:$0xff]
  %v94 = vld [vmem:[%s1 + $0x30] sm:$0xff]
  %v95 = vld [vmem:[%s1 + $0x38] sm:$0xff]
  %v96 = vld [vmem:[%s1 + $0x40] sm:$0xff]
  %v97 = vld [vmem:[%s1 + $0x48] sm:$0xff]
  %v98 = vld [vmem:[%s1 + $0x50] sm:$0xff]
  %v99 = vld [vmem:[%s1 + $0x58] sm:$0xff]
  %v100 = vld [vmem:[%s1 + $0x60] sm:$0xff]
  %v101 = vld [vmem:[%s1 + $0x68] sm:$0xff]
  %v102 = vld [vmem:[%s1 + $0x70] sm:$0xff]
  %v103 = vld [vmem:[%s1 + $0x78] sm:$0xff]
  %v104 = vld [vmem:[%s1 + $0x80] sm:$0xff]
  %v105 = vld [vmem:[%s1 + $0x88] sm:$0xff]
  %v106 = vld [vmem:[%s1 + $0x90] sm:$0xff]
  %v107 = vld [vmem:[%s1 + $0x98] sm:$0xff]
  %v108 = vld [vmem:[%s1 + $0xa0] sm:$0xff]
  %v109 = vld [vmem:[%s1 + $0xa8] sm:$0xff]
  %v110 = vld [vmem:[%s1 + $0xb0] sm:$0xff]
  %v111 = vld [vmem:[%s1 + $0xb8] sm:$0xff]
  %v112 = vld [vmem:[%s1 + $0xc0] sm:$0xff]
  %v113 = vld [vmem:[%s1 + $0xc8] sm:$0xff]
  %v114 = vld [vmem:[%s1 + $0xd0] sm:$0xff]
  %v115 = vld [vmem:[%s1 + $0xd8] sm:$0xff]
  %v116 = vld [vmem:[%s1 + $0xe0] sm:$0xff]
  %v117 = vld [vmem:[%s1 + $0xe8] sm:$0xff]
  %v118 = vld [vmem:[%s1 + $0xf0] sm:$0xff]
  %v119 = vld [vmem:[%s1 + $0xf8] sm:$0xff]
  %v120 = vld [vmem:[%s1 + $0x100] sm:$0xff]
  %v121 = vld [vmem:[%s1 + $0x108] sm:$0xff]
  %v122 = vld [vmem:[%s1 + $0x110] sm:$0xff]
  %v123 = vld [vmem:[%s1 + $0x118] sm:$0xff]
  %v124 = vld [vmem:[%s1 + $0x120] sm:$0xff]
  %v125 = vld [vmem:[%s1 + $0x128] sm:$0xff]
  %v126 = vld [vmem:[%s1 + $0x130] sm:$0xff]
  %v127 = vld [vmem:[%s1 + $0x138] sm:$0xff]
  %v128 = vld [vmem:[%s1 + $0x140] sm:$0xff]
  %v129 = vld [vmem:[%s1 + $0x148] sm:$0xff]
  %v130 = vld [vmem:[%s1 + $0x150] sm:$0xff]
  %v131 = vld [vmem:[%s1 + $0x158] sm:$0xff]
  %v132 = vld [vmem:[%s1 + $0x160] sm:$0xff]
  %v133 = vld [vmem:[%s1 + $0x168] sm:$0xff]
  %v134 = vld [vmem:[%s1 + $0x170] sm:$0xff]
  %v135 = vld [vmem:[%s1 + $0x178] sm:$0xff]
  %v136 = vld [vmem:[%s1 + $0x180] sm:$0xff]
  %v137 = vld [vmem:[%s1 + $0x188] sm:$0xff]
  %v138 = vld [vmem:[%s1 + $0x190] sm:$0xff]
  %v139 = vld [vmem:[%s1 + $0x198] sm:$0xff]
  %v140 = vld [vmem:[%s1 + $0x1a0] sm:$0xff]
  %v141 = vld [vmem:[%s1 + $0x1a8] sm:$0xff]
  %v142 = vld [vmem:[%s1 + $0x1b0] sm:$0xff]
  %v143 = vld [vmem:[%s1 + $0x1b8] sm:$0xff]
  %v144 = vld [vmem:[%s1 + $0x1c0] sm:$0xff]
  %v145 = vld [vmem:[%s1 + $0x1c8] sm:$0xff]
  %v146 = vld [vmem:[%s1 + $0x1d0] sm:$0xff]
  %v147 = vld [vmem:[%s1 + $0x1d8] sm:$0xff]
  %v148 = vld [vmem:[%s1 + $0x1e0] sm:$0xff]
  %v149 = vld [vmem:[%s1 + $0x1e8] sm:$0xff]
  %v150 = vld [vmem:[%s1 + $0x1f0] sm:$0xff]
  %v151 = vld [vmem:[%s1 + $0x1f8] sm:$0xff]
  %v152 = vld [vmem:[%s2] sm:$0xf]
  %s153 = smul.u32 0, 2
  %s154 = smul.addr %s153, 4
  %s155 = scalar_lea.vmem %s58, %s154
  %v156 = vld [vmem:[%s155] sm:$0xf]
  %v157 = vld [vmem:[%s155 + $0x4] sm:$0xf]
  %158 = vst [vmem:[#allocation2] sm:$0xf] %v156
  %159 = vst [vmem:[#allocation2 + $0x8] sm:$0xf] %v157
  %v160 = vld [vmem:[#allocation2] sm:$0xff]
  %v161 = vld [vmem:[#allocation2 + $0x8] sm:$0xff]
  %v163 = vlaneseq
  %v164 = vshrl.u32 %v163, 7
  %v165 = vsub.s32 0, %v164
  %v166 = vrot.slane %v152, %v165
  %v167 = vlaneseq
  %v168 = vshrl.u32 %v167, 7
  %v169 = vsub.s32 1, %v168
  %v170 = vrot.slane %v152, %v169
  %v171 = vlaneseq
  %v172 = vshrl.u32 %v171, 7
  %v173 = vsub.s32 2, %v172
  %v174 = vrot.slane %v152, %v173
  %v175 = vlaneseq
  %v176 = vshrl.u32 %v175, 7
  %v177 = vsub.s32 3, %v176
  %v178 = vrot.slane %v152, %v177
  %v185 = vunpack.c.l.b16 %v160
  %v186 = vunpack.c.h.b16 %v160
  %v187 = vunpack.c.l.b16 %v161
  %v188 = vunpack.c.h.b16 %v161
  %v189 = vpack.c.b16 %v187, %v185
  %v190 = vpack.c.b16 %v188, %v186
  %v257 = vunpack.c.l.b16 %v88
  %v258 = vunpack.c.h.b16 %v88
  %v259 = vunpack.c.l.b16 %v89
  %v260 = vunpack.c.h.b16 %v89
  %v261 = vunpack.c.l.b16 %v90
  %v262 = vunpack.c.h.b16 %v90
  %v263 = vunpack.c.l.b16 %v91
  %v264 = vunpack.c.h.b16 %v91
  %v265 = vunpack.c.l.b16 %v92
  %v266 = vunpack.c.h.b16 %v92
  %v267 = vunpack.c.l.b16 %v93
  %v268 = vunpack.c.h.b16 %v93
  %v269 = vunpack.c.l.b16 %v94
  %v270 = vunpack.c.h.b16 %v94
  %v271 = vunpack.c.l.b16 %v95
  %v272 = vunpack.c.h.b16 %v95
  %v273 = vunpack.c.l.b16 %v96
  %v274 = vunpack.c.h.b16 %v96
  %v275 = vunpack.c.l.b16 %v97
  %v276 = vunpack.c.h.b16 %v97
  %v277 = vunpack.c.l.b16 %v98
  %v278 = vunpack.c.h.b16 %v98
  %v279 = vunpack.c.l.b16 %v99
  %v280 = vunpack.c.h.b16 %v99
  %v281 = vunpack.c.l.b16 %v100
  %v282 = vunpack.c.h.b16 %v100
  %v283 = vunpack.c.l.b16 %v101
  %v284 = vunpack.c.h.b16 %v101
  %v285 = vunpack.c.l.b16 %v102
  %v286 = vunpack.c.h.b16 %v102
  %v287 = vunpack.c.l.b16 %v103
  %v288 = vunpack.c.h.b16 %v103
  %v289 = vunpack.c.l.b16 %v104
  %v290 = vunpack.c.h.b16 %v104
  %v291 = vunpack.c.l.b16 %v105
  %v292 = vunpack.c.h.b16 %v105
  %v293 = vunpack.c.l.b16 %v106
  %v294 = vunpack.c.h.b16 %v106
  %v295 = vunpack.c.l.b16 %v107
  %v296 = vunpack.c.h.b16 %v107
  %v297 = vunpack.c.l.b16 %v108
  %v298 = vunpack.c.h.b16 %v108
  %v299 = vunpack.c.l.b16 %v109
  %v300 = vunpack.c.h.b16 %v109
  %v301 = vunpack.c.l.b16 %v110
  %v302 = vunpack.c.h.b16 %v110
  %v303 = vunpack.c.l.b16 %v111
  %v304 = vunpack.c.h.b16 %v111
  %v305 = vunpack.c.l.b16 %v112
  %v306 = vunpack.c.h.b16 %v112
  %v307 = vunpack.c.l.b16 %v113
  %v308 = vunpack.c.h.b16 %v113
  %v309 = vunpack.c.l.b16 %v114
  %v310 = vunpack.c.h.b16 %v114
  %v311 = vunpack.c.l.b16 %v115
  %v312 = vunpack.c.h.b16 %v115
  %v313 = vunpack.c.l.b16 %v116
  %v314 = vunpack.c.h.b16 %v116
  %v315 = vunpack.c.l.b16 %v117
  %v316 = vunpack.c.h.b16 %v117
  %v317 = vunpack.c.l.b16 %v118
  %v318 = vunpack.c.h.b16 %v118
  %v319 = vunpack.c.l.b16 %v119
  %v320 = vunpack.c.h.b16 %v119
  %v321 = vunpack.c.l.b16 %v120
  %v322 = vunpack.c.h.b16 %v120
  %v323 = vunpack.c.l.b16 %v121
  %v324 = vunpack.c.h.b16 %v121
  %v325 = vunpack.c.l.b16 %v122
  %v326 = vunpack.c.h.b16 %v122
  %v327 = vunpack.c.l.b16 %v123
  %v328 = vunpack.c.h.b16 %v123
  %v329 = vunpack.c.l.b16 %v124
  %v330 = vunpack.c.h.b16 %v124
  %v331 = vunpack.c.l.b16 %v125
  %v332 = vunpack.c.h.b16 %v125
  %v333 = vunpack.c.l.b16 %v126
  %v334 = vunpack.c.h.b16 %v126
  %v335 = vunpack.c.l.b16 %v127
  %v336 = vunpack.c.h.b16 %v127
  %v337 = vunpack.c.l.b16 %v128
  %v338 = vunpack.c.h.b16 %v128
  %v339 = vunpack.c.l.b16 %v129
  %v340 = vunpack.c.h.b16 %v129
  %v341 = vunpack.c.l.b16 %v130
  %v342 = vunpack.c.h.b16 %v130
  %v343 = vunpack.c.l.b16 %v131
  %v344 = vunpack.c.h.b16 %v131
  %v345 = vunpack.c.l.b16 %v132
  %v346 = vunpack.c.h.b16 %v132
  %v347 = vunpack.c.l.b16 %v133
  %v348 = vunpack.c.h.b16 %v133
  %v349 = vunpack.c.l.b16 %v134
  %v350 = vunpack.c.h.b16 %v134
  %v351 = vunpack.c.l.b16 %v135
  %v352 = vunpack.c.h.b16 %v135
  %v353 = vunpack.c.l.b16 %v136
  %v354 = vunpack.c.h.b16 %v136
  %v355 = vunpack.c.l.b16 %v137
  %v356 = vunpack.c.h.b16 %v137
  %v357 = vunpack.c.l.b16 %v138
  %v358 = vunpack.c.h.b16 %v138
  %v359 = vunpack.c.l.b16 %v139
  %v360 = vunpack.c.h.b16 %v139
  %v361 = vunpack.c.l.b16 %v140
  %v362 = vunpack.c.h.b16 %v140
  %v363 = vunpack.c.l.b16 %v141
  %v364 = vunpack.c.h.b16 %v141
  %v365 = vunpack.c.l.b16 %v142
  %v366 = vunpack.c.h.b16 %v142
  %v367 = vunpack.c.l.b16 %v143
  %v368 = vunpack.c.h.b16 %v143
  %v369 = vunpack.c.l.b16 %v144
  %v370 = vunpack.c.h.b16 %v144
  %v371 = vunpack.c.l.b16 %v145
  %v372 = vunpack.c.h.b16 %v145
  %v373 = vunpack.c.l.b16 %v146
  %v374 = vunpack.c.h.b16 %v146
  %v375 = vunpack.c.l.b16 %v147
  %v376 = vunpack.c.h.b16 %v147
  %v377 = vunpack.c.l.b16 %v148
  %v378 = vunpack.c.h.b16 %v148
  %v379 = vunpack.c.l.b16 %v149
  %v380 = vunpack.c.h.b16 %v149
  %v381 = vunpack.c.l.b16 %v150
  %v382 = vunpack.c.h.b16 %v150
  %v383 = vunpack.c.l.b16 %v151
  %v384 = vunpack.c.h.b16 %v151
  %v385 = vpack.c.b16 %v261, %v257
  %v386 = vpack.c.b16 %v262, %v258
  %v387 = vpack.c.b16 %v263, %v259
  %v388 = vpack.c.b16 %v264, %v260
  %v389 = vpack.c.b16 %v269, %v265
  %v390 = vpack.c.b16 %v270, %v266
  %v391 = vpack.c.b16 %v271, %v267
  %v392 = vpack.c.b16 %v272, %v268
  %v393 = vpack.c.b16 %v277, %v273
  %v394 = vpack.c.b16 %v278, %v274
  %v395 = vpack.c.b16 %v279, %v275
  %v396 = vpack.c.b16 %v280, %v276
  %v397 = vpack.c.b16 %v285, %v281
  %v398 = vpack.c.b16 %v286, %v282
  %v399 = vpack.c.b16 %v287, %v283
  %v400 = vpack.c.b16 %v288, %v284
  %v401 = vpack.c.b16 %v293, %v289
  %v402 = vpack.c.b16 %v294, %v290
  %v403 = vpack.c.b16 %v295, %v291
  %v404 = vpack.c.b16 %v296, %v292
  %v405 = vpack.c.b16 %v301, %v297
  %v406 = vpack.c.b16 %v302, %v298
  %v407 = vpack.c.b16 %v303, %v299
  %v408 = vpack.c.b16 %v304, %v300
  %v409 = vpack.c.b16 %v309, %v305
  %v410 = vpack.c.b16 %v310, %v306
  %v411 = vpack.c.b16 %v311, %v307
  %v412 = vpack.c.b16 %v312, %v308
  %v413 = vpack.c.b16 %v317, %v313
  %v414 = vpack.c.b16 %v318, %v314
  %v415 = vpack.c.b16 %v319, %v315
  %v416 = vpack.c.b16 %v320, %v316
  %v417 = vpack.c.b16 %v325, %v321
  %v418 = vpack.c.b16 %v326, %v322
  %v419 = vpack.c.b16 %v327, %v323
  %v420 = vpack.c.b16 %v328, %v324
  %v421 = vpack.c.b16 %v333, %v329
  %v422 = vpack.c.b16 %v334, %v330
  %v423 = vpack.c.b16 %v335, %v331
  %v424 = vpack.c.b16 %v336, %v332
  %v425 = vpack.c.b16 %v341, %v337
  %v426 = vpack.c.b16 %v342, %v338
  %v427 = vpack.c.b16 %v343, %v339
  %v428 = vpack.c.b16 %v344, %v340
  %v429 = vpack.c.b16 %v349, %v345
  %v430 = vpack.c.b16 %v350, %v346
  %v431 = vpack.c.b16 %v351, %v347
  %v432 = vpack.c.b16 %v352, %v348
  %v433 = vpack.c.b16 %v357, %v353
  %v434 = vpack.c.b16 %v358, %v354
  %v435 = vpack.c.b16 %v359, %v355
  %v436 = vpack.c.b16 %v360, %v356
  %v437 = vpack.c.b16 %v365, %v361
  %v438 = vpack.c.b16 %v366, %v362
  %v439 = vpack.c.b16 %v367, %v363
  %v440 = vpack.c.b16 %v368, %v364
  %v441 = vpack.c.b16 %v373, %v369
  %v442 = vpack.c.b16 %v374, %v370
  %v443 = vpack.c.b16 %v375, %v371
  %v444 = vpack.c.b16 %v376, %v372
  %v445 = vpack.c.b16 %v381, %v377
  %v446 = vpack.c.b16 %v382, %v378
  %v447 = vpack.c.b16 %v383, %v379
  %v448 = vpack.c.b16 %v384, %v380
  %513 = vmatprep.subr.bf16.mxu0 %v414
  %514 = vmatpush1.bf16.msra.mxu0 %v413
  %515 = vmatprep.subr.bf16.mxu0 %v410
  %516 = vmatpush1.bf16.msra.mxu0 %v409
  %517 = vmatprep.subr.bf16.mxu0 %v406
  %518 = vmatpush1.bf16.msra.mxu0 %v405
  %519 = vmatprep.subr.bf16.mxu0 %v402
  %520 = vmatpush1.bf16.msra.mxu0 %v401
  %521 = vmatprep.subr.bf16.mxu0 %v398
  %522 = vmatpush1.bf16.msra.mxu0 %v397
  %523 = vmatprep.subr.bf16.mxu0 %v394
  %524 = vmatpush1.bf16.msra.mxu0 %v393
  %525 = vmatprep.subr.bf16.mxu0 %v390
  %526 = vmatpush1.bf16.msra.mxu0 %v389
  %527 = vmatprep.subr.bf16.mxu0 %v386
  %528 = vmatpush1.bf16.msra.mxu0 %v385
  %529 = vmatprep.subr.bf16.mxu0 %v446
  %530 = vmatpush2.bf16.msra.mxu0 %v445
  %531 = vmatprep.subr.bf16.mxu0 %v442
  %532 = vmatpush2.bf16.msra.mxu0 %v441
  %533 = vmatprep.subr.bf16.mxu0 %v438
  %534 = vmatpush2.bf16.msra.mxu0 %v437
  %535 = vmatprep.subr.bf16.mxu0 %v434
  %536 = vmatpush2.bf16.msra.mxu0 %v433
  %537 = vmatprep.subr.bf16.mxu0 %v430
  %538 = vmatpush2.bf16.msra.mxu0 %v429
  %539 = vmatprep.subr.bf16.mxu0 %v426
  %540 = vmatpush2.bf16.msra.mxu0 %v425
  %541 = vmatprep.subr.bf16.mxu0 %v422
  %542 = vmatpush2.bf16.msra.mxu0 %v421
  %543 = vmatprep.subr.bf16.mxu0 %v418
  %544 = vmatpush2.bf16.msra.mxu0 %v417
  %545 = vmatprep.mubr.bf16.mxu0 %v190
  %546 = vmatmul.mubr.bf16.gmra.mxu0 %v189
  %v547 = vpop.f32.mrf.mxu0
  %v548 = vadd.f32 %v166, %v547
  %v549 = vpop.f32.mrf.mxu0
  %v550 = vadd.f32 %v170, %v549
  %v551 = vpop.f32.mrf.mxu0
  %v552 = vadd.f32 %v166, %v551
  %v553 = vpop.f32.mrf.mxu0
  %v554 = vadd.f32 %v170, %v553
  %555 = vdwg.mxu0
  %556 = vmatprep.subr.bf16.mxu0 %v416
  %557 = vmatpush1.bf16.msra.mxu0 %v415
  %558 = vmatprep.subr.bf16.mxu0 %v412
  %559 = vmatpush1.bf16.msra.mxu0 %v411
  %560 = vmatprep.subr.bf16.mxu0 %v408
  %561 = vmatpush1.bf16.msra.mxu0 %v407
  %562 = vmatprep.subr.bf16.mxu0 %v404
  %563 = vmatpush1.bf16.msra.mxu0 %v403
  %564 = vmatprep.subr.bf16.mxu0 %v400
  %565 = vmatpush1.bf16.msra.mxu0 %v399
  %566 = vmatprep.subr.bf16.mxu0 %v396
  %567 = vmatpush1.bf16.msra.mxu0 %v395
  %568 = vmatprep.subr.bf16.mxu0 %v392
  %569 = vmatpush1.bf16.msra.mxu0 %v391
  %570 = vmatprep.subr.bf16.mxu0 %v388
  %571 = vmatpush1.bf16.msra.mxu0 %v387
  %572 = vmatprep.subr.bf16.mxu0 %v448
  %573 = vmatpush2.bf16.msra.mxu0 %v447
  %574 = vmatprep.subr.bf16.mxu0 %v444
  %575 = vmatpush2.bf16.msra.mxu0 %v443
  %576 = vmatprep.subr.bf16.mxu0 %v440
  %577 = vmatpush2.bf16.msra.mxu0 %v439
  %578 = vmatprep.subr.bf16.mxu0 %v436
  %579 = vmatpush2.bf16.msra.mxu0 %v435
  %580 = vmatprep.subr.bf16.mxu0 %v432
  %581 = vmatpush2.bf16.msra.mxu0 %v431
  %582 = vmatprep.subr.bf16.mxu0 %v428
  %583 = vmatpush2.bf16.msra.mxu0 %v427
  %584 = vmatprep.subr.bf16.mxu0 %v424
  %585 = vmatpush2.bf16.msra.mxu0 %v423
  %586 = vmatprep.subr.bf16.mxu0 %v420
  %587 = vmatpush2.bf16.msra.mxu0 %v419
  %588 = vmatprep.mubr.bf16.mxu0 %v190
  %589 = vmatmul.mubr.bf16.gmra.mxu0 %v189
  %v590 = vpop.f32.mrf.mxu0
  %v591 = vadd.f32 %v174, %v590
  %v592 = vpop.f32.mrf.mxu0
  %v593 = vadd.f32 %v178, %v592
  %v594 = vpop.f32.mrf.mxu0
  %v595 = vadd.f32 %v174, %v594
  %v596 = vpop.f32.mrf.mxu0
  %v597 = vadd.f32 %v178, %v596
  %598 = vdwg.mxu0
  %v599 = vxor.u32 %v548, 2147483648
  %v600 = vxor.u32 %v550, 2147483648
  %v601 = vxor.u32 %v591, 2147483648
  %v602 = vxor.u32 %v552, 2147483648
  %v603 = vxor.u32 %v554, 2147483648
  %v604 = vxor.u32 %v595, 2147483648
  %v605 = vmul.f32 %v599, 1.442695
  %v606 = vpow.pop %v605
  %v607 = vmul.f32 %v600, 1.442695
  %v608 = vpow.pop %v607
  %v609 = vmul.f32 %v601, 1.442695
  %v610 = vpow.pop %v609
  %v611 = vmul.f32 %v602, 1.442695
  %v612 = vpow.pop %v611
  %v613 = vmul.f32 %v603, 1.442695
  %v614 = vpow.pop %v613
  %v615 = vmul.f32 %v604, 1.442695
  %v616 = vpow.pop %v615
  %v617 = vadd.f32 %v606, 1.0
  %v618 = vadd.f32 %v608, 1.0
  %v619 = vadd.f32 %v610, 1.0
  %v620 = vadd.f32 %v612, 1.0
  %v621 = vadd.f32 %v614, 1.0
  %v622 = vadd.f32 %v616, 1.0
  %v623 = vrcp.pop %v617
  %v624 = vmul.f32 1.0, %v623
  %v625 = vrcp.pop %v618
  %v626 = vmul.f32 1.0, %v625
  %v627 = vrcp.pop %v619
  %v628 = vmul.f32 1.0, %v627
  %v629 = vrcp.pop %v620
  %v630 = vmul.f32 1.0, %v629
  %v631 = vrcp.pop %v621
  %v632 = vmul.f32 1.0, %v631
  %v633 = vrcp.pop %v622
  %v634 = vmul.f32 1.0, %v633
  %v635 = vtanh.pop %v593
  %v636 = vtanh.pop %v597
  %v637 = vld [vmem:[#allocation3] sm:$0xff]
  %v638 = vld [vmem:[#allocation3 + $0x8] sm:$0xff]
  %v639 = vmul.f32 %v626, %v637
  %v640 = vmul.f32 %v632, %v638
  %v641 = vmul.f32 %v624, %v635
  %v642 = vmul.f32 %v630, %v636
  %v643 = vadd.f32 %v639, %v641
  %v644 = vadd.f32 %v640, %v642
  %v645 = vtanh.pop %v643
  %v646 = vtanh.pop %v644
  %v647 = vmul.f32 %v628, %v645
  %v648 = vmul.f32 %v634, %v646
  %v649 = vpack.c.bf16 %v648, %v647
  %650 = vst [vmem:[#allocation3] sm:$0xff] %v643
  %651 = vst [vmem:[#allocation3 + $0x8] sm:$0xff] %v644
  %v653 = vunpack.c.l.b16 %v649
  %v654 = vunpack.c.h.b16 %v649
  %v655 = vpack.c.b16 %v653, %v653
  %v656 = vpack.c.b16 %v654, %v654
  %659 = vst [vmem:[#allocation2 + $0x4] sm:$0xf] %v655
  %660 = vst [vmem:[#allocation2 + $0xc] sm:$0xf] %v656
  %s661 = smul.addr %s153, 4
  %s662 = scalar_lea.vmem %s73, %s661
  %663 = vst [vmem:[%s662] sm:$0xf] %v655
  %664 = vst [vmem:[%s662 + $0x4] sm:$0xf] %v656
  %s665 = ssub.s32 1, 0
  %s666 = smul.u32 %s665, 2
  %s667 = smul.addr %s666, 4
  %s668 = scalar_lea.vmem %s58, %s667
  %v669 = vld [vmem:[%s668] sm:$0xf]
  %v670 = vld [vmem:[%s668 + $0x4] sm:$0xf]
  %671 = vst [vmem:[#allocation2] sm:$0xf] %v669
  %672 = vst [vmem:[#allocation2 + $0x8] sm:$0xf] %v670
  %v673 = vld [vmem:[#allocation2] sm:$0xff]
  %v674 = vld [vmem:[#allocation2 + $0x8] sm:$0xff]
  %v677 = vunpack.c.l.b16 %v673
  %v678 = vunpack.c.h.b16 %v673
  %v679 = vunpack.c.l.b16 %v674
  %v680 = vunpack.c.h.b16 %v674
  %v681 = vpack.c.b16 %v679, %v677
  %v682 = vpack.c.b16 %v680, %v678
  %685 = vmatprep.subr.bf16.mxu0 %v414
  %686 = vmatpush1.bf16.msra.mxu0 %v413
  %687 = vmatprep.subr.bf16.mxu0 %v410
  %688 = vmatpush1.bf16.msra.mxu0 %v409
  %689 = vmatprep.subr.bf16.mxu0 %v406
  %690 = vmatpush1.bf16.msra.mxu0 %v405
  %691 = vmatprep.subr.bf16.mxu0 %v402
  %692 = vmatpush1.bf16.msra.mxu0 %v401
  %693 = vmatprep.subr.bf16.mxu0 %v398
  %694 = vmatpush1.bf16.msra.mxu0 %v397
  %695 = vmatprep.subr.bf16.mxu0 %v394
  %696 = vmatpush1.bf16.msra.mxu0 %v393
  %697 = vmatprep.subr.bf16.mxu0 %v390
  %698 = vmatpush1.bf16.msra.mxu0 %v389
  %699 = vmatprep.subr.bf16.mxu0 %v386
  %700 = vmatpush1.bf16.msra.mxu0 %v385
  %701 = vmatprep.subr.bf16.mxu0 %v446
  %702 = vmatpush2.bf16.msra.mxu0 %v445
  %703 = vmatprep.subr.bf16.mxu0 %v442
  %704 = vmatpush2.bf16.msra.mxu0 %v441
  %705 = vmatprep.subr.bf16.mxu0 %v438
  %706 = vmatpush2.bf16.msra.mxu0 %v437
  %707 = vmatprep.subr.bf16.mxu0 %v434
  %708 = vmatpush2.bf16.msra.mxu0 %v433
  %709 = vmatprep.subr.bf16.mxu0 %v430
  %710 = vmatpush2.bf16.msra.mxu0 %v429
  %711 = vmatprep.subr.bf16.mxu0 %v426
  %712 = vmatpush2.bf16.msra.mxu0 %v425
  %713 = vmatprep.subr.bf16.mxu0 %v422
  %714 = vmatpush2.bf16.msra.mxu0 %v421
  %715 = vmatprep.subr.bf16.mxu0 %v418
  %716 = vmatpush2.bf16.msra.mxu0 %v417
  %717 = vmatprep.mubr.bf16.mxu0 %v682
  %718 = vmatmul.mubr.bf16.gmra.mxu0 %v681
  %v719 = vpop.f32.mrf.mxu0
  %v720 = vadd.f32 %v166, %v719
  %v721 = vpop.f32.mrf.mxu0
  %v722 = vadd.f32 %v170, %v721
  %v723 = vpop.f32.mrf.mxu0
  %v724 = vadd.f32 %v166, %v723
  %v725 = vpop.f32.mrf.mxu0
  %v726 = vadd.f32 %v170, %v725
  %727 = vdwg.mxu0
  %728 = vmatprep.subr.bf16.mxu0 %v416
  %729 = vmatpush1.bf16.msra.mxu0 %v415
  %730 = vmatprep.subr.bf16.mxu0 %v412
  %731 = vmatpush1.bf16.msra.mxu0 %v411
  %732 = vmatprep.subr.bf16.mxu0 %v408
  %733 = vmatpush1.bf16.msra.mxu0 %v407
  %734 = vmatprep.subr.bf16.mxu0 %v404
  %735 = vmatpush1.bf16.msra.mxu0 %v403
  %736 = vmatprep.subr.bf16.mxu0 %v400
  %737 = vmatpush1.bf16.msra.mxu0 %v399
  %738 = vmatprep.subr.bf16.mxu0 %v396
  %739 = vmatpush1.bf16.msra.mxu0 %v395
  %740 = vmatprep.subr.bf16.mxu0 %v392
  %741 = vmatpush1.bf16.msra.mxu0 %v391
  %742 = vmatprep.subr.bf16.mxu0 %v388
  %743 = vmatpush1.bf16.msra.mxu0 %v387
  %744 = vmatprep.subr.bf16.mxu0 %v448
  %745 = vmatpush2.bf16.msra.mxu0 %v447
  %746 = vmatprep.subr.bf16.mxu0 %v444
  %747 = vmatpush2.bf16.msra.mxu0 %v443
  %748 = vmatprep.subr.bf16.mxu0 %v440
  %749 = vmatpush2.bf16.msra.mxu0 %v439
  %750 = vmatprep.subr.bf16.mxu0 %v436
  %751 = vmatpush2.bf16.msra.mxu0 %v435
  %752 = vmatprep.subr.bf16.mxu0 %v432
  %753 = vmatpush2.bf16.msra.mxu0 %v431
  %754 = vmatprep.subr.bf16.mxu0 %v428
  %755 = vmatpush2.bf16.msra.mxu0 %v427
  %756 = vmatprep.subr.bf16.mxu0 %v424
  %757 = vmatpush2.bf16.msra.mxu0 %v423
  %758 = vmatprep.subr.bf16.mxu0 %v420
  %759 = vmatpush2.bf16.msra.mxu0 %v419
  %760 = vmatprep.mubr.bf16.mxu0 %v682
  %761 = vmatmul.mubr.bf16.gmra.mxu0 %v681
  %v762 = vpop.f32.mrf.mxu0
  %v763 = vadd.f32 %v174, %v762
  %v764 = vpop.f32.mrf.mxu0
  %v765 = vadd.f32 %v178, %v764
  %v766 = vpop.f32.mrf.mxu0
  %v767 = vadd.f32 %v174, %v766
  %v768 = vpop.f32.mrf.mxu0
  %v769 = vadd.f32 %v178, %v768
  %770 = vdwg.mxu0
  %v771 = vxor.u32 %v720, 2147483648
  %v772 = vxor.u32 %v722, 2147483648
  %v773 = vxor.u32 %v763, 2147483648
  %v774 = vxor.u32 %v724, 2147483648
  %v775 = vxor.u32 %v726, 2147483648
  %v776 = vxor.u32 %v767, 2147483648
  %v777 = vmul.f32 %v771, 1.442695
  %v778 = vpow.pop %v777
  %v779 = vmul.f32 %v772, 1.442695
  %v780 = vpow.pop %v779
  %v781 = vmul.f32 %v773, 1.442695
  %v782 = vpow.pop %v781
  %v783 = vmul.f32 %v774, 1.442695
  %v784 = vpow.pop %v783
  %v785 = vmul.f32 %v775, 1.442695
  %v786 = vpow.pop %v785
  %v787 = vmul.f32 %v776, 1.442695
  %v788 = vpow.pop %v787
  %v789 = vadd.f32 %v778, 1.0
  %v790 = vadd.f32 %v780, 1.0
  %v791 = vadd.f32 %v782, 1.0
  %v792 = vadd.f32 %v784, 1.0
  %v793 = vadd.f32 %v786, 1.0
  %v794 = vadd.f32 %v788, 1.0
  %v795 = vrcp.pop %v789
  %v796 = vmul.f32 1.0, %v795
  %v797 = vrcp.pop %v790
  %v798 = vmul.f32 1.0, %v797
  %v799 = vrcp.pop %v791
  %v800 = vmul.f32 1.0, %v799
  %v801 = vrcp.pop %v792
  %v802 = vmul.f32 1.0, %v801
  %v803 = vrcp.pop %v793
  %v804 = vmul.f32 1.0, %v803
  %v805 = vrcp.pop %v794
  %v806 = vmul.f32 1.0, %v805
  %v807 = vtanh.pop %v765
  %v808 = vtanh.pop %v769
  %v809 = vld [vmem:[#allocation3] sm:$0xff]
  %v810 = vld [vmem:[#allocation3 + $0x8] sm:$0xff]
  %v811 = vmul.f32 %v798, %v809
  %v812 = vmul.f32 %v804, %v810
  %v813 = vmul.f32 %v796, %v807
  %v814 = vmul.f32 %v802, %v808
  %v815 = vadd.f32 %v811, %v813
  %v816 = vadd.f32 %v812, %v814
  %v817 = vtanh.pop %v815
  %v818 = vtanh.pop %v816
  %v819 = vmul.f32 %v800, %v817
  %v820 = vmul.f32 %v806, %v818
  %v821 = vpack.c.bf16 %v820, %v819
  %822 = vst [vmem:[#allocation3] sm:$0xff] %v815
  %823 = vst [vmem:[#allocation3 + $0x8] sm:$0xff] %v816
  %v825 = vunpack.c.l.b16 %v821
  %v826 = vunpack.c.h.b16 %v821
  %v827 = vpack.c.b16 %v825, %v825
  %v828 = vpack.c.b16 %v826, %v826
  %831 = vst [vmem:[#allocation2 + $0x4] sm:$0xf] %v827
  %832 = vst [vmem:[#allocation2 + $0xc] sm:$0xf] %v828
  %s833 = smul.addr %s666, 4
  %s834 = scalar_lea.vmem %s73, %s833
  %835 = vst [vmem:[%s834] sm:$0xf] %v827
  %836 = vst [vmem:[%s834 + $0x4] sm:$0xf] %v828
  %s837 = smul.u32 0, 2
  %s838 = ssub.s32 0, %s837
  %s839 = smul.u32 0, %s838
  %s840 = sadd.s32 0, %s839
  %s841 = smul.u32 2, %s840
  %p842 = scmp.lt.s32.totalorder %s841, 1
  %s843 = scalar_select %p842, %s841, 1
  %s844 = smul.addr %s843, 2
  %s845 = smul.addr %s844, 4
  %s846 = scalar_lea.vmem %s3, %s845
  // Predicated region
  $region18: #{music_vae_forward.14} parent=0 // pred_check
    _
  $region19: #{music_vae_forward.14} parent=0 // pred_check_branch
    %848 = sbr.rel (0) target = $region21
  $region20: #{music_vae_forward.14} parent=0 // pred_region
    %s849 = smul.u32 0, 2
    %s850 = ssub.s32 0, %s849
    %s851 = smul.u32 0, %s850
    %s852 = sadd.s32 0, %s851
    %s853 = smul.u32 2, %s852
  $region21: #{music_vae_forward.14} parent=0 // pred_fallthru
    _
  // Predicated region
  $region22: #{music_vae_forward.14} parent=0 // pred_check
    _
  $region23: #{music_vae_forward.14} parent=0 // pred_check_branch
    %855 = sbr.rel (0) target = $region25
  $region24: #{music_vae_forward.14} parent=0 // pred_region
    %s856 = smul.u32 0, 2
    %s857 = ssub.s32 0, %s856
    %s858 = smul.u32 0, %s857
    %s859 = sadd.s32 0, %s858
    %s860 = smul.u32 2, %s859
    %p861 = scmp.lt.s32.totalorder %s860, 1
    %s862 = scalar_select %p861, %s860, 1
    %s863 = smul.addr %s862, 2
    %s864 = smul.addr %s863, 4
    %s865 = scalar_lea.vmem %s3, %s864
  $region25: #{music_vae_forward.14} parent=0 // pred_fallthru
    _

// kernel: music_vae_forward.11
$region0: #{music_vae_forward.11}
  #allocation0 [shape = 'u32[]', space=smem, size = 0x4, offset = 0x4, fixed_abs, tag = 'smem constant byte address 0x4 - core index']
  #allocation1 [shape = 'u32[144,128]{1,0:T(1,128)}', space=vmem, size = 0x12000, scoped, tag = 'internal scratch']
  #allocation2 [shape = 'bf16[16,384]{1,0:T(8,128)(2,1)}', space=vmem, size = 0x3000, scoped, tag = 'scratch operand']
  #allocation3 [shape = 'f32[16,128]{1,0:T(8,128)}', space=vmem, size = 0x2000, scoped, tag = 'scratch operand']
  %s0 = inlined_call_operand.vmem [shape: bf16[8,16,256], index: 0, kind: input, shape index: {}]
  %s1 = inlined_call_operand.vmem [shape: bf16[2,384,512], index: 1, kind: input, shape index: {}]
  %s2 = inlined_call_operand.vmem [shape: f32[2,1,512], index: 2, kind: input, shape index: {}]
  %s3 = inlined_call_operand.vmem [shape: bf16[2,8,16,128], index: 3, kind: output, shape index: {}]
  %s4 = sld [smem:[#allocation0]]
  $region49: #{music_vae_forward.11} parent=0
    _
  %s6 = ssub.s32 1, %s4
  %s7 = scalar_select 0, %s6, %s4
  loop: start=0, step=1, limit=4
  $region2: #{music_vae_forward.11} parent=0 // loop_pre_header
    _
  $region3: #{music_vae_forward.11} parent=0 // loop_header
    %s9 = sphi 0, %s13
    %p10 = scmp.ge.s32.totalorder %s9, 4
    %s16 = sphi 0, %s28
    %s17 = sphi 0, %s24
    %s18 = sphi 0, %s16
    %s19 = sphi 0, %s17
    %s20 = sphi 0, %s18
    %s21 = sphi 0, %s19
    %s39 = sphi 0, %s41
    %s42 = sphi 0, %s39
    %s43 = sphi 0, %s42
    %s59 = sphi 0, %s43
    %s65 = sphi 0, %s67
    %s68 = sphi 0, %s65
    %s69 = sphi 0, %s68
    %s85 = sphi 0, %s69
    %s91 = sphi 0, %s93
    %s94 = sphi 0, %s91
    %s95 = sphi 0, %s94
    %s111 = sphi 0, %s95
    %s127 = sphi 0, %s129
    %s130 = sphi 0, %s127
    %s131 = sphi 0, %s130
    %s147 = sphi 0, %s131
  $region4: #{music_vae_forward.11} parent=0 // loop_header_branch
    %12 = sbr.rel (%p10) target = $region8
  $region5: #{music_vae_forward.11} parent=0 // loop_body
    %s14 = ssub.s32 %s9, 1
    %s15 = ssub.s32 %s9, 2
    %s22 = sadd.s32 1, %s17
    %p23 = scmp.ge.s32.totalorder %s22, 1
    %s24 = scalar_select %p23, 0, %s22
    %s25 = sadd.s32 1, %s16
    %s26 = scalar_select %p23, %s25, %s16
    %p27 = scmp.ge.s32.totalorder %s26, 2
    %s28 = scalar_select %p27, 0, %s26
    %s29 = smul.u32 %s17, 2
    %s30 = ssub.s32 0, %s29
    %s31 = smul.u32 %s16, %s30
    %s32 = sadd.s32 %s17, %s31
    %s33 = smul.u32 %s24, 2
    %s34 = ssub.s32 0, %s33
    %s35 = smul.u32 %s28, %s34
    %s36 = sadd.s32 %s24, %s35
    %s37 = ssub.s32 %s32, %s36
    %p38 = scmp.eq.s32.totalorder %s37, 0
    %s40 = sadd.s32 %s39, 1
    %s41 = scalar_select %p38, %s39, %s40
    %p44 = pneg %p38
    %p45 = scmp.eq.s32.totalorder %s9, 1
    %p46 = por %p44, %p45
    %p47 = scmp.ne.s32.totalorder %s39, %s42
    %p48 = scmp.eq.s32.totalorder %s9, 0
    %p49 = por %p47, %p48
    %p50 = scmp.ne.s32.totalorder %s39, %s42
    %p51 = scmp.eq.s32.totalorder %s14, 1
    %p52 = por %p50, %p51
    %p53 = scmp.ne.s32.totalorder %s42, %s43
    %p54 = scmp.eq.s32.totalorder %s14, 0
    %p55 = por %p53, %p54
    %p56 = scmp.ne.s32.totalorder %s42, %s43
    %p57 = scmp.eq.s32.totalorder %s15, 1
    %p58 = por %p56, %p57
    %p60 = scmp.ne.s32.totalorder %s43, %s59
    %p61 = scmp.eq.s32.totalorder %s15, 0
    %p62 = por %p60, %p61
    %s63 = ssub.s32 %s16, %s28
    %p64 = scmp.eq.s32.totalorder %s63, 0
    %s66 = sadd.s32 %s65, 1
    %s67 = scalar_select %p64, %s65, %s66
    %p70 = pneg %p64
    %p71 = scmp.eq.s32.totalorder %s9, 1
    %p72 = por %p70, %p71
    %p73 = scmp.ne.s32.totalorder %s65, %s68
    %p74 = scmp.eq.s32.totalorder %s9, 0
    %p75 = por %p73, %p74
    %p76 = scmp.ne.s32.totalorder %s65, %s68
    %p77 = scmp.eq.s32.totalorder %s14, 1
    %p78 = por %p76, %p77
    %p79 = scmp.ne.s32.totalorder %s68, %s69
    %p80 = scmp.eq.s32.totalorder %s14, 0
    %p81 = por %p79, %p80
    %p82 = scmp.ne.s32.totalorder %s68, %s69
    %p83 = scmp.eq.s32.totalorder %s15, 1
    %p84 = por %p82, %p83
    %p86 = scmp.ne.s32.totalorder %s69, %s85
    %p87 = scmp.eq.s32.totalorder %s15, 0
    %p88 = por %p86, %p87
    %s89 = ssub.s32 %s16, %s28
    %p90 = scmp.eq.s32.totalorder %s89, 0
    %s92 = sadd.s32 %s91, 1
    %s93 = scalar_select %p90, %s91, %s92
    %p96 = pneg %p90
    %p97 = scmp.eq.s32.totalorder %s9, 1
    %p98 = por %p96, %p97
    %p99 = scmp.ne.s32.totalorder %s91, %s94
    %p100 = scmp.eq.s32.totalorder %s9, 0
    %p101 = por %p99, %p100
    %p102 = scmp.ne.s32.totalorder %s91, %s94
    %p103 = scmp.eq.s32.totalorder %s14, 1
    %p104 = por %p102, %p103
    %p105 = scmp.ne.s32.totalorder %s94, %s95
    %p106 = scmp.eq.s32.totalorder %s14, 0
    %p107 = por %p105, %p106
    %p108 = scmp.ne.s32.totalorder %s94, %s95
    %p109 = scmp.eq.s32.totalorder %s15, 1
    %p110 = por %p108, %p109
    %p112 = scmp.ne.s32.totalorder %s95, %s111
    %p113 = scmp.eq.s32.totalorder %s15, 0
    %p114 = por %p112, %p113
    %s115 = smul.u32 %s17, 2
    %s116 = ssub.s32 0, %s115
    %s117 = smul.u32 %s16, %s116
    %s118 = sadd.s32 %s17, %s117
    %s119 = smul.u32 %s24, 2
    %s120 = ssub.s32 0, %s119
    %s121 = smul.u32 %s28, %s120
    %s122 = sadd.s32 %s24, %s121
    %s123 = ssub.s32 %s16, %s28
    %s124 = ssub.s32 %s118, %s122
    %s125 = sor.u32 %s123, %s124
    %p126 = scmp.eq.s32.totalorder %s125, 0
    %s128 = sadd.s32 %s127, 1
    %s129 = scalar_select %p126, %s127, %s128
    %p132 = pneg %p126
    %p133 = scmp.eq.s32.totalorder %s9, 1
    %p134 = por %p132, %p133
    %p135 = scmp.ne.s32.totalorder %s127, %s130
    %p136 = scmp.eq.s32.totalorder %s9, 0
    %p137 = por %p135, %p136
    %p138 = scmp.ne.s32.totalorder %s127, %s130
    %p139 = scmp.eq.s32.totalorder %s14, 1
    %p140 = por %p138, %p139
    %p141 = scmp.ne.s32.totalorder %s130, %s131
    %p142 = scmp.eq.s32.totalorder %s14, 0
    %p143 = por %p141, %p142
    %p144 = scmp.ne.s32.totalorder %s130, %s131
    %p145 = scmp.eq.s32.totalorder %s15, 1
    %p146 = por %p144, %p145
    %p148 = scmp.ne.s32.totalorder %s131, %s147
    %p149 = scmp.eq.s32.totalorder %s15, 0
    %p150 = por %p148, %p149
    %p151 = scmp.le.s32.totalorder 1, %s9
    %p152 = scmp.lt.s32.totalorder %s9, 3
    %p153 = pnand %p151, %p152
    %p154 = pneg %p153
    // Predicated region
    $region9: #{music_vae_forward.11} parent=5 // pred_check
      _
    $region10: #{music_vae_forward.11} parent=5 // pred_check_branch
      %156 = sbr.rel (%p153) target = $region12
    $region11: #{music_vae_forward.11} parent=5 // pred_region
      %s157 = ssub.s32 %s9, 1
    $region12: #{music_vae_forward.11} parent=5 // pred_fallthru
      _
    %p158 = scmp.lt.s32.totalorder %s9, 2
    // Predicated region
    $region13: #{music_vae_forward.11} parent=5 // pred_check
      %p159 = pneg %p158
    $region14: #{music_vae_forward.11} parent=5 // pred_check_branch
      %161 = sbr.rel (%p159) target = $region16
    $region15: #{music_vae_forward.11} parent=5 // pred_region
      // Predicated region
      $region17: #{music_vae_forward.11} parent=15 // pred_check
        %p162 = pneg %p49
      $region18: #{music_vae_forward.11} parent=15 // pred_check_branch
        %164 = sbr.rel (%p162) target = $region20
      $region19: #{music_vae_forward.11} parent=15 // pred_region
        %s165 = smul.u32 %s17, 2
        %s166 = ssub.s32 0, %s165
        %s167 = smul.u32 %s16, %s166
        %s168 = sadd.s32 %s17, %s167
        %s169 = smul.u32 8, %s168
        %p170 = scmp.lt.s32.totalorder %s169, 7
        %s171 = scalar_select %p170, %s169, 7
        %s172 = smul.addr %s171, 4
        %s173 = smul.addr %s172, 4
        %s174 = scalar_lea.vmem %s0, %s173
        %s175 = smul.u32 %s17, 2
        %s176 = ssub.s32 0, %s175
        %s177 = smul.u32 %s16, %s176
        %s178 = sadd.s32 %s17, %s177
        %s179 = smul.u32 8, %s178
      $region20: #{music_vae_forward.11} parent=15 // pred_fallthru
        _
      // Predicated region
      $region21: #{music_vae_forward.11} parent=15 // pred_check
        %p180 = pneg %p75
      $region22: #{music_vae_forward.11} parent=15 // pred_check_branch
        %182 = sbr.rel (%p180) target = $region24
      $region23: #{music_vae_forward.11} parent=15 // pred_region
        %p183 = scmp.lt.s32.totalorder %s16, 1
        %s184 = scalar_select %p183, %s16, 1
        %s185 = smul.addr %s184, 192
        %s186 = smul.addr %s185, 4
        %s187 = scalar_lea.vmem %s1, %s186
      $region24: #{music_vae_forward.11} parent=15 // pred_fallthru
        _
      // Predicated region
      $region25: #{music_vae_forward.11} parent=15 // pred_check
        %p188 = pneg %p101
      $region26: #{music_vae_forward.11} parent=15 // pred_check_branch
        %190 = sbr.rel (%p188) target = $region28
      $region27: #{music_vae_forward.11} parent=15 // pred_region
        %p191 = scmp.lt.s32.totalorder %s16, 1
        %s192 = scalar_select %p191, %s16, 1
        %s193 = smul.addr %s192, 4
        %s194 = scalar_lea.vmem %s2, %s193
      $region28: #{music_vae_forward.11} parent=15 // pred_fallthru
        _
    $region16: #{music_vae_forward.11} parent=5 // pred_fallthru
      _
    %p195 = scmp.le.s32.totalorder 1, %s9
    %p196 = scmp.lt.s32.totalorder %s9, 3
    %p197 = pnand %p195, %p196
    %p198 = pneg %p197
    // Predicated region
    $region29: #{music_vae_forward.11} parent=5 // pred_check
      _
    $region30: #{music_vae_forward.11} parent=5 // pred_check_branch
      %200 = sbr.rel (%p197) target = $region32
    $region31: #{music_vae_forward.11} parent=5 // pred_region
      %s201 = ssub.s32 %s9, 1
      %s202 = smul.u32 %s19, 2
      %s203 = ssub.s32 0, %s202
      %s204 = smul.u32 %s18, %s203
      %s205 = sadd.s32 %s19, %s204
      %s206 = smul.u32 8, %s205
      %p207 = scmp.lt.s32.totalorder %s206, 7
      %s208 = scalar_select %p207, %s206, 7
      %s209 = smul.addr %s208, 4
      %s210 = smul.addr %s209, 4
      %s211 = scalar_lea.vmem %s0, %s210
      %p212 = pneg %p55
      %p213 = pneg %p52
      %p214 = scmp.lt.s32.totalorder %s18, 1
      %s215 = scalar_select %p214, %s18, 1
      %s216 = smul.addr %s215, 192
      %s217 = smul.addr %s216, 4
      %s218 = scalar_lea.vmem %s1, %s217
      %p219 = pneg %p81
      %p220 = pneg %p78
      %p221 = scmp.lt.s32.totalorder %s18, 1
      %s222 = scalar_select %p221, %s18, 1
      %s223 = smul.addr %s222, 4
      %s224 = scalar_lea.vmem %s2, %s223
      %p225 = pneg %p107
      %p226 = pneg %p104
      %p227 = pneg %p143
      %p228 = pneg %p140
      %s229 = smul.u32 %s19, 2
      %s230 = ssub.s32 0, %s229
      %s231 = smul.u32 %s18, %s230
      %s232 = sadd.s32 %s19, %s231
      %s233 = smul.u32 8, %s232
      %p234 = scmp.lt.s32.totalorder %s18, 1
      %s235 = scalar_select %p234, %s18, 1
      %p236 = scmp.lt.s32.totalorder %s233, 7
      %s237 = scalar_select %p236, %s233, 7
      %s238 = smul.addr %s237, 2
      %s239 = smul.addr %s235, 16
      %s240 = sadd.s32 %s238, %s239
      %s241 = smul.addr %s240, 4
      %s242 = scalar_lea.vmem %s3, %s241
      %s243 = smul.u32 %s19, 2
      %s244 = ssub.s32 0, %s243
      %s245 = smul.u32 %s18, %s244
      %s246 = sadd.s32 %s19, %s245
      %s247 = smul.u32 8, %s246
      %p248 = scmp.lt.s32.totalorder %s247, 7
      %s249 = scalar_select %p248, %s247, 7
      %s250 = smul.addr %s249, 4
      %s251 = smul.addr %s250, 4
      %s252 = scalar_lea.vmem %s0, %s251
      %s253 = smul.u32 %s19, 2
      %s254 = ssub.s32 0, %s253
      %s255 = smul.u32 %s18, %s254
      %s256 = sadd.s32 %s19, %s255
      %s257 = smul.u32 8, %s256
      %p258 = scmp.lt.s32.totalorder %s18, 1
      %s259 = scalar_select %p258, %s18, 1
      %s260 = smul.addr %s259, 192
      %s261 = smul.addr %s260, 4
      %s262 = scalar_lea.vmem %s1, %s261
      %p263 = scmp.lt.s32.totalorder %s18, 1
      %s264 = scalar_select %p263, %s18, 1
      %s265 = smul.addr %s264, 4
      %s266 = scalar_lea.vmem %s2, %s265
      %s267 = smul.u32 %s19, 2
      %s268 = ssub.s32 0, %s267
      %s269 = smul.u32 %s18, %s268
      %s270 = sadd.s32 %s19, %s269
      %s271 = smul.u32 8, %s270
      %p272 = scmp.lt.s32.totalorder %s18, 1
      %s273 = scalar_select %p272, %s18, 1
      %p274 = scmp.lt.s32.totalorder %s271, 7
      %s275 = scalar_select %p274, %s271, 7
      %s276 = smul.addr %s275, 2
      %s277 = smul.addr %s273, 16
      %s278 = sadd.s32 %s276, %s277
      %s279 = smul.addr %s278, 4
      %s280 = scalar_lea.vmem %s3, %s279
      %s281 = smul.u32 %s19, 2
      %s282 = ssub.s32 0, %s281
      %s283 = smul.u32 %s18, %s282
      %s284 = sadd.s32 %s19, %s283
      %s285 = smul.u32 8, %s284
      %p287 = scmp.eq.s32.totalorder %s19, 0
      // Predicated region
      $region33: #{music_vae_forward.11} parent=31 // pred_check
        %p288 = pneg %p287
      $region34: #{music_vae_forward.11} parent=31 // pred_check_branch
        %290 = sbr.rel (%p288) target = $region36
      $region35: #{music_vae_forward.11} parent=31 // pred_region
        %291 = vst [vmem:[#allocation2] sm:$0xff] 0
        %292 = vst [vmem:[#allocation2 + $0x8] sm:$0xf] 0
        %293 = vst [vmem:[#allocation2 + $0xc] sm:$0xff] 0
        %294 = vst [vmem:[#allocation2 + $0x14] sm:$0xf] 0
        %295 = vst [vmem:[#allocation3] sm:$0xff] 0.0
        %296 = vst [vmem:[#allocation3 + $0x8] sm:$0xff] 0.0
      $region36: #{music_vae_forward.11} parent=31 // pred_fallthru
        _
      %v297 = vld [vmem:[%s262] sm:$0xff]
      %v298 = vld [vmem:[%s262 + $0x8] sm:$0xff]
      %v299 = vld [vmem:[%s262 + $0x10] sm:$0xff]
      %v300 = vld [vmem:[%s262 + $0x18] sm:$0xff]
      %v301 = vld [vmem:[%s262 + $0x20] sm:$0xff]
      %v302 = vld [vmem:[%s262 + $0x28] sm:$0xff]
      %v303 = vld [vmem:[%s262 + $0x30] sm:$0xff]
      %v304 = vld [vmem:[%s262 + $0x38] sm:$0xff]
      %v305 = vld [vmem:[%s262 + $0x40] sm:$0xff]
      %v306 = vld [vmem:[%s262 + $0x48] sm:$0xff]
      %v307 = vld [vmem:[%s262 + $0x50] sm:$0xff]
      %v308 = vld [vmem:[%s262 + $0x58] sm:$0xff]
      %v309 = vld [vmem:[%s262 + $0x60] sm:$0xff]
      %v310 = vld [vmem:[%s262 + $0x68] sm:$0xff]
      %v311 = vld [vmem:[%s262 + $0x70] sm:$0xff]
      %v312 = vld [vmem:[%s262 + $0x78] sm:$0xff]
      %v313 = vld [vmem:[%s262 + $0x80] sm:$0xff]
      %v314 = vld [vmem:[%s262 + $0x88] sm:$0xff]
      %v315 = vld [vmem:[%s262 + $0x90] sm:$0xff]
      %v316 = vld [vmem:[%s262 + $0x98] sm:$0xff]
      %v317 = vld [vmem:[%s262 + $0xa0] sm:$0xff]
      %v318 = vld [vmem:[%s262 + $0xa8] sm:$0xff]
      %v319 = vld [vmem:[%s262 + $0xb0] sm:$0xff]
      %v320 = vld [vmem:[%s262 + $0xb8] sm:$0xff]
      %v321 = vld [vmem:[%s262 + $0xc0] sm:$0xff]
      %v322 = vld [vmem:[%s262 + $0xc8] sm:$0xff]
      %v323 = vld [vmem:[%s262 + $0xd0] sm:$0xff]
      %v324 = vld [vmem:[%s262 + $0xd8] sm:$0xff]
      %v325 = vld [vmem:[%s262 + $0xe0] sm:$0xff]
      %v326 = vld [vmem:[%s262 + $0xe8] sm:$0xff]
      %v327 = vld [vmem:[%s262 + $0xf0] sm:$0xff]
      %v328 = vld [vmem:[%s262 + $0xf8] sm:$0xff]
      %v329 = vld [vmem:[%s262 + $0x100] sm:$0xff]
      %v330 = vld [vmem:[%s262 + $0x108] sm:$0xff]
      %v331 = vld [vmem:[%s262 + $0x110] sm:$0xff]
      %v332 = vld [vmem:[%s262 + $0x118] sm:$0xff]
      %v333 = vld [vmem:[%s262 + $0x120] sm:$0xff]
      %v334 = vld [vmem:[%s262 + $0x128] sm:$0xff]
      %v335 = vld [vmem:[%s262 + $0x130] sm:$0xff]
      %v336 = vld [vmem:[%s262 + $0x138] sm:$0xff]
      %v337 = vld [vmem:[%s262 + $0x140] sm:$0xff]
      %v338 = vld [vmem:[%s262 + $0x148] sm:$0xff]
      %v339 = vld [vmem:[%s262 + $0x150] sm:$0xff]
      %v340 = vld [vmem:[%s262 + $0x158] sm:$0xff]
      %v341 = vld [vmem:[%s262 + $0x160] sm:$0xff]
      %v342 = vld [vmem:[%s262 + $0x168] sm:$0xff]
      %v343 = vld [vmem:[%s262 + $0x170] sm:$0xff]
      %v344 = vld [vmem:[%s262 + $0x178] sm:$0xff]
      %v345 = vld [vmem:[%s262 + $0x180] sm:$0xff]
      %v346 = vld [vmem:[%s262 + $0x188] sm:$0xff]
      %v347 = vld [vmem:[%s262 + $0x190] sm:$0xff]
      %v348 = vld [vmem:[%s262 + $0x198] sm:$0xff]
      %v349 = vld [vmem:[%s262 + $0x1a0] sm:$0xff]
      %v350 = vld [vmem:[%s262 + $0x1a8] sm:$0xff]
      %v351 = vld [vmem:[%s262 + $0x1b0] sm:$0xff]
      %v352 = vld [vmem:[%s262 + $0x1b8] sm:$0xff]
      %v353 = vld [vmem:[%s262 + $0x1c0] sm:$0xff]
      %v354 = vld [vmem:[%s262 + $0x1c8] sm:$0xff]
      %v355 = vld [vmem:[%s262 + $0x1d0] sm:$0xff]
      %v356 = vld [vmem:[%s262 + $0x1d8] sm:$0xff]
      %v357 = vld [vmem:[%s262 + $0x1e0] sm:$0xff]
      %v358 = vld [vmem:[%s262 + $0x1e8] sm:$0xff]
      %v359 = vld [vmem:[%s262 + $0x1f0] sm:$0xff]
      %v360 = vld [vmem:[%s262 + $0x1f8] sm:$0xff]
      %v361 = vld [vmem:[%s262 + $0x200] sm:$0xff]
      %v362 = vld [vmem:[%s262 + $0x208] sm:$0xff]
      %v363 = vld [vmem:[%s262 + $0x210] sm:$0xff]
      %v364 = vld [vmem:[%s262 + $0x218] sm:$0xff]
      %v365 = vld [vmem:[%s262 + $0x220] sm:$0xff]
      %v366 = vld [vmem:[%s262 + $0x228] sm:$0xff]
      %v367 = vld [vmem:[%s262 + $0x230] sm:$0xff]
      %v368 = vld [vmem:[%s262 + $0x238] sm:$0xff]
      %v369 = vld [vmem:[%s262 + $0x240] sm:$0xff]
      %v370 = vld [vmem:[%s262 + $0x248] sm:$0xff]
      %v371 = vld [vmem:[%s262 + $0x250] sm:$0xff]
      %v372 = vld [vmem:[%s262 + $0x258] sm:$0xff]
      %v373 = vld [vmem:[%s262 + $0x260] sm:$0xff]
      %v374 = vld [vmem:[%s262 + $0x268] sm:$0xff]
      %v375 = vld [vmem:[%s262 + $0x270] sm:$0xff]
      %v376 = vld [vmem:[%s262 + $0x278] sm:$0xff]
      %v377 = vld [vmem:[%s262 + $0x280] sm:$0xff]
      %v378 = vld [vmem:[%s262 + $0x288] sm:$0xff]
      %v379 = vld [vmem:[%s262 + $0x290] sm:$0xff]
      %v380 = vld [vmem:[%s262 + $0x298] sm:$0xff]
      %v381 = vld [vmem:[%s262 + $0x2a0] sm:$0xff]
      %v382 = vld [vmem:[%s262 + $0x2a8] sm:$0xff]
      %v383 = vld [vmem:[%s262 + $0x2b0] sm:$0xff]
      %v384 = vld [vmem:[%s262 + $0x2b8] sm:$0xff]
      %v385 = vld [vmem:[%s262 + $0x2c0] sm:$0xff]
      %v386 = vld [vmem:[%s262 + $0x2c8] sm:$0xff]
      %v387 = vld [vmem:[%s262 + $0x2d0] sm:$0xff]
      %v388 = vld [vmem:[%s262 + $0x2d8] sm:$0xff]
      %v389 = vld [vmem:[%s262 + $0x2e0] sm:$0xff]
      %v390 = vld [vmem:[%s262 + $0x2e8] sm:$0xff]
      %v391 = vld [vmem:[%s262 + $0x2f0] sm:$0xff]
      %v392 = vld [vmem:[%s262 + $0x2f8] sm:$0xff]
      %v393 = vld [vmem:[%s266] sm:$0xf]
      %s394 = smul.u32 %s18, 7
      %s395 = smul.u32 %s394, 4
      %s396 = smul.addr %s395, 4
      %s397 = scalar_lea.vmem %s252, %s396
      %v398 = vld [vmem:[%s397] sm:$0xff]
      %v399 = vld [vmem:[%s397 + $0x8] sm:$0xff]
      %400 = vst [vmem:[#allocation2] sm:$0xff] %v398
      %401 = vst [vmem:[#allocation2 + $0xc] sm:$0xff] %v399
      %v402 = vld [vmem:[#allocation2] sm:$0xff]
      %v403 = vld [vmem:[#allocation2 + $0x8] sm:$0xf]
      %v404 = vld [vmem:[#allocation2 + $0xc] sm:$0xff]
      %v405 = vld [vmem:[#allocation2 + $0x14] sm:$0xf]
      %v407 = vlaneseq
      %v408 = vshrl.u32 %v407, 7
      %v409 = vsub.s32 0, %v408
      %v410 = vrot.slane %v393, %v409
      %v411 = vlaneseq
      %v412 = vshrl.u32 %v411, 7
      %v413 = vsub.s32 1, %v412
      %v414 = vrot.slane %v393, %v413
      %v415 = vlaneseq
      %v416 = vshrl.u32 %v415, 7
      %v417 = vsub.s32 2, %v416
      %v418 = vrot.slane %v393, %v417
      %v419 = vlaneseq
      %v420 = vshrl.u32 %v419, 7
      %v421 = vsub.s32 3, %v420
      %v422 = vrot.slane %v393, %v421
      %v431 = vunpack.c.l.b16 %v402
      %v432 = vunpack.c.h.b16 %v402
      %v433 = vunpack.c.l.b16 %v403
      %v434 = vunpack.c.l.b16 %v404
      %v435 = vunpack.c.h.b16 %v404
      %v436 = vunpack.c.l.b16 %v405
      %v437 = vpack.c.b16 %v434, %v431
      %v438 = vpack.c.b16 %v435, %v432
      %v439 = vpack.c.b16 %v436, %v433
      %v539 = vunpack.c.l.b16 %v297
      %v540 = vunpack.c.h.b16 %v297
      %v541 = vunpack.c.l.b16 %v298
      %v542 = vunpack.c.h.b16 %v298
      %v543 = vunpack.c.l.b16 %v299
      %v544 = vunpack.c.h.b16 %v299
      %v545 = vunpack.c.l.b16 %v300
      %v546 = vunpack.c.h.b16 %v300
      %v547 = vunpack.c.l.b16 %v301
      %v548 = vunpack.c.h.b16 %v301
      %v549 = vunpack.c.l.b16 %v302
      %v550 = vunpack.c.h.b16 %v302
      %v551 = vunpack.c.l.b16 %v303
      %v552 = vunpack.c.h.b16 %v303
      %v553 = vunpack.c.l.b16 %v304
      %v554 = vunpack.c.h.b16 %v304
      %v555 = vunpack.c.l.b16 %v305
      %v556 = vunpack.c.h.b16 %v305
      %v557 = vunpack.c.l.b16 %v306
      %v558 = vunpack.c.h.b16 %v306
      %v559 = vunpack.c.l.b16 %v307
      %v560 = vunpack.c.h.b16 %v307
      %v561 = vunpack.c.l.b16 %v308
      %v562 = vunpack.c.h.b16 %v308
      %v563 = vunpack.c.l.b16 %v309
      %v564 = vunpack.c.h.b16 %v309
      %v565 = vunpack.c.l.b16 %v310
      %v566 = vunpack.c.h.b16 %v310
      %v567 = vunpack.c.l.b16 %v311
      %v568 = vunpack.c.h.b16 %v311
      %v569 = vunpack.c.l.b16 %v312
      %v570 = vunpack.c.h.b16 %v312
      %v571 = vunpack.c.l.b16 %v313
      %v572 = vunpack.c.h.b16 %v313
      %v573 = vunpack.c.l.b16 %v314
      %v574 = vunpack.c.h.b16 %v314
      %v575 = vunpack.c.l.b16 %v315
      %v576 = vunpack.c.h.b16 %v315
      %v577 = vunpack.c.l.b16 %v316
      %v578 = vunpack.c.h.b16 %v316
      %v579 = vunpack.c.l.b16 %v317
      %v580 = vunpack.c.h.b16 %v317
      %v581 = vunpack.c.l.b16 %v318
      %v582 = vunpack.c.h.b16 %v318
      %v583 = vunpack.c.l.b16 %v319
      %v584 = vunpack.c.h.b16 %v319
      %v585 = vunpack.c.l.b16 %v320
      %v586 = vunpack.c.h.b16 %v320
      %v587 = vunpack.c.l.b16 %v321
      %v588 = vunpack.c.h.b16 %v321
      %v589 = vunpack.c.l.b16 %v322
      %v590 = vunpack.c.h.b16 %v322
      %v591 = vunpack.c.l.b16 %v323
      %v592 = vunpack.c.h.b16 %v323
      %v593 = vunpack.c.l.b16 %v324
      %v594 = vunpack.c.h.b16 %v324
      %v595 = vunpack.c.l.b16 %v325
      %v596 = vunpack.c.h.b16 %v325
      %v597 = vunpack.c.l.b16 %v326
      %v598 = vunpack.c.h.b16 %v326
      %v599 = vunpack.c.l.b16 %v327
      %v600 = vunpack.c.h.b16 %v327
      %v601 = vunpack.c.l.b16 %v328
      %v602 = vunpack.c.h.b16 %v328
      %v603 = vunpack.c.l.b16 %v329
      %v604 = vunpack.c.h.b16 %v329
      %v605 = vunpack.c.l.b16 %v330
      %v606 = vunpack.c.h.b16 %v330
      %v607 = vunpack.c.l.b16 %v331
      %v608 = vunpack.c.h.b16 %v331
      %v609 = vunpack.c.l.b16 %v332
      %v610 = vunpack.c.h.b16 %v332
      %v611 = vunpack.c.l.b16 %v333
      %v612 = vunpack.c.h.b16 %v333
      %v613 = vunpack.c.l.b16 %v334
      %v614 = vunpack.c.h.b16 %v334
      %v615 = vunpack.c.l.b16 %v335
      %v616 = vunpack.c.h.b16 %v335
      %v617 = vunpack.c.l.b16 %v336
      %v618 = vunpack.c.h.b16 %v336
      %v619 = vunpack.c.l.b16 %v337
      %v620 = vunpack.c.h.b16 %v337
      %v621 = vunpack.c.l.b16 %v338
      %v622 = vunpack.c.h.b16 %v338
      %v623 = vunpack.c.l.b16 %v339
      %v624 = vunpack.c.h.b16 %v339
      %v625 = vunpack.c.l.b16 %v340
      %v626 = vunpack.c.h.b16 %v340
      %v627 = vunpack.c.l.b16 %v341
      %v628 = vunpack.c.h.b16 %v341
      %v629 = vunpack.c.l.b16 %v342
      %v630 = vunpack.c.h.b16 %v342
      %v631 = vunpack.c.l.b16 %v343
      %v632 = vunpack.c.h.b16 %v343
      %v633 = vunpack.c.l.b16 %v344
      %v634 = vunpack.c.h.b16 %v344
      %v635 = vunpack.c.l.b16 %v345
      %v636 = vunpack.c.h.b16 %v345
      %v637 = vunpack.c.l.b16 %v346
      %v638 = vunpack.c.h.b16 %v346
      %v639 = vunpack.c.l.b16 %v347
      %v640 = vunpack.c.h.b16 %v347
      %v641 = vunpack.c.l.b16 %v348
      %v642 = vunpack.c.h.b16 %v348
      %v643 = vunpack.c.l.b16 %v349
      %v644 = vunpack.c.h.b16 %v349
      %v645 = vunpack.c.l.b16 %v350
      %v646 = vunpack.c.h.b16 %v350
      %v647 = vunpack.c.l.b16 %v351
      %v648 = vunpack.c.h.b16 %v351
      %v649 = vunpack.c.l.b16 %v352
      %v650 = vunpack.c.h.b16 %v352
      %v651 = vunpack.c.l.b16 %v353
      %v652 = vunpack.c.h.b16 %v353
      %v653 = vunpack.c.l.b16 %v354
      %v654 = vunpack.c.h.b16 %v354
      %v655 = vunpack.c.l.b16 %v355
      %v656 = vunpack.c.h.b16 %v355
      %v657 = vunpack.c.l.b16 %v356
      %v658 = vunpack.c.h.b16 %v356
      %v659 = vunpack.c.l.b16 %v357
      %v660 = vunpack.c.h.b16 %v357
      %v661 = vunpack.c.l.b16 %v358
      %v662 = vunpack.c.h.b16 %v358
      %v663 = vunpack.c.l.b16 %v359
      %v664 = vunpack.c.h.b16 %v359
      %v665 = vunpack.c.l.b16 %v360
      %v666 = vunpack.c.h.b16 %v360
      %v667 = vunpack.c.l.b16 %v361
      %v668 = vunpack.c.h.b16 %v361
      %v669 = vunpack.c.l.b16 %v362
      %v670 = vunpack.c.h.b16 %v362
      %v671 = vunpack.c.l.b16 %v363
      %v672 = vunpack.c.h.b16 %v363
      %v673 = vunpack.c.l.b16 %v364
      %v674 = vunpack.c.h.b16 %v364
      %v675 = vunpack.c.l.b16 %v365
      %v676 = vunpack.c.h.b16 %v365
      %v677 = vunpack.c.l.b16 %v366
      %v678 = vunpack.c.h.b16 %v366
      %v679 = vunpack.c.l.b16 %v367
      %v680 = vunpack.c.h.b16 %v367
      %v681 = vunpack.c.l.b16 %v368
      %v682 = vunpack.c.h.b16 %v368
      %v683 = vunpack.c.l.b16 %v369
      %v684 = vunpack.c.h.b16 %v369
      %v685 = vunpack.c.l.b16 %v370
      %v686 = vunpack.c.h.b16 %v370
      %v687 = vunpack.c.l.b16 %v371
      %v688 = vunpack.c.h.b16 %v371
      %v689 = vunpack.c.l.b16 %v372
      %v690 = vunpack.c.h.b16 %v372
      %v691 = vunpack.c.l.b16 %v373
      %v692 = vunpack.c.h.b16 %v373
      %v693 = vunpack.c.l.b16 %v374
      %v694 = vunpack.c.h.b16 %v374
      %v695 = vunpack.c.l.b16 %v375
      %v696 = vunpack.c.h.b16 %v375
      %v697 = vunpack.c.l.b16 %v376
      %v698 = vunpack.c.h.b16 %v376
      %v699 = vunpack.c.l.b16 %v377
      %v700 = vunpack.c.h.b16 %v377
      %v701 = vunpack.c.l.b16 %v378
      %v702 = vunpack.c.h.b16 %v378
      %v703 = vunpack.c.l.b16 %v379
      %v704 = vunpack.c.h.b16 %v379
      %v705 = vunpack.c.l.b16 %v380
      %v706 = vunpack.c.h.b16 %v380
      %v707 = vunpack.c.l.b16 %v381
      %v708 = vunpack.c.h.b16 %v381
      %v709 = vunpack.c.l.b16 %v382
      %v710 = vunpack.c.h.b16 %v382
      %v711 = vunpack.c.l.b16 %v383
      %v712 = vunpack.c.h.b16 %v383
      %v713 = vunpack.c.l.b16 %v384
      %v714 = vunpack.c.h.b16 %v384
      %v715 = vunpack.c.l.b16 %v385
      %v716 = vunpack.c.h.b16 %v385
      %v717 = vunpack.c.l.b16 %v386
      %v718 = vunpack.c.h.b16 %v386
      %v719 = vunpack.c.l.b16 %v387
      %v720 = vunpack.c.h.b16 %v387
      %v721 = vunpack.c.l.b16 %v388
      %v722 = vunpack.c.h.b16 %v388
      %v723 = vunpack.c.l.b16 %v389
      %v724 = vunpack.c.h.b16 %v389
      %v725 = vunpack.c.l.b16 %v390
      %v726 = vunpack.c.h.b16 %v390
      %v727 = vunpack.c.l.b16 %v391
      %v728 = vunpack.c.h.b16 %v391
      %v729 = vunpack.c.l.b16 %v392
      %v730 = vunpack.c.h.b16 %v392
      %v731 = vpack.c.b16 %v543, %v539
      %v732 = vpack.c.b16 %v544, %v540
      %v733 = vpack.c.b16 %v545, %v541
      %v734 = vpack.c.b16 %v546, %v542
      %v735 = vpack.c.b16 %v551, %v547
      %v736 = vpack.c.b16 %v552, %v548
      %v737 = vpack.c.b16 %v553, %v549
      %v738 = vpack.c.b16 %v554, %v550
      %v739 = vpack.c.b16 %v559, %v555
      %v740 = vpack.c.b16 %v560, %v556
      %v741 = vpack.c.b16 %v561, %v557
      %v742 = vpack.c.b16 %v562, %v558
      %v743 = vpack.c.b16 %v567, %v563
      %v744 = vpack.c.b16 %v568, %v564
      %v745 = vpack.c.b16 %v569, %v565
      %v746 = vpack.c.b16 %v570, %v566
      %v747 = vpack.c.b16 %v575, %v571
      %v748 = vpack.c.b16 %v576, %v572
      %v749 = vpack.c.b16 %v577, %v573
      %v750 = vpack.c.b16 %v578, %v574
      %v751 = vpack.c.b16 %v583, %v579
      %v752 = vpack.c.b16 %v584, %v580
      %v753 = vpack.c.b16 %v585, %v581
      %v754 = vpack.c.b16 %v586, %v582
      %v755 = vpack.c.b16 %v591, %v587
      %v756 = vpack.c.b16 %v592, %v588
      %v757 = vpack.c.b16 %v593, %v589
      %v758 = vpack.c.b16 %v594, %v590
      %v759 = vpack.c.b16 %v599, %v595
      %v760 = vpack.c.b16 %v600, %v596
      %v761 = vpack.c.b16 %v601, %v597
      %v762 = vpack.c.b16 %v602, %v598
      %v763 = vpack.c.b16 %v607, %v603
      %v764 = vpack.c.b16 %v608, %v604
      %v765 = vpack.c.b16 %v609, %v605
      %v766 = vpack.c.b16 %v610, %v606
      %v767 = vpack.c.b16 %v615, %v611
      %v768 = vpack.c.b16 %v616, %v612
      %v769 = vpack.c.b16 %v617, %v613
      %v770 = vpack.c.b16 %v618, %v614
      %v771 = vpack.c.b16 %v623, %v619
      %v772 = vpack.c.b16 %v624, %v620
      %v773 = vpack.c.b16 %v625, %v621
      %v774 = vpack.c.b16 %v626, %v622
      %v775 = vpack.c.b16 %v631, %v627
      %v776 = vpack.c.b16 %v632, %v628
      %v777 = vpack.c.b16 %v633, %v629
      %v778 = vpack.c.b16 %v634, %v630
      %v779 = vpack.c.b16 %v639, %v635
      %v780 = vpack.c.b16 %v640, %v636
      %v781 = vpack.c.b16 %v641, %v637
      %v782 = vpack.c.b16 %v642, %v638
      %v783 = vpack.c.b16 %v647, %v643
      %v784 = vpack.c.b16 %v648, %v644
      %v785 = vpack.c.b16 %v649, %v645
      %v786 = vpack.c.b16 %v650, %v646
      %v787 = vpack.c.b16 %v655, %v651
      %v788 = vpack.c.b16 %v656, %v652
      %v789 = vpack.c.b16 %v657, %v653
      %v790 = vpack.c.b16 %v658, %v654
      %v791 = vpack.c.b16 %v663, %v659
      %v792 = vpack.c.b16 %v664, %v660
      %v793 = vpack.c.b16 %v665, %v661
      %v794 = vpack.c.b16 %v666, %v662
      %v795 = vpack.c.b16 %v671, %v667
      %v796 = vpack.c.b16 %v672, %v668
      %v797 = vpack.c.b16 %v673, %v669
      %v798 = vpack.c.b16 %v674, %v670
      %v799 = vpack.c.b16 %v679, %v675
      %v800 = vpack.c.b16 %v680, %v676
      %v801 = vpack.c.b16 %v681, %v677
      %v802 = vpack.c.b16 %v682, %v678
      %v803 = vpack.c.b16 %v687, %v683
      %v804 = vpack.c.b16 %v688, %v684
      %v805 = vpack.c.b16 %v689, %v685
      %v806 = vpack.c.b16 %v690, %v686
      %v807 = vpack.c.b16 %v695, %v691
      %v808 = vpack.c.b16 %v696, %v692
      %v809 = vpack.c.b16 %v697, %v693
      %v810 = vpack.c.b16 %v698, %v694
      %v811 = vpack.c.b16 %v703, %v699
      %v812 = vpack.c.b16 %v704, %v700
      %v813 = vpack.c.b16 %v705, %v701
      %v814 = vpack.c.b16 %v706, %v702
      %v815 = vpack.c.b16 %v711, %v707
      %v816 = vpack.c.b16 %v712, %v708
      %v817 = vpack.c.b16 %v713, %v709
      %v818 = vpack.c.b16 %v714, %v710
      %v819 = vpack.c.b16 %v719, %v715
      %v820 = vpack.c.b16 %v720, %v716
      %v821 = vpack.c.b16 %v721, %v717
      %v822 = vpack.c.b16 %v722, %v718
      %v823 = vpack.c.b16 %v727, %v723
      %v824 = vpack.c.b16 %v728, %v724
      %v825 = vpack.c.b16 %v729, %v725
      %v826 = vpack.c.b16 %v730, %v726
      %923 = vmatprep.subr.bf16.mxu0 %v760
      %924 = vmatpush1.bf16.msra.mxu0 %v759
      %925 = vmatprep.subr.bf16.mxu0 %v756
      %926 = vmatpush1.bf16.msra.mxu0 %v755
      %927 = vmatprep.subr.bf16.mxu0 %v752
      %928 = vmatpush1.bf16.msra.mxu0 %v751
      %929 = vmatprep.subr.bf16.mxu0 %v748
      %930 = vmatpush1.bf16.msra.mxu0 %v747
      %931 = vmatprep.subr.bf16.mxu0 %v744
      %932 = vmatpush1.bf16.msra.mxu0 %v743
      %933 = vmatprep.subr.bf16.mxu0 %v740
      %934 = vmatpush1.bf16.msra.mxu0 %v739
      %935 = vmatprep.subr.bf16.mxu0 %v736
      %936 = vmatpush1.bf16.msra.mxu0 %v735
      %937 = vmatprep.subr.bf16.mxu0 %v732
      %938 = vmatpush1.bf16.msra.mxu0 %v731
      %939 = vmatprep.subr.bf16.mxu0 %v792
      %940 = vmatpush2.bf16.msra.mxu0 %v791
      %941 = vmatprep.subr.bf16.mxu0 %v788
      %942 = vmatpush2.bf16.msra.mxu0 %v787
      %943 = vmatprep.subr.bf16.mxu0 %v784
      %944 = vmatpush2.bf16.msra.mxu0 %v783
      %945 = vmatprep.subr.bf16.mxu0 %v780
      %946 = vmatpush2.bf16.msra.mxu0 %v779
      %947 = vmatprep.subr.bf16.mxu0 %v776
      %948 = vmatpush2.bf16.msra.mxu0 %v775
      %949 = vmatprep.subr.bf16.mxu0 %v772
      %950 = vmatpush2.bf16.msra.mxu0 %v771
      %951 = vmatprep.subr.bf16.mxu0 %v768
      %952 = vmatpush2.bf16.msra.mxu0 %v767
      %953 = vmatprep.subr.bf16.mxu0 %v764
      %954 = vmatpush2.bf16.msra.mxu0 %v763
      %955 = vmatprep.mubr.bf16.mxu0 %v438
      %956 = vmatmul.mubr.bf16.gmra.mxu0 %v437
      %v957 = vpop.f32.mrf.mxu0
      %v958 = vadd.f32 %v410, %v957
      %v959 = vpop.f32.mrf.mxu0
      %v960 = vadd.f32 %v414, %v959
      %v961 = vpop.f32.mrf.mxu0
      %v962 = vadd.f32 %v410, %v961
      %v963 = vpop.f32.mrf.mxu0
      %v964 = vadd.f32 %v414, %v963
      %965 = vdwg.mxu0
      %966 = vmatprep.subr.bf16.mxu0 %v824
      %967 = vmatpush1.bf16.msra.mxu0 %v823
      %968 = vmatprep.subr.bf16.mxu0 %v820
      %969 = vmatpush1.bf16.msra.mxu0 %v819
      %970 = vmatprep.subr.bf16.mxu0 %v816
      %971 = vmatpush1.bf16.msra.mxu0 %v815
      %972 = vmatprep.subr.bf16.mxu0 %v812
      %973 = vmatpush1.bf16.msra.mxu0 %v811
      %974 = vmatprep.subr.bf16.mxu0 %v808
      %975 = vmatpush1.bf16.msra.mxu0 %v807
      %976 = vmatprep.subr.bf16.mxu0 %v804
      %977 = vmatpush1.bf16.msra.mxu0 %v803
      %978 = vmatprep.subr.bf16.mxu0 %v800
      %979 = vmatpush1.bf16.msra.mxu0 %v799
      %980 = vmatprep.subr.bf16.mxu0 %v796
      %981 = vmatpush1.bf16.msra.mxu0 %v795
      %982 = vmatprep.subr.bf16.mxu0 0
      %983 = vmatpush2.bf16.msra.mxu0 0
      %984 = vmatprep.subr.bf16.mxu0 0
      %985 = vmatpush2.bf16.msra.mxu0 0
      %986 = vmatprep.subr.bf16.mxu0 0
      %987 = vmatpush2.bf16.msra.mxu0 0
      %988 = vmatprep.subr.bf16.mxu0 0
      %989 = vmatpush2.bf16.msra.mxu0 0
      %990 = vmatprep.subr.bf16.mxu0 0
      %991 = vmatpush2.bf16.msra.mxu0 0
      %992 = vmatprep.subr.bf16.mxu0 0
      %993 = vmatpush2.bf16.msra.mxu0 0
      %994 = vmatprep.subr.bf16.mxu0 0
      %995 = vmatpush2.bf16.msra.mxu0 0
      %996 = vmatprep.subr.bf16.mxu0 0
      %997 = vmatpush2.bf16.msra.mxu0 0
      %998 = vmatprep.mubr.bf16.mxu0 0
      %999 = vmatmul.mubr.bf16.gmra.mxu0 %v439
      %v1000 = vpop.f32.mrf.mxu0
      %v1001 = vadd.f32 %v958, %v1000
      %v1002 = vpop.f32.mrf.mxu0
      %v1003 = vadd.f32 %v960, %v1002
      %v1004 = vpop.f32.mrf.mxu0
      %v1005 = vadd.f32 %v962, %v1004
      %v1006 = vpop.f32.mrf.mxu0
      %v1007 = vadd.f32 %v964, %v1006
      %1008 = vdwg.mxu0
      %1009 = vmatprep.subr.bf16.mxu0 %v762
      %1010 = vmatpush1.bf16.msra.mxu0 %v761
      %1011 = vmatprep.subr.bf16.mxu0 %v758
      %1012 = vmatpush1.bf16.msra.mxu0 %v757
      %1013 = vmatprep.subr.bf16.mxu0 %v754
      %1014 = vmatpush1.bf16.msra.mxu0 %v753
      %1015 = vmatprep.subr.bf16.mxu0 %v750
      %1016 = vmatpush1.bf16.msra.mxu0 %v749
      %1017 = vmatprep.subr.bf16.mxu0 %v746
      %1018 = vmatpush1.bf16.msra.mxu0 %v745
      %1019 = vmatprep.subr.bf16.mxu0 %v742
      %1020 = vmatpush1.bf16.msra.mxu0 %v741
      %1021 = vmatprep.subr.bf16.mxu0 %v738
      %1022 = vmatpush1.bf16.msra.mxu0 %v737
      %1023 = vmatprep.subr.bf16.mxu0 %v734
      %1024 = vmatpush1.bf16.msra.mxu0 %v733
      %1025 = vmatprep.subr.bf16.mxu0 %v794
      %1026 = vmatpush2.bf16.msra.mxu0 %v793
      %1027 = vmatprep.subr.bf16.mxu0 %v790
      %1028 = vmatpush2.bf16.msra.mxu0 %v789
      %1029 = vmatprep.subr.bf16.mxu0 %v786
      %1030 = vmatpush2.bf16.msra.mxu0 %v785
      %1031 = vmatprep.subr.bf16.mxu0 %v782
      %1032 = vmatpush2.bf16.msra.mxu0 %v781
      %1033 = vmatprep.subr.bf16.mxu0 %v778
      %1034 = vmatpush2.bf16.msra.mxu0 %v777
      %1035 = vmatprep.subr.bf16.mxu0 %v774
      %1036 = vmatpush2.bf16.msra.mxu0 %v773
      %1037 = vmatprep.subr.bf16.mxu0 %v770
      %1038 = vmatpush2.bf16.msra.mxu0 %v769
      %1039 = vmatprep.subr.bf16.mxu0 %v766
      %1040 = vmatpush2.bf16.msra.mxu0 %v765
      %1041 = vmatprep.mubr.bf16.mxu0 %v438
      %1042 = vmatmul.mubr.bf16.gmra.mxu0 %v437
      %v1043 = vpop.f32.mrf.mxu0
      %v1044 = vadd.f32 %v418, %v1043
      %v1045 = vpop.f32.mrf.mxu0
      %v1046 = vadd.f32 %v422, %v1045
      %v1047 = vpop.f32.mrf.mxu0
      %v1048 = vadd.f32 %v418, %v1047
      %v1049 = vpop.f32.mrf.mxu0
      %v1050 = vadd.f32 %v422, %v1049
      %1051 = vdwg.mxu0
      %1052 = vmatprep.subr.bf16.mxu0 %v826
      %1053 = vmatpush1.bf16.msra.mxu0 %v825
      %1054 = vmatprep.subr.bf16.mxu0 %v822
      %1055 = vmatpush1.bf16.msra.mxu0 %v821
      %1056 = vmatprep.subr.bf16.mxu0 %v818
      %1057 = vmatpush1.bf16.msra.mxu0 %v817
      %1058 = vmatprep.subr.bf16.mxu0 %v814
      %1059 = vmatpush1.bf16.msra.mxu0 %v813
      %1060 = vmatprep.subr.bf16.mxu0 %v810
      %1061 = vmatpush1.bf16.msra.mxu0 %v809
      %1062 = vmatprep.subr.bf16.mxu0 %v806
      %1063 = vmatpush1.bf16.msra.mxu0 %v805
      %1064 = vmatprep.subr.bf16.mxu0 %v802
      %1065 = vmatpush1.bf16.msra.mxu0 %v801
      %1066 = vmatprep.subr.bf16.mxu0 %v798
      %1067 = vmatpush1.bf16.msra.mxu0 %v797
      %1068 = vmatprep.subr.bf16.mxu0 0
      %1069 = vmatpush2.bf16.msra.mxu0 0
      %1070 = vmatprep.subr.bf16.mxu0 0
      %1071 = vmatpush2.bf16.msra.mxu0 0
      %1072 = vmatprep.subr.bf16.mxu0 0
      %1073 = vmatpush2.bf16.msra.mxu0 0
      %1074 = vmatprep.subr.bf16.mxu0 0
      %1075 = vmatpush2.bf16.msra.mxu0 0
      %1076 = vmatprep.subr.bf16.mxu0 0
      %1077 = vmatpush2.bf16.msra.mxu0 0
      %1078 = vmatprep.subr.bf16.mxu0 0
      %1079 = vmatpush2.bf16.msra.mxu0 0
      %1080 = vmatprep.subr.bf16.mxu0 0
      %1081 = vmatpush2.bf16.msra.mxu0 0
      %1082 = vmatprep.subr.bf16.mxu0 0
      %1083 = vmatpush2.bf16.msra.mxu0 0
      %1084 = vmatprep.mubr.bf16.mxu0 0
      %1085 = vmatmul.mubr.bf16.gmra.mxu0 %v439
      %v1086 = vpop.f32.mrf.mxu0
      %v1087 = vadd.f32 %v1044, %v1086
      %v1088 = vpop.f32.mrf.mxu0
      %v1089 = vadd.f32 %v1046, %v1088
      %v1090 = vpop.f32.mrf.mxu0
      %v1091 = vadd.f32 %v1048, %v1090
      %v1092 = vpop.f32.mrf.mxu0
      %v1093 = vadd.f32 %v1050, %v1092
      %1094 = vdwg.mxu0
      %v1095 = vxor.u32 %v1001, 2147483648
      %v1096 = vxor.u32 %v1003, 2147483648
      %v1097 = vxor.u32 %v1087, 2147483648
      %v1098 = vxor.u32 %v1005, 2147483648
      %v1099 = vxor.u32 %v1007, 2147483648
      %v1100 = vxor.u32 %v1091, 2147483648
      %v1101 = vmul.f32 %v1095, 1.442695
      %v1102 = vpow.pop %v1101
      %v1103 = vmul.f32 %v1096, 1.442695
      %v1104 = vpow.pop %v1103
      %v1105 = vmul.f32 %v1097, 1.442695
      %v1106 = vpow.pop %v1105
      %v1107 = vmul.f32 %v1098, 1.442695
      %v1108 = vpow.pop %v1107
      %v1109 = vmul.f32 %v1099, 1.442695
      %v1110 = vpow.pop %v1109
      %v1111 = vmul.f32 %v1100, 1.442695
      %v1112 = vpow.pop %v1111
      %v1113 = vadd.f32 %v1102, 1.0
      %v1114 = vadd.f32 %v1104, 1.0
      %v1115 = vadd.f32 %v1106, 1.0
      %v1116 = vadd.f32 %v1108, 1.0
      %v1117 = vadd.f32 %v1110, 1.0
      %v1118 = vadd.f32 %v1112, 1.0
      %v1119 = vrcp.pop %v1113
      %v1120 = vmul.f32 1.0, %v1119
      %v1121 = vrcp.pop %v1114
      %v1122 = vmul.f32 1.0, %v1121
      %v1123 = vrcp.pop %v1115
      %v1124 = vmul.f32 1.0, %v1123
      %v1125 = vrcp.pop %v1116
      %v1126 = vmul.f32 1.0, %v1125
      %v1127 = vrcp.pop %v1117
      %v1128 = vmul.f32 1.0, %v1127
      %v1129 = vrcp.pop %v1118
      %v1130 = vmul.f32 1.0, %v1129
      %v1131 = vtanh.pop %v1089
      %v1132 = vtanh.pop %v1093
      %v1133 = vld [vmem:[#allocation3] sm:$0xff]
      %v1134 = vld [vmem:[#allocation3 + $0x8] sm:$0xff]
      %v1135 = vmul.f32 %v1122, %v1133
      %v1136 = vmul.f32 %v1128, %v1134
      %v1137 = vmul.f32 %v1120, %v1131
      %v1138 = vmul.f32 %v1126, %v1132
      %v1139 = vadd.f32 %v1135, %v1137
      %v1140 = vadd.f32 %v1136, %v1138
      %v1141 = vtanh.pop %v1139
      %v1142 = vtanh.pop %v1140
      %v1143 = vmul.f32 %v1124, %v1141
      %v1144 = vmul.f32 %v1130, %v1142
      %v1145 = vpack.c.bf16 %v1144, %v1143
      %1146 = vst [vmem:[#allocation3] sm:$0xff] %v1139
      %1147 = vst [vmem:[#allocation3 + $0x8] sm:$0xff] %v1140
      %v1149 = vunpack.c.l.b16 %v1145
      %v1150 = vunpack.c.h.b16 %v1145
      %v1151 = vpack.c.b16 %v1149, %v1149
      %v1152 = vpack.c.b16 %v1150, %v1150
      %1155 = vst [vmem:[#allocation2 + $0x8] sm:$0xf] %v1151
      %1156 = vst [vmem:[#allocation2 + $0x14] sm:$0xf] %v1152
      %s1157 = smul.u32 %s394, 2
      %s1158 = smul.addr %s1157, 4
      %s1159 = scalar_lea.vmem %s280, %s1158
      %1160 = vst [vmem:[%s1159] sm:$0xf] %v1151
      %1161 = vst [vmem:[%s1159 + $0x4] sm:$0xf] %v1152
      %s1162 = smul.u32 %s18, 5
      %s1163 = sadd.s32 %s1162, 1
      %s1164 = smul.u32 %s1163, 4
      %s1165 = smul.addr %s1164, 4
      %s1166 = scalar_lea.vmem %s252, %s1165
      %v1167 = vld [vmem:[%s1166] sm:$0xff]
      %v1168 = vld [vmem:[%s1166 + $0x8] sm:$0xff]
      %1169 = vst [vmem:[#allocation2] sm:$0xff] %v1167
      %1170 = vst [vmem:[#allocation2 + $0xc] sm:$0xff] %v1168
      %v1171 = vld [vmem:[#allocation2] sm:$0xff]
      %v1172 = vld [vmem:[#allocation2 + $0x8] sm:$0xf]
      %v1173 = vld [vmem:[#allocation2 + $0xc] sm:$0xff]
      %v1174 = vld [vmem:[#allocation2 + $0x14] sm:$0xf]
      %v1179 = vunpack.c.l.b16 %v1171
      %v1180 = vunpack.c.h.b16 %v1171
      %v1181 = vunpack.c.l.b16 %v1172
      %v1182 = vunpack.c.l.b16 %v1173
      %v1183 = vunpack.c.h.b16 %v1173
      %v1184 = vunpack.c.l.b16 %v1174
      %v1185 = vpack.c.b16 %v1182, %v1179
      %v1186 = vpack.c.b16 %v1183, %v1180
      %v1187 = vpack.c.b16 %v1184, %v1181
      %1191 = vmatprep.subr.bf16.mxu0 %v760
      %1192 = vmatpush1.bf16.msra.mxu0 %v759
      %1193 = vmatprep.subr.bf16.mxu0 %v756
      %1194 = vmatpush1.bf16.msra.mxu0 %v755
      %1195 = vmatprep.subr.bf16.mxu0 %v752
      %1196 = vmatpush1.bf16.msra.mxu0 %v751
      %1197 = vmatprep.subr.bf16.mxu0 %v748
      %1198 = vmatpush1.bf16.msra.mxu0 %v747
      %1199 = vmatprep.subr.bf16.mxu0 %v744
      %1200 = vmatpush1.bf16.msra.mxu0 %v743
      %1201 = vmatprep.subr.bf16.mxu0 %v740
      %1202 = vmatpush1.bf16.msra.mxu0 %v739
      %1203 = vmatprep.subr.bf16.mxu0 %v736
      %1204 = vmatpush1.bf16.msra.mxu0 %v735
      %1205 = vmatprep.subr.bf16.mxu0 %v732
      %1206 = vmatpush1.bf16.msra.mxu0 %v731
      %1207 = vmatprep.subr.bf16.mxu0 %v792
      %1208 = vmatpush2.bf16.msra.mxu0 %v791
      %1209 = vmatprep.subr.bf16.mxu0 %v788
      %1210 = vmatpush2.bf16.msra.mxu0 %v787
      %1211 = vmatprep.subr.bf16.mxu0 %v784
      %1212 = vmatpush2.bf16.msra.mxu0 %v783
      %1213 = vmatprep.subr.bf16.mxu0 %v780
      %1214 = vmatpush2.bf16.msra.mxu0 %v779
      %1215 = vmatprep.subr.bf16.mxu0 %v776
      %1216 = vmatpush2.bf16.msra.mxu0 %v775
      %1217 = vmatprep.subr.bf16.mxu0 %v772
      %1218 = vmatpush2.bf16.msra.mxu0 %v771
      %1219 = vmatprep.subr.bf16.mxu0 %v768
      %1220 = vmatpush2.bf16.msra.mxu0 %v767
      %1221 = vmatprep.subr.bf16.mxu0 %v764
      %1222 = vmatpush2.bf16.msra.mxu0 %v763
      %1223 = vmatprep.mubr.bf16.mxu0 %v1186
      %1224 = vmatmul.mubr.bf16.gmra.mxu0 %v1185
      %v1225 = vpop.f32.mrf.mxu0
      %v1226 = vadd.f32 %v410, %v1225
      %v1227 = vpop.f32.mrf.mxu0
      %v1228 = vadd.f32 %v414, %v1227
      %v1229 = vpop.f32.mrf.mxu0
      %v1230 = vadd.f32 %v410, %v1229
      %v1231 = vpop.f32.mrf.mxu0
      %v1232 = vadd.f32 %v414, %v1231
      %1233 = vdwg.mxu0
      %1234 = vmatprep.subr.bf16.mxu0 %v824
      %1235 = vmatpush1.bf16.msra.mxu0 %v823
      %1236 = vmatprep.subr.bf16.mxu0 %v820
      %1237 = vmatpush1.bf16.msra.mxu0 %v819
      %1238 = vmatprep.subr.bf16.mxu0 %v816
      %1239 = vmatpush1.bf16.msra.mxu0 %v815
      %1240 = vmatprep.subr.bf16.mxu0 %v812
      %1241 = vmatpush1.bf16.msra.mxu0 %v811
      %1242 = vmatprep.subr.bf16.mxu0 %v808
      %1243 = vmatpush1.bf16.msra.mxu0 %v807
      %1244 = vmatprep.subr.bf16.mxu0 %v804
      %1245 = vmatpush1.bf16.msra.mxu0 %v803
      %1246 = vmatprep.subr.bf16.mxu0 %v800
      %1247 = vmatpush1.bf16.msra.mxu0 %v799
      %1248 = vmatprep.subr.bf16.mxu0 %v796
      %1249 = vmatpush1.bf16.msra.mxu0 %v795
      %1250 = vmatprep.subr.bf16.mxu0 0
      %1251 = vmatpush2.bf16.msra.mxu0 0
      %1252 = vmatprep.subr.bf16.mxu0 0
      %1253 = vmatpush2.bf16.msra.mxu0 0
      %1254 = vmatprep.subr.bf16.mxu0 0
      %1255 = vmatpush2.bf16.msra.mxu0 0
      %1256 = vmatprep.subr.bf16.mxu0 0
      %1257 = vmatpush2.bf16.msra.mxu0 0
      %1258 = vmatprep.subr.bf16.mxu0 0
      %1259 = vmatpush2.bf16.msra.mxu0 0
      %1260 = vmatprep.subr.bf16.mxu0 0
      %1261 = vmatpush2.bf16.msra.mxu0 0
      %1262 = vmatprep.subr.bf16.mxu0 0
      %1263 = vmatpush2.bf16.msra.mxu0 0
      %1264 = vmatprep.subr.bf16.mxu0 0
      %1265 = vmatpush2.bf16.msra.mxu0 0
      %1266 = vmatprep.mubr.bf16.mxu0 0
      %1267 = vmatmul.mubr.bf16.gmra.mxu0 %v1187
      %v1268 = vpop.f32.mrf.mxu0
      %v1269 = vadd.f32 %v1226, %v1268
      %v1270 = vpop.f32.mrf.mxu0
      %v1271 = vadd.f32 %v1228, %v1270
      %v1272 = vpop.f32.mrf.mxu0
      %v1273 = vadd.f32 %v1230, %v1272
      %v1274 = vpop.f32.mrf.mxu0
      %v1275 = vadd.f32 %v1232, %v1274
      %1276 = vdwg.mxu0
      %1277 = vmatprep.subr.bf16.mxu0 %v762
      %1278 = vmatpush1.bf16.msra.mxu0 %v761
      %1279 = vmatprep.subr.bf16.mxu0 %v758
      %1280 = vmatpush1.bf16.msra.mxu0 %v757
      %1281 = vmatprep.subr.bf16.mxu0 %v754
      %1282 = vmatpush1.bf16.msra.mxu0 %v753
      %1283 = vmatprep.subr.bf16.mxu0 %v750
      %1284 = vmatpush1.bf16.msra.mxu0 %v749
      %1285 = vmatprep.subr.bf16.mxu0 %v746
      %1286 = vmatpush1.bf16.msra.mxu0 %v745
      %1287 = vmatprep.subr.bf16.mxu0 %v742
      %1288 = vmatpush1.bf16.msra.mxu0 %v741
      %1289 = vmatprep.subr.bf16.mxu0 %v738
      %1290 = vmatpush1.bf16.msra.mxu0 %v737
      %1291 = vmatprep.subr.bf16.mxu0 %v734
      %1292 = vmatpush1.bf16.msra.mxu0 %v733
      %1293 = vmatprep.subr.bf16.mxu0 %v794
      %1294 = vmatpush2.bf16.msra.mxu0 %v793
      %1295 = vmatprep.subr.bf16.mxu0 %v790
      %1296 = vmatpush2.bf16.msra.mxu0 %v789
      %1297 = vmatprep.subr.bf16.mxu0 %v786
      %1298 = vmatpush2.bf16.msra.mxu0 %v785
      %1299 = vmatprep.subr.bf16.mxu0 %v782
      %1300 = vmatpush2.bf16.msra.mxu0 %v781
      %1301 = vmatprep.subr.bf16.mxu0 %v778
      %1302 = vmatpush2.bf16.msra.mxu0 %v777
      %1303 = vmatprep.subr.bf16.mxu0 %v774
      %1304 = vmatpush2.bf16.msra.mxu0 %v773
      %1305 = vmatprep.subr.bf16.mxu0 %v770
      %1306 = vmatpush2.bf16.msra.mxu0 %v769
      %1307 = vmatprep.subr.bf16.mxu0 %v766
      %1308 = vmatpush2.bf16.msra.mxu0 %v765
      %1309 = vmatprep.mubr.bf16.mxu0 %v1186
      %1310 = vmatmul.mubr.bf16.gmra.mxu0 %v1185
      %v1311 = vpop.f32.mrf.mxu0
      %v1312 = vadd.f32 %v418, %v1311
      %v1313 = vpop.f32.mrf.mxu0
      %v1314 = vadd.f32 %v422, %v1313
      %v1315 = vpop.f32.mrf.mxu0
      %v1316 = vadd.f32 %v418, %v1315
      %v1317 = vpop.f32.mrf.mxu0
      %v1318 = vadd.f32 %v422, %v1317
      %1319 = vdwg.mxu0
      %1320 = vmatprep.subr.bf16.mxu0 %v826
      %1321 = vmatpush1.bf16.msra.mxu0 %v825
      %1322 = vmatprep.subr.bf16.mxu0 %v822
      %1323 = vmatpush1.bf16.msra.mxu0 %v821
      %1324 = vmatprep.subr.bf16.mxu0 %v818
      %1325 = vmatpush1.bf16.msra.mxu0 %v817
      %1326 = vmatprep.subr.bf16.mxu0 %v814
      %1327 = vmatpush1.bf16.msra.mxu0 %v813
      %1328 = vmatprep.subr.bf16.mxu0 %v810
      %1329 = vmatpush1.bf16.msra.mxu0 %v809
      %1330 = vmatprep.subr.bf16.mxu0 %v806
      %1331 = vmatpush1.bf16.msra.mxu0 %v805
      %1332 = vmatprep.subr.bf16.mxu0 %v802
      %1333 = vmatpush1.bf16.msra.mxu0 %v801
      %1334 = vmatprep.subr.bf16.mxu0 %v798
      %1335 = vmatpush1.bf16.msra.mxu0 %v797
      %1336 = vmatprep.subr.bf16.mxu0 0
      %1337 = vmatpush2.bf16.msra.mxu0 0
      %1338 = vmatprep.subr.bf16.mxu0 0
      %1339 = vmatpush2.bf16.msra.mxu0 0
      %1340 = vmatprep.subr.bf16.mxu0 0
      %1341 = vmatpush2.bf16.msra.mxu0 0
      %1342 = vmatprep.subr.bf16.mxu0 0
      %1343 = vmatpush2.bf16.msra.mxu0 0
      %1344 = vmatprep.subr.bf16.mxu0 0
      %1345 = vmatpush2.bf16.msra.mxu0 0
      %1346 = vmatprep.subr.bf16.mxu0 0
      %1347 = vmatpush2.bf16.msra.mxu0 0
      %1348 = vmatprep.subr.bf16.mxu0 0
      %1349 = vmatpush2.bf16.msra.mxu0 0
      %1350 = vmatprep.subr.bf16.mxu0 0
      %1351 = vmatpush2.bf16.msra.mxu0 0
      %1352 = vmatprep.mubr.bf16.mxu0 0
      %1353 = vmatmul.mubr.bf16.gmra.mxu0 %v1187
      %v1354 = vpop.f32.mrf.mxu0
      %v1355 = vadd.f32 %v1312, %v1354
      %v1356 = vpop.f32.mrf.mxu0
      %v1357 = vadd.f32 %v1314, %v1356
      %v1358 = vpop.f32.mrf.mxu0
      %v1359 = vadd.f32 %v1316, %v1358
      %v1360 = vpop.f32.mrf.mxu0
      %v1361 = vadd.f32 %v1318, %v1360
      %1362 = vdwg.mxu0
      %v1363 = vxor.u32 %v1269, 2147483648
      %v1364 = vxor.u32 %v1271, 2147483648
      %v1365 = vxor.u32 %v1355, 2147483648
      %v1366 = vxor.u32 %v1273, 2147483648
      %v1367 = vxor.u32 %v1275, 2147483648
      %v1368 = vxor.u32 %v1359, 2147483648
      %v1369 = vmul.f32 %v1363, 1.442695
      %v1370 = vpow.pop %v1369
      %v1371 = vmul.f32 %v1364, 1.442695
      %v1372 = vpow.pop %v1371
      %v1373 = vmul.f32 %v1365, 1.442695
      %v1374 = vpow.pop %v1373
      %v1375 = vmul.f32 %v1366, 1.442695
      %v1376 = vpow.pop %v1375
      %v1377 = vmul.f32 %v1367, 1.442695
      %v1378 = vpow.pop %v1377
      %v1379 = vmul.f32 %v1368, 1.442695
      %v1380 = vpow.pop %v1379
      %v1381 = vadd.f32 %v1370, 1.0
      %v1382 = vadd.f32 %v1372, 1.0
      %v1383 = vadd.f32 %v1374, 1.0
      %v1384 = vadd.f32 %v1376, 1.0
      %v1385 = vadd.f32 %v1378, 1.0
      %v1386 = vadd.f32 %v1380, 1.0
      %v1387 = vrcp.pop %v1381
      %v1388 = vmul.f32 1.0, %v1387
      %v1389 = vrcp.pop %v1382
      %v1390 = vmul.f32 1.0, %v1389
      %v1391 = vrcp.pop %v1383
      %v1392 = vmul.f32 1.0, %v1391
      %v1393 = vrcp.pop %v1384
      %v1394 = vmul.f32 1.0, %v1393
      %v1395 = vrcp.pop %v1385
      %v1396 = vmul.f32 1.0, %v1395
      %v1397 = vrcp.pop %v1386
      %v1398 = vmul.f32 1.0, %v1397
      %v1399 = vtanh.pop %v1357
      %v1400 = vtanh.pop %v1361
      %v1401 = vld [vmem:[#allocation3] sm:$0xff]
      %v1402 = vld [vmem:[#allocation3 + $0x8] sm:$0xff]
      %v1403 = vmul.f32 %v1390, %v1401
      %v1404 = vmul.f32 %v1396, %v1402
      %v1405 = vmul.f32 %v1388, %v1399
      %v1406 = vmul.f32 %v1394, %v1400
      %v1407 = vadd.f32 %v1403, %v1405
      %v1408 = vadd.f32 %v1404, %v1406
      %v1409 = vtanh.pop %v1407
      %v1410 = vtanh.pop %v1408
      %v1411 = vmul.f32 %v1392, %v1409
      %v1412 = vmul.f32 %v1398, %v1410
      %v1413 = vpack.c.bf16 %v1412, %v1411
      %1414 = vst [vmem:[#allocation3] sm:$0xff] %v1407
      %1415 = vst [vmem:[#allocation3 + $0x8] sm:$0xff] %v1408
      %v1417 = vunpack.c.l.b16 %v1413
      %v1418 = vunpack.c.h.b16 %v1413
      %v1419 = vpack.c.b16 %v1417, %v1417
      %v1420 = vpack.c.b16 %v1418, %v1418
      %1423 = vst [vmem:[#allocation2 + $0x8] sm:$0xf] %v1419
      %1424 = vst [vmem:[#allocation2 + $0x14] sm:$0xf] %v1420
      %s1425 = smul.u32 %s1163, 2
      %s1426 = smul.addr %s1425, 4
      %s1427 = scalar_lea.vmem %s280, %s1426
      %1428 = vst [vmem:[%s1427] sm:$0xf] %v1419
      %1429 = vst [vmem:[%s1427 + $0x4] sm:$0xf] %v1420
      %s1430 = smul.u32 %s18, 3
      %s1431 = sadd.s32 %s1430, 2
      %s1432 = smul.u32 %s1431, 4
      %s1433 = smul.addr %s1432, 4
      %s1434 = scalar_lea.vmem %s252, %s1433
      %v1435 = vld [vmem:[%s1434] sm:$0xff]
      %v1436 = vld [vmem:[%s1434 + $0x8] sm:$0xff]
      %1437 = vst [vmem:[#allocation2] sm:$0xff] %v1435
      %1438 = vst [vmem:[#allocation2 + $0xc] sm:$0xff] %v1436
      %v1439 = vld [vmem:[#allocation2] sm:$0xff]
      %v1440 = vld [vmem:[#allocation2 + $0x8] sm:$0xf]
      %v1441 = vld [vmem:[#allocation2 + $0xc] sm:$0xff]
      %v1442 = vld [vmem:[#allocation2 + $0x14] sm:$0xf]
      %v1447 = vunpack.c.l.b16 %v1439
      %v1448 = vunpack.c.h.b16 %v1439
      %v1449 = vunpack.c.l.b16 %v1440
      %v1450 = vunpack.c.l.b16 %v1441
      %v1451 = vunpack.c.h.b16 %v1441
      %v1452 = vunpack.c.l.b16 %v1442
      %v1453 = vpack.c.b16 %v1450, %v1447
      %v1454 = vpack.c.b16 %v1451, %v1448
      %v1455 = vpack.c.b16 %v1452, %v1449
      %1459 = vmatprep.subr.bf16.mxu0 %v760
      %1460 = vmatpush1.bf16.msra.mxu0 %v759
      %1461 = vmatprep.subr.bf16.mxu0 %v756
      %1462 = vmatpush1.bf16.msra.mxu0 %v755
      %1463 = vmatprep.subr.bf16.mxu0 %v752
      %1464 = vmatpush1.bf16.msra.mxu0 %v751
      %1465 = vmatprep.subr.bf16.mxu0 %v748
      %1466 = vmatpush1.bf16.msra.mxu0 %v747
      %1467 = vmatprep.subr.bf16.mxu0 %v744
      %1468 = vmatpush1.bf16.msra.mxu0 %v743
      %1469 = vmatprep.subr.bf16.mxu0 %v740
      %1470 = vmatpush1.bf16.msra.mxu0 %v739
      %1471 = vmatprep.subr.bf16.mxu0 %v736
      %1472 = vmatpush1.bf16.msra.mxu0 %v735
      %1473 = vmatprep.subr.bf16.mxu0 %v732
      %1474 = vmatpush1.bf16.msra.mxu0 %v731
      %1475 = vmatprep.subr.bf16.mxu0 %v792
      %1476 = vmatpush2.bf16.msra.mxu0 %v791
      %1477 = vmatprep.subr.bf16.mxu0 %v788
      %1478 = vmatpush2.bf16.msra.mxu0 %v787
      %1479 = vmatprep.subr.bf16.mxu0 %v784
      %1480 = vmatpush2.bf16.msra.mxu0 %v783
      %1481 = vmatprep.subr.bf16.mxu0 %v780
      %1482 = vmatpush2.bf16.msra.mxu0 %v779
      %1483 = vmatprep.subr.bf16.mxu0 %v776
      %1484 = vmatpush2.bf16.msra.mxu0 %v775
      %1485 = vmatprep.subr.bf16.mxu0 %v772
      %1486 = vmatpush2.bf16.msra.mxu0 %v771
      %1487 = vmatprep.subr.bf16.mxu0 %v768
      %1488 = vmatpush2.bf16.msra.mxu0 %v767
      %1489 = vmatprep.subr.bf16.mxu0 %v764
      %1490 = vmatpush2.bf16.msra.mxu0 %v763
      %1491 = vmatprep.mubr.bf16.mxu0 %v1454
      %1492 = vmatmul.mubr.bf16.gmra.mxu0 %v1453
      %v1493 = vpop.f32.mrf.mxu0
      %v1494 = vadd.f32 %v410, %v1493
      %v1495 = vpop.f32.mrf.mxu0
      %v1496 = vadd.f32 %v414, %v1495
      %v1497 = vpop.f32.mrf.mxu0
      %v1498 = vadd.f32 %v410, %v1497
      %v1499 = vpop.f32.mrf.mxu0
      %v1500 = vadd.f32 %v414, %v1499
      %1501 = vdwg.mxu0
      %1502 = vmatprep.subr.bf16.mxu0 %v824
      %1503 = vmatpush1.bf16.msra.mxu0 %v823
      %1504 = vmatprep.subr.bf16.mxu0 %v820
      %1505 = vmatpush1.bf16.msra.mxu0 %v819
      %1506 = vmatprep.subr.bf16.mxu0 %v816
      %1507 = vmatpush1.bf16.msra.mxu0 %v815
      %1508 = vmatprep.subr.bf16.mxu0 %v812
      %1509 = vmatpush1.bf16.msra.mxu0 %v811
      %1510 = vmatprep.subr.bf16.mxu0 %v808
      %1511 = vmatpush1.bf16.msra.mxu0 %v807
      %1512 = vmatprep.subr.bf16.mxu0 %v804
      %1513 = vmatpush1.bf16.msra.mxu0 %v803
      %1514 = vmatprep.subr.bf16.mxu0 %v800
      %1515 = vmatpush1.bf16.msra.mxu0 %v799
      %1516 = vmatprep.subr.bf16.mxu0 %v796
      %1517 = vmatpush1.bf16.msra.mxu0 %v795
      %1518 = vmatprep.subr.bf16.mxu0 0
      %1519 = vmatpush2.bf16.msra.mxu0 0
      %1520 = vmatprep.subr.bf16.mxu0 0
      %1521 = vmatpush2.bf16.msra.mxu0 0
      %1522 = vmatprep.subr.bf16.mxu0 0
      %1523 = vmatpush2.bf16.msra.mxu0 0
      %1524 = vmatprep.subr.bf16.mxu0 0
      %1525 = vmatpush2.bf16.msra.mxu0 0
      %1526 = vmatprep.subr.bf16.mxu0 0
      %1527 = vmatpush2.bf16.msra.mxu0 0
      %1528 = vmatprep.subr.bf16.mxu0 0
      %1529 = vmatpush2.bf16.msra.mxu0 0
      %1530 = vmatprep.subr.bf16.mxu0 0
      %1531 = vmatpush2.bf16.msra.mxu0 0
      %1532 = vmatprep.subr.bf16.mxu0 0
      %1533 = vmatpush2.bf16.msra.mxu0 0
      %1534 = vmatprep.mubr.bf16.mxu0 0
      %1535 = vmatmul.mubr.bf16.gmra.mxu0 %v1455
      %v1536 = vpop.f32.mrf.mxu0
      %v1537 = vadd.f32 %v1494, %v1536
      %v1538 = vpop.f32.mrf.mxu0
      %v1539 = vadd.f32 %v1496, %v1538
      %v1540 = vpop.f32.mrf.mxu0
      %v1541 = vadd.f32 %v1498, %v1540
      %v1542 = vpop.f32.mrf.mxu0
      %v1543 = vadd.f32 %v1500, %v1542
      %1544 = vdwg.mxu0
      %1545 = vmatprep.subr.bf16.mxu0 %v762
      %1546 = vmatpush1.bf16.msra.mxu0 %v761
      %1547 = vmatprep.subr.bf16.mxu0 %v758
      %1548 = vmatpush1.bf16.msra.mxu0 %v757
      %1549 = vmatprep.subr.bf16.mxu0 %v754
      %1550 = vmatpush1.bf16.msra.mxu0 %v753
      %1551 = vmatprep.subr.bf16.mxu0 %v750
      %1552 = vmatpush1.bf16.msra.mxu0 %v749
      %1553 = vmatprep.subr.bf16.mxu0 %v746
      %1554 = vmatpush1.bf16.msra.mxu0 %v745
      %1555 = vmatprep.subr.bf16.mxu0 %v742
      %1556 = vmatpush1.bf16.msra.mxu0 %v741
      %1557 = vmatprep.subr.bf16.mxu0 %v738
      %1558 = vmatpush1.bf16.msra.mxu0 %v737
      %1559 = vmatprep.subr.bf16.mxu0 %v734
      %1560 = vmatpush1.bf16.msra.mxu0 %v733
      %1561 = vmatprep.subr.bf16.mxu0 %v794
      %1562 = vmatpush2.bf16.msra.mxu0 %v793
      %1563 = vmatprep.subr.bf16.mxu0 %v790
      %1564 = vmatpush2.bf16.msra.mxu0 %v789
      %1565 = vmatprep.subr.bf16.mxu0 %v786
      %1566 = vmatpush2.bf16.msra.mxu0 %v785
      %1567 = vmatprep.subr.bf16.mxu0 %v782
      %1568 = vmatpush2.bf16.msra.mxu0 %v781
      %1569 = vmatprep.subr.bf16.mxu0 %v778
      %1570 = vmatpush2.bf16.msra.mxu0 %v777
      %1571 = vmatprep.subr.bf16.mxu0 %v774
      %1572 = vmatpush2.bf16.msra.mxu0 %v773
      %1573 = vmatprep.subr.bf16.mxu0 %v770
      %1574 = vmatpush2.bf16.msra.mxu0 %v769
      %1575 = vmatprep.subr.bf16.mxu0 %v766
      %1576 = vmatpush2.bf16.msra.mxu0 %v765
      %1577 = vmatprep.mubr.bf16.mxu0 %v1454
      %1578 = vmatmul.mubr.bf16.gmra.mxu0 %v1453
      %v1579 = vpop.f32.mrf.mxu0
      %v1580 = vadd.f32 %v418, %v1579
      %v1581 = vpop.f32.mrf.mxu0
      %v1582 = vadd.f32 %v422, %v1581
      %v1583 = vpop.f32.mrf.mxu0
      %v1584 = vadd.f32 %v418, %v1583
      %v1585 = vpop.f32.mrf.mxu0
      %v1586 = vadd.f32 %v422, %v1585
      %1587 = vdwg.mxu0
      %1588 = vmatprep.subr.bf16.mxu0 %v826
      %1589 = vmatpush1.bf16.msra.mxu0 %v825
      %1590 = vmatprep.subr.bf16.mxu0 %v822
      %1591 = vmatpush1.bf16.msra.mxu0 %v821
      %1592 = vmatprep.subr.bf16.mxu0 %v818
      %1593 = vmatpush1.bf16.msra.mxu0 %v817
      %1594 = vmatprep.subr.bf16.mxu0 %v814
      %1595 = vmatpush1.bf16.msra.mxu0 %v813
      %1596 = vmatprep.subr.bf16.mxu0 %v810
      %1597 = vmatpush1.bf16.msra.mxu0 %v809
      %1598 = vmatprep.subr.bf16.mxu0 %v806
      %1599 = vmatpush1.bf16.msra.mxu0 %v805
      %1600 = vmatprep.subr.bf16.mxu0 %v802
      %1601 = vmatpush1.bf16.msra.mxu0 %v801
      %1602 = vmatprep.subr.bf16.mxu0 %v798
      %1603 = vmatpush1.bf16.msra.mxu0 %v797
      %1604 = vmatprep.subr.bf16.mxu0 0
      %1605 = vmatpush2.bf16.msra.mxu0 0
      %1606 = vmatprep.subr.bf16.mxu0 0
      %1607 = vmatpush2.bf16.msra.mxu0 0
      %1608 = vmatprep.subr.bf16.mxu0 0
      %1609 = vmatpush2.bf16.msra.mxu0 0
      %1610 = vmatprep.subr.bf16.mxu0 0
      %1611 = vmatpush2.bf16.msra.mxu0 0
      %1612 = vmatprep.subr.bf16.mxu0 0
      %1613 = vmatpush2.bf16.msra.mxu0 0
      %1614 = vmatprep.subr.bf16.mxu0 0
      %1615 = vmatpush2.bf16.msra.mxu0 0
      %1616 = vmatprep.subr.bf16.mxu0 0
      %1617 = vmatpush2.bf16.msra.mxu0 0
      %1618 = vmatprep.subr.bf16.mxu0 0
      %1619 = vmatpush2.bf16.msra.mxu0 0
      %1620 = vmatprep.mubr.bf16.mxu0 0
      %1621 = vmatmul.mubr.bf16.gmra.mxu0 %v1455
      %v1622 = vpop.f32.mrf.mxu0
      %v1623 = vadd.f32 %v1580, %v1622
      %v1624 = vpop.f32.mrf.mxu0
      %v1625 = vadd.f32 %v1582, %v1624
      %v1626 = vpop.f32.mrf.mxu0
      %v1627 = vadd.f32 %v1584, %v1626
      %v1628 = vpop.f32.mrf.mxu0
      %v1629 = vadd.f32 %v1586, %v1628
      %1630 = vdwg.mxu0
      %v1631 = vxor.u32 %v1537, 2147483648
      %v1632 = vxor.u32 %v1539, 2147483648
      %v1633 = vxor.u32 %v1623, 2147483648
      %v1634 = vxor.u32 %v1541, 2147483648
      %v1635 = vxor.u32 %v1543, 2147483648
      %v1636 = vxor.u32 %v1627, 2147483648
      %v1637 = vmul.f32 %v1631, 1.442695
      %v1638 = vpow.pop %v1637
      %v1639 = vmul.f32 %v1632, 1.442695
      %v1640 = vpow.pop %v1639
      %v1641 = vmul.f32 %v1633, 1.442695
      %v1642 = vpow.pop %v1641
      %v1643 = vmul.f32 %v1634, 1.442695
      %v1644 = vpow.pop %v1643
      %v1645 = vmul.f32 %v1635, 1.442695
      %v1646 = vpow.pop %v1645
      %v1647 = vmul.f32 %v1636, 1.442695
      %v1648 = vpow.pop %v1647
      %v1649 = vadd.f32 %v1638, 1.0
      %v1650 = vadd.f32 %v1640, 1.0
      %v1651 = vadd.f32 %v1642, 1.0
      %v1652 = vadd.f32 %v1644, 1.0
      %v1653 = vadd.f32 %v1646, 1.0
      %v1654 = vadd.f32 %v1648, 1.0
      %v1655 = vrcp.pop %v1649
      %v1656 = vmul.f32 1.0, %v1655
      %v1657 = vrcp.pop %v1650
      %v1658 = vmul.f32 1.0, %v1657
      %v1659 = vrcp.pop %v1651
      %v1660 = vmul.f32 1.0, %v1659
      %v1661 = vrcp.pop %v1652
      %v1662 = vmul.f32 1.0, %v1661
      %v1663 = vrcp.pop %v1653
      %v1664 = vmul.f32 1.0, %v1663
      %v1665 = vrcp.pop %v1654
      %v1666 = vmul.f32 1.0, %v1665
      %v1667 = vtanh.pop %v1625
      %v1668 = vtanh.pop %v1629
      %v1669 = vld [vmem:[#allocation3] sm:$0xff]
      %v1670 = vld [vmem:[#allocation3 + $0x8] sm:$0xff]
      %v1671 = vmul.f32 %v1658, %v1669
      %v1672 = vmul.f32 %v1664, %v1670
      %v1673 = vmul.f32 %v1656, %v1667
      %v1674 = vmul.f32 %v1662, %v1668
      %v1675 = vadd.f32 %v1671, %v1673
      %v1676 = vadd.f32 %v1672, %v1674
      %v1677 = vtanh.pop %v1675
      %v1678 = vtanh.pop %v1676
      %v1679 = vmul.f32 %v1660, %v1677
      %v1680 = vmul.f32 %v1666, %v1678
      %v1681 = vpack.c.bf16 %v1680, %v1679
      %1682 = vst [vmem:[#allocation3] sm:$0xff] %v1675
      %1683 = vst [vmem:[#allocation3 + $0x8] sm:$0xff] %v1676
      %v1685 = vunpack.c.l.b16 %v1681
      %v1686 = vunpack.c.h.b16 %v1681
      %v1687 = vpack.c.b16 %v1685, %v1685
      %v1688 = vpack.c.b16 %v1686, %v1686
      %1691 = vst [vmem:[#allocation2 + $0x8] sm:$0xf] %v1687
      %1692 = vst [vmem:[#allocation2 + $0x14] sm:$0xf] %v1688
      %s1693 = smul.u32 %s1431, 2
      %s1694 = smul.addr %s1693, 4
      %s1695 = scalar_lea.vmem %s280, %s1694
      %1696 = vst [vmem:[%s1695] sm:$0xf] %v1687
      %1697 = vst [vmem:[%s1695 + $0x4] sm:$0xf] %v1688
      %s1698 = sadd.s32 %s18, 3
      %s1699 = smul.u32 %s1698, 4
      %s1700 = smul.addr %s1699, 4
      %s1701 = scalar_lea.vmem %s252, %s1700
      %v1702 = vld [vmem:[%s1701] sm:$0xff]
      %v1703 = vld [vmem:[%s1701 + $0x8] sm:$0xff]
      %1704 = vst [vmem:[#allocation2] sm:$0xff] %v1702
      %1705 = vst [vmem:[#allocation2 + $0xc] sm:$0xff] %v1703
      %v1706 = vld [vmem:[#allocation2] sm:$0xff]
      %v1707 = vld [vmem:[#allocation2 + $0x8] sm:$0xf]
      %v1708 = vld [vmem:[#allocation2 + $0xc] sm:$0xff]
      %v1709 = vld [vmem:[#allocation2 + $0x14] sm:$0xf]
      %v1714 = vunpack.c.l.b16 %v1706
      %v1715 = vunpack.c.h.b16 %v1706
      %v1716 = vunpack.c.l.b16 %v1707
      %v1717 = vunpack.c.l.b16 %v1708
      %v1718 = vunpack.c.h.b16 %v1708
      %v1719 = vunpack.c.l.b16 %v1709
      %v1720 = vpack.c.b16 %v1717, %v1714
      %v1721 = vpack.c.b16 %v1718, %v1715
      %v1722 = vpack.c.b16 %v1719, %v1716
      %1726 = vmatprep.subr.bf16.mxu0 %v760
      %1727 = vmatpush1.bf16.msra.mxu0 %v759
      %1728 = vmatprep.subr.bf16.mxu0 %v756
      %1729 = vmatpush1.bf16.msra.mxu0 %v755
      %1730 = vmatprep.subr.bf16.mxu0 %v752
      %1731 = vmatpush1.bf16.msra.mxu0 %v751
      %1732 = vmatprep.subr.bf16.mxu0 %v748
      %1733 = vmatpush1.bf16.msra.mxu0 %v747
      %1734 = vmatprep.subr.bf16.mxu0 %v744
      %1735 = vmatpush1.bf16.msra.mxu0 %v743
      %1736 = vmatprep.subr.bf16.mxu0 %v740
      %1737 = vmatpush1.bf16.msra.mxu0 %v739
      %1738 = vmatprep.subr.bf16.mxu0 %v736
      %1739 = vmatpush1.bf16.msra.mxu0 %v735
      %1740 = vmatprep.subr.bf16.mxu0 %v732
      %1741 = vmatpush1.bf16.msra.mxu0 %v731
      %1742 = vmatprep.subr.bf16.mxu0 %v792
      %1743 = vmatpush2.bf16.msra.mxu0 %v791
      %1744 = vmatprep.subr.bf16.mxu0 %v788
      %1745 = vmatpush2.bf16.msra.mxu0 %v787
      %1746 = vmatprep.subr.bf16.mxu0 %v784
      %1747 = vmatpush2.bf16.msra.mxu0 %v783
      %1748 = vmatprep.subr.bf16.mxu0 %v780
      %1749 = vmatpush2.bf16.msra.mxu0 %v779
      %1750 = vmatprep.subr.bf16.mxu0 %v776
      %1751 = vmatpush2.bf16.msra.mxu0 %v775
      %1752 = vmatprep.subr.bf16.mxu0 %v772
      %1753 = vmatpush2.bf16.msra.mxu0 %v771
      %1754 = vmatprep.subr.bf16.mxu0 %v768
      %1755 = vmatpush2.bf16.msra.mxu0 %v767
      %1756 = vmatprep.subr.bf16.mxu0 %v764
      %1757 = vmatpush2.bf16.msra.mxu0 %v763
      %1758 = vmatprep.mubr.bf16.mxu0 %v1721
      %1759 = vmatmul.mubr.bf16.gmra.mxu0 %v1720
      %v1760 = vpop.f32.mrf.mxu0
      %v1761 = vadd.f32 %v410, %v1760
      %v1762 = vpop.f32.mrf.mxu0
      %v1763 = vadd.f32 %v414, %v1762
      %v1764 = vpop.f32.mrf.mxu0
      %v1765 = vadd.f32 %v410, %v1764
      %v1766 = vpop.f32.mrf.mxu0
      %v1767 = vadd.f32 %v414, %v1766
      %1768 = vdwg.mxu0
      %1769 = vmatprep.subr.bf16.mxu0 %v824
      %1770 = vmatpush1.bf16.msra.mxu0 %v823
      %1771 = vmatprep.subr.bf16.mxu0 %v820
      %1772 = vmatpush1.bf16.msra.mxu0 %v819
      %1773 = vmatprep.subr.bf16.mxu0 %v816
      %1774 = vmatpush1.bf16.msra.mxu0 %v815
      %1775 = vmatprep.subr.bf16.mxu0 %v812
      %1776 = vmatpush1.bf16.msra.mxu0 %v811
      %1777 = vmatprep.subr.bf16.mxu0 %v808
      %1778 = vmatpush1.bf16.msra.mxu0 %v807
      %1779 = vmatprep.subr.bf16.mxu0 %v804
      %1780 = vmatpush1.bf16.msra.mxu0 %v803
      %1781 = vmatprep.subr.bf16.mxu0 %v800
      %1782 = vmatpush1.bf16.msra.mxu0 %v799
      %1783 = vmatprep.subr.bf16.mxu0 %v796
      %1784 = vmatpush1.bf16.msra.mxu0 %v795
      %1785 = vmatprep.subr.bf16.mxu0 0
      %1786 = vmatpush2.bf16.msra.mxu0 0
      %1787 = vmatprep.subr.bf16.mxu0 0
      %1788 = vmatpush2.bf16.msra.mxu0 0
      %1789 = vmatprep.subr.bf16.mxu0 0
      %1790 = vmatpush2.bf16.msra.mxu0 0
      %1791 = vmatprep.subr.bf16.mxu0 0
      %1792 = vmatpush2.bf16.msra.mxu0 0
      %1793 = vmatprep.subr.bf16.mxu0 0
      %1794 = vmatpush2.bf16.msra.mxu0 0
      %1795 = vmatprep.subr.bf16.mxu0 0
      %1796 = vmatpush2.bf16.msra.mxu0 0
      %1797 = vmatprep.subr.bf16.mxu0 0
      %1798 = vmatpush2.bf16.msra.mxu0 0
      %1799 = vmatprep.subr.bf16.mxu0 0
      %1800 = vmatpush2.bf16.msra.mxu0 0
      %1801 = vmatprep.mubr.bf16.mxu0 0
      %1802 = vmatmul.mubr.bf16.gmra.mxu0 %v1722
      %v1803 = vpop.f32.mrf.mxu0
      %v1804 = vadd.f32 %v1761, %v1803
      %v1805 = vpop.f32.mrf.mxu0
      %v1806 = vadd.f32 %v1763, %v1805
      %v1807 = vpop.f32.mrf.mxu0
      %v1808 = vadd.f32 %v1765, %v1807
      %v1809 = vpop.f32.mrf.mxu0
      %v1810 = vadd.f32 %v1767, %v1809
      %1811 = vdwg.mxu0
      %1812 = vmatprep.subr.bf16.mxu0 %v762
      %1813 = vmatpush1.bf16.msra.mxu0 %v761
      %1814 = vmatprep.subr.bf16.mxu0 %v758
      %1815 = vmatpush1.bf16.msra.mxu0 %v757
      %1816 = vmatprep.subr.bf16.mxu0 %v754
      %1817 = vmatpush1.bf16.msra.mxu0 %v753
      %1818 = vmatprep.subr.bf16.mxu0 %v750
      %1819 = vmatpush1.bf16.msra.mxu0 %v749
      %1820 = vmatprep.subr.bf16.mxu0 %v746
      %1821 = vmatpush1.bf16.msra.mxu0 %v745
      %1822 = vmatprep.subr.bf16.mxu0 %v742
      %1823 = vmatpush1.bf16.msra.mxu0 %v741
      %1824 = vmatprep.subr.bf16.mxu0 %v738
      %1825 = vmatpush1.bf16.msra.mxu0 %v737
      %1826 = vmatprep.subr.bf16.mxu0 %v734
      %1827 = vmatpush1.bf16.msra.mxu0 %v733
      %1828 = vmatprep.subr.bf16.mxu0 %v794
      %1829 = vmatpush2.bf16.msra.mxu0 %v793
      %1830 = vmatprep.subr.bf16.mxu0 %v790
      %1831 = vmatpush2.bf16.msra.mxu0 %v789
      %1832 = vmatprep.subr.bf16.mxu0 %v786
      %1833 = vmatpush2.bf16.msra.mxu0 %v785
      %1834 = vmatprep.subr.bf16.mxu0 %v782
      %1835 = vmatpush2.bf16.msra.mxu0 %v781
      %1836 = vmatprep.subr.bf16.mxu0 %v778
      %1837 = vmatpush2.bf16.msra.mxu0 %v777
      %1838 = vmatprep.subr.bf16.mxu0 %v774
      %1839 = vmatpush2.bf16.msra.mxu0 %v773
      %1840 = vmatprep.subr.bf16.mxu0 %v770
      %1841 = vmatpush2.bf16.msra.mxu0 %v769
      %1842 = vmatprep.subr.bf16.mxu0 %v766
      %1843 = vmatpush2.bf16.msra.mxu0 %v765
      %1844 = vmatprep.mubr.bf16.mxu0 %v1721
      %1845 = vmatmul.mubr.bf16.gmra.mxu0 %v1720
      %v1846 = vpop.f32.mrf.mxu0
      %v1847 = vadd.f32 %v418, %v1846
      %v1848 = vpop.f32.mrf.mxu0
      %v1849 = vadd.f32 %v422, %v1848
      %v1850 = vpop.f32.mrf.mxu0
      %v1851 = vadd.f32 %v418, %v1850
      %v1852 = vpop.f32.mrf.mxu0
      %v1853 = vadd.f32 %v422, %v1852
      %1854 = vdwg.mxu0
      %1855 = vmatprep.subr.bf16.mxu0 %v826
      %1856 = vmatpush1.bf16.msra.mxu0 %v825
      %1857 = vmatprep.subr.bf16.mxu0 %v822
      %1858 = vmatpush1.bf16.msra.mxu0 %v821
      %1859 = vmatprep.subr.bf16.mxu0 %v818
      %1860 = vmatpush1.bf16.msra.mxu0 %v817
      %1861 = vmatprep.subr.bf16.mxu0 %v814
      %1862 = vmatpush1.bf16.msra.mxu0 %v813
      %1863 = vmatprep.subr.bf16.mxu0 %v810
      %1864 = vmatpush1.bf16.msra.mxu0 %v809
      %1865 = vmatprep.subr.bf16.mxu0 %v806
      %1866 = vmatpush1.bf16.msra.mxu0 %v805
      %1867 = vmatprep.subr.bf16.mxu0 %v802
      %1868 = vmatpush1.bf16.msra.mxu0 %v801
      %1869 = vmatprep.subr.bf16.mxu0 %v798
      %1870 = vmatpush1.bf16.msra.mxu0 %v797
      %1871 = vmatprep.subr.bf16.mxu0 0
      %1872 = vmatpush2.bf16.msra.mxu0 0
      %1873 = vmatprep.subr.bf16.mxu0 0
      %1874 = vmatpush2.bf16.msra.mxu0 0
      %1875 = vmatprep.subr.bf16.mxu0 0
      %1876 = vmatpush2.bf16.msra.mxu0 0
      %1877 = vmatprep.subr.bf16.mxu0 0
      %1878 = vmatpush2.bf16.msra.mxu0 0
      %1879 = vmatprep.subr.bf16.mxu0 0
      %1880 = vmatpush2.bf16.msra.mxu0 0
      %1881 = vmatprep.subr.bf16.mxu0 0
      %1882 = vmatpush2.bf16.msra.mxu0 0
      %1883 = vmatprep.subr.bf16.mxu0 0
      %1884 = vmatpush2.bf16.msra.mxu0 0
      %1885 = vmatprep.subr.bf16.mxu0 0
      %1886 = vmatpush2.bf16.msra.mxu0 0
      %1887 = vmatprep.mubr.bf16.mxu0 0
      %1888 = vmatmul.mubr.bf16.gmra.mxu0 %v1722
      %v1889 = vpop.f32.mrf.mxu0
      %v1890 = vadd.f32 %v1847, %v1889
      %v1891 = vpop.f32.mrf.mxu0
      %v1892 = vadd.f32 %v1849, %v1891
      %v1893 = vpop.f32.mrf.mxu0
      %v1894 = vadd.f32 %v1851, %v1893
      %v1895 = vpop.f32.mrf.mxu0
      %v1896 = vadd.f32 %v1853, %v1895
      %1897 = vdwg.mxu0
      %v1898 = vxor.u32 %v1804, 2147483648
      %v1899 = vxor.u32 %v1806, 2147483648
      %v1900 = vxor.u32 %v1890, 2147483648
      %v1901 = vxor.u32 %v1808, 2147483648
      %v1902 = vxor.u32 %v1810, 2147483648
      %v1903 = vxor.u32 %v1894, 2147483648
      %v1904 = vmul.f32 %v1898, 1.442695
      %v1905 = vpow.pop %v1904
      %v1906 = vmul.f32 %v1899, 1.442695
      %v1907 = vpow.pop %v1906
      %v1908 = vmul.f32 %v1900, 1.442695
      %v1909 = vpow.pop %v1908
      %v1910 = vmul.f32 %v1901, 1.442695
      %v1911 = vpow.pop %v1910
      %v1912 = vmul.f32 %v1902, 1.442695
      %v1913 = vpow.pop %v1912
      %v1914 = vmul.f32 %v1903, 1.442695
      %v1915 = vpow.pop %v1914
      %v1916 = vadd.f32 %v1905, 1.0
      %v1917 = vadd.f32 %v1907, 1.0
      %v1918 = vadd.f32 %v1909, 1.0
      %v1919 = vadd.f32 %v1911, 1.0
      %v1920 = vadd.f32 %v1913, 1.0
      %v1921 = vadd.f32 %v1915, 1.0
      %v1922 = vrcp.pop %v1916
      %v1923 = vmul.f32 1.0, %v1922
      %v1924 = vrcp.pop %v1917
      %v1925 = vmul.f32 1.0, %v1924
      %v1926 = vrcp.pop %v1918
      %v1927 = vmul.f32 1.0, %v1926
      %v1928 = vrcp.pop %v1919
      %v1929 = vmul.f32 1.0, %v1928
      %v1930 = vrcp.pop %v1920
      %v1931 = vmul.f32 1.0, %v1930
      %v1932 = vrcp.pop %v1921
      %v1933 = vmul.f32 1.0, %v1932
      %v1934 = vtanh.pop %v1892
      %v1935 = vtanh.pop %v1896
      %v1936 = vld [vmem:[#allocation3] sm:$0xff]
      %v1937 = vld [vmem:[#allocation3 + $0x8] sm:$0xff]
      %v1938 = vmul.f32 %v1925, %v1936
      %v1939 = vmul.f32 %v1931, %v1937
      %v1940 = vmul.f32 %v1923, %v1934
      %v1941 = vmul.f32 %v1929, %v1935
      %v1942 = vadd.f32 %v1938, %v1940
      %v1943 = vadd.f32 %v1939, %v1941
      %v1944 = vtanh.pop %v1942
      %v1945 = vtanh.pop %v1943
      %v1946 = vmul.f32 %v1927, %v1944
      %v1947 = vmul.f32 %v1933, %v1945
      %v1948 = vpack.c.bf16 %v1947, %v1946
      %1949 = vst [vmem:[#allocation3] sm:$0xff] %v1942
      %1950 = vst [vmem:[#allocation3 + $0x8] sm:$0xff] %v1943
      %v1952 = vunpack.c.l.b16 %v1948
      %v1953 = vunpack.c.h.b16 %v1948
      %v1954 = vpack.c.b16 %v1952, %v1952
      %v1955 = vpack.c.b16 %v1953, %v1953
      %1958 = vst [vmem:[#allocation2 + $0x8] sm:$0xf] %v1954
      %1959 = vst [vmem:[#allocation2 + $0x14] sm:$0xf] %v1955
      %s1960 = smul.u32 %s1698, 2
      %s1961 = smul.addr %s1960, 4
      %s1962 = scalar_lea.vmem %s280, %s1961
      %1963 = vst [vmem:[%s1962] sm:$0xf] %v1954
      %1964 = vst [vmem:[%s1962 + $0x4] sm:$0xf] %v1955
      %s1965 = ssub.s32 4, %s18
      %s1966 = smul.u32 %s1965, 4
      %s1967 = smul.addr %s1966, 4
      %s1968 = scalar_lea.vmem %s252, %s1967
      %v1969 = vld [vmem:[%s1968] sm:$0xff]
      %v1970 = vld [vmem:[%s1968 + $0x8] sm:$0xff]
      %1971 = vst [vmem:[#allocation2] sm:$0xff] %v1969
      %1972 = vst [vmem:[#allocation2 + $0xc] sm:$0xff] %v1970
      %v1973 = vld [vmem:[#allocation2] sm:$0xff]
      %v1974 = vld [vmem:[#allocation2 + $0x8] sm:$0xf]
      %v1975 = vld [vmem:[#allocation2 + $0xc] sm:$0xff]
      %v1976 = vld [vmem:[#allocation2 + $0x14] sm:$0xf]
      %v1981 = vunpack.c.l.b16 %v1973
      %v1982 = vunpack.c.h.b16 %v1973
      %v1983 = vunpack.c.l.b16 %v1974
      %v1984 = vunpack.c.l.b16 %v1975
      %v1985 = vunpack.c.h.b16 %v1975
      %v1986 = vunpack.c.l.b16 %v1976
      %v1987 = vpack.c.b16 %v1984, %v1981
      %v1988 = vpack.c.b16 %v1985, %v1982
      %v1989 = vpack.c.b16 %v1986, %v1983
      %1993 = vmatprep.subr.bf16.mxu0 %v760
      %1994 = vmatpush1.bf16.msra.mxu0 %v759
      %1995 = vmatprep.subr.bf16.mxu0 %v756
      %1996 = vmatpush1.bf16.msra.mxu0 %v755
      %1997 = vmatprep.subr.bf16.mxu0 %v752
      %1998 = vmatpush1.bf16.msra.mxu0 %v751
      %1999 = vmatprep.subr.bf16.mxu0 %v748
      %2000 = vmatpush1.bf16.msra.mxu0 %v747
      %2001 = vmatprep.subr.bf16.mxu0 %v744
      %2002 = vmatpush1.bf16.msra.mxu0 %v743
      %2003 = vmatprep.subr.bf16.mxu0 %v740
      %2004 = vmatpush1.bf16.msra.mxu0 %v739
      %2005 = vmatprep.subr.bf16.mxu0 %v736
      %2006 = vmatpush1.bf16.msra.mxu0 %v735
      %2007 = vmatprep.subr.bf16.mxu0 %v732
      %2008 = vmatpush1.bf16.msra.mxu0 %v731
      %2009 = vmatprep.subr.bf16.mxu0 %v792
      %2010 = vmatpush2.bf16.msra.mxu0 %v791
      %2011 = vmatprep.subr.bf16.mxu0 %v788
      %2012 = vmatpush2.bf16.msra.mxu0 %v787
      %2013 = vmatprep.subr.bf16.mxu0 %v784
      %2014 = vmatpush2.bf16.msra.mxu0 %v783
      %2015 = vmatprep.subr.bf16.mxu0 %v780
      %2016 = vmatpush2.bf16.msra.mxu0 %v779
      %2017 = vmatprep.subr.bf16.mxu0 %v776
      %2018 = vmatpush2.bf16.msra.mxu0 %v775
      %2019 = vmatprep.subr.bf16.mxu0 %v772
      %2020 = vmatpush2.bf16.msra.mxu0 %v771
      %2021 = vmatprep.subr.bf16.mxu0 %v768
      %2022 = vmatpush2.bf16.msra.mxu0 %v767
      %2023 = vmatprep.subr.bf16.mxu0 %v764
      %2024 = vmatpush2.bf16.msra.mxu0 %v763
      %2025 = vmatprep.mubr.bf16.mxu0 %v1988
      %2026 = vmatmul.mubr.bf16.gmra.mxu0 %v1987
      %v2027 = vpop.f32.mrf.mxu0
      %v2028 = vadd.f32 %v410, %v2027
      %v2029 = vpop.f32.mrf.mxu0
      %v2030 = vadd.f32 %v414, %v2029
      %v2031 = vpop.f32.mrf.mxu0
      %v2032 = vadd.f32 %v410, %v2031
      %v2033 = vpop.f32.mrf.mxu0
      %v2034 = vadd.f32 %v414, %v2033
      %2035 = vdwg.mxu0
      %2036 = vmatprep.subr.bf16.mxu0 %v824
      %2037 = vmatpush1.bf16.msra.mxu0 %v823
      %2038 = vmatprep.subr.bf16.mxu0 %v820
      %2039 = vmatpush1.bf16.msra.mxu0 %v819
      %2040 = vmatprep.subr.bf16.mxu0 %v816
      %2041 = vmatpush1.bf16.msra.mxu0 %v815
      %2042 = vmatprep.subr.bf16.mxu0 %v812
      %2043 = vmatpush1.bf16.msra.mxu0 %v811
      %2044 = vmatprep.subr.bf16.mxu0 %v808
      %2045 = vmatpush1.bf16.msra.mxu0 %v807
      %2046 = vmatprep.subr.bf16.mxu0 %v804
      %2047 = vmatpush1.bf16.msra.mxu0 %v803
      %2048 = vmatprep.subr.bf16.mxu0 %v800
      %2049 = vmatpush1.bf16.msra.mxu0 %v799
      %2050 = vmatprep.subr.bf16.mxu0 %v796
      %2051 = vmatpush1.bf16.msra.mxu0 %v795
      %2052 = vmatprep.subr.bf16.mxu0 0
      %2053 = vmatpush2.bf16.msra.mxu0 0
      %2054 = vmatprep.subr.bf16.mxu0 0
      %2055 = vmatpush2.bf16.msra.mxu0 0
      %2056 = vmatprep.subr.bf16.mxu0 0
      %2057 = vmatpush2.bf16.msra.mxu0 0
      %2058 = vmatprep.subr.bf16.mxu0 0
      %2059 = vmatpush2.bf16.msra.mxu0 0
      %2060 = vmatprep.subr.bf16.mxu0 0
      %2061 = vmatpush2.bf16.msra.mxu0 0
      %2062 = vmatprep.subr.bf16.mxu0 0
      %2063 = vmatpush2.bf16.msra.mxu0 0
      %2064 = vmatprep.subr.bf16.mxu0 0
      %2065 = vmatpush2.bf16.msra.mxu0 0
      %2066 = vmatprep.subr.bf16.mxu0 0
      %2067 = vmatpush2.bf16.msra.mxu0 0
      %2068 = vmatprep.mubr.bf16.mxu0 0
      %2069 = vmatmul.mubr.bf16.gmra.mxu0 %v1989
      %v2070 = vpop.f32.mrf.mxu0
      %v2071 = vadd.f32 %v2028, %v2070
      %v2072 = vpop.f32.mrf.mxu0
      %v2073 = vadd.f32 %v2030, %v2072
      %v2074 = vpop.f32.mrf.mxu0
      %v2075 = vadd.f32 %v2032, %v2074
      %v2076 = vpop.f32.mrf.mxu0
      %v2077 = vadd.f32 %v2034, %v2076
      %2078 = vdwg.mxu0
      %2079 = vmatprep.subr.bf16.mxu0 %v762
      %2080 = vmatpush1.bf16.msra.mxu0 %v761
      %2081 = vmatprep.subr.bf16.mxu0 %v758
      %2082 = vmatpush1.bf16.msra.mxu0 %v757
      %2083 = vmatprep.subr.bf16.mxu0 %v754
      %2084 = vmatpush1.bf16.msra.mxu0 %v753
      %2085 = vmatprep.subr.bf16.mxu0 %v750
      %2086 = vmatpush1.bf16.msra.mxu0 %v749
      %2087 = vmatprep.subr.bf16.mxu0 %v746
      %2088 = vmatpush1.bf16.msra.mxu0 %v745
      %2089 = vmatprep.subr.bf16.mxu0 %v742
      %2090 = vmatpush1.bf16.msra.mxu0 %v741
      %2091 = vmatprep.subr.bf16.mxu0 %v738
      %2092 = vmatpush1.bf16.msra.mxu0 %v737
      %2093 = vmatprep.subr.bf16.mxu0 %v734
      %2094 = vmatpush1.bf16.msra.mxu0 %v733
      %2095 = vmatprep.subr.bf16.mxu0 %v794
      %2096 = vmatpush2.bf16.msra.mxu0 %v793
      %2097 = vmatprep.subr.bf16.mxu0 %v790
      %2098 = vmatpush2.bf16.msra.mxu0 %v789
      %2099 = vmatprep.subr.bf16.mxu0 %v786
      %2100 = vmatpush2.bf16.msra.mxu0 %v785
      %2101 = vmatprep.subr.bf16.mxu0 %v782
      %2102 = vmatpush2.bf16.msra.mxu0 %v781
      %2103 = vmatprep.subr.bf16.mxu0 %v778
      %2104 = vmatpush2.bf16.msra.mxu0 %v777
      %2105 = vmatprep.subr.bf16.mxu0 %v774
      %2106 = vmatpush2.bf16.msra.mxu0 %v773
      %2107 = vmatprep.subr.bf16.mxu0 %v770
      %2108 = vmatpush2.bf16.msra.mxu0 %v769
      %2109 = vmatprep.subr.bf16.mxu0 %v766
      %2110 = vmatpush2.bf16.msra.mxu0 %v765
      %2111 = vmatprep.mubr.bf16.mxu0 %v1988
      %2112 = vmatmul.mubr.bf16.gmra.mxu0 %v1987
      %v2113 = vpop.f32.mrf.mxu0
      %v2114 = vadd.f32 %v418, %v2113
      %v2115 = vpop.f32.mrf.mxu0
      %v2116 = vadd.f32 %v422, %v2115
      %v2117 = vpop.f32.mrf.mxu0
      %v2118 = vadd.f32 %v418, %v2117
      %v2119 = vpop.f32.mrf.mxu0
      %v2120 = vadd.f32 %v422, %v2119
      %2121 = vdwg.mxu0
      %2122 = vmatprep.subr.bf16.mxu0 %v826
      %2123 = vmatpush1.bf16.msra.mxu0 %v825
      %2124 = vmatprep.subr.bf16.mxu0 %v822
      %2125 = vmatpush1.bf16.msra.mxu0 %v821
      %2126 = vmatprep.subr.bf16.mxu0 %v818
      %2127 = vmatpush1.bf16.msra.mxu0 %v817
      %2128 = vmatprep.subr.bf16.mxu0 %v814
      %2129 = vmatpush1.bf16.msra.mxu0 %v813
      %2130 = vmatprep.subr.bf16.mxu0 %v810
      %2131 = vmatpush1.bf16.msra.mxu0 %v809
      %2132 = vmatprep.subr.bf16.mxu0 %v806
      %2133 = vmatpush1.bf16.msra.mxu0 %v805
      %2134 = vmatprep.subr.bf16.mxu0 %v802
      %2135 = vmatpush1.bf16.msra.mxu0 %v801
      %2136 = vmatprep.subr.bf16.mxu0 %v798
      %2137 = vmatpush1.bf16.msra.mxu0 %v797
      %2138 = vmatprep.subr.bf16.mxu0 0
      %2139 = vmatpush2.bf16.msra.mxu0 0
      %2140 = vmatprep.subr.bf16.mxu0 0
      %2141 = vmatpush2.bf16.msra.mxu0 0
      %2142 = vmatprep.subr.bf16.mxu0 0
      %2143 = vmatpush2.bf16.msra.mxu0 0
      %2144 = vmatprep.subr.bf16.mxu0 0
      %2145 = vmatpush2.bf16.msra.mxu0 0
      %2146 = vmatprep.subr.bf16.mxu0 0
      %2147 = vmatpush2.bf16.msra.mxu0 0
      %2148 = vmatprep.subr.bf16.mxu0 0
      %2149 = vmatpush2.bf16.msra.mxu0 0
      %2150 = vmatprep.subr.bf16.mxu0 0
      %2151 = vmatpush2.bf16.msra.mxu0 0
      %2152 = vmatprep.subr.bf16.mxu0 0
      %2153 = vmatpush2.bf16.msra.mxu0 0
      %2154 = vmatprep.mubr.bf16.mxu0 0
      %2155 = vmatmul.mubr.bf16.gmra.mxu0 %v1989
      %v2156 = vpop.f32.mrf.mxu0
      %v2157 = vadd.f32 %v2114, %v2156
      %v2158 = vpop.f32.mrf.mxu0
      %v2159 = vadd.f32 %v2116, %v2158
      %v2160 = vpop.f32.mrf.mxu0
      %v2161 = vadd.f32 %v2118, %v2160
      %v2162 = vpop.f32.mrf.mxu0
      %v2163 = vadd.f32 %v2120, %v2162
      %2164 = vdwg.mxu0
      %v2165 = vxor.u32 %v2071, 2147483648
      %v2166 = vxor.u32 %v2073, 2147483648
      %v2167 = vxor.u32 %v2157, 2147483648
      %v2168 = vxor.u32 %v2075, 2147483648
      %v2169 = vxor.u32 %v2077, 2147483648
      %v2170 = vxor.u32 %v2161, 2147483648
      %v2171 = vmul.f32 %v2165, 1.442695
      %v2172 = vpow.pop %v2171
      %v2173 = vmul.f32 %v2166, 1.442695
      %v2174 = vpow.pop %v2173
      %v2175 = vmul.f32 %v2167, 1.442695
      %v2176 = vpow.pop %v2175
      %v2177 = vmul.f32 %v2168, 1.442695
      %v2178 = vpow.pop %v2177
      %v2179 = vmul.f32 %v2169, 1.442695
      %v2180 = vpow.pop %v2179
      %v2181 = vmul.f32 %v2170, 1.442695
      %v2182 = vpow.pop %v2181
      %v2183 = vadd.f32 %v2172, 1.0
      %v2184 = vadd.f32 %v2174, 1.0
      %v2185 = vadd.f32 %v2176, 1.0
      %v2186 = vadd.f32 %v2178, 1.0
      %v2187 = vadd.f32 %v2180, 1.0
      %v2188 = vadd.f32 %v2182, 1.0
      %v2189 = vrcp.pop %v2183
      %v2190 = vmul.f32 1.0, %v2189
      %v2191 = vrcp.pop %v2184
      %v2192 = vmul.f32 1.0, %v2191
      %v2193 = vrcp.pop %v2185
      %v2194 = vmul.f32 1.0, %v2193
      %v2195 = vrcp.pop %v2186
      %v2196 = vmul.f32 1.0, %v2195
      %v2197 = vrcp.pop %v2187
      %v2198 = vmul.f32 1.0, %v2197
      %v2199 = vrcp.pop %v2188
      %v2200 = vmul.f32 1.0, %v2199
      %v2201 = vtanh.pop %v2159
      %v2202 = vtanh.pop %v2163
      %v2203 = vld [vmem:[#allocation3] sm:$0xff]
      %v2204 = vld [vmem:[#allocation3 + $0x8] sm:$0xff]
      %v2205 = vmul.f32 %v2192, %v2203
      %v2206 = vmul.f32 %v2198, %v2204
      %v2207 = vmul.f32 %v2190, %v2201
      %v2208 = vmul.f32 %v2196, %v2202
      %v2209 = vadd.f32 %v2205, %v2207
      %v2210 = vadd.f32 %v2206, %v2208
      %v2211 = vtanh.pop %v2209
      %v2212 = vtanh.pop %v2210
      %v2213 = vmul.f32 %v2194, %v2211
      %v2214 = vmul.f32 %v2200, %v2212
      %v2215 = vpack.c.bf16 %v2214, %v2213
      %2216 = vst [vmem:[#allocation3] sm:$0xff] %v2209
      %2217 = vst [vmem:[#allocation3 + $0x8] sm:$0xff] %v2210
      %v2219 = vunpack.c.l.b16 %v2215
      %v2220 = vunpack.c.h.b16 %v2215
      %v2221 = vpack.c.b16 %v2219, %v2219
      %v2222 = vpack.c.b16 %v2220, %v2220
      %2225 = vst [vmem:[#allocation2 + $0x8] sm:$0xf] %v2221
      %2226 = vst [vmem:[#allocation2 + $0x14] sm:$0xf] %v2222
      %s2227 = smul.u32 %s1965, 2
      %s2228 = smul.addr %s2227, 4
      %s2229 = scalar_lea.vmem %s280, %s2228
      %2230 = vst [vmem:[%s2229] sm:$0xf] %v2221
      %2231 = vst [vmem:[%s2229 + $0x4] sm:$0xf] %v2222
      %s2232 = smul.u32 %s18, 4294967293
      %s2233 = sadd.s32 %s2232, 5
      %s2234 = smul.u32 %s2233, 4
      %s2235 = smul.addr %s2234, 4
      %s2236 = scalar_lea.vmem %s252, %s2235
      %v2237 = vld [vmem:[%s2236] sm:$0xff]
      %v2238 = vld [vmem:[%s2236 + $0x8] sm:$0xff]
      %2239 = vst [vmem:[#allocation2] sm:$0xff] %v2237
      %2240 = vst [vmem:[#allocation2 + $0xc] sm:$0xff] %v2238
      %v2241 = vld [vmem:[#allocation2] sm:$0xff]
      %v2242 = vld [vmem:[#allocation2 + $0x8] sm:$0xf]
      %v2243 = vld [vmem:[#allocation2 + $0xc] sm:$0xff]
      %v2244 = vld [vmem:[#allocation2 + $0x14] sm:$0xf]
      %v2249 = vunpack.c.l.b16 %v2241
      %v2250 = vunpack.c.h.b16 %v2241
      %v2251 = vunpack.c.l.b16 %v2242
      %v2252 = vunpack.c.l.b16 %v2243
      %v2253 = vunpack.c.h.b16 %v2243
      %v2254 = vunpack.c.l.b16 %v2244
      %v2255 = vpack.c.b16 %v2252, %v2249
      %v2256 = vpack.c.b16 %v2253, %v2250
      %v2257 = vpack.c.b16 %v2254, %v2251
      %2261 = vmatprep.subr.bf16.mxu0 %v760
      %2262 = vmatpush1.bf16.msra.mxu0 %v759
      %2263 = vmatprep.subr.bf16.mxu0 %v756
      %2264 = vmatpush1.bf16.msra.mxu0 %v755
      %2265 = vmatprep.subr.bf16.mxu0 %v752
      %2266 = vmatpush1.bf16.msra.mxu0 %v751
      %2267 = vmatprep.subr.bf16.mxu0 %v748
      %2268 = vmatpush1.bf16.msra.mxu0 %v747
      %2269 = vmatprep.subr.bf16.mxu0 %v744
      %2270 = vmatpush1.bf16.msra.mxu0 %v743
      %2271 = vmatprep.subr.bf16.mxu0 %v740
      %2272 = vmatpush1.bf16.msra.mxu0 %v739
      %2273 = vmatprep.subr.bf16.mxu0 %v736
      %2274 = vmatpush1.bf16.msra.mxu0 %v735
      %2275 = vmatprep.subr.bf16.mxu0 %v732
      %2276 = vmatpush1.bf16.msra.mxu0 %v731
      %2277 = vmatprep.subr.bf16.mxu0 %v792
      %2278 = vmatpush2.bf16.msra.mxu0 %v791
      %2279 = vmatprep.subr.bf16.mxu0 %v788
      %2280 = vmatpush2.bf16.msra.mxu0 %v787
      %2281 = vmatprep.subr.bf16.mxu0 %v784
      %2282 = vmatpush2.bf16.msra.mxu0 %v783
      %2283 = vmatprep.subr.bf16.mxu0 %v780
      %2284 = vmatpush2.bf16.msra.mxu0 %v779
      %2285 = vmatprep.subr.bf16.mxu0 %v776
      %2286 = vmatpush2.bf16.msra.mxu0 %v775
      %2287 = vmatprep.subr.bf16.mxu0 %v772
      %2288 = vmatpush2.bf16.msra.mxu0 %v771
      %2289 = vmatprep.subr.bf16.mxu0 %v768
      %2290 = vmatpush2.bf16.msra.mxu0 %v767
      %2291 = vmatprep.subr.bf16.mxu0 %v764
      %2292 = vmatpush2.bf16.msra.mxu0 %v763
      %2293 = vmatprep.mubr.bf16.mxu0 %v2256
      %2294 = vmatmul.mubr.bf16.gmra.mxu0 %v2255
      %v2295 = vpop.f32.mrf.mxu0
      %v2296 = vadd.f32 %v410, %v2295
      %v2297 = vpop.f32.mrf.mxu0
      %v2298 = vadd.f32 %v414, %v2297
      %v2299 = vpop.f32.mrf.mxu0
      %v2300 = vadd.f32 %v410, %v2299
      %v2301 = vpop.f32.mrf.mxu0
      %v2302 = vadd.f32 %v414, %v2301
      %2303 = vdwg.mxu0
      %2304 = vmatprep.subr.bf16.mxu0 %v824
      %2305 = vmatpush1.bf16.msra.mxu0 %v823
      %2306 = vmatprep.subr.bf16.mxu0 %v820
      %2307 = vmatpush1.bf16.msra.mxu0 %v819
      %2308 = vmatprep.subr.bf16.mxu0 %v816
      %2309 = vmatpush1.bf16.msra.mxu0 %v815
      %2310 = vmatprep.subr.bf16.mxu0 %v812
      %2311 = vmatpush1.bf16.msra.mxu0 %v811
      %2312 = vmatprep.subr.bf16.mxu0 %v808
      %2313 = vmatpush1.bf16.msra.mxu0 %v807
      %2314 = vmatprep.subr.bf16.mxu0 %v804
      %2315 = vmatpush1.bf16.msra.mxu0 %v803
      %2316 = vmatprep.subr.bf16.mxu0 %v800
      %2317 = vmatpush1.bf16.msra.mxu0 %v799
      %2318 = vmatprep.subr.bf16.mxu0 %v796
      %2319 = vmatpush1.bf16.msra.mxu0 %v795
      %2320 = vmatprep.subr.bf16.mxu0 0
      %2321 = vmatpush2.bf16.msra.mxu0 0
      %2322 = vmatprep.subr.bf16.mxu0 0
      %2323 = vmatpush2.bf16.msra.mxu0 0
      %2324 = vmatprep.subr.bf16.mxu0 0
      %2325 = vmatpush2.bf16.msra.mxu0 0
      %2326 = vmatprep.subr.bf16.mxu0 0
      %2327 = vmatpush2.bf16.msra.mxu0 0
      %2328 = vmatprep.subr.bf16.mxu0 0
      %2329 = vmatpush2.bf16.msra.mxu0 0
      %2330 = vmatprep.subr.bf16.mxu0 0
      %2331 = vmatpush2.bf16.msra.mxu0 0
      %2332 = vmatprep.subr.bf16.mxu0 0
      %2333 = vmatpush2.bf16.msra.mxu0 0
      %2334 = vmatprep.subr.bf16.mxu0 0
      %2335 = vmatpush2.bf16.msra.mxu0 0
      %2336 = vmatprep.mubr.bf16.mxu0 0
      %2337 = vmatmul.mubr.bf16.gmra.mxu0 %v2257
      %v2338 = vpop.f32.mrf.mxu0
      %v2339 = vadd.f32 %v2296, %v2338
      %v2340 = vpop.f32.mrf.mxu0
      %v2341 = vadd.f32 %v2298, %v2340
      %v2342 = vpop.f32.mrf.mxu0
      %v2343 = vadd.f32 %v2300, %v2342
      %v2344 = vpop.f32.mrf.mxu0
      %v2345 = vadd.f32 %v2302, %v2344
      %2346 = vdwg.mxu0
      %2347 = vmatprep.subr.bf16.mxu0 %v762
      %2348 = vmatpush1.bf16.msra.mxu0 %v761
      %2349 = vmatprep.subr.bf16.mxu0 %v758
      %2350 = vmatpush1.bf16.msra.mxu0 %v757
      %2351 = vmatprep.subr.bf16.mxu0 %v754
      %2352 = vmatpush1.bf16.msra.mxu0 %v753
      %2353 = vmatprep.subr.bf16.mxu0 %v750
      %2354 = vmatpush1.bf16.msra.mxu0 %v749
      %2355 = vmatprep.subr.bf16.mxu0 %v746
      %2356 = vmatpush1.bf16.msra.mxu0 %v745
      %2357 = vmatprep.subr.bf16.mxu0 %v742
      %2358 = vmatpush1.bf16.msra.mxu0 %v741
      %2359 = vmatprep.subr.bf16.mxu0 %v738
      %2360 = vmatpush1.bf16.msra.mxu0 %v737
      %2361 = vmatprep.subr.bf16.mxu0 %v734
      %2362 = vmatpush1.bf16.msra.mxu0 %v733
      %2363 = vmatprep.subr.bf16.mxu0 %v794
      %2364 = vmatpush2.bf16.msra.mxu0 %v793
      %2365 = vmatprep.subr.bf16.mxu0 %v790
      %2366 = vmatpush2.bf16.msra.mxu0 %v789
      %2367 = vmatprep.subr.bf16.mxu0 %v786
      %2368 = vmatpush2.bf16.msra.mxu0 %v785
      %2369 = vmatprep.subr.bf16.mxu0 %v782
      %2370 = vmatpush2.bf16.msra.mxu0 %v781
      %2371 = vmatprep.subr.bf16.mxu0 %v778
      %2372 = vmatpush2.bf16.msra.mxu0 %v777
      %2373 = vmatprep.subr.bf16.mxu0 %v774
      %2374 = vmatpush2.bf16.msra.mxu0 %v773
      %2375 = vmatprep.subr.bf16.mxu0 %v770
      %2376 = vmatpush2.bf16.msra.mxu0 %v769
      %2377 = vmatprep.subr.bf16.mxu0 %v766
      %2378 = vmatpush2.bf16.msra.mxu0 %v765
      %2379 = vmatprep.mubr.bf16.mxu0 %v2256
      %2380 = vmatmul.mubr.bf16.gmra.mxu0 %v2255
      %v2381 = vpop.f32.mrf.mxu0
      %v2382 = vadd.f32 %v418, %v2381
      %v2383 = vpop.f32.mrf.mxu0
      %v2384 = vadd.f32 %v422, %v2383
      %v2385 = vpop.f32.mrf.mxu0
      %v2386 = vadd.f32 %v418, %v2385
      %v2387 = vpop.f32.mrf.mxu0
      %v2388 = vadd.f32 %v422, %v2387
      %2389 = vdwg.mxu0
      %2390 = vmatprep.subr.bf16.mxu0 %v826
      %2391 = vmatpush1.bf16.msra.mxu0 %v825
      %2392 = vmatprep.subr.bf16.mxu0 %v822
      %2393 = vmatpush1.bf16.msra.mxu0 %v821
      %2394 = vmatprep.subr.bf16.mxu0 %v818
      %2395 = vmatpush1.bf16.msra.mxu0 %v817
      %2396 = vmatprep.subr.bf16.mxu0 %v814
      %2397 = vmatpush1.bf16.msra.mxu0 %v813
      %2398 = vmatprep.subr.bf16.mxu0 %v810
      %2399 = vmatpush1.bf16.msra.mxu0 %v809
      %2400 = vmatprep.subr.bf16.mxu0 %v806
      %2401 = vmatpush1.bf16.msra.mxu0 %v805
      %2402 = vmatprep.subr.bf16.mxu0 %v802
      %2403 = vmatpush1.bf16.msra.mxu0 %v801
      %2404 = vmatprep.subr.bf16.mxu0 %v798
      %2405 = vmatpush1.bf16.msra.mxu0 %v797
      %2406 = vmatprep.subr.bf16.mxu0 0
      %2407 = vmatpush2.bf16.msra.mxu0 0
      %2408 = vmatprep.subr.bf16.mxu0 0
      %2409 = vmatpush2.bf16.msra.mxu0 0
      %2410 = vmatprep.subr.bf16.mxu0 0
      %2411 = vmatpush2.bf16.msra.mxu0 0
      %2412 = vmatprep.subr.bf16.mxu0 0
      %2413 = vmatpush2.bf16.msra.mxu0 0
      %2414 = vmatprep.subr.bf16.mxu0 0
      %2415 = vmatpush2.bf16.msra.mxu0 0
      %2416 = vmatprep.subr.bf16.mxu0 0
      %2417 = vmatpush2.bf16.msra.mxu0 0
      %2418 = vmatprep.subr.bf16.mxu0 0
      %2419 = vmatpush2.bf16.msra.mxu0 0
      %2420 = vmatprep.subr.bf16.mxu0 0
      %2421 = vmatpush2.bf16.msra.mxu0 0
      %2422 = vmatprep.mubr.bf16.mxu0 0
      %2423 = vmatmul.mubr.bf16.gmra.mxu0 %v2257
      %v2424 = vpop.f32.mrf.mxu0
      %v2425 = vadd.f32 %v2382, %v2424
      %v2426 = vpop.f32.mrf.mxu0
      %v2427 = vadd.f32 %v2384, %v2426
      %v2428 = vpop.f32.mrf.mxu0
      %v2429 = vadd.f32 %v2386, %v2428
      %v2430 = vpop.f32.mrf.mxu0
      %v2431 = vadd.f32 %v2388, %v2430
      %2432 = vdwg.mxu0
      %v2433 = vxor.u32 %v2339, 2147483648
      %v2434 = vxor.u32 %v2341, 2147483648
      %v2435 = vxor.u32 %v2425, 2147483648
      %v2436 = vxor.u32 %v2343, 2147483648
      %v2437 = vxor.u32 %v2345, 2147483648
      %v2438 = vxor.u32 %v2429, 2147483648
      %v2439 = vmul.f32 %v2433, 1.442695
      %v2440 = vpow.pop %v2439
      %v2441 = vmul.f32 %v2434, 1.442695
      %v2442 = vpow.pop %v2441
      %v2443 = vmul.f32 %v2435, 1.442695
      %v2444 = vpow.pop %v2443
      %v2445 = vmul.f32 %v2436, 1.442695
      %v2446 = vpow.pop %v2445
      %v2447 = vmul.f32 %v2437, 1.442695
      %v2448 = vpow.pop %v2447
      %v2449 = vmul.f32 %v2438, 1.442695
      %v2450 = vpow.pop %v2449
      %v2451 = vadd.f32 %v2440, 1.0
      %v2452 = vadd.f32 %v2442, 1.0
      %v2453 = vadd.f32 %v2444, 1.0
      %v2454 = vadd.f32 %v2446, 1.0
      %v2455 = vadd.f32 %v2448, 1.0
      %v2456 = vadd.f32 %v2450, 1.0
      %v2457 = vrcp.pop %v2451
      %v2458 = vmul.f32 1.0, %v2457
      %v2459 = vrcp.pop %v2452
      %v2460 = vmul.f32 1.0, %v2459
      %v2461 = vrcp.pop %v2453
      %v2462 = vmul.f32 1.0, %v2461
      %v2463 = vrcp.pop %v2454
      %v2464 = vmul.f32 1.0, %v2463
      %v2465 = vrcp.pop %v2455
      %v2466 = vmul.f32 1.0, %v2465
      %v2467 = vrcp.pop %v2456
      %v2468 = vmul.f32 1.0, %v2467
      %v2469 = vtanh.pop %v2427
      %v2470 = vtanh.pop %v2431
      %v2471 = vld [vmem:[#allocation3] sm:$0xff]
      %v2472 = vld [vmem:[#allocation3 + $0x8] sm:$0xff]
      %v2473 = vmul.f32 %v2460, %v2471
      %v2474 = vmul.f32 %v2466, %v2472
      %v2475 = vmul.f32 %v2458, %v2469
      %v2476 = vmul.f32 %v2464, %v2470
      %v2477 = vadd.f32 %v2473, %v2475
      %v2478 = vadd.f32 %v2474, %v2476
      %v2479 = vtanh.pop %v2477
      %v2480 = vtanh.pop %v2478
      %v2481 = vmul.f32 %v2462, %v2479
      %v2482 = vmul.f32 %v2468, %v2480
      %v2483 = vpack.c.bf16 %v2482, %v2481
      %2484 = vst [vmem:[#allocation3] sm:$0xff] %v2477
      %2485 = vst [vmem:[#allocation3 + $0x8] sm:$0xff] %v2478
      %v2487 = vunpack.c.l.b16 %v2483
      %v2488 = vunpack.c.h.b16 %v2483
      %v2489 = vpack.c.b16 %v2487, %v2487
      %v2490 = vpack.c.b16 %v2488, %v2488
      %2493 = vst [vmem:[#allocation2 + $0x8] sm:$0xf] %v2489
      %2494 = vst [vmem:[#allocation2 + $0x14] sm:$0xf] %v2490
      %s2495 = smul.u32 %s2233, 2
      %s2496 = smul.addr %s2495, 4
      %s2497 = scalar_lea.vmem %s280, %s2496
      %2498 = vst [vmem:[%s2497] sm:$0xf] %v2489
      %2499 = vst [vmem:[%s2497 + $0x4] sm:$0xf] %v2490
      %s2500 = smul.u32 %s18, 4294967291
      %s2501 = sadd.s32 %s2500, 6
      %s2502 = smul.u32 %s2501, 4
      %s2503 = smul.addr %s2502, 4
      %s2504 = scalar_lea.vmem %s252, %s2503
      %v2505 = vld [vmem:[%s2504] sm:$0xff]
      %v2506 = vld [vmem:[%s2504 + $0x8] sm:$0xff]
      %2507 = vst [vmem:[#allocation2] sm:$0xff] %v2505
      %2508 = vst [vmem:[#allocation2 + $0xc] sm:$0xff] %v2506
      %v2509 = vld [vmem:[#allocation2] sm:$0xff]
      %v2510 = vld [vmem:[#allocation2 + $0x8] sm:$0xf]
      %v2511 = vld [vmem:[#allocation2 + $0xc] sm:$0xff]
      %v2512 = vld [vmem:[#allocation2 + $0x14] sm:$0xf]
      %v2517 = vunpack.c.l.b16 %v2509
      %v2518 = vunpack.c.h.b16 %v2509
      %v2519 = vunpack.c.l.b16 %v2510
      %v2520 = vunpack.c.l.b16 %v2511
      %v2521 = vunpack.c.h.b16 %v2511
      %v2522 = vunpack.c.l.b16 %v2512
      %v2523 = vpack.c.b16 %v2520, %v2517
      %v2524 = vpack.c.b16 %v2521, %v2518
      %v2525 = vpack.c.b16 %v2522, %v2519
      %2529 = vmatprep.subr.bf16.mxu0 %v760
      %2530 = vmatpush1.bf16.msra.mxu0 %v759
      %2531 = vmatprep.subr.bf16.mxu0 %v756
      %2532 = vmatpush1.bf16.msra.mxu0 %v755
      %2533 = vmatprep.subr.bf16.mxu0 %v752
      %2534 = vmatpush1.bf16.msra.mxu0 %v751
      %2535 = vmatprep.subr.bf16.mxu0 %v748
      %2536 = vmatpush1.bf16.msra.mxu0 %v747
      %2537 = vmatprep.subr.bf16.mxu0 %v744
      %2538 = vmatpush1.bf16.msra.mxu0 %v743
      %2539 = vmatprep.subr.bf16.mxu0 %v740
      %2540 = vmatpush1.bf16.msra.mxu0 %v739
      %2541 = vmatprep.subr.bf16.mxu0 %v736
      %2542 = vmatpush1.bf16.msra.mxu0 %v735
      %2543 = vmatprep.subr.bf16.mxu0 %v732
      %2544 = vmatpush1.bf16.msra.mxu0 %v731
      %2545 = vmatprep.subr.bf16.mxu0 %v792
      %2546 = vmatpush2.bf16.msra.mxu0 %v791
      %2547 = vmatprep.subr.bf16.mxu0 %v788
      %2548 = vmatpush2.bf16.msra.mxu0 %v787
      %2549 = vmatprep.subr.bf16.mxu0 %v784
      %2550 = vmatpush2.bf16.msra.mxu0 %v783
      %2551 = vmatprep.subr.bf16.mxu0 %v780
      %2552 = vmatpush2.bf16.msra.mxu0 %v779
      %2553 = vmatprep.subr.bf16.mxu0 %v776
      %2554 = vmatpush2.bf16.msra.mxu0 %v775
      %2555 = vmatprep.subr.bf16.mxu0 %v772
      %2556 = vmatpush2.bf16.msra.mxu0 %v771
      %2557 = vmatprep.subr.bf16.mxu0 %v768
      %2558 = vmatpush2.bf16.msra.mxu0 %v767
      %2559 = vmatprep.subr.bf16.mxu0 %v764
      %2560 = vmatpush2.bf16.msra.mxu0 %v763
      %2561 = vmatprep.mubr.bf16.mxu0 %v2524
      %2562 = vmatmul.mubr.bf16.gmra.mxu0 %v2523
      %v2563 = vpop.f32.mrf.mxu0
      %v2564 = vadd.f32 %v410, %v2563
      %v2565 = vpop.f32.mrf.mxu0
      %v2566 = vadd.f32 %v414, %v2565
      %v2567 = vpop.f32.mrf.mxu0
      %v2568 = vadd.f32 %v410, %v2567
      %v2569 = vpop.f32.mrf.mxu0
      %v2570 = vadd.f32 %v414, %v2569
      %2571 = vdwg.mxu0
      %2572 = vmatprep.subr.bf16.mxu0 %v824
      %2573 = vmatpush1.bf16.msra.mxu0 %v823
      %2574 = vmatprep.subr.bf16.mxu0 %v820
      %2575 = vmatpush1.bf16.msra.mxu0 %v819
      %2576 = vmatprep.subr.bf16.mxu0 %v816
      %2577 = vmatpush1.bf16.msra.mxu0 %v815
      %2578 = vmatprep.subr.bf16.mxu0 %v812
      %2579 = vmatpush1.bf16.msra.mxu0 %v811
      %2580 = vmatprep.subr.bf16.mxu0 %v808
      %2581 = vmatpush1.bf16.msra.mxu0 %v807
      %2582 = vmatprep.subr.bf16.mxu0 %v804
      %2583 = vmatpush1.bf16.msra.mxu0 %v803
      %2584 = vmatprep.subr.bf16.mxu0 %v800
      %2585 = vmatpush1.bf16.msra.mxu0 %v799
      %2586 = vmatprep.subr.bf16.mxu0 %v796
      %2587 = vmatpush1.bf16.msra.mxu0 %v795
      %2588 = vmatprep.subr.bf16.mxu0 0
      %2589 = vmatpush2.bf16.msra.mxu0 0
      %2590 = vmatprep.subr.bf16.mxu0 0
      %2591 = vmatpush2.bf16.msra.mxu0 0
      %2592 = vmatprep.subr.bf16.mxu0 0
      %2593 = vmatpush2.bf16.msra.mxu0 0
      %2594 = vmatprep.subr.bf16.mxu0 0
      %2595 = vmatpush2.bf16.msra.mxu0 0
      %2596 = vmatprep.subr.bf16.mxu0 0
      %2597 = vmatpush2.bf16.msra.mxu0 0
      %2598 = vmatprep.subr.bf16.mxu0 0
      %2599 = vmatpush2.bf16.msra.mxu0 0
      %2600 = vmatprep.subr.bf16.mxu0 0
      %2601 = vmatpush2.bf16.msra.mxu0 0
      %2602 = vmatprep.subr.bf16.mxu0 0
      %2603 = vmatpush2.bf16.msra.mxu0 0
      %2604 = vmatprep.mubr.bf16.mxu0 0
      %2605 = vmatmul.mubr.bf16.gmra.mxu0 %v2525
      %v2606 = vpop.f32.mrf.mxu0
      %v2607 = vadd.f32 %v2564, %v2606
      %v2608 = vpop.f32.mrf.mxu0
      %v2609 = vadd.f32 %v2566, %v2608
      %v2610 = vpop.f32.mrf.mxu0
      %v2611 = vadd.f32 %v2568, %v2610
      %v2612 = vpop.f32.mrf.mxu0
      %v2613 = vadd.f32 %v2570, %v2612
      %2614 = vdwg.mxu0
      %2615 = vmatprep.subr.bf16.mxu0 %v762
      %2616 = vmatpush1.bf16.msra.mxu0 %v761
      %2617 = vmatprep.subr.bf16.mxu0 %v758
      %2618 = vmatpush1.bf16.msra.mxu0 %v757
      %2619 = vmatprep.subr.bf16.mxu0 %v754
      %2620 = vmatpush1.bf16.msra.mxu0 %v753
      %2621 = vmatprep.subr.bf16.mxu0 %v750
      %2622 = vmatpush1.bf16.msra.mxu0 %v749
      %2623 = vmatprep.subr.bf16.mxu0 %v746
      %2624 = vmatpush1.bf16.msra.mxu0 %v745
      %2625 = vmatprep.subr.bf16.mxu0 %v742
      %2626 = vmatpush1.bf16.msra.mxu0 %v741
      %2627 = vmatprep.subr.bf16.mxu0 %v738
      %2628 = vmatpush1.bf16.msra.mxu0 %v737
      %2629 = vmatprep.subr.bf16.mxu0 %v734
      %2630 = vmatpush1.bf16.msra.mxu0 %v733
      %2631 = vmatprep.subr.bf16.mxu0 %v794
      %2632 = vmatpush2.bf16.msra.mxu0 %v793
      %2633 = vmatprep.subr.bf16.mxu0 %v790
      %2634 = vmatpush2.bf16.msra.mxu0 %v789
      %2635 = vmatprep.subr.bf16.mxu0 %v786
      %2636 = vmatpush2.bf16.msra.mxu0 %v785
      %2637 = vmatprep.subr.bf16.mxu0 %v782
      %2638 = vmatpush2.bf16.msra.mxu0 %v781
      %2639 = vmatprep.subr.bf16.mxu0 %v778
      %2640 = vmatpush2.bf16.msra.mxu0 %v777
      %2641 = vmatprep.subr.bf16.mxu0 %v774
      %2642 = vmatpush2.bf16.msra.mxu0 %v773
      %2643 = vmatprep.subr.bf16.mxu0 %v770
      %2644 = vmatpush2.bf16.msra.mxu0 %v769
      %2645 = vmatprep.subr.bf16.mxu0 %v766
      %2646 = vmatpush2.bf16.msra.mxu0 %v765
      %2647 = vmatprep.mubr.bf16.mxu0 %v2524
      %2648 = vmatmul.mubr.bf16.gmra.mxu0 %v2523
      %v2649 = vpop.f32.mrf.mxu0
      %v2650 = vadd.f32 %v418, %v2649
      %v2651 = vpop.f32.mrf.mxu0
      %v2652 = vadd.f32 %v422, %v2651
      %v2653 = vpop.f32.mrf.mxu0
      %v2654 = vadd.f32 %v418, %v2653
      %v2655 = vpop.f32.mrf.mxu0
      %v2656 = vadd.f32 %v422, %v2655
      %2657 = vdwg.mxu0
      %2658 = vmatprep.subr.bf16.mxu0 %v826
      %2659 = vmatpush1.bf16.msra.mxu0 %v825
      %2660 = vmatprep.subr.bf16.mxu0 %v822
      %2661 = vmatpush1.bf16.msra.mxu0 %v821
      %2662 = vmatprep.subr.bf16.mxu0 %v818
      %2663 = vmatpush1.bf16.msra.mxu0 %v817
      %2664 = vmatprep.subr.bf16.mxu0 %v814
      %2665 = vmatpush1.bf16.msra.mxu0 %v813
      %2666 = vmatprep.subr.bf16.mxu0 %v810
      %2667 = vmatpush1.bf16.msra.mxu0 %v809
      %2668 = vmatprep.subr.bf16.mxu0 %v806
      %2669 = vmatpush1.bf16.msra.mxu0 %v805
      %2670 = vmatprep.subr.bf16.mxu0 %v802
      %2671 = vmatpush1.bf16.msra.mxu0 %v801
      %2672 = vmatprep.subr.bf16.mxu0 %v798
      %2673 = vmatpush1.bf16.msra.mxu0 %v797
      %2674 = vmatprep.subr.bf16.mxu0 0
      %2675 = vmatpush2.bf16.msra.mxu0 0
      %2676 = vmatprep.subr.bf16.mxu0 0
      %2677 = vmatpush2.bf16.msra.mxu0 0
      %2678 = vmatprep.subr.bf16.mxu0 0
      %2679 = vmatpush2.bf16.msra.mxu0 0
      %2680 = vmatprep.subr.bf16.mxu0 0
      %2681 = vmatpush2.bf16.msra.mxu0 0
      %2682 = vmatprep.subr.bf16.mxu0 0
      %2683 = vmatpush2.bf16.msra.mxu0 0
      %2684 = vmatprep.subr.bf16.mxu0 0
      %2685 = vmatpush2.bf16.msra.mxu0 0
      %2686 = vmatprep.subr.bf16.mxu0 0
      %2687 = vmatpush2.bf16.msra.mxu0 0
      %2688 = vmatprep.subr.bf16.mxu0 0
      %2689 = vmatpush2.bf16.msra.mxu0 0
      %2690 = vmatprep.mubr.bf16.mxu0 0
      %2691 = vmatmul.mubr.bf16.gmra.mxu0 %v2525
      %v2692 = vpop.f32.mrf.mxu0
      %v2693 = vadd.f32 %v2650, %v2692
      %v2694 = vpop.f32.mrf.mxu0
      %v2695 = vadd.f32 %v2652, %v2694
      %v2696 = vpop.f32.mrf.mxu0
      %v2697 = vadd.f32 %v2654, %v2696
      %v2698 = vpop.f32.mrf.mxu0
      %v2699 = vadd.f32 %v2656, %v2698
      %2700 = vdwg.mxu0
      %v2701 = vxor.u32 %v2607, 2147483648
      %v2702 = vxor.u32 %v2609, 2147483648
      %v2703 = vxor.u32 %v2693, 2147483648
      %v2704 = vxor.u32 %v2611, 2147483648
      %v2705 = vxor.u32 %v2613, 2147483648
      %v2706 = vxor.u32 %v2697, 2147483648
      %v2707 = vmul.f32 %v2701, 1.442695
      %v2708 = vpow.pop %v2707
      %v2709 = vmul.f32 %v2702, 1.442695
      %v2710 = vpow.pop %v2709
      %v2711 = vmul.f32 %v2703, 1.442695
      %v2712 = vpow.pop %v2711
      %v2713 = vmul.f32 %v2704, 1.442695
      %v2714 = vpow.pop %v2713
      %v2715 = vmul.f32 %v2705, 1.442695
      %v2716 = vpow.pop %v2715
      %v2717 = vmul.f32 %v2706, 1.442695
      %v2718 = vpow.pop %v2717
      %v2719 = vadd.f32 %v2708, 1.0
      %v2720 = vadd.f32 %v2710, 1.0
      %v2721 = vadd.f32 %v2712, 1.0
      %v2722 = vadd.f32 %v2714, 1.0
      %v2723 = vadd.f32 %v2716, 1.0
      %v2724 = vadd.f32 %v2718, 1.0
      %v2725 = vrcp.pop %v2719
      %v2726 = vmul.f32 1.0, %v2725
      %v2727 = vrcp.pop %v2720
      %v2728 = vmul.f32 1.0, %v2727
      %v2729 = vrcp.pop %v2721
      %v2730 = vmul.f32 1.0, %v2729
      %v2731 = vrcp.pop %v2722
      %v2732 = vmul.f32 1.0, %v2731
      %v2733 = vrcp.pop %v2723
      %v2734 = vmul.f32 1.0, %v2733
      %v2735 = vrcp.pop %v2724
      %v2736 = vmul.f32 1.0, %v2735
      %v2737 = vtanh.pop %v2695
      %v2738 = vtanh.pop %v2699
      %v2739 = vld [vmem:[#allocation3] sm:$0xff]
      %v2740 = vld [vmem:[#allocation3 + $0x8] sm:$0xff]
      %v2741 = vmul.f32 %v2728, %v2739
      %v2742 = vmul.f32 %v2734, %v2740
      %v2743 = vmul.f32 %v2726, %v2737
      %v2744 = vmul.f32 %v2732, %v2738
      %v2745 = vadd.f32 %v2741, %v2743
      %v2746 = vadd.f32 %v2742, %v2744
      %v2747 = vtanh.pop %v2745
      %v2748 = vtanh.pop %v2746
      %v2749 = vmul.f32 %v2730, %v2747
      %v2750 = vmul.f32 %v2736, %v2748
      %v2751 = vpack.c.bf16 %v2750, %v2749
      %2752 = vst [vmem:[#allocation3] sm:$0xff] %v2745
      %2753 = vst [vmem:[#allocation3 + $0x8] sm:$0xff] %v2746
      %v2755 = vunpack.c.l.b16 %v2751
      %v2756 = vunpack.c.h.b16 %v2751
      %v2757 = vpack.c.b16 %v2755, %v2755
      %v2758 = vpack.c.b16 %v2756, %v2756
      %2761 = vst [vmem:[#allocation2 + $0x8] sm:$0xf] %v2757
      %2762 = vst [vmem:[#allocation2 + $0x14] sm:$0xf] %v2758
      %s2763 = smul.u32 %s2501, 2
      %s2764 = smul.addr %s2763, 4
      %s2765 = scalar_lea.vmem %s280, %s2764
      %2766 = vst [vmem:[%s2765] sm:$0xf] %v2757
      %2767 = vst [vmem:[%s2765 + $0x4] sm:$0xf] %v2758
      %s2768 = smul.u32 %s18, 4294967289
      %s2769 = sadd.s32 %s2768, 7
      %s2770 = smul.u32 %s2769, 4
      %s2771 = smul.addr %s2770, 4
      %s2772 = scalar_lea.vmem %s252, %s2771
      %v2773 = vld [vmem:[%s2772] sm:$0xff]
      %v2774 = vld [vmem:[%s2772 + $0x8] sm:$0xff]
      %2775 = vst [vmem:[#allocation2] sm:$0xff] %v2773
      %2776 = vst [vmem:[#allocation2 + $0xc] sm:$0xff] %v2774
      %v2777 = vld [vmem:[#allocation2] sm:$0xff]
      %v2778 = vld [vmem:[#allocation2 + $0x8] sm:$0xf]
      %v2779 = vld [vmem:[#allocation2 + $0xc] sm:$0xff]
      %v2780 = vld [vmem:[#allocation2 + $0x14] sm:$0xf]
      %v2785 = vunpack.c.l.b16 %v2777
      %v2786 = vunpack.c.h.b16 %v2777
      %v2787 = vunpack.c.l.b16 %v2778
      %v2788 = vunpack.c.l.b16 %v2779
      %v2789 = vunpack.c.h.b16 %v2779
      %v2790 = vunpack.c.l.b16 %v2780
      %v2791 = vpack.c.b16 %v2788, %v2785
      %v2792 = vpack.c.b16 %v2789, %v2786
      %v2793 = vpack.c.b16 %v2790, %v2787
      %2797 = vmatprep.subr.bf16.mxu0 %v760
      %2798 = vmatpush1.bf16.msra.mxu0 %v759
      %2799 = vmatprep.subr.bf16.mxu0 %v756
      %2800 = vmatpush1.bf16.msra.mxu0 %v755
      %2801 = vmatprep.subr.bf16.mxu0 %v752
      %2802 = vmatpush1.bf16.msra.mxu0 %v751
      %2803 = vmatprep.subr.bf16.mxu0 %v748
      %2804 = vmatpush1.bf16.msra.mxu0 %v747
      %2805 = vmatprep.subr.bf16.mxu0 %v744
      %2806 = vmatpush1.bf16.msra.mxu0 %v743
      %2807 = vmatprep.subr.bf16.mxu0 %v740
      %2808 = vmatpush1.bf16.msra.mxu0 %v739
      %2809 = vmatprep.subr.bf16.mxu0 %v736
      %2810 = vmatpush1.bf16.msra.mxu0 %v735
      %2811 = vmatprep.subr.bf16.mxu0 %v732
      %2812 = vmatpush1.bf16.msra.mxu0 %v731
      %2813 = vmatprep.subr.bf16.mxu0 %v792
      %2814 = vmatpush2.bf16.msra.mxu0 %v791
      %2815 = vmatprep.subr.bf16.mxu0 %v788
      %2816 = vmatpush2.bf16.msra.mxu0 %v787
      %2817 = vmatprep.subr.bf16.mxu0 %v784
      %2818 = vmatpush2.bf16.msra.mxu0 %v783
      %2819 = vmatprep.subr.bf16.mxu0 %v780
      %2820 = vmatpush2.bf16.msra.mxu0 %v779
      %2821 = vmatprep.subr.bf16.mxu0 %v776
      %2822 = vmatpush2.bf16.msra.mxu0 %v775
      %2823 = vmatprep.subr.bf16.mxu0 %v772
      %2824 = vmatpush2.bf16.msra.mxu0 %v771
      %2825 = vmatprep.subr.bf16.mxu0 %v768
      %2826 = vmatpush2.bf16.msra.mxu0 %v767
      %2827 = vmatprep.subr.bf16.mxu0 %v764
      %2828 = vmatpush2.bf16.msra.mxu0 %v763
      %2829 = vmatprep.mubr.bf16.mxu0 %v2792
      %2830 = vmatmul.mubr.bf16.gmra.mxu0 %v2791
      %v2831 = vpop.f32.mrf.mxu0
      %v2832 = vadd.f32 %v410, %v2831
      %v2833 = vpop.f32.mrf.mxu0
      %v2834 = vadd.f32 %v414, %v2833
      %v2835 = vpop.f32.mrf.mxu0
      %v2836 = vadd.f32 %v410, %v2835
      %v2837 = vpop.f32.mrf.mxu0
      %v2838 = vadd.f32 %v414, %v2837
      %2839 = vdwg.mxu0
      %2840 = vmatprep.subr.bf16.mxu0 %v824
      %2841 = vmatpush1.bf16.msra.mxu0 %v823
      %2842 = vmatprep.subr.bf16.mxu0 %v820
      %2843 = vmatpush1.bf16.msra.mxu0 %v819
      %2844 = vmatprep.subr.bf16.mxu0 %v816
      %2845 = vmatpush1.bf16.msra.mxu0 %v815
      %2846 = vmatprep.subr.bf16.mxu0 %v812
      %2847 = vmatpush1.bf16.msra.mxu0 %v811
      %2848 = vmatprep.subr.bf16.mxu0 %v808
      %2849 = vmatpush1.bf16.msra.mxu0 %v807
      %2850 = vmatprep.subr.bf16.mxu0 %v804
      %2851 = vmatpush1.bf16.msra.mxu0 %v803
      %2852 = vmatprep.subr.bf16.mxu0 %v800
      %2853 = vmatpush1.bf16.msra.mxu0 %v799
      %2854 = vmatprep.subr.bf16.mxu0 %v796
      %2855 = vmatpush1.bf16.msra.mxu0 %v795
      %2856 = vmatprep.subr.bf16.mxu0 0
      %2857 = vmatpush2.bf16.msra.mxu0 0
      %2858 = vmatprep.subr.bf16.mxu0 0
      %2859 = vmatpush2.bf16.msra.mxu0 0
      %2860 = vmatprep.subr.bf16.mxu0 0
      %2861 = vmatpush2.bf16.msra.mxu0 0
      %2862 = vmatprep.subr.bf16.mxu0 0
      %2863 = vmatpush2.bf16.msra.mxu0 0
      %2864 = vmatprep.subr.bf16.mxu0 0
      %2865 = vmatpush2.bf16.msra.mxu0 0
      %2866 = vmatprep.subr.bf16.mxu0 0
      %2867 = vmatpush2.bf16.msra.mxu0 0
      %2868 = vmatprep.subr.bf16.mxu0 0
      %2869 = vmatpush2.bf16.msra.mxu0 0
      %2870 = vmatprep.subr.bf16.mxu0 0
      %2871 = vmatpush2.bf16.msra.mxu0 0
      %2872 = vmatprep.mubr.bf16.mxu0 0
      %2873 = vmatmul.mubr.bf16.gmra.mxu0 %v2793
      %v2874 = vpop.f32.mrf.mxu0
      %v2875 = vadd.f32 %v2832, %v2874
      %v2876 = vpop.f32.mrf.mxu0
      %v2877 = vadd.f32 %v2834, %v2876
      %v2878 = vpop.f32.mrf.mxu0
      %v2879 = vadd.f32 %v2836, %v2878
      %v2880 = vpop.f32.mrf.mxu0
      %v2881 = vadd.f32 %v2838, %v2880
      %2882 = vdwg.mxu0
      %2883 = vmatprep.subr.bf16.mxu0 %v762
      %2884 = vmatpush1.bf16.msra.mxu0 %v761
      %2885 = vmatprep.subr.bf16.mxu0 %v758
      %2886 = vmatpush1.bf16.msra.mxu0 %v757
      %2887 = vmatprep.subr.bf16.mxu0 %v754
      %2888 = vmatpush1.bf16.msra.mxu0 %v753
      %2889 = vmatprep.subr.bf16.mxu0 %v750
      %2890 = vmatpush1.bf16.msra.mxu0 %v749
      %2891 = vmatprep.subr.bf16.mxu0 %v746
      %2892 = vmatpush1.bf16.msra.mxu0 %v745
      %2893 = vmatprep.subr.bf16.mxu0 %v742
      %2894 = vmatpush1.bf16.msra.mxu0 %v741
      %2895 = vmatprep.subr.bf16.mxu0 %v738
      %2896 = vmatpush1.bf16.msra.mxu0 %v737
      %2897 = vmatprep.subr.bf16.mxu0 %v734
      %2898 = vmatpush1.bf16.msra.mxu0 %v733
      %2899 = vmatprep.subr.bf16.mxu0 %v794
      %2900 = vmatpush2.bf16.msra.mxu0 %v793
      %2901 = vmatprep.subr.bf16.mxu0 %v790
      %2902 = vmatpush2.bf16.msra.mxu0 %v789
      %2903 = vmatprep.subr.bf16.mxu0 %v786
      %2904 = vmatpush2.bf16.msra.mxu0 %v785
      %2905 = vmatprep.subr.bf16.mxu0 %v782
      %2906 = vmatpush2.bf16.msra.mxu0 %v781
      %2907 = vmatprep.subr.bf16.mxu0 %v778
      %2908 = vmatpush2.bf16.msra.mxu0 %v777
      %2909 = vmatprep.subr.bf16.mxu0 %v774
      %2910 = vmatpush2.bf16.msra.mxu0 %v773
      %2911 = vmatprep.subr.bf16.mxu0 %v770
      %2912 = vmatpush2.bf16.msra.mxu0 %v769
      %2913 = vmatprep.subr.bf16.mxu0 %v766
      %2914 = vmatpush2.bf16.msra.mxu0 %v765
      %2915 = vmatprep.mubr.bf16.mxu0 %v2792
      %2916 = vmatmul.mubr.bf16.gmra.mxu0 %v2791
      %v2917 = vpop.f32.mrf.mxu0
      %v2918 = vadd.f32 %v418, %v2917
      %v2919 = vpop.f32.mrf.mxu0
      %v2920 = vadd.f32 %v422, %v2919
      %v2921 = vpop.f32.mrf.mxu0
      %v2922 = vadd.f32 %v418, %v2921
      %v2923 = vpop.f32.mrf.mxu0
      %v2924 = vadd.f32 %v422, %v2923
      %2925 = vdwg.mxu0
      %2926 = vmatprep.subr.bf16.mxu0 %v826
      %2927 = vmatpush1.bf16.msra.mxu0 %v825
      %2928 = vmatprep.subr.bf16.mxu0 %v822
      %2929 = vmatpush1.bf16.msra.mxu0 %v821
      %2930 = vmatprep.subr.bf16.mxu0 %v818
      %2931 = vmatpush1.bf16.msra.mxu0 %v817
      %2932 = vmatprep.subr.bf16.mxu0 %v814
      %2933 = vmatpush1.bf16.msra.mxu0 %v813
      %2934 = vmatprep.subr.bf16.mxu0 %v810
      %2935 = vmatpush1.bf16.msra.mxu0 %v809
      %2936 = vmatprep.subr.bf16.mxu0 %v806
      %2937 = vmatpush1.bf16.msra.mxu0 %v805
      %2938 = vmatprep.subr.bf16.mxu0 %v802
      %2939 = vmatpush1.bf16.msra.mxu0 %v801
      %2940 = vmatprep.subr.bf16.mxu0 %v798
      %2941 = vmatpush1.bf16.msra.mxu0 %v797
      %2942 = vmatprep.subr.bf16.mxu0 0
      %2943 = vmatpush2.bf16.msra.mxu0 0
      %2944 = vmatprep.subr.bf16.mxu0 0
      %2945 = vmatpush2.bf16.msra.mxu0 0
      %2946 = vmatprep.subr.bf16.mxu0 0
      %2947 = vmatpush2.bf16.msra.mxu0 0
      %2948 = vmatprep.subr.bf16.mxu0 0
      %2949 = vmatpush2.bf16.msra.mxu0 0
      %2950 = vmatprep.subr.bf16.mxu0 0
      %2951 = vmatpush2.bf16.msra.mxu0 0
      %2952 = vmatprep.subr.bf16.mxu0 0
      %2953 = vmatpush2.bf16.msra.mxu0 0
      %2954 = vmatprep.subr.bf16.mxu0 0
      %2955 = vmatpush2.bf16.msra.mxu0 0
      %2956 = vmatprep.subr.bf16.mxu0 0
      %2957 = vmatpush2.bf16.msra.mxu0 0
      %2958 = vmatprep.mubr.bf16.mxu0 0
      %2959 = vmatmul.mubr.bf16.gmra.mxu0 %v2793
      %v2960 = vpop.f32.mrf.mxu0
      %v2961 = vadd.f32 %v2918, %v2960
      %v2962 = vpop.f32.mrf.mxu0
      %v2963 = vadd.f32 %v2920, %v2962
      %v2964 = vpop.f32.mrf.mxu0
      %v2965 = vadd.f32 %v2922, %v2964
      %v2966 = vpop.f32.mrf.mxu0
      %v2967 = vadd.f32 %v2924, %v2966
      %2968 = vdwg.mxu0
      %v2969 = vxor.u32 %v2875, 2147483648
      %v2970 = vxor.u32 %v2877, 2147483648
      %v2971 = vxor.u32 %v2961, 2147483648
      %v2972 = vxor.u32 %v2879, 2147483648
      %v2973 = vxor.u32 %v2881, 2147483648
      %v2974 = vxor.u32 %v2965, 2147483648
      %v2975 = vmul.f32 %v2969, 1.442695
      %v2976 = vpow.pop %v2975
      %v2977 = vmul.f32 %v2970, 1.442695
      %v2978 = vpow.pop %v2977
      %v2979 = vmul.f32 %v2971, 1.442695
      %v2980 = vpow.pop %v2979
      %v2981 = vmul.f32 %v2972, 1.442695
      %v2982 = vpow.pop %v2981
      %v2983 = vmul.f32 %v2973, 1.442695
      %v2984 = vpow.pop %v2983
      %v2985 = vmul.f32 %v2974, 1.442695
      %v2986 = vpow.pop %v2985
      %v2987 = vadd.f32 %v2976, 1.0
      %v2988 = vadd.f32 %v2978, 1.0
      %v2989 = vadd.f32 %v2980, 1.0
      %v2990 = vadd.f32 %v2982, 1.0
      %v2991 = vadd.f32 %v2984, 1.0
      %v2992 = vadd.f32 %v2986, 1.0
      %v2993 = vrcp.pop %v2987
      %v2994 = vmul.f32 1.0, %v2993
      %v2995 = vrcp.pop %v2988
      %v2996 = vmul.f32 1.0, %v2995
      %v2997 = vrcp.pop %v2989
      %v2998 = vmul.f32 1.0, %v2997
      %v2999 = vrcp.pop %v2990
      %v3000 = vmul.f32 1.0, %v2999
      %v3001 = vrcp.pop %v2991
      %v3002 = vmul.f32 1.0, %v3001
      %v3003 = vrcp.pop %v2992
      %v3004 = vmul.f32 1.0, %v3003
      %v3005 = vtanh.pop %v2963
      %v3006 = vtanh.pop %v2967
      %v3007 = vld [vmem:[#allocation3] sm:$0xff]
      %v3008 = vld [vmem:[#allocation3 + $0x8] sm:$0xff]
      %v3009 = vmul.f32 %v2996, %v3007
      %v3010 = vmul.f32 %v3002, %v3008
      %v3011 = vmul.f32 %v2994, %v3005
      %v3012 = vmul.f32 %v3000, %v3006
      %v3013 = vadd.f32 %v3009, %v3011
      %v3014 = vadd.f32 %v3010, %v3012
      %v3015 = vtanh.pop %v3013
      %v3016 = vtanh.pop %v3014
      %v3017 = vmul.f32 %v2998, %v3015
      %v3018 = vmul.f32 %v3004, %v3016
      %v3019 = vpack.c.bf16 %v3018, %v3017
      %3020 = vst [vmem:[#allocation3] sm:$0xff] %v3013
      %3021 = vst [vmem:[#allocation3 + $0x8] sm:$0xff] %v3014
      %v3023 = vunpack.c.l.b16 %v3019
      %v3024 = vunpack.c.h.b16 %v3019
      %v3025 = vpack.c.b16 %v3023, %v3023
      %v3026 = vpack.c.b16 %v3024, %v3024
      %3029 = vst [vmem:[#allocation2 + $0x8] sm:$0xf] %v3025
      %3030 = vst [vmem:[#allocation2 + $0x14] sm:$0xf] %v3026
      %s3031 = smul.u32 %s2769, 2
      %s3032 = smul.addr %s3031, 4
      %s3033 = scalar_lea.vmem %s280, %s3032
      %3034 = vst [vmem:[%s3033] sm:$0xf] %v3025
      %3035 = vst [vmem:[%s3033 + $0x4] sm:$0xf] %v3026
      %s3036 = smul.u32 %s19, 2
      %s3037 = ssub.s32 0, %s3036
      %s3038 = smul.u32 %s18, %s3037
      %s3039 = sadd.s32 %s19, %s3038
      %s3040 = smul.u32 8, %s3039
      %p3041 = scmp.lt.s32.totalorder %s18, 1
      %s3042 = scalar_select %p3041, %s18, 1
      %p3043 = scmp.lt.s32.totalorder %s3040, 7
      %s3044 = scalar_select %p3043, %s3040, 7
      %s3045 = smul.addr %s3044, 2
      %s3046 = smul.addr %s3042, 16
      %s3047 = sadd.s32 %s3045, %s3046
      %s3048 = smul.addr %s3047, 4
      %s3049 = scalar_lea.vmem %s3, %s3048
      // Predicated region
      $region37: #{music_vae_forward.11} parent=31 // pred_check
        %p3050 = pneg %p140
      $region38: #{music_vae_forward.11} parent=31 // pred_check_branch
        %3052 = sbr.rel (%p3050) target = $region40
      $region39: #{music_vae_forward.11} parent=31 // pred_region
        %s3053 = smul.u32 %s19, 2
        %s3054 = ssub.s32 0, %s3053
        %s3055 = smul.u32 %s18, %s3054
        %s3056 = sadd.s32 %s19, %s3055
        %s3057 = smul.u32 8, %s3056
      $region40: #{music_vae_forward.11} parent=31 // pred_fallthru
        _
    $region32: #{music_vae_forward.11} parent=5 // pred_fallthru
      _
    %p3058 = scmp.le.s32.totalorder 2, %s9
    // Predicated region
    $region41: #{music_vae_forward.11} parent=5 // pred_check
      %p3059 = pneg %p3058
    $region42: #{music_vae_forward.11} parent=5 // pred_check_branch
      %3061 = sbr.rel (%p3059) target = $region44
    $region43: #{music_vae_forward.11} parent=5 // pred_region
      %s3062 = ssub.s32 %s9, 2
      // Predicated region
      $region45: #{music_vae_forward.11} parent=43 // pred_check
        %p3063 = pneg %p146
      $region46: #{music_vae_forward.11} parent=43 // pred_check_branch
        %3065 = sbr.rel (%p3063) target = $region48
      $region47: #{music_vae_forward.11} parent=43 // pred_region
        %s3066 = smul.u32 %s21, 2
        %s3067 = ssub.s32 0, %s3066
        %s3068 = smul.u32 %s20, %s3067
        %s3069 = sadd.s32 %s21, %s3068
        %s3070 = smul.u32 8, %s3069
        %p3071 = scmp.lt.s32.totalorder %s20, 1
        %s3072 = scalar_select %p3071, %s20, 1
        %p3073 = scmp.lt.s32.totalorder %s3070, 7
        %s3074 = scalar_select %p3073, %s3070, 7
        %s3075 = smul.addr %s3074, 2
        %s3076 = smul.addr %s3072, 16
        %s3077 = sadd.s32 %s3075, %s3076
        %s3078 = smul.addr %s3077, 4
        %s3079 = scalar_lea.vmem %s3, %s3078
      $region48: #{music_vae_forward.11} parent=43 // pred_fallthru
        _
    $region44: #{music_vae_forward.11} parent=5 // pred_fallthru
      _
  $region6: #{music_vae_forward.11} parent=0 // loop_footer
    %s13 = sadd.s32 1, %s9
  $region7: #{music_vae_forward.11} parent=0 // loop_footer_branch
    %8 = sbr.rel target = $region3
  $region8: #{music_vae_forward.11} parent=0 // loop_exit
    _

// kernel: music_vae_forward.19
$region0: #{music_vae_forward.19}
  #allocation0 [shape = 'u32[]', space=smem, size = 0x4, offset = 0x4, fixed_abs, tag = 'smem constant byte address 0x4 - core index']
  #allocation1 [shape = 'u32[144,128]{1,0:T(1,128)}', space=vmem, size = 0x12000, scoped, tag = 'internal scratch']
  %s0 = inlined_call_operand.vmem [shape: bf16[64,128], index: 0, kind: input, shape index: {}]
  %s1 = inlined_call_operand.vmem [shape: bf16[128,128], index: 1, kind: input, shape index: {}]
  %s2 = inlined_call_operand.vmem [shape: f32[1,128], index: 2, kind: input, shape index: {}]
  %s3 = inlined_call_operand.vmem [shape: f32[64,128], index: 3, kind: output, shape index: {}]
  %s4 = sld [smem:[#allocation0]]
  $region22: #{music_vae_forward.19} parent=0
    _
  %s6 = ssub.s32 1, %s4
  %s7 = scalar_select 0, %s6, %s4
  // Predicated region
  $region2: #{music_vae_forward.19} parent=0 // pred_check
    _
  $region3: #{music_vae_forward.19} parent=0 // pred_check_branch
    %9 = sbr.rel (0) target = $region5
  $region4: #{music_vae_forward.19} parent=0 // pred_region
    _
  $region5: #{music_vae_forward.19} parent=0 // pred_fallthru
    _
  // Predicated region
  $region6: #{music_vae_forward.19} parent=0 // pred_check
    _
  $region7: #{music_vae_forward.19} parent=0 // pred_check_branch
    %11 = sbr.rel (0) target = $region9
  $region8: #{music_vae_forward.19} parent=0 // pred_region
    _
  $region9: #{music_vae_forward.19} parent=0 // pred_fallthru
    _
  // Predicated region
  $region10: #{music_vae_forward.19} parent=0 // pred_check
    _
  $region11: #{music_vae_forward.19} parent=0 // pred_check_branch
    %13 = sbr.rel (0) target = $region13
  $region12: #{music_vae_forward.19} parent=0 // pred_region
    _
  $region13: #{music_vae_forward.19} parent=0 // pred_fallthru
    _
  %v15 = vld [vmem:[%s0] sm:$0xf]
  %v16 = vld [vmem:[%s0 + $0x4] sm:$0xf]
  %v17 = vld [vmem:[%s0 + $0x8] sm:$0xf]
  %v18 = vld [vmem:[%s0 + $0xc] sm:$0xf]
  %v19 = vld [vmem:[%s0 + $0x10] sm:$0xf]
  %v20 = vld [vmem:[%s0 + $0x14] sm:$0xf]
  %v21 = vld [vmem:[%s0 + $0x18] sm:$0xf]
  %v22 = vld [vmem:[%s0 + $0x1c] sm:$0xf]
  %v23 = vld [vmem:[%s1] sm:$0xf]
  %v24 = vld [vmem:[%s1 + $0x4] sm:$0xf]
  %v25 = vld [vmem:[%s1 + $0x8] sm:$0xf]
  %v26 = vld [vmem:[%s1 + $0xc] sm:$0xf]
  %v27 = vld [vmem:[%s1 + $0x10] sm:$0xf]
  %v28 = vld [vmem:[%s1 + $0x14] sm:$0xf]
  %v29 = vld [vmem:[%s1 + $0x18] sm:$0xf]
  %v30 = vld [vmem:[%s1 + $0x1c] sm:$0xf]
  %v31 = vld [vmem:[%s1 + $0x20] sm:$0xf]
  %v32 = vld [vmem:[%s1 + $0x24] sm:$0xf]
  %v33 = vld [vmem:[%s1 + $0x28] sm:$0xf]
  %v34 = vld [vmem:[%s1 + $0x2c] sm:$0xf]
  %v35 = vld [vmem:[%s1 + $0x30] sm:$0xf]
  %v36 = vld [vmem:[%s1 + $0x34] sm:$0xf]
  %v37 = vld [vmem:[%s1 + $0x38] sm:$0xf]
  %v38 = vld [vmem:[%s1 + $0x3c] sm:$0xf]
  %v39 = vld [vmem:[%s2] sm:$0x1]
  %v41 = vlaneseq
  %v42 = vshrl.u32 %v41, 7
  %v43 = vsub.s32 0, %v42
  %v44 = vrot.slane %v39, %v43
  %v54 = vunpack.c.l.b16 %v15
  %v55 = vunpack.c.l.b16 %v16
  %v56 = vunpack.c.l.b16 %v17
  %v57 = vunpack.c.l.b16 %v18
  %v58 = vunpack.c.l.b16 %v19
  %v59 = vunpack.c.l.b16 %v20
  %v60 = vunpack.c.l.b16 %v21
  %v61 = vunpack.c.l.b16 %v22
  %v62 = vpack.c.b16 %v55, %v54
  %v63 = vpack.c.b16 %v57, %v56
  %v64 = vpack.c.b16 %v59, %v58
  %v65 = vpack.c.b16 %v61, %v60
  %v86 = vunpack.c.l.b16 %v23
  %v87 = vunpack.c.l.b16 %v24
  %v88 = vunpack.c.l.b16 %v25
  %v89 = vunpack.c.l.b16 %v26
  %v90 = vunpack.c.l.b16 %v27
  %v91 = vunpack.c.l.b16 %v28
  %v92 = vunpack.c.l.b16 %v29
  %v93 = vunpack.c.l.b16 %v30
  %v94 = vunpack.c.l.b16 %v31
  %v95 = vunpack.c.l.b16 %v32
  %v96 = vunpack.c.l.b16 %v33
  %v97 = vunpack.c.l.b16 %v34
  %v98 = vunpack.c.l.b16 %v35
  %v99 = vunpack.c.l.b16 %v36
  %v100 = vunpack.c.l.b16 %v37
  %v101 = vunpack.c.l.b16 %v38
  %v102 = vpack.c.b16 %v87, %v86
  %v103 = vpack.c.b16 %v89, %v88
  %v104 = vpack.c.b16 %v91, %v90
  %v105 = vpack.c.b16 %v93, %v92
  %v106 = vpack.c.b16 %v95, %v94
  %v107 = vpack.c.b16 %v97, %v96
  %v108 = vpack.c.b16 %v99, %v98
  %v109 = vpack.c.b16 %v101, %v100
  %118 = vmatprep.subr.bf16.mxu0 0
  %119 = vmatpush1.bf16.msra.mxu0 %v109
  %120 = vmatprep.subr.bf16.mxu0 0
  %121 = vmatpush1.bf16.msra.mxu0 %v108
  %122 = vmatprep.subr.bf16.mxu0 0
  %123 = vmatpush1.bf16.msra.mxu0 %v107
  %124 = vmatprep.subr.bf16.mxu0 0
  %125 = vmatpush1.bf16.msra.mxu0 %v106
  %126 = vmatprep.subr.bf16.mxu0 0
  %127 = vmatpush1.bf16.msra.mxu0 %v105
  %128 = vmatprep.subr.bf16.mxu0 0
  %129 = vmatpush1.bf16.msra.mxu0 %v104
  %130 = vmatprep.subr.bf16.mxu0 0
  %131 = vmatpush1.bf16.msra.mxu0 %v103
  %132 = vmatprep.subr.bf16.mxu0 0
  %133 = vmatpush1.bf16.msra.mxu0 %v102
  %134 = vmatprep.subr.bf16.mxu0 0
  %135 = vmatpush2.bf16.msra.mxu0 0
  %136 = vmatprep.subr.bf16.mxu0 0
  %137 = vmatpush2.bf16.msra.mxu0 0
  %138 = vmatprep.subr.bf16.mxu0 0
  %139 = vmatpush2.bf16.msra.mxu0 0
  %140 = vmatprep.subr.bf16.mxu0 0
  %141 = vmatpush2.bf16.msra.mxu0 0
  %142 = vmatprep.subr.bf16.mxu0 0
  %143 = vmatpush2.bf16.msra.mxu0 0
  %144 = vmatprep.subr.bf16.mxu0 0
  %145 = vmatpush2.bf16.msra.mxu0 0
  %146 = vmatprep.subr.bf16.mxu0 0
  %147 = vmatpush2.bf16.msra.mxu0 0
  %148 = vmatprep.subr.bf16.mxu0 0
  %149 = vmatpush2.bf16.msra.mxu0 0
  %150 = vmatprep.mubr.bf16.mxu0 0
  %151 = vmatmul.mubr.bf16.gmra.mxu0 %v62
  %v152 = vpop.f32.mrf.mxu0
  %v153 = vadd.f32 %v44, %v152
  %v154 = vpop.f32.mrf.mxu0
  %v155 = vpop.f32.mrf.mxu0
  %v156 = vadd.f32 %v44, %v155
  %v157 = vpop.f32.mrf.mxu0
  %158 = vmatprep.mubr.bf16.mxu0 0
  %159 = vmatmul.mubr.bf16.gmra.mxu0 %v63
  %v160 = vpop.f32.mrf.mxu0
  %v161 = vadd.f32 %v44, %v160
  %v162 = vpop.f32.mrf.mxu0
  %v163 = vpop.f32.mrf.mxu0
  %v164 = vadd.f32 %v44, %v163
  %v165 = vpop.f32.mrf.mxu0
  %166 = vmatprep.mubr.bf16.mxu0 0
  %167 = vmatmul.mubr.bf16.gmra.mxu0 %v64
  %v168 = vpop.f32.mrf.mxu0
  %v169 = vadd.f32 %v44, %v168
  %v170 = vpop.f32.mrf.mxu0
  %v171 = vpop.f32.mrf.mxu0
  %v172 = vadd.f32 %v44, %v171
  %v173 = vpop.f32.mrf.mxu0
  %174 = vmatprep.mubr.bf16.mxu0 0
  %175 = vmatmul.mubr.bf16.gmra.mxu0 %v65
  %v176 = vpop.f32.mrf.mxu0
  %v177 = vadd.f32 %v44, %v176
  %v178 = vpop.f32.mrf.mxu0
  %v179 = vpop.f32.mrf.mxu0
  %v180 = vadd.f32 %v44, %v179
  %v181 = vpop.f32.mrf.mxu0
  %182 = vdwg.mxu0
  %v183 = vlaneseq
  %v184 = vand.u32 %v183, 127
  %vm185 = vcmp.lt.s32.totalorder %v184, 16
  %v186 = vsel %vm185, %v153, -1e+30
  %v187 = vsel %vm185, %v156, -1e+30
  %v188 = vsel %vm185, %v161, -1e+30
  %v189 = vsel %vm185, %v164, -1e+30
  %v190 = vsel %vm185, %v169, -1e+30
  %v191 = vsel %vm185, %v172, -1e+30
  %v192 = vsel %vm185, %v177, -1e+30
  %v193 = vsel %vm185, %v180, -1e+30
  %194 = vmax.xlane.f32.xlu0 %v186
  %v195 = vpop.xlane.xlu0 %194
  %196 = vmax.xlane.f32.xlu0 %v187
  %v197 = vpop.xlane.xlu0 %196
  %198 = vmax.xlane.f32.xlu0 %v188
  %v199 = vpop.xlane.xlu0 %198
  %200 = vmax.xlane.f32.xlu0 %v189
  %v201 = vpop.xlane.xlu0 %200
  %202 = vmax.xlane.f32.xlu0 %v190
  %v203 = vpop.xlane.xlu0 %202
  %204 = vmax.xlane.f32.xlu0 %v191
  %v205 = vpop.xlane.xlu0 %204
  %206 = vmax.xlane.f32.xlu0 %v192
  %v207 = vpop.xlane.xlu0 %206
  %208 = vmax.xlane.f32.xlu0 %v193
  %v209 = vpop.xlane.xlu0 %208
  %v210 = vsub.f32 %v186, %v195
  %v211 = vsub.f32 %v187, %v197
  %v212 = vsub.f32 %v188, %v199
  %v213 = vsub.f32 %v189, %v201
  %v214 = vsub.f32 %v190, %v203
  %v215 = vsub.f32 %v191, %v205
  %v216 = vsub.f32 %v192, %v207
  %v217 = vsub.f32 %v193, %v209
  %v218 = vmul.f32 %v210, 1.442695
  %v219 = vpow.pop %v218
  %v220 = vmul.f32 %v211, 1.442695
  %v221 = vpow.pop %v220
  %v222 = vmul.f32 %v212, 1.442695
  %v223 = vpow.pop %v222
  %v224 = vmul.f32 %v213, 1.442695
  %v225 = vpow.pop %v224
  %v226 = vmul.f32 %v214, 1.442695
  %v227 = vpow.pop %v226
  %v228 = vmul.f32 %v215, 1.442695
  %v229 = vpow.pop %v228
  %v230 = vmul.f32 %v216, 1.442695
  %v231 = vpow.pop %v230
  %v232 = vmul.f32 %v217, 1.442695
  %v233 = vpow.pop %v232
  %234 = vadd.xlane.f32.xlu0 %v219
  %v235 = vpop.xlane.xlu0 %234
  %236 = vadd.xlane.f32.xlu0 %v221
  %v237 = vpop.xlane.xlu0 %236
  %238 = vadd.xlane.f32.xlu0 %v223
  %v239 = vpop.xlane.xlu0 %238
  %240 = vadd.xlane.f32.xlu0 %v225
  %v241 = vpop.xlane.xlu0 %240
  %242 = vadd.xlane.f32.xlu0 %v227
  %v243 = vpop.xlane.xlu0 %242
  %244 = vadd.xlane.f32.xlu0 %v229
  %v245 = vpop.xlane.xlu0 %244
  %246 = vadd.xlane.f32.xlu0 %v231
  %v247 = vpop.xlane.xlu0 %246
  %248 = vadd.xlane.f32.xlu0 %v233
  %v249 = vpop.xlane.xlu0 %248
  %v250 = vrcp.pop %v235
  %v251 = vmul.f32 %v219, %v250
  %v252 = vrcp.pop %v237
  %v253 = vmul.f32 %v221, %v252
  %v254 = vrcp.pop %v239
  %v255 = vmul.f32 %v223, %v254
  %v256 = vrcp.pop %v241
  %v257 = vmul.f32 %v225, %v256
  %v258 = vrcp.pop %v243
  %v259 = vmul.f32 %v227, %v258
  %v260 = vrcp.pop %v245
  %v261 = vmul.f32 %v229, %v260
  %v262 = vrcp.pop %v247
  %v263 = vmul.f32 %v231, %v262
  %v264 = vrcp.pop %v249
  %v265 = vmul.f32 %v233, %v264
  %266 = vst [vmem:[%s3] sm:$0xff] %v251
  %267 = vst [vmem:[%s3 + $0x8] sm:$0xff] %v253
  %268 = vst [vmem:[%s3 + $0x10] sm:$0xff] %v255
  %269 = vst [vmem:[%s3 + $0x18] sm:$0xff] %v257
  %270 = vst [vmem:[%s3 + $0x20] sm:$0xff] %v259
  %271 = vst [vmem:[%s3 + $0x28] sm:$0xff] %v261
  %272 = vst [vmem:[%s3 + $0x30] sm:$0xff] %v263
  %273 = vst [vmem:[%s3 + $0x38] sm:$0xff] %v265
  // Predicated region
  $region14: #{music_vae_forward.19} parent=0 // pred_check
    _
  $region15: #{music_vae_forward.19} parent=0 // pred_check_branch
    %275 = sbr.rel (0) target = $region17
  $region16: #{music_vae_forward.19} parent=0 // pred_region
    _
  $region17: #{music_vae_forward.19} parent=0 // pred_fallthru
    _
  // Predicated region
  $region18: #{music_vae_forward.19} parent=0 // pred_check
    _
  $region19: #{music_vae_forward.19} parent=0 // pred_check_branch
    %277 = sbr.rel (0) target = $region21
  $region20: #{music_vae_forward.19} parent=0 // pred_region
    _
  $region21: #{music_vae_forward.19} parent=0 // pred_fallthru
    _

// kernel: music_vae_forward.17
$region0: #{music_vae_forward.17}
  #allocation0 [shape = 'u32[]', space=smem, size = 0x4, offset = 0x4, fixed_abs, tag = 'smem constant byte address 0x4 - core index']
  #allocation1 [shape = 'u32[144,128]{1,0:T(1,128)}', space=vmem, size = 0x12000, scoped, tag = 'internal scratch']
  #allocation2 [shape = 'bf16[16,256]{1,0:T(8,128)(2,1)}', space=vmem, size = 0x2000, scoped, tag = 'scratch operand']
  #allocation3 [shape = 'f32[16,128]{1,0:T(8,128)}', space=vmem, size = 0x2000, scoped, tag = 'scratch operand']
  %s0 = inlined_call_operand.vmem [shape: bf16[5,16,128], index: 0, kind: input, shape index: {}]
  %s1 = inlined_call_operand.vmem [shape: bf16[1,256,512], index: 1, kind: input, shape index: {}]
  %s2 = inlined_call_operand.vmem [shape: f32[1,1,512], index: 2, kind: input, shape index: {}]
  %s3 = inlined_call_operand.vmem [shape: bf16[1,5,16,128], index: 3, kind: output, shape index: {}]
  %s4 = sld [smem:[#allocation0]]
  $region26: #{music_vae_forward.17} parent=0
    _
  %s6 = ssub.s32 1, %s4
  %s7 = scalar_select 0, %s6, %s4
  // Predicated region
  $region2: #{music_vae_forward.17} parent=0 // pred_check
    _
  $region3: #{music_vae_forward.17} parent=0 // pred_check_branch
    %9 = sbr.rel (0) target = $region5
  $region4: #{music_vae_forward.17} parent=0 // pred_region
    %s10 = smul.u32 0, 2
    %s11 = ssub.s32 0, %s10
    %s12 = smul.u32 0, %s11
    %s13 = sadd.s32 0, %s12
    %s14 = smul.u32 5, %s13
    %p15 = scmp.lt.s32.totalorder %s14, 4
    %s16 = scalar_select %p15, %s14, 4
    %s17 = smul.addr %s16, 2
    %s18 = smul.addr %s17, 4
    %s19 = scalar_lea.vmem %s0, %s18
    %s20 = smul.u32 0, 2
    %s21 = ssub.s32 0, %s20
    %s22 = smul.u32 0, %s21
    %s23 = sadd.s32 0, %s22
    %s24 = smul.u32 5, %s23
  $region5: #{music_vae_forward.17} parent=0 // pred_fallthru
    _
  // Predicated region
  $region6: #{music_vae_forward.17} parent=0 // pred_check
    _
  $region7: #{music_vae_forward.17} parent=0 // pred_check_branch
    %26 = sbr.rel (0) target = $region9
  $region8: #{music_vae_forward.17} parent=0 // pred_region
    _
  $region9: #{music_vae_forward.17} parent=0 // pred_fallthru
    _
  // Predicated region
  $region10: #{music_vae_forward.17} parent=0 // pred_check
    _
  $region11: #{music_vae_forward.17} parent=0 // pred_check_branch
    %28 = sbr.rel (0) target = $region13
  $region12: #{music_vae_forward.17} parent=0 // pred_region
    _
  $region13: #{music_vae_forward.17} parent=0 // pred_fallthru
    _
  %s29 = smul.u32 0, 2
  %s30 = ssub.s32 0, %s29
  %s31 = smul.u32 0, %s30
  %s32 = sadd.s32 0, %s31
  %s33 = smul.u32 5, %s32
  %p34 = scmp.lt.s32.totalorder %s33, 4
  %s35 = scalar_select %p34, %s33, 4
  %s36 = smul.addr %s35, 2
  %s37 = smul.addr %s36, 4
  %s38 = scalar_lea.vmem %s0, %s37
  %s39 = smul.u32 0, 2
  %s40 = ssub.s32 0, %s39
  %s41 = smul.u32 0, %s40
  %s42 = sadd.s32 0, %s41
  %s43 = smul.u32 5, %s42
  %p44 = scmp.lt.s32.totalorder %s43, 4
  %s45 = scalar_select %p44, %s43, 4
  %s46 = smul.addr %s45, 2
  %s47 = smul.addr %s46, 4
  %s48 = scalar_lea.vmem %s3, %s47
  %s49 = smul.u32 0, 2
  %s50 = ssub.s32 0, %s49
  %s51 = smul.u32 0, %s50
  %s52 = sadd.s32 0, %s51
  %s53 = smul.u32 5, %s52
  %p54 = scmp.lt.s32.totalorder %s53, 4
  %s55 = scalar_select %p54, %s53, 4
  %s56 = smul.addr %s55, 2
  %s57 = smul.addr %s56, 4
  %s58 = scalar_lea.vmem %s0, %s57
  %s59 = smul.u32 0, 2
  %s60 = ssub.s32 0, %s59
  %s61 = smul.u32 0, %s60
  %s62 = sadd.s32 0, %s61
  %s63 = smul.u32 5, %s62
  %s64 = smul.u32 0, 2
  %s65 = ssub.s32 0, %s64
  %s66 = smul.u32 0, %s65
  %s67 = sadd.s32 0, %s66
  %s68 = smul.u32 5, %s67
  %p69 = scmp.lt.s32.totalorder %s68, 4
  %s70 = scalar_select %p69, %s68, 4
  %s71 = smul.addr %s70, 2
  %s72 = smul.addr %s71, 4
  %s73 = scalar_lea.vmem %s3, %s72
  %s74 = smul.u32 0, 2
  %s75 = ssub.s32 0, %s74
  %s76 = smul.u32 0, %s75
  %s77 = sadd.s32 0, %s76
  %s78 = smul.u32 5, %s77
  %p80 = scmp.eq.s32.totalorder 0, 0
  // Predicated region
  $region14: #{music_vae_forward.17} parent=0 // pred_check
    %p81 = pneg %p80
  $region15: #{music_vae_forward.17} parent=0 // pred_check_branch
    %83 = sbr.rel (%p81) target = $region17
  $region16: #{music_vae_forward.17} parent=0 // pred_region
    %84 = vst [vmem:[#allocation2] sm:$0xff] 0
    %85 = vst [vmem:[#allocation2 + $0x8] sm:$0xff] 0
    %86 = vst [vmem:[#allocation3] sm:$0xff] 0.0
    %87 = vst [vmem:[#allocation3 + $0x8] sm:$0xff] 0.0
  $region17: #{music_vae_forward.17} parent=0 // pred_fallthru
    _
  %v88 = vld [vmem:[%s1] sm:$0xff]
  %v89 = vld [vmem:[%s1 + $0x8] sm:$0xff]
  %v90 = vld [vmem:[%s1 + $0x10] sm:$0xff]
  %v91 = vld [vmem:[%s1 + $0x18] sm:$0xff]
  %v92 = vld [vmem:[%s1 + $0x20] sm:$0xff]
  %v93 = vld [vmem:[%s1 + $0x28] sm:$0xff]
  %v94 = vld [vmem:[%s1 + $0x30] sm:$0xff]
  %v95 = vld [vmem:[%s1 + $0x38] sm:$0xff]
  %v96 = vld [vmem:[%s1 + $0x40] sm:$0xff]
  %v97 = vld [vmem:[%s1 + $0x48] sm:$0xff]
  %v98 = vld [vmem:[%s1 + $0x50] sm:$0xff]
  %v99 = vld [vmem:[%s1 + $0x58] sm:$0xff]
  %v100 = vld [vmem:[%s1 + $0x60] sm:$0xff]
  %v101 = vld [vmem:[%s1 + $0x68] sm:$0xff]
  %v102 = vld [vmem:[%s1 + $0x70] sm:$0xff]
  %v103 = vld [vmem:[%s1 + $0x78] sm:$0xff]
  %v104 = vld [vmem:[%s1 + $0x80] sm:$0xff]
  %v105 = vld [vmem:[%s1 + $0x88] sm:$0xff]
  %v106 = vld [vmem:[%s1 + $0x90] sm:$0xff]
  %v107 = vld [vmem:[%s1 + $0x98] sm:$0xff]
  %v108 = vld [vmem:[%s1 + $0xa0] sm:$0xff]
  %v109 = vld [vmem:[%s1 + $0xa8] sm:$0xff]
  %v110 = vld [vmem:[%s1 + $0xb0] sm:$0xff]
  %v111 = vld [vmem:[%s1 + $0xb8] sm:$0xff]
  %v112 = vld [vmem:[%s1 + $0xc0] sm:$0xff]
  %v113 = vld [vmem:[%s1 + $0xc8] sm:$0xff]
  %v114 = vld [vmem:[%s1 + $0xd0] sm:$0xff]
  %v115 = vld [vmem:[%s1 + $0xd8] sm:$0xff]
  %v116 = vld [vmem:[%s1 + $0xe0] sm:$0xff]
  %v117 = vld [vmem:[%s1 + $0xe8] sm:$0xff]
  %v118 = vld [vmem:[%s1 + $0xf0] sm:$0xff]
  %v119 = vld [vmem:[%s1 + $0xf8] sm:$0xff]
  %v120 = vld [vmem:[%s1 + $0x100] sm:$0xff]
  %v121 = vld [vmem:[%s1 + $0x108] sm:$0xff]
  %v122 = vld [vmem:[%s1 + $0x110] sm:$0xff]
  %v123 = vld [vmem:[%s1 + $0x118] sm:$0xff]
  %v124 = vld [vmem:[%s1 + $0x120] sm:$0xff]
  %v125 = vld [vmem:[%s1 + $0x128] sm:$0xff]
  %v126 = vld [vmem:[%s1 + $0x130] sm:$0xff]
  %v127 = vld [vmem:[%s1 + $0x138] sm:$0xff]
  %v128 = vld [vmem:[%s1 + $0x140] sm:$0xff]
  %v129 = vld [vmem:[%s1 + $0x148] sm:$0xff]
  %v130 = vld [vmem:[%s1 + $0x150] sm:$0xff]
  %v131 = vld [vmem:[%s1 + $0x158] sm:$0xff]
  %v132 = vld [vmem:[%s1 + $0x160] sm:$0xff]
  %v133 = vld [vmem:[%s1 + $0x168] sm:$0xff]
  %v134 = vld [vmem:[%s1 + $0x170] sm:$0xff]
  %v135 = vld [vmem:[%s1 + $0x178] sm:$0xff]
  %v136 = vld [vmem:[%s1 + $0x180] sm:$0xff]
  %v137 = vld [vmem:[%s1 + $0x188] sm:$0xff]
  %v138 = vld [vmem:[%s1 + $0x190] sm:$0xff]
  %v139 = vld [vmem:[%s1 + $0x198] sm:$0xff]
  %v140 = vld [vmem:[%s1 + $0x1a0] sm:$0xff]
  %v141 = vld [vmem:[%s1 + $0x1a8] sm:$0xff]
  %v142 = vld [vmem:[%s1 + $0x1b0] sm:$0xff]
  %v143 = vld [vmem:[%s1 + $0x1b8] sm:$0xff]
  %v144 = vld [vmem:[%s1 + $0x1c0] sm:$0xff]
  %v145 = vld [vmem:[%s1 + $0x1c8] sm:$0xff]
  %v146 = vld [vmem:[%s1 + $0x1d0] sm:$0xff]
  %v147 = vld [vmem:[%s1 + $0x1d8] sm:$0xff]
  %v148 = vld [vmem:[%s1 + $0x1e0] sm:$0xff]
  %v149 = vld [vmem:[%s1 + $0x1e8] sm:$0xff]
  %v150 = vld [vmem:[%s1 + $0x1f0] sm:$0xff]
  %v151 = vld [vmem:[%s1 + $0x1f8] sm:$0xff]
  %v152 = vld [vmem:[%s2] sm:$0xf]
  %s153 = smul.u32 0, 4
  %s154 = smul.u32 %s153, 2
  %s155 = smul.addr %s154, 4
  %s156 = scalar_lea.vmem %s58, %s155
  %v157 = vld [vmem:[%s156] sm:$0xf]
  %v158 = vld [vmem:[%s156 + $0x4] sm:$0xf]
  %159 = vst [vmem:[#allocation2] sm:$0xf] %v157
  %160 = vst [vmem:[#allocation2 + $0x8] sm:$0xf] %v158
  %v161 = vld [vmem:[#allocation2] sm:$0xff]
  %v162 = vld [vmem:[#allocation2 + $0x8] sm:$0xff]
  %v164 = vlaneseq
  %v165 = vshrl.u32 %v164, 7
  %v166 = vsub.s32 0, %v165
  %v167 = vrot.slane %v152, %v166
  %v168 = vlaneseq
  %v169 = vshrl.u32 %v168, 7
  %v170 = vsub.s32 1, %v169
  %v171 = vrot.slane %v152, %v170
  %v172 = vlaneseq
  %v173 = vshrl.u32 %v172, 7
  %v174 = vsub.s32 2, %v173
  %v175 = vrot.slane %v152, %v174
  %v176 = vlaneseq
  %v177 = vshrl.u32 %v176, 7
  %v178 = vsub.s32 3, %v177
  %v179 = vrot.slane %v152, %v178
  %v186 = vunpack.c.l.b16 %v161
  %v187 = vunpack.c.h.b16 %v161
  %v188 = vunpack.c.l.b16 %v162
  %v189 = vunpack.c.h.b16 %v162
  %v190 = vpack.c.b16 %v188, %v186
  %v191 = vpack.c.b16 %v189, %v187
  %v258 = vunpack.c.l.b16 %v88
  %v259 = vunpack.c.h.b16 %v88
  %v260 = vunpack.c.l.b16 %v89
  %v261 = vunpack.c.h.b16 %v89
  %v262 = vunpack.c.l.b16 %v90
  %v263 = vunpack.c.h.b16 %v90
  %v264 = vunpack.c.l.b16 %v91
  %v265 = vunpack.c.h.b16 %v91
  %v266 = vunpack.c.l.b16 %v92
  %v267 = vunpack.c.h.b16 %v92
  %v268 = vunpack.c.l.b16 %v93
  %v269 = vunpack.c.h.b16 %v93
  %v270 = vunpack.c.l.b16 %v94
  %v271 = vunpack.c.h.b16 %v94
  %v272 = vunpack.c.l.b16 %v95
  %v273 = vunpack.c.h.b16 %v95
  %v274 = vunpack.c.l.b16 %v96
  %v275 = vunpack.c.h.b16 %v96
  %v276 = vunpack.c.l.b16 %v97
  %v277 = vunpack.c.h.b16 %v97
  %v278 = vunpack.c.l.b16 %v98
  %v279 = vunpack.c.h.b16 %v98
  %v280 = vunpack.c.l.b16 %v99
  %v281 = vunpack.c.h.b16 %v99
  %v282 = vunpack.c.l.b16 %v100
  %v283 = vunpack.c.h.b16 %v100
  %v284 = vunpack.c.l.b16 %v101
  %v285 = vunpack.c.h.b16 %v101
  %v286 = vunpack.c.l.b16 %v102
  %v287 = vunpack.c.h.b16 %v102
  %v288 = vunpack.c.l.b16 %v103
  %v289 = vunpack.c.h.b16 %v103
  %v290 = vunpack.c.l.b16 %v104
  %v291 = vunpack.c.h.b16 %v104
  %v292 = vunpack.c.l.b16 %v105
  %v293 = vunpack.c.h.b16 %v105
  %v294 = vunpack.c.l.b16 %v106
  %v295 = vunpack.c.h.b16 %v106
  %v296 = vunpack.c.l.b16 %v107
  %v297 = vunpack.c.h.b16 %v107
  %v298 = vunpack.c.l.b16 %v108
  %v299 = vunpack.c.h.b16 %v108
  %v300 = vunpack.c.l.b16 %v109
  %v301 = vunpack.c.h.b16 %v109
  %v302 = vunpack.c.l.b16 %v110
  %v303 = vunpack.c.h.b16 %v110
  %v304 = vunpack.c.l.b16 %v111
  %v305 = vunpack.c.h.b16 %v111
  %v306 = vunpack.c.l.b16 %v112
  %v307 = vunpack.c.h.b16 %v112
  %v308 = vunpack.c.l.b16 %v113
  %v309 = vunpack.c.h.b16 %v113
  %v310 = vunpack.c.l.b16 %v114
  %v311 = vunpack.c.h.b16 %v114
  %v312 = vunpack.c.l.b16 %v115
  %v313 = vunpack.c.h.b16 %v115
  %v314 = vunpack.c.l.b16 %v116
  %v315 = vunpack.c.h.b16 %v116
  %v316 = vunpack.c.l.b16 %v117
  %v317 = vunpack.c.h.b16 %v117
  %v318 = vunpack.c.l.b16 %v118
  %v319 = vunpack.c.h.b16 %v118
  %v320 = vunpack.c.l.b16 %v119
  %v321 = vunpack.c.h.b16 %v119
  %v322 = vunpack.c.l.b16 %v120
  %v323 = vunpack.c.h.b16 %v120
  %v324 = vunpack.c.l.b16 %v121
  %v325 = vunpack.c.h.b16 %v121
  %v326 = vunpack.c.l.b16 %v122
  %v327 = vunpack.c.h.b16 %v122
  %v328 = vunpack.c.l.b16 %v123
  %v329 = vunpack.c.h.b16 %v123
  %v330 = vunpack.c.l.b16 %v124
  %v331 = vunpack.c.h.b16 %v124
  %v332 = vunpack.c.l.b16 %v125
  %v333 = vunpack.c.h.b16 %v125
  %v334 = vunpack.c.l.b16 %v126
  %v335 = vunpack.c.h.b16 %v126
  %v336 = vunpack.c.l.b16 %v127
  %v337 = vunpack.c.h.b16 %v127
  %v338 = vunpack.c.l.b16 %v128
  %v339 = vunpack.c.h.b16 %v128
  %v340 = vunpack.c.l.b16 %v129
  %v341 = vunpack.c.h.b16 %v129
  %v342 = vunpack.c.l.b16 %v130
  %v343 = vunpack.c.h.b16 %v130
  %v344 = vunpack.c.l.b16 %v131
  %v345 = vunpack.c.h.b16 %v131
  %v346 = vunpack.c.l.b16 %v132
  %v347 = vunpack.c.h.b16 %v132
  %v348 = vunpack.c.l.b16 %v133
  %v349 = vunpack.c.h.b16 %v133
  %v350 = vunpack.c.l.b16 %v134
  %v351 = vunpack.c.h.b16 %v134
  %v352 = vunpack.c.l.b16 %v135
  %v353 = vunpack.c.h.b16 %v135
  %v354 = vunpack.c.l.b16 %v136
  %v355 = vunpack.c.h.b16 %v136
  %v356 = vunpack.c.l.b16 %v137
  %v357 = vunpack.c.h.b16 %v137
  %v358 = vunpack.c.l.b16 %v138
  %v359 = vunpack.c.h.b16 %v138
  %v360 = vunpack.c.l.b16 %v139
  %v361 = vunpack.c.h.b16 %v139
  %v362 = vunpack.c.l.b16 %v140
  %v363 = vunpack.c.h.b16 %v140
  %v364 = vunpack.c.l.b16 %v141
  %v365 = vunpack.c.h.b16 %v141
  %v366 = vunpack.c.l.b16 %v142
  %v367 = vunpack.c.h.b16 %v142
  %v368 = vunpack.c.l.b16 %v143
  %v369 = vunpack.c.h.b16 %v143
  %v370 = vunpack.c.l.b16 %v144
  %v371 = vunpack.c.h.b16 %v144
  %v372 = vunpack.c.l.b16 %v145
  %v373 = vunpack.c.h.b16 %v145
  %v374 = vunpack.c.l.b16 %v146
  %v375 = vunpack.c.h.b16 %v146
  %v376 = vunpack.c.l.b16 %v147
  %v377 = vunpack.c.h.b16 %v147
  %v378 = vunpack.c.l.b16 %v148
  %v379 = vunpack.c.h.b16 %v148
  %v380 = vunpack.c.l.b16 %v149
  %v381 = vunpack.c.h.b16 %v149
  %v382 = vunpack.c.l.b16 %v150
  %v383 = vunpack.c.h.b16 %v150
  %v384 = vunpack.c.l.b16 %v151
  %v385 = vunpack.c.h.b16 %v151
  %v386 = vpack.c.b16 %v262, %v258
  %v387 = vpack.c.b16 %v263, %v259
  %v388 = vpack.c.b16 %v264, %v260
  %v389 = vpack.c.b16 %v265, %v261
  %v390 = vpack.c.b16 %v270, %v266
  %v391 = vpack.c.b16 %v271, %v267
  %v392 = vpack.c.b16 %v272, %v268
  %v393 = vpack.c.b16 %v273, %v269
  %v394 = vpack.c.b16 %v278, %v274
  %v395 = vpack.c.b16 %v279, %v275
  %v396 = vpack.c.b16 %v280, %v276
  %v397 = vpack.c.b16 %v281, %v277
  %v398 = vpack.c.b16 %v286, %v282
  %v399 = vpack.c.b16 %v287, %v283
  %v400 = vpack.c.b16 %v288, %v284
  %v401 = vpack.c.b16 %v289, %v285
  %v402 = vpack.c.b16 %v294, %v290
  %v403 = vpack.c.b16 %v295, %v291
  %v404 = vpack.c.b16 %v296, %v292
  %v405 = vpack.c.b16 %v297, %v293
  %v406 = vpack.c.b16 %v302, %v298
  %v407 = vpack.c.b16 %v303, %v299
  %v408 = vpack.c.b16 %v304, %v300
  %v409 = vpack.c.b16 %v305, %v301
  %v410 = vpack.c.b16 %v310, %v306
  %v411 = vpack.c.b16 %v311, %v307
  %v412 = vpack.c.b16 %v312, %v308
  %v413 = vpack.c.b16 %v313, %v309
  %v414 = vpack.c.b16 %v318, %v314
  %v415 = vpack.c.b16 %v319, %v315
  %v416 = vpack.c.b16 %v320, %v316
  %v417 = vpack.c.b16 %v321, %v317
  %v418 = vpack.c.b16 %v326, %v322
  %v419 = vpack.c.b16 %v327, %v323
  %v420 = vpack.c.b16 %v328, %v324
  %v421 = vpack.c.b16 %v329, %v325
  %v422 = vpack.c.b16 %v334, %v330
  %v423 = vpack.c.b16 %v335, %v331
  %v424 = vpack.c.b16 %v336, %v332
  %v425 = vpack.c.b16 %v337, %v333
  %v426 = vpack.c.b16 %v342, %v338
  %v427 = vpack.c.b16 %v343, %v339
  %v428 = vpack.c.b16 %v344, %v340
  %v429 = vpack.c.b16 %v345, %v341
  %v430 = vpack.c.b16 %v350, %v346
  %v431 = vpack.c.b16 %v351, %v347
  %v432 = vpack.c.b16 %v352, %v348
  %v433 = vpack.c.b16 %v353, %v349
  %v434 = vpack.c.b16 %v358, %v354
  %v435 = vpack.c.b16 %v359, %v355
  %v436 = vpack.c.b16 %v360, %v356
  %v437 = vpack.c.b16 %v361, %v357
  %v438 = vpack.c.b16 %v366, %v362
  %v439 = vpack.c.b16 %v367, %v363
  %v440 = vpack.c.b16 %v368, %v364
  %v441 = vpack.c.b16 %v369, %v365
  %v442 = vpack.c.b16 %v374, %v370
  %v443 = vpack.c.b16 %v375, %v371
  %v444 = vpack.c.b16 %v376, %v372
  %v445 = vpack.c.b16 %v377, %v373
  %v446 = vpack.c.b16 %v382, %v378
  %v447 = vpack.c.b16 %v383, %v379
  %v448 = vpack.c.b16 %v384, %v380
  %v449 = vpack.c.b16 %v385, %v381
  %514 = vmatprep.subr.bf16.mxu0 %v415
  %515 = vmatpush1.bf16.msra.mxu0 %v414
  %516 = vmatprep.subr.bf16.mxu0 %v411
  %517 = vmatpush1.bf16.msra.mxu0 %v410
  %518 = vmatprep.subr.bf16.mxu0 %v407
  %519 = vmatpush1.bf16.msra.mxu0 %v406
  %520 = vmatprep.subr.bf16.mxu0 %v403
  %521 = vmatpush1.bf16.msra.mxu0 %v402
  %522 = vmatprep.subr.bf16.mxu0 %v399
  %523 = vmatpush1.bf16.msra.mxu0 %v398
  %524 = vmatprep.subr.bf16.mxu0 %v395
  %525 = vmatpush1.bf16.msra.mxu0 %v394
  %526 = vmatprep.subr.bf16.mxu0 %v391
  %527 = vmatpush1.bf16.msra.mxu0 %v390
  %528 = vmatprep.subr.bf16.mxu0 %v387
  %529 = vmatpush1.bf16.msra.mxu0 %v386
  %530 = vmatprep.subr.bf16.mxu0 %v447
  %531 = vmatpush2.bf16.msra.mxu0 %v446
  %532 = vmatprep.subr.bf16.mxu0 %v443
  %533 = vmatpush2.bf16.msra.mxu0 %v442
  %534 = vmatprep.subr.bf16.mxu0 %v439
  %535 = vmatpush2.bf16.msra.mxu0 %v438
  %536 = vmatprep.subr.bf16.mxu0 %v435
  %537 = vmatpush2.bf16.msra.mxu0 %v434
  %538 = vmatprep.subr.bf16.mxu0 %v431
  %539 = vmatpush2.bf16.msra.mxu0 %v430
  %540 = vmatprep.subr.bf16.mxu0 %v427
  %541 = vmatpush2.bf16.msra.mxu0 %v426
  %542 = vmatprep.subr.bf16.mxu0 %v423
  %543 = vmatpush2.bf16.msra.mxu0 %v422
  %544 = vmatprep.subr.bf16.mxu0 %v419
  %545 = vmatpush2.bf16.msra.mxu0 %v418
  %546 = vmatprep.mubr.bf16.mxu0 %v191
  %547 = vmatmul.mubr.bf16.gmra.mxu0 %v190
  %v548 = vpop.f32.mrf.mxu0
  %v549 = vadd.f32 %v167, %v548
  %v550 = vpop.f32.mrf.mxu0
  %v551 = vadd.f32 %v171, %v550
  %v552 = vpop.f32.mrf.mxu0
  %v553 = vadd.f32 %v167, %v552
  %v554 = vpop.f32.mrf.mxu0
  %v555 = vadd.f32 %v171, %v554
  %556 = vdwg.mxu0
  %557 = vmatprep.subr.bf16.mxu0 %v417
  %558 = vmatpush1.bf16.msra.mxu0 %v416
  %559 = vmatprep.subr.bf16.mxu0 %v413
  %560 = vmatpush1.bf16.msra.mxu0 %v412
  %561 = vmatprep.subr.bf16.mxu0 %v409
  %562 = vmatpush1.bf16.msra.mxu0 %v408
  %563 = vmatprep.subr.bf16.mxu0 %v405
  %564 = vmatpush1.bf16.msra.mxu0 %v404
  %565 = vmatprep.subr.bf16.mxu0 %v401
  %566 = vmatpush1.bf16.msra.mxu0 %v400
  %567 = vmatprep.subr.bf16.mxu0 %v397
  %568 = vmatpush1.bf16.msra.mxu0 %v396
  %569 = vmatprep.subr.bf16.mxu0 %v393
  %570 = vmatpush1.bf16.msra.mxu0 %v392
  %571 = vmatprep.subr.bf16.mxu0 %v389
  %572 = vmatpush1.bf16.msra.mxu0 %v388
  %573 = vmatprep.subr.bf16.mxu0 %v449
  %574 = vmatpush2.bf16.msra.mxu0 %v448
  %575 = vmatprep.subr.bf16.mxu0 %v445
  %576 = vmatpush2.bf16.msra.mxu0 %v444
  %577 = vmatprep.subr.bf16.mxu0 %v441
  %578 = vmatpush2.bf16.msra.mxu0 %v440
  %579 = vmatprep.subr.bf16.mxu0 %v437
  %580 = vmatpush2.bf16.msra.mxu0 %v436
  %581 = vmatprep.subr.bf16.mxu0 %v433
  %582 = vmatpush2.bf16.msra.mxu0 %v432
  %583 = vmatprep.subr.bf16.mxu0 %v429
  %584 = vmatpush2.bf16.msra.mxu0 %v428
  %585 = vmatprep.subr.bf16.mxu0 %v425
  %586 = vmatpush2.bf16.msra.mxu0 %v424
  %587 = vmatprep.subr.bf16.mxu0 %v421
  %588 = vmatpush2.bf16.msra.mxu0 %v420
  %589 = vmatprep.mubr.bf16.mxu0 %v191
  %590 = vmatmul.mubr.bf16.gmra.mxu0 %v190
  %v591 = vpop.f32.mrf.mxu0
  %v592 = vadd.f32 %v175, %v591
  %v593 = vpop.f32.mrf.mxu0
  %v594 = vadd.f32 %v179, %v593
  %v595 = vpop.f32.mrf.mxu0
  %v596 = vadd.f32 %v175, %v595
  %v597 = vpop.f32.mrf.mxu0
  %v598 = vadd.f32 %v179, %v597
  %599 = vdwg.mxu0
  %v600 = vxor.u32 %v549, 2147483648
  %v601 = vxor.u32 %v551, 2147483648
  %v602 = vxor.u32 %v592, 2147483648
  %v603 = vxor.u32 %v553, 2147483648
  %v604 = vxor.u32 %v555, 2147483648
  %v605 = vxor.u32 %v596, 2147483648
  %v606 = vmul.f32 %v600, 1.442695
  %v607 = vpow.pop %v606
  %v608 = vmul.f32 %v601, 1.442695
  %v609 = vpow.pop %v608
  %v610 = vmul.f32 %v602, 1.442695
  %v611 = vpow.pop %v610
  %v612 = vmul.f32 %v603, 1.442695
  %v613 = vpow.pop %v612
  %v614 = vmul.f32 %v604, 1.442695
  %v615 = vpow.pop %v614
  %v616 = vmul.f32 %v605, 1.442695
  %v617 = vpow.pop %v616
  %v618 = vadd.f32 %v607, 1.0
  %v619 = vadd.f32 %v609, 1.0
  %v620 = vadd.f32 %v611, 1.0
  %v621 = vadd.f32 %v613, 1.0
  %v622 = vadd.f32 %v615, 1.0
  %v623 = vadd.f32 %v617, 1.0
  %v624 = vrcp.pop %v618
  %v625 = vmul.f32 1.0, %v624
  %v626 = vrcp.pop %v619
  %v627 = vmul.f32 1.0, %v626
  %v628 = vrcp.pop %v620
  %v629 = vmul.f32 1.0, %v628
  %v630 = vrcp.pop %v621
  %v631 = vmul.f32 1.0, %v630
  %v632 = vrcp.pop %v622
  %v633 = vmul.f32 1.0, %v632
  %v634 = vrcp.pop %v623
  %v635 = vmul.f32 1.0, %v634
  %v636 = vtanh.pop %v594
  %v637 = vtanh.pop %v598
  %v638 = vld [vmem:[#allocation3] sm:$0xff]
  %v639 = vld [vmem:[#allocation3 + $0x8] sm:$0xff]
  %v640 = vmul.f32 %v627, %v638
  %v641 = vmul.f32 %v633, %v639
  %v642 = vmul.f32 %v625, %v636
  %v643 = vmul.f32 %v631, %v637
  %v644 = vadd.f32 %v640, %v642
  %v645 = vadd.f32 %v641, %v643
  %v646 = vtanh.pop %v644
  %v647 = vtanh.pop %v645
  %v648 = vmul.f32 %v629, %v646
  %v649 = vmul.f32 %v635, %v647
  %v650 = vpack.c.bf16 %v649, %v648
  %651 = vst [vmem:[#allocation3] sm:$0xff] %v644
  %652 = vst [vmem:[#allocation3 + $0x8] sm:$0xff] %v645
  %v654 = vunpack.c.l.b16 %v650
  %v655 = vunpack.c.h.b16 %v650
  %v656 = vpack.c.b16 %v654, %v654
  %v657 = vpack.c.b16 %v655, %v655
  %660 = vst [vmem:[#allocation2 + $0x4] sm:$0xf] %v656
  %661 = vst [vmem:[#allocation2 + $0xc] sm:$0xf] %v657
  %s662 = smul.addr %s154, 4
  %s663 = scalar_lea.vmem %s73, %s662
  %664 = vst [vmem:[%s663] sm:$0xf] %v656
  %665 = vst [vmem:[%s663 + $0x4] sm:$0xf] %v657
  %s666 = smul.u32 0, 2
  %s667 = sadd.s32 %s666, 1
  %s668 = smul.u32 %s667, 2
  %s669 = smul.addr %s668, 4
  %s670 = scalar_lea.vmem %s58, %s669
  %v671 = vld [vmem:[%s670] sm:$0xf]
  %v672 = vld [vmem:[%s670 + $0x4] sm:$0xf]
  %673 = vst [vmem:[#allocation2] sm:$0xf] %v671
  %674 = vst [vmem:[#allocation2 + $0x8] sm:$0xf] %v672
  %v675 = vld [vmem:[#allocation2] sm:$0xff]
  %v676 = vld [vmem:[#allocation2 + $0x8] sm:$0xff]
  %v679 = vunpack.c.l.b16 %v675
  %v680 = vunpack.c.h.b16 %v675
  %v681 = vunpack.c.l.b16 %v676
  %v682 = vunpack.c.h.b16 %v676
  %v683 = vpack.c.b16 %v681, %v679
  %v684 = vpack.c.b16 %v682, %v680
  %687 = vmatprep.subr.bf16.mxu0 %v415
  %688 = vmatpush1.bf16.msra.mxu0 %v414
  %689 = vmatprep.subr.bf16.mxu0 %v411
  %690 = vmatpush1.bf16.msra.mxu0 %v410
  %691 = vmatprep.subr.bf16.mxu0 %v407
  %692 = vmatpush1.bf16.msra.mxu0 %v406
  %693 = vmatprep.subr.bf16.mxu0 %v403
  %694 = vmatpush1.bf16.msra.mxu0 %v402
  %695 = vmatprep.subr.bf16.mxu0 %v399
  %696 = vmatpush1.bf16.msra.mxu0 %v398
  %697 = vmatprep.subr.bf16.mxu0 %v395
  %698 = vmatpush1.bf16.msra.mxu0 %v394
  %699 = vmatprep.subr.bf16.mxu0 %v391
  %700 = vmatpush1.bf16.msra.mxu0 %v390
  %701 = vmatprep.subr.bf16.mxu0 %v387
  %702 = vmatpush1.bf16.msra.mxu0 %v386
  %703 = vmatprep.subr.bf16.mxu0 %v447
  %704 = vmatpush2.bf16.msra.mxu0 %v446
  %705 = vmatprep.subr.bf16.mxu0 %v443
  %706 = vmatpush2.bf16.msra.mxu0 %v442
  %707 = vmatprep.subr.bf16.mxu0 %v439
  %708 = vmatpush2.bf16.msra.mxu0 %v438
  %709 = vmatprep.subr.bf16.mxu0 %v435
  %710 = vmatpush2.bf16.msra.mxu0 %v434
  %711 = vmatprep.subr.bf16.mxu0 %v431
  %712 = vmatpush2.bf16.msra.mxu0 %v430
  %713 = vmatprep.subr.bf16.mxu0 %v427
  %714 = vmatpush2.bf16.msra.mxu0 %v426
  %715 = vmatprep.subr.bf16.mxu0 %v423
  %716 = vmatpush2.bf16.msra.mxu0 %v422
  %717 = vmatprep.subr.bf16.mxu0 %v419
  %718 = vmatpush2.bf16.msra.mxu0 %v418
  %719 = vmatprep.mubr.bf16.mxu0 %v684
  %720 = vmatmul.mubr.bf16.gmra.mxu0 %v683
  %v721 = vpop.f32.mrf.mxu0
  %v722 = vadd.f32 %v167, %v721
  %v723 = vpop.f32.mrf.mxu0
  %v724 = vadd.f32 %v171, %v723
  %v725 = vpop.f32.mrf.mxu0
  %v726 = vadd.f32 %v167, %v725
  %v727 = vpop.f32.mrf.mxu0
  %v728 = vadd.f32 %v171, %v727
  %729 = vdwg.mxu0
  %730 = vmatprep.subr.bf16.mxu0 %v417
  %731 = vmatpush1.bf16.msra.mxu0 %v416
  %732 = vmatprep.subr.bf16.mxu0 %v413
  %733 = vmatpush1.bf16.msra.mxu0 %v412
  %734 = vmatprep.subr.bf16.mxu0 %v409
  %735 = vmatpush1.bf16.msra.mxu0 %v408
  %736 = vmatprep.subr.bf16.mxu0 %v405
  %737 = vmatpush1.bf16.msra.mxu0 %v404
  %738 = vmatprep.subr.bf16.mxu0 %v401
  %739 = vmatpush1.bf16.msra.mxu0 %v400
  %740 = vmatprep.subr.bf16.mxu0 %v397
  %741 = vmatpush1.bf16.msra.mxu0 %v396
  %742 = vmatprep.subr.bf16.mxu0 %v393
  %743 = vmatpush1.bf16.msra.mxu0 %v392
  %744 = vmatprep.subr.bf16.mxu0 %v389
  %745 = vmatpush1.bf16.msra.mxu0 %v388
  %746 = vmatprep.subr.bf16.mxu0 %v449
  %747 = vmatpush2.bf16.msra.mxu0 %v448
  %748 = vmatprep.subr.bf16.mxu0 %v445
  %749 = vmatpush2.bf16.msra.mxu0 %v444
  %750 = vmatprep.subr.bf16.mxu0 %v441
  %751 = vmatpush2.bf16.msra.mxu0 %v440
  %752 = vmatprep.subr.bf16.mxu0 %v437
  %753 = vmatpush2.bf16.msra.mxu0 %v436
  %754 = vmatprep.subr.bf16.mxu0 %v433
  %755 = vmatpush2.bf16.msra.mxu0 %v432
  %756 = vmatprep.subr.bf16.mxu0 %v429
  %757 = vmatpush2.bf16.msra.mxu0 %v428
  %758 = vmatprep.subr.bf16.mxu0 %v425
  %759 = vmatpush2.bf16.msra.mxu0 %v424
  %760 = vmatprep.subr.bf16.mxu0 %v421
  %761 = vmatpush2.bf16.msra.mxu0 %v420
  %762 = vmatprep.mubr.bf16.mxu0 %v684
  %763 = vmatmul.mubr.bf16.gmra.mxu0 %v683
  %v764 = vpop.f32.mrf.mxu0
  %v765 = vadd.f32 %v175, %v764
  %v766 = vpop.f32.mrf.mxu0
  %v767 = vadd.f32 %v179, %v766
  %v768 = vpop.f32.mrf.mxu0
  %v769 = vadd.f32 %v175, %v768
  %v770 = vpop.f32.mrf.mxu0
  %v771 = vadd.f32 %v179, %v770
  %772 = vdwg.mxu0
  %v773 = vxor.u32 %v722, 2147483648
  %v774 = vxor.u32 %v724, 2147483648
  %v775 = vxor.u32 %v765, 2147483648
  %v776 = vxor.u32 %v726, 2147483648
  %v777 = vxor.u32 %v728, 2147483648
  %v778 = vxor.u32 %v769, 2147483648
  %v779 = vmul.f32 %v773, 1.442695
  %v780 = vpow.pop %v779
  %v781 = vmul.f32 %v774, 1.442695
  %v782 = vpow.pop %v781
  %v783 = vmul.f32 %v775, 1.442695
  %v784 = vpow.pop %v783
  %v785 = vmul.f32 %v776, 1.442695
  %v786 = vpow.pop %v785
  %v787 = vmul.f32 %v777, 1.442695
  %v788 = vpow.pop %v787
  %v789 = vmul.f32 %v778, 1.442695
  %v790 = vpow.pop %v789
  %v791 = vadd.f32 %v780, 1.0
  %v792 = vadd.f32 %v782, 1.0
  %v793 = vadd.f32 %v784, 1.0
  %v794 = vadd.f32 %v786, 1.0
  %v795 = vadd.f32 %v788, 1.0
  %v796 = vadd.f32 %v790, 1.0
  %v797 = vrcp.pop %v791
  %v798 = vmul.f32 1.0, %v797
  %v799 = vrcp.pop %v792
  %v800 = vmul.f32 1.0, %v799
  %v801 = vrcp.pop %v793
  %v802 = vmul.f32 1.0, %v801
  %v803 = vrcp.pop %v794
  %v804 = vmul.f32 1.0, %v803
  %v805 = vrcp.pop %v795
  %v806 = vmul.f32 1.0, %v805
  %v807 = vrcp.pop %v796
  %v808 = vmul.f32 1.0, %v807
  %v809 = vtanh.pop %v767
  %v810 = vtanh.pop %v771
  %v811 = vld [vmem:[#allocation3] sm:$0xff]
  %v812 = vld [vmem:[#allocation3 + $0x8] sm:$0xff]
  %v813 = vmul.f32 %v800, %v811
  %v814 = vmul.f32 %v806, %v812
  %v815 = vmul.f32 %v798, %v809
  %v816 = vmul.f32 %v804, %v810
  %v817 = vadd.f32 %v813, %v815
  %v818 = vadd.f32 %v814, %v816
  %v819 = vtanh.pop %v817
  %v820 = vtanh.pop %v818
  %v821 = vmul.f32 %v802, %v819
  %v822 = vmul.f32 %v808, %v820
  %v823 = vpack.c.bf16 %v822, %v821
  %824 = vst [vmem:[#allocation3] sm:$0xff] %v817
  %825 = vst [vmem:[#allocation3 + $0x8] sm:$0xff] %v818
  %v827 = vunpack.c.l.b16 %v823
  %v828 = vunpack.c.h.b16 %v823
  %v829 = vpack.c.b16 %v827, %v827
  %v830 = vpack.c.b16 %v828, %v828
  %833 = vst [vmem:[#allocation2 + $0x4] sm:$0xf] %v829
  %834 = vst [vmem:[#allocation2 + $0xc] sm:$0xf] %v830
  %s835 = smul.addr %s668, 4
  %s836 = scalar_lea.vmem %s73, %s835
  %837 = vst [vmem:[%s836] sm:$0xf] %v829
  %838 = vst [vmem:[%s836 + $0x4] sm:$0xf] %v830
  %s839 = scalar_lea.vmem %s58, 16
  %v840 = vld [vmem:[%s839] sm:$0xf]
  %v841 = vld [vmem:[%s839 + $0x4] sm:$0xf]
  %842 = vst [vmem:[#allocation2] sm:$0xf] %v840
  %843 = vst [vmem:[#allocation2 + $0x8] sm:$0xf] %v841
  %v844 = vld [vmem:[#allocation2] sm:$0xff]
  %v845 = vld [vmem:[#allocation2 + $0x8] sm:$0xff]
  %v848 = vunpack.c.l.b16 %v844
  %v849 = vunpack.c.h.b16 %v844
  %v850 = vunpack.c.l.b16 %v845
  %v851 = vunpack.c.h.b16 %v845
  %v852 = vpack.c.b16 %v850, %v848
  %v853 = vpack.c.b16 %v851, %v849
  %856 = vmatprep.subr.bf16.mxu0 %v415
  %857 = vmatpush1.bf16.msra.mxu0 %v414
  %858 = vmatprep.subr.bf16.mxu0 %v411
  %859 = vmatpush1.bf16.msra.mxu0 %v410
  %860 = vmatprep.subr.bf16.mxu0 %v407
  %861 = vmatpush1.bf16.msra.mxu0 %v406
  %862 = vmatprep.subr.bf16.mxu0 %v403
  %863 = vmatpush1.bf16.msra.mxu0 %v402
  %864 = vmatprep.subr.bf16.mxu0 %v399
  %865 = vmatpush1.bf16.msra.mxu0 %v398
  %866 = vmatprep.subr.bf16.mxu0 %v395
  %867 = vmatpush1.bf16.msra.mxu0 %v394
  %868 = vmatprep.subr.bf16.mxu0 %v391
  %869 = vmatpush1.bf16.msra.mxu0 %v390
  %870 = vmatprep.subr.bf16.mxu0 %v387
  %871 = vmatpush1.bf16.msra.mxu0 %v386
  %872 = vmatprep.subr.bf16.mxu0 %v447
  %873 = vmatpush2.bf16.msra.mxu0 %v446
  %874 = vmatprep.subr.bf16.mxu0 %v443
  %875 = vmatpush2.bf16.msra.mxu0 %v442
  %876 = vmatprep.subr.bf16.mxu0 %v439
  %877 = vmatpush2.bf16.msra.mxu0 %v438
  %878 = vmatprep.subr.bf16.mxu0 %v435
  %879 = vmatpush2.bf16.msra.mxu0 %v434
  %880 = vmatprep.subr.bf16.mxu0 %v431
  %881 = vmatpush2.bf16.msra.mxu0 %v430
  %882 = vmatprep.subr.bf16.mxu0 %v427
  %883 = vmatpush2.bf16.msra.mxu0 %v426
  %884 = vmatprep.subr.bf16.mxu0 %v423
  %885 = vmatpush2.bf16.msra.mxu0 %v422
  %886 = vmatprep.subr.bf16.mxu0 %v419
  %887 = vmatpush2.bf16.msra.mxu0 %v418
  %888 = vmatprep.mubr.bf16.mxu0 %v853
  %889 = vmatmul.mubr.bf16.gmra.mxu0 %v852
  %v890 = vpop.f32.mrf.mxu0
  %v891 = vadd.f32 %v167, %v890
  %v892 = vpop.f32.mrf.mxu0
  %v893 = vadd.f32 %v171, %v892
  %v894 = vpop.f32.mrf.mxu0
  %v895 = vadd.f32 %v167, %v894
  %v896 = vpop.f32.mrf.mxu0
  %v897 = vadd.f32 %v171, %v896
  %898 = vdwg.mxu0
  %899 = vmatprep.subr.bf16.mxu0 %v417
  %900 = vmatpush1.bf16.msra.mxu0 %v416
  %901 = vmatprep.subr.bf16.mxu0 %v413
  %902 = vmatpush1.bf16.msra.mxu0 %v412
  %903 = vmatprep.subr.bf16.mxu0 %v409
  %904 = vmatpush1.bf16.msra.mxu0 %v408
  %905 = vmatprep.subr.bf16.mxu0 %v405
  %906 = vmatpush1.bf16.msra.mxu0 %v404
  %907 = vmatprep.subr.bf16.mxu0 %v401
  %908 = vmatpush1.bf16.msra.mxu0 %v400
  %909 = vmatprep.subr.bf16.mxu0 %v397
  %910 = vmatpush1.bf16.msra.mxu0 %v396
  %911 = vmatprep.subr.bf16.mxu0 %v393
  %912 = vmatpush1.bf16.msra.mxu0 %v392
  %913 = vmatprep.subr.bf16.mxu0 %v389
  %914 = vmatpush1.bf16.msra.mxu0 %v388
  %915 = vmatprep.subr.bf16.mxu0 %v449
  %916 = vmatpush2.bf16.msra.mxu0 %v448
  %917 = vmatprep.subr.bf16.mxu0 %v445
  %918 = vmatpush2.bf16.msra.mxu0 %v444
  %919 = vmatprep.subr.bf16.mxu0 %v441
  %920 = vmatpush2.bf16.msra.mxu0 %v440
  %921 = vmatprep.subr.bf16.mxu0 %v437
  %922 = vmatpush2.bf16.msra.mxu0 %v436
  %923 = vmatprep.subr.bf16.mxu0 %v433
  %924 = vmatpush2.bf16.msra.mxu0 %v432
  %925 = vmatprep.subr.bf16.mxu0 %v429
  %926 = vmatpush2.bf16.msra.mxu0 %v428
  %927 = vmatprep.subr.bf16.mxu0 %v425
  %928 = vmatpush2.bf16.msra.mxu0 %v424
  %929 = vmatprep.subr.bf16.mxu0 %v421
  %930 = vmatpush2.bf16.msra.mxu0 %v420
  %931 = vmatprep.mubr.bf16.mxu0 %v853
  %932 = vmatmul.mubr.bf16.gmra.mxu0 %v852
  %v933 = vpop.f32.mrf.mxu0
  %v934 = vadd.f32 %v175, %v933
  %v935 = vpop.f32.mrf.mxu0
  %v936 = vadd.f32 %v179, %v935
  %v937 = vpop.f32.mrf.mxu0
  %v938 = vadd.f32 %v175, %v937
  %v939 = vpop.f32.mrf.mxu0
  %v940 = vadd.f32 %v179, %v939
  %941 = vdwg.mxu0
  %v942 = vxor.u32 %v891, 2147483648
  %v943 = vxor.u32 %v893, 2147483648
  %v944 = vxor.u32 %v934, 2147483648
  %v945 = vxor.u32 %v895, 2147483648
  %v946 = vxor.u32 %v897, 2147483648
  %v947 = vxor.u32 %v938, 2147483648
  %v948 = vmul.f32 %v942, 1.442695
  %v949 = vpow.pop %v948
  %v950 = vmul.f32 %v943, 1.442695
  %v951 = vpow.pop %v950
  %v952 = vmul.f32 %v944, 1.442695
  %v953 = vpow.pop %v952
  %v954 = vmul.f32 %v945, 1.442695
  %v955 = vpow.pop %v954
  %v956 = vmul.f32 %v946, 1.442695
  %v957 = vpow.pop %v956
  %v958 = vmul.f32 %v947, 1.442695
  %v959 = vpow.pop %v958
  %v960 = vadd.f32 %v949, 1.0
  %v961 = vadd.f32 %v951, 1.0
  %v962 = vadd.f32 %v953, 1.0
  %v963 = vadd.f32 %v955, 1.0
  %v964 = vadd.f32 %v957, 1.0
  %v965 = vadd.f32 %v959, 1.0
  %v966 = vrcp.pop %v960
  %v967 = vmul.f32 1.0, %v966
  %v968 = vrcp.pop %v961
  %v969 = vmul.f32 1.0, %v968
  %v970 = vrcp.pop %v962
  %v971 = vmul.f32 1.0, %v970
  %v972 = vrcp.pop %v963
  %v973 = vmul.f32 1.0, %v972
  %v974 = vrcp.pop %v964
  %v975 = vmul.f32 1.0, %v974
  %v976 = vrcp.pop %v965
  %v977 = vmul.f32 1.0, %v976
  %v978 = vtanh.pop %v936
  %v979 = vtanh.pop %v940
  %v980 = vld [vmem:[#allocation3] sm:$0xff]
  %v981 = vld [vmem:[#allocation3 + $0x8] sm:$0xff]
  %v982 = vmul.f32 %v969, %v980
  %v983 = vmul.f32 %v975, %v981
  %v984 = vmul.f32 %v967, %v978
  %v985 = vmul.f32 %v973, %v979
  %v986 = vadd.f32 %v982, %v984
  %v987 = vadd.f32 %v983, %v985
  %v988 = vtanh.pop %v986
  %v989 = vtanh.pop %v987
  %v990 = vmul.f32 %v971, %v988
  %v991 = vmul.f32 %v977, %v989
  %v992 = vpack.c.bf16 %v991, %v990
  %993 = vst [vmem:[#allocation3] sm:$0xff] %v986
  %994 = vst [vmem:[#allocation3 + $0x8] sm:$0xff] %v987
  %v996 = vunpack.c.l.b16 %v992
  %v997 = vunpack.c.h.b16 %v992
  %v998 = vpack.c.b16 %v996, %v996
  %v999 = vpack.c.b16 %v997, %v997
  %1002 = vst [vmem:[#allocation2 + $0x4] sm:$0xf] %v998
  %1003 = vst [vmem:[#allocation2 + $0xc] sm:$0xf] %v999
  %s1004 = scalar_lea.vmem %s73, 16
  %1005 = vst [vmem:[%s1004] sm:$0xf] %v998
  %1006 = vst [vmem:[%s1004 + $0x4] sm:$0xf] %v999
  %s1007 = smul.u32 0, 4294967294
  %s1008 = sadd.s32 %s1007, 3
  %s1009 = smul.u32 %s1008, 2
  %s1010 = smul.addr %s1009, 4
  %s1011 = scalar_lea.vmem %s58, %s1010
  %v1012 = vld [vmem:[%s1011] sm:$0xf]
  %v1013 = vld [vmem:[%s1011 + $0x4] sm:$0xf]
  %1014 = vst [vmem:[#allocation2] sm:$0xf] %v1012
  %1015 = vst [vmem:[#allocation2 + $0x8] sm:$0xf] %v1013
  %v1016 = vld [vmem:[#allocation2] sm:$0xff]
  %v1017 = vld [vmem:[#allocation2 + $0x8] sm:$0xff]
  %v1020 = vunpack.c.l.b16 %v1016
  %v1021 = vunpack.c.h.b16 %v1016
  %v1022 = vunpack.c.l.b16 %v1017
  %v1023 = vunpack.c.h.b16 %v1017
  %v1024 = vpack.c.b16 %v1022, %v1020
  %v1025 = vpack.c.b16 %v1023, %v1021
  %1028 = vmatprep.subr.bf16.mxu0 %v415
  %1029 = vmatpush1.bf16.msra.mxu0 %v414
  %1030 = vmatprep.subr.bf16.mxu0 %v411
  %1031 = vmatpush1.bf16.msra.mxu0 %v410
  %1032 = vmatprep.subr.bf16.mxu0 %v407
  %1033 = vmatpush1.bf16.msra.mxu0 %v406
  %1034 = vmatprep.subr.bf16.mxu0 %v403
  %1035 = vmatpush1.bf16.msra.mxu0 %v402
  %1036 = vmatprep.subr.bf16.mxu0 %v399
  %1037 = vmatpush1.bf16.msra.mxu0 %v398
  %1038 = vmatprep.subr.bf16.mxu0 %v395
  %1039 = vmatpush1.bf16.msra.mxu0 %v394
  %1040 = vmatprep.subr.bf16.mxu0 %v391
  %1041 = vmatpush1.bf16.msra.mxu0 %v390
  %1042 = vmatprep.subr.bf16.mxu0 %v387
  %1043 = vmatpush1.bf16.msra.mxu0 %v386
  %1044 = vmatprep.subr.bf16.mxu0 %v447
  %1045 = vmatpush2.bf16.msra.mxu0 %v446
  %1046 = vmatprep.subr.bf16.mxu0 %v443
  %1047 = vmatpush2.bf16.msra.mxu0 %v442
  %1048 = vmatprep.subr.bf16.mxu0 %v439
  %1049 = vmatpush2.bf16.msra.mxu0 %v438
  %1050 = vmatprep.subr.bf16.mxu0 %v435
  %1051 = vmatpush2.bf16.msra.mxu0 %v434
  %1052 = vmatprep.subr.bf16.mxu0 %v431
  %1053 = vmatpush2.bf16.msra.mxu0 %v430
  %1054 = vmatprep.subr.bf16.mxu0 %v427
  %1055 = vmatpush2.bf16.msra.mxu0 %v426
  %1056 = vmatprep.subr.bf16.mxu0 %v423
  %1057 = vmatpush2.bf16.msra.mxu0 %v422
  %1058 = vmatprep.subr.bf16.mxu0 %v419
  %1059 = vmatpush2.bf16.msra.mxu0 %v418
  %1060 = vmatprep.mubr.bf16.mxu0 %v1025
  %1061 = vmatmul.mubr.bf16.gmra.mxu0 %v1024
  %v1062 = vpop.f32.mrf.mxu0
  %v1063 = vadd.f32 %v167, %v1062
  %v1064 = vpop.f32.mrf.mxu0
  %v1065 = vadd.f32 %v171, %v1064
  %v1066 = vpop.f32.mrf.mxu0
  %v1067 = vadd.f32 %v167, %v1066
  %v1068 = vpop.f32.mrf.mxu0
  %v1069 = vadd.f32 %v171, %v1068
  %1070 = vdwg.mxu0
  %1071 = vmatprep.subr.bf16.mxu0 %v417
  %1072 = vmatpush1.bf16.msra.mxu0 %v416
  %1073 = vmatprep.subr.bf16.mxu0 %v413
  %1074 = vmatpush1.bf16.msra.mxu0 %v412
  %1075 = vmatprep.subr.bf16.mxu0 %v409
  %1076 = vmatpush1.bf16.msra.mxu0 %v408
  %1077 = vmatprep.subr.bf16.mxu0 %v405
  %1078 = vmatpush1.bf16.msra.mxu0 %v404
  %1079 = vmatprep.subr.bf16.mxu0 %v401
  %1080 = vmatpush1.bf16.msra.mxu0 %v400
  %1081 = vmatprep.subr.bf16.mxu0 %v397
  %1082 = vmatpush1.bf16.msra.mxu0 %v396
  %1083 = vmatprep.subr.bf16.mxu0 %v393
  %1084 = vmatpush1.bf16.msra.mxu0 %v392
  %1085 = vmatprep.subr.bf16.mxu0 %v389
  %1086 = vmatpush1.bf16.msra.mxu0 %v388
  %1087 = vmatprep.subr.bf16.mxu0 %v449
  %1088 = vmatpush2.bf16.msra.mxu0 %v448
  %1089 = vmatprep.subr.bf16.mxu0 %v445
  %1090 = vmatpush2.bf16.msra.mxu0 %v444
  %1091 = vmatprep.subr.bf16.mxu0 %v441
  %1092 = vmatpush2.bf16.msra.mxu0 %v440
  %1093 = vmatprep.subr.bf16.mxu0 %v437
  %1094 = vmatpush2.bf16.msra.mxu0 %v436
  %1095 = vmatprep.subr.bf16.mxu0 %v433
  %1096 = vmatpush2.bf16.msra.mxu0 %v432
  %1097 = vmatprep.subr.bf16.mxu0 %v429
  %1098 = vmatpush2.bf16.msra.mxu0 %v428
  %1099 = vmatprep.subr.bf16.mxu0 %v425
  %1100 = vmatpush2.bf16.msra.mxu0 %v424
  %1101 = vmatprep.subr.bf16.mxu0 %v421
  %1102 = vmatpush2.bf16.msra.mxu0 %v420
  %1103 = vmatprep.mubr.bf16.mxu0 %v1025
  %1104 = vmatmul.mubr.bf16.gmra.mxu0 %v1024
  %v1105 = vpop.f32.mrf.mxu0
  %v1106 = vadd.f32 %v175, %v1105
  %v1107 = vpop.f32.mrf.mxu0
  %v1108 = vadd.f32 %v179, %v1107
  %v1109 = vpop.f32.mrf.mxu0
  %v1110 = vadd.f32 %v175, %v1109
  %v1111 = vpop.f32.mrf.mxu0
  %v1112 = vadd.f32 %v179, %v1111
  %1113 = vdwg.mxu0
  %v1114 = vxor.u32 %v1063, 2147483648
  %v1115 = vxor.u32 %v1065, 2147483648
  %v1116 = vxor.u32 %v1106, 2147483648
  %v1117 = vxor.u32 %v1067, 2147483648
  %v1118 = vxor.u32 %v1069, 2147483648
  %v1119 = vxor.u32 %v1110, 2147483648
  %v1120 = vmul.f32 %v1114, 1.442695
  %v1121 = vpow.pop %v1120
  %v1122 = vmul.f32 %v1115, 1.442695
  %v1123 = vpow.pop %v1122
  %v1124 = vmul.f32 %v1116, 1.442695
  %v1125 = vpow.pop %v1124
  %v1126 = vmul.f32 %v1117, 1.442695
  %v1127 = vpow.pop %v1126
  %v1128 = vmul.f32 %v1118, 1.442695
  %v1129 = vpow.pop %v1128
  %v1130 = vmul.f32 %v1119, 1.442695
  %v1131 = vpow.pop %v1130
  %v1132 = vadd.f32 %v1121, 1.0
  %v1133 = vadd.f32 %v1123, 1.0
  %v1134 = vadd.f32 %v1125, 1.0
  %v1135 = vadd.f32 %v1127, 1.0
  %v1136 = vadd.f32 %v1129, 1.0
  %v1137 = vadd.f32 %v1131, 1.0
  %v1138 = vrcp.pop %v1132
  %v1139 = vmul.f32 1.0, %v1138
  %v1140 = vrcp.pop %v1133
  %v1141 = vmul.f32 1.0, %v1140
  %v1142 = vrcp.pop %v1134
  %v1143 = vmul.f32 1.0, %v1142
  %v1144 = vrcp.pop %v1135
  %v1145 = vmul.f32 1.0, %v1144
  %v1146 = vrcp.pop %v1136
  %v1147 = vmul.f32 1.0, %v1146
  %v1148 = vrcp.pop %v1137
  %v1149 = vmul.f32 1.0, %v1148
  %v1150 = vtanh.pop %v1108
  %v1151 = vtanh.pop %v1112
  %v1152 = vld [vmem:[#allocation3] sm:$0xff]
  %v1153 = vld [vmem:[#allocation3 + $0x8] sm:$0xff]
  %v1154 = vmul.f32 %v1141, %v1152
  %v1155 = vmul.f32 %v1147, %v1153
  %v1156 = vmul.f32 %v1139, %v1150
  %v1157 = vmul.f32 %v1145, %v1151
  %v1158 = vadd.f32 %v1154, %v1156
  %v1159 = vadd.f32 %v1155, %v1157
  %v1160 = vtanh.pop %v1158
  %v1161 = vtanh.pop %v1159
  %v1162 = vmul.f32 %v1143, %v1160
  %v1163 = vmul.f32 %v1149, %v1161
  %v1164 = vpack.c.bf16 %v1163, %v1162
  %1165 = vst [vmem:[#allocation3] sm:$0xff] %v1158
  %1166 = vst [vmem:[#allocation3 + $0x8] sm:$0xff] %v1159
  %v1168 = vunpack.c.l.b16 %v1164
  %v1169 = vunpack.c.h.b16 %v1164
  %v1170 = vpack.c.b16 %v1168, %v1168
  %v1171 = vpack.c.b16 %v1169, %v1169
  %1174 = vst [vmem:[#allocation2 + $0x4] sm:$0xf] %v1170
  %1175 = vst [vmem:[#allocation2 + $0xc] sm:$0xf] %v1171
  %s1176 = smul.addr %s1009, 4
  %s1177 = scalar_lea.vmem %s73, %s1176
  %1178 = vst [vmem:[%s1177] sm:$0xf] %v1170
  %1179 = vst [vmem:[%s1177 + $0x4] sm:$0xf] %v1171
  %s1180 = smul.u32 0, 4294967292
  %s1181 = sadd.s32 %s1180, 4
  %s1182 = smul.u32 %s1181, 2
  %s1183 = smul.addr %s1182, 4
  %s1184 = scalar_lea.vmem %s58, %s1183
  %v1185 = vld [vmem:[%s1184] sm:$0xf]
  %v1186 = vld [vmem:[%s1184 + $0x4] sm:$0xf]
  %1187 = vst [vmem:[#allocation2] sm:$0xf] %v1185
  %1188 = vst [vmem:[#allocation2 + $0x8] sm:$0xf] %v1186
  %v1189 = vld [vmem:[#allocation2] sm:$0xff]
  %v1190 = vld [vmem:[#allocation2 + $0x8] sm:$0xff]
  %v1193 = vunpack.c.l.b16 %v1189
  %v1194 = vunpack.c.h.b16 %v1189
  %v1195 = vunpack.c.l.b16 %v1190
  %v1196 = vunpack.c.h.b16 %v1190
  %v1197 = vpack.c.b16 %v1195, %v1193
  %v1198 = vpack.c.b16 %v1196, %v1194
  %1201 = vmatprep.subr.bf16.mxu0 %v415
  %1202 = vmatpush1.bf16.msra.mxu0 %v414
  %1203 = vmatprep.subr.bf16.mxu0 %v411
  %1204 = vmatpush1.bf16.msra.mxu0 %v410
  %1205 = vmatprep.subr.bf16.mxu0 %v407
  %1206 = vmatpush1.bf16.msra.mxu0 %v406
  %1207 = vmatprep.subr.bf16.mxu0 %v403
  %1208 = vmatpush1.bf16.msra.mxu0 %v402
  %1209 = vmatprep.subr.bf16.mxu0 %v399
  %1210 = vmatpush1.bf16.msra.mxu0 %v398
  %1211 = vmatprep.subr.bf16.mxu0 %v395
  %1212 = vmatpush1.bf16.msra.mxu0 %v394
  %1213 = vmatprep.subr.bf16.mxu0 %v391
  %1214 = vmatpush1.bf16.msra.mxu0 %v390
  %1215 = vmatprep.subr.bf16.mxu0 %v387
  %1216 = vmatpush1.bf16.msra.mxu0 %v386
  %1217 = vmatprep.subr.bf16.mxu0 %v447
  %1218 = vmatpush2.bf16.msra.mxu0 %v446
  %1219 = vmatprep.subr.bf16.mxu0 %v443
  %1220 = vmatpush2.bf16.msra.mxu0 %v442
  %1221 = vmatprep.subr.bf16.mxu0 %v439
  %1222 = vmatpush2.bf16.msra.mxu0 %v438
  %1223 = vmatprep.subr.bf16.mxu0 %v435
  %1224 = vmatpush2.bf16.msra.mxu0 %v434
  %1225 = vmatprep.subr.bf16.mxu0 %v431
  %1226 = vmatpush2.bf16.msra.mxu0 %v430
  %1227 = vmatprep.subr.bf16.mxu0 %v427
  %1228 = vmatpush2.bf16.msra.mxu0 %v426
  %1229 = vmatprep.subr.bf16.mxu0 %v423
  %1230 = vmatpush2.bf16.msra.mxu0 %v422
  %1231 = vmatprep.subr.bf16.mxu0 %v419
  %1232 = vmatpush2.bf16.msra.mxu0 %v418
  %1233 = vmatprep.mubr.bf16.mxu0 %v1198
  %1234 = vmatmul.mubr.bf16.gmra.mxu0 %v1197
  %v1235 = vpop.f32.mrf.mxu0
  %v1236 = vadd.f32 %v167, %v1235
  %v1237 = vpop.f32.mrf.mxu0
  %v1238 = vadd.f32 %v171, %v1237
  %v1239 = vpop.f32.mrf.mxu0
  %v1240 = vadd.f32 %v167, %v1239
  %v1241 = vpop.f32.mrf.mxu0
  %v1242 = vadd.f32 %v171, %v1241
  %1243 = vdwg.mxu0
  %1244 = vmatprep.subr.bf16.mxu0 %v417
  %1245 = vmatpush1.bf16.msra.mxu0 %v416
  %1246 = vmatprep.subr.bf16.mxu0 %v413
  %1247 = vmatpush1.bf16.msra.mxu0 %v412
  %1248 = vmatprep.subr.bf16.mxu0 %v409
  %1249 = vmatpush1.bf16.msra.mxu0 %v408
  %1250 = vmatprep.subr.bf16.mxu0 %v405
  %1251 = vmatpush1.bf16.msra.mxu0 %v404
  %1252 = vmatprep.subr.bf16.mxu0 %v401
  %1253 = vmatpush1.bf16.msra.mxu0 %v400
  %1254 = vmatprep.subr.bf16.mxu0 %v397
  %1255 = vmatpush1.bf16.msra.mxu0 %v396
  %1256 = vmatprep.subr.bf16.mxu0 %v393
  %1257 = vmatpush1.bf16.msra.mxu0 %v392
  %1258 = vmatprep.subr.bf16.mxu0 %v389
  %1259 = vmatpush1.bf16.msra.mxu0 %v388
  %1260 = vmatprep.subr.bf16.mxu0 %v449
  %1261 = vmatpush2.bf16.msra.mxu0 %v448
  %1262 = vmatprep.subr.bf16.mxu0 %v445
  %1263 = vmatpush2.bf16.msra.mxu0 %v444
  %1264 = vmatprep.subr.bf16.mxu0 %v441
  %1265 = vmatpush2.bf16.msra.mxu0 %v440
  %1266 = vmatprep.subr.bf16.mxu0 %v437
  %1267 = vmatpush2.bf16.msra.mxu0 %v436
  %1268 = vmatprep.subr.bf16.mxu0 %v433
  %1269 = vmatpush2.bf16.msra.mxu0 %v432
  %1270 = vmatprep.subr.bf16.mxu0 %v429
  %1271 = vmatpush2.bf16.msra.mxu0 %v428
  %1272 = vmatprep.subr.bf16.mxu0 %v425
  %1273 = vmatpush2.bf16.msra.mxu0 %v424
  %1274 = vmatprep.subr.bf16.mxu0 %v421
  %1275 = vmatpush2.bf16.msra.mxu0 %v420
  %1276 = vmatprep.mubr.bf16.mxu0 %v1198
  %1277 = vmatmul.mubr.bf16.gmra.mxu0 %v1197
  %v1278 = vpop.f32.mrf.mxu0
  %v1279 = vadd.f32 %v175, %v1278
  %v1280 = vpop.f32.mrf.mxu0
  %v1281 = vadd.f32 %v179, %v1280
  %v1282 = vpop.f32.mrf.mxu0
  %v1283 = vadd.f32 %v175, %v1282
  %v1284 = vpop.f32.mrf.mxu0
  %v1285 = vadd.f32 %v179, %v1284
  %1286 = vdwg.mxu0
  %v1287 = vxor.u32 %v1236, 2147483648
  %v1288 = vxor.u32 %v1238, 2147483648
  %v1289 = vxor.u32 %v1279, 2147483648
  %v1290 = vxor.u32 %v1240, 2147483648
  %v1291 = vxor.u32 %v1242, 2147483648
  %v1292 = vxor.u32 %v1283, 2147483648
  %v1293 = vmul.f32 %v1287, 1.442695
  %v1294 = vpow.pop %v1293
  %v1295 = vmul.f32 %v1288, 1.442695
  %v1296 = vpow.pop %v1295
  %v1297 = vmul.f32 %v1289, 1.442695
  %v1298 = vpow.pop %v1297
  %v1299 = vmul.f32 %v1290, 1.442695
  %v1300 = vpow.pop %v1299
  %v1301 = vmul.f32 %v1291, 1.442695
  %v1302 = vpow.pop %v1301
  %v1303 = vmul.f32 %v1292, 1.442695
  %v1304 = vpow.pop %v1303
  %v1305 = vadd.f32 %v1294, 1.0
  %v1306 = vadd.f32 %v1296, 1.0
  %v1307 = vadd.f32 %v1298, 1.0
  %v1308 = vadd.f32 %v1300, 1.0
  %v1309 = vadd.f32 %v1302, 1.0
  %v1310 = vadd.f32 %v1304, 1.0
  %v1311 = vrcp.pop %v1305
  %v1312 = vmul.f32 1.0, %v1311
  %v1313 = vrcp.pop %v1306
  %v1314 = vmul.f32 1.0, %v1313
  %v1315 = vrcp.pop %v1307
  %v1316 = vmul.f32 1.0, %v1315
  %v1317 = vrcp.pop %v1308
  %v1318 = vmul.f32 1.0, %v1317
  %v1319 = vrcp.pop %v1309
  %v1320 = vmul.f32 1.0, %v1319
  %v1321 = vrcp.pop %v1310
  %v1322 = vmul.f32 1.0, %v1321
  %v1323 = vtanh.pop %v1281
  %v1324 = vtanh.pop %v1285
  %v1325 = vld [vmem:[#allocation3] sm:$0xff]
  %v1326 = vld [vmem:[#allocation3 + $0x8] sm:$0xff]
  %v1327 = vmul.f32 %v1314, %v1325
  %v1328 = vmul.f32 %v1320, %v1326
  %v1329 = vmul.f32 %v1312, %v1323
  %v1330 = vmul.f32 %v1318, %v1324
  %v1331 = vadd.f32 %v1327, %v1329
  %v1332 = vadd.f32 %v1328, %v1330
  %v1333 = vtanh.pop %v1331
  %v1334 = vtanh.pop %v1332
  %v1335 = vmul.f32 %v1316, %v1333
  %v1336 = vmul.f32 %v1322, %v1334
  %v1337 = vpack.c.bf16 %v1336, %v1335
  %1338 = vst [vmem:[#allocation3] sm:$0xff] %v1331
  %1339 = vst [vmem:[#allocation3 + $0x8] sm:$0xff] %v1332
  %v1341 = vunpack.c.l.b16 %v1337
  %v1342 = vunpack.c.h.b16 %v1337
  %v1343 = vpack.c.b16 %v1341, %v1341
  %v1344 = vpack.c.b16 %v1342, %v1342
  %1347 = vst [vmem:[#allocation2 + $0x4] sm:$0xf] %v1343
  %1348 = vst [vmem:[#allocation2 + $0xc] sm:$0xf] %v1344
  %s1349 = smul.addr %s1182, 4
  %s1350 = scalar_lea.vmem %s73, %s1349
  %1351 = vst [vmem:[%s1350] sm:$0xf] %v1343
  %1352 = vst [vmem:[%s1350 + $0x4] sm:$0xf] %v1344
  %s1353 = smul.u32 0, 2
  %s1354 = ssub.s32 0, %s1353
  %s1355 = smul.u32 0, %s1354
  %s1356 = sadd.s32 0, %s1355
  %s1357 = smul.u32 5, %s1356
  %p1358 = scmp.lt.s32.totalorder %s1357, 4
  %s1359 = scalar_select %p1358, %s1357, 4
  %s1360 = smul.addr %s1359, 2
  %s1361 = smul.addr %s1360, 4
  %s1362 = scalar_lea.vmem %s3, %s1361
  // Predicated region
  $region18: #{music_vae_forward.17} parent=0 // pred_check
    _
  $region19: #{music_vae_forward.17} parent=0 // pred_check_branch
    %1364 = sbr.rel (0) target = $region21
  $region20: #{music_vae_forward.17} parent=0 // pred_region
    %s1365 = smul.u32 0, 2
    %s1366 = ssub.s32 0, %s1365
    %s1367 = smul.u32 0, %s1366
    %s1368 = sadd.s32 0, %s1367
    %s1369 = smul.u32 5, %s1368
  $region21: #{music_vae_forward.17} parent=0 // pred_fallthru
    _
  // Predicated region
  $region22: #{music_vae_forward.17} parent=0 // pred_check
    _
  $region23: #{music_vae_forward.17} parent=0 // pred_check_branch
    %1371 = sbr.rel (0) target = $region25
  $region24: #{music_vae_forward.17} parent=0 // pred_region
    %s1372 = smul.u32 0, 2
    %s1373 = ssub.s32 0, %s1372
    %s1374 = smul.u32 0, %s1373
    %s1375 = sadd.s32 0, %s1374
    %s1376 = smul.u32 5, %s1375
    %p1377 = scmp.lt.s32.totalorder %s1376, 4
    %s1378 = scalar_select %p1377, %s1376, 4
    %s1379 = smul.addr %s1378, 2
    %s1380 = smul.addr %s1379, 4
    %s1381 = scalar_lea.vmem %s3, %s1380
  $region25: #{music_vae_forward.17} parent=0 // pred_fallthru
    _

</llo_original>
